<compile_context>
chip_gen: v6e
topology: v6e:2x2x1
jax: 0.10.0
libtpu: 0.0.40
codegen_flags: <defaults>
</compile_context>

<pallas_src>
import functools

import jax
import jax.numpy as jnp
from jax.experimental import pallas as pl
from jax.experimental.pallas import tpu as pltpu


# Conservative budgets so the same tiling works on v5e/v6e (128 MiB VMEM) and v7x (64 MiB).
_TILE_VMEM_BUDGET = 16 * 1024 * 1024
_VMEM_LIMIT_BYTES = 32 * 1024 * 1024


def _per_image_vmem_bytes(H, W, Cin, Cint, Cout, cbytes):
    """Rough per-image VMEM footprint of the fused conv kernel (for batch-tile sizing)."""
    hp, wp = H + 2, W + 2
    io = 2 * H * W * (Cin * cbytes + Cout * 4)       # double-buffered input / output blocks
    pad = hp * wp * (Cin + Cint) * 4                 # f32 zero-padded scratch buffers
    col = H * W * 9 * (Cin + Cint) * (4 + cbytes)    # im2col patch matrices (f32 + cast copy)
    act = 2 * H * W * (Cint + Cout) * 4              # live conv outputs
    return io + pad + col + act


def _pick_batch_tile(n, per_image_bytes, budget_bytes):
    for b in range(n, 0, -1):
        if n % b == 0 and b * per_image_bytes <= budget_bytes:
            return b
    return 1


def _conv_conv_stats_kernel(x_ref, w1_ref, b1_ref, w2_ref, b2_ref,
                            y_ref, stats_ref, xpad_ref, hpad_ref,
                            *, B, H, W, Cin, Cint, Cout):
    """conv1 -> ReLU -> conv2 -> ReLU for a tile of B images + partial BN stats.

    x_ref:     (B, H, W, Cin)     compute dtype (bf16 by default)
    w1_ref:    (9*Cin, Cint)      compute dtype
    w2_ref:    (9*Cint, Cout)     compute dtype
    b1/b2:     (1, Cint)/(1, Cout) f32
    y_ref:     (B*H*W, Cout)      f32 output for this tile
    stats_ref: (1, 2, Cout)       f32 per-program [sum, sum_sq]
    xpad_ref:  (B, H+2, W+2, Cin)  f32 VMEM scratch
    hpad_ref:  (B, H+2, W+2, Cint) f32 VMEM scratch
    """
    f32 = jnp.float32
    M = B * H * W

    # Zero only the 1-pixel border of the padded scratch buffers.  The interior is fully
    # overwritten below, so this is all the zeroing ever needed, and (unlike a
    # zero-once-at-step-0 scheme) it stays correct when the 'parallel' grid axis is split
    # across TensorCores, each with its own scratch instance.
    for ref, C in ((xpad_ref, Cin), (hpad_ref, Cint)):
        ref[:, 0:1, :, :] = jnp.zeros((B, 1, W + 2, C), f32)
        ref[:, H + 1:H + 2, :, :] = jnp.zeros((B, 1, W + 2, C), f32)
        ref[:, :, 0:1, :] = jnp.zeros((B, H + 2, 1, C), f32)
        ref[:, :, W + 1:W + 2, :] = jnp.zeros((B, H + 2, 1, C), f32)

    # ---- conv1 (3x3, pad=1) via im2col: one (M, 9*Cin) @ (9*Cin, Cint) MXU matmul ----
    xpad_ref[:, 1:H + 1, 1:W + 1, :] = x_ref[...].astype(f32)
    xp = xpad_ref[...]
    taps1 = [xp[:, dy:dy + H, dx:dx + W, :].reshape(M, Cin)
             for dy in range(3) for dx in range(3)]
    patches1 = jnp.concatenate(taps1, axis=-1).astype(w1_ref.dtype)      # (M, 9*Cin)
    h = jax.lax.dot_general(patches1, w1_ref[...], (((1,), (0,)), ((), ())),
                            preferred_element_type=f32)                  # (M, Cint) f32
    h = jnp.maximum(h + b1_ref[...], 0.0)                                # actfunc = ReLU

    # ---- conv2 (3x3, pad=1) via im2col from zero-padded hidden activations ----
    hpad_ref[:, 1:H + 1, 1:W + 1, :] = h.reshape(B, H, W, Cint)
    hp = hpad_ref[...]
    taps2 = [hp[:, dy:dy + H, dx:dx + W, :].reshape(M, Cint)
             for dy in range(3) for dx in range(3)]
    patches2 = jnp.concatenate(taps2, axis=-1).astype(w2_ref.dtype)      # (M, 9*Cint)
    y = jax.lax.dot_general(patches2, w2_ref[...], (((1,), (0,)), ((), ())),
                            preferred_element_type=f32)                  # (M, Cout) f32
    y = jnp.maximum(y + b2_ref[...], 0.0)                                # actfunc = ReLU

    # ---- per-program partial BatchNorm statistics (enables 'parallel' grid axis) ----
    s = jnp.sum(y, axis=0, keepdims=True)                                # (1, Cout)
    ss = jnp.sum(y * y, axis=0, keepdims=True)                           # (1, Cout)
    stats_ref[...] = jnp.concatenate([s, ss], axis=0).reshape(1, 2, Cout)

    y_ref[...] = y.astype(y_ref.dtype)


def _bn_apply_kernel(y_ref, scale_ref, shift_ref, o_ref):
    """BatchNorm apply: one FMA per element with precomputed per-channel scale/shift."""
    o_ref[...] = y_ref[...].astype(jnp.float32) * scale_ref[...] + shift_ref[...]


def conv_block_pallas(x_nchw, params, eps=1e-5, compute_dtype=jnp.bfloat16):
    """Forward pass of convBlock (train-mode BatchNorm). Returns NCHW f32."""
    w1, b1, w2, b2, gamma, beta = params
    N, Cin, H, W = x_nchw.shape
    Cint = w1.shape[-1]
    Cout = w2.shape[-1]

    cbytes = jnp.dtype(compute_dtype).itemsize
    b_tile = _pick_batch_tile(
        N, _per_image_vmem_bytes(H, W, Cin, Cint, Cout, cbytes), _TILE_VMEM_BUDGET)
    grid = N // b_tile
    m_tile = b_tile * H * W

    # NCHW -> NHWC; activations and conv weights are fed to the MXU in compute_dtype
    # (bf16 by default -> f32 accumulation, half the activation HBM traffic).
    x = jnp.transpose(x_nchw, (0, 2, 3, 1)).astype(compute_dtype)
    w1r = w1.reshape(9 * Cin, Cint).astype(compute_dtype)
    w2r = w2.reshape(9 * Cint, Cout).astype(compute_dtype)
    b1r = b1.reshape(1, Cint).astype(jnp.float32)
    b2r = b2.reshape(1, Cout).astype(jnp.float32)

    kern = functools.partial(_conv_conv_stats_kernel,
                             B=b_tile, H=H, W=W, Cin=Cin, Cint=Cint, Cout=Cout)
    y_flat, stats_partial = pl.pallas_call(
        kern,
        out_shape=(jax.ShapeDtypeStruct((N * H * W, Cout), jnp.float32),
                   jax.ShapeDtypeStruct((grid, 2, Cout), jnp.float32)),
        grid_spec=pltpu.PrefetchScalarGridSpec(
            num_scalar_prefetch=0,
            grid=(grid,),
            in_specs=[
                pl.BlockSpec((b_tile, H, W, Cin), lambda g: (g, 0, 0, 0)),
                pl.BlockSpec((9 * Cin, Cint), lambda g: (0, 0)),
                pl.BlockSpec((1, Cint), lambda g: (0, 0)),
                pl.BlockSpec((9 * Cint, Cout), lambda g: (0, 0)),
                pl.BlockSpec((1, Cout), lambda g: (0, 0)),
            ],
            out_specs=(
                pl.BlockSpec((m_tile, Cout), lambda g: (g, 0)),
                pl.BlockSpec((1, 2, Cout), lambda g: (g, 0, 0)),
            ),
            scratch_shapes=[
                pltpu.VMEM((b_tile, H + 2, W + 2, Cin), jnp.float32),
                pltpu.VMEM((b_tile, H + 2, W + 2, Cint), jnp.float32),
            ],
        ),
        compiler_params=pltpu.CompilerParams(
            dimension_semantics=("parallel",),          # no cross-step state -> megacore OK
            vmem_limit_bytes=_VMEM_LIMIT_BYTES),
    )(x, w1r, b1r, w2r, b2r)

    # ---- reduce partial stats and precompute per-channel BN affine (tiny, O(Cout)) ----
    stats = jnp.sum(stats_partial, axis=0)                       # (2, Cout)
    count = jnp.float32(N * H * W)
    mean = stats[0] / count
    var = jnp.maximum(stats[1] / count - mean * mean, 0.0)       # biased var (train-mode BN)
    # TODO(synk): E[x^2]-E[x]^2 can lose precision for large activation means; a two-pass /
    # Welford scheme would be more robust at production scale.
    scale = gamma.reshape(-1).astype(jnp.float32) * jax.lax.rsqrt(var + eps)
    shift = beta.reshape(-1).astype(jnp.float32) - mean * scale
    scale_row = jnp.tile(scale, W).reshape(1, W * Cout)
    shift_row = jnp.tile(shift, W).reshape(1, W * Cout)

    # Lane-dense view for the memory-bound normalization pass:
    # (N*H*W, Cout) -> (N*H, W*Cout) is a free row-major regrouping.
    y_dense = y_flat.reshape(N * H, W * Cout)
    rows_tile = b_tile * H

    out_dense = pl.pallas_call(
        _bn_apply_kernel,
        out_shape=jax.ShapeDtypeStruct((N * H, W * Cout), jnp.float32),
        grid_spec=pltpu.PrefetchScalarGridSpec(
            num_scalar_prefetch=0,
            grid=(grid,),
            in_specs=[
                pl.BlockSpec((rows_tile, W * Cout), lambda g: (g, 0)),
                pl.BlockSpec((1, W * Cout), lambda g: (0, 0)),
                pl.BlockSpec((1, W * Cout), lambda g: (0, 0)),
            ],
            out_specs=pl.BlockSpec((rows_tile, W * Cout), lambda g: (g, 0)),
        ),
        input_output_aliases={0: 0},                    # normalize y in place
        compiler_params=pltpu.CompilerParams(
            dimension_semantics=("parallel",),
            vmem_limit_bytes=_VMEM_LIMIT_BYTES),
    )(y_dense, scale_row, shift_row)

    out = out_dense.reshape(N, H, W, Cout)
    return jnp.transpose(out, (0, 3, 1, 2))             # back to NCHW


def conv_block_reference(x_nchw, params, eps=1e-5, conv_dtype=jnp.float32):
    """Pure-JAX reference matching the PyTorch forward (train-mode BN).

    `conv_dtype` sets the precision of the convolution inputs (accumulation is always f32),
    so the kernel's mixed-precision path can be checked against a matched-precision reference.
    """
    w1, b1, w2, b2, gamma, beta = params
    dn = ('NCHW', 'OIHW', 'NCHW')

    def conv(inp, w):
        return jax.lax.conv_general_dilated(
            inp.astype(conv_dtype),
            jnp.transpose(w, (3, 2, 0, 1)).astype(conv_dtype),
            (1, 1), 'SAME', dimension_numbers=dn,
            preferred_element_type=jnp.float32)

    h = jnp.maximum(conv(x_nchw, w1) + b1.reshape(1, -1, 1, 1), 0.0)
    y = jnp.maximum(conv(h, w2) + b2.reshape(1, -1, 1, 1), 0.0)
    mean = jnp.mean(y, axis=(0, 2, 3), keepdims=True)
    var = jnp.var(y, axis=(0, 2, 3), keepdims=True)      # biased variance (PyTorch train mode)
    scale = gamma.reshape(1, -1, 1, 1) * jax.lax.rsqrt(var + eps)
    shift = beta.reshape(1, -1, 1, 1) - mean * scale
    return y * scale + shift


if __name__ == "__main__":
    N, Cin, Cint, Cout, H, W = 2, 4, 8, 4, 16, 16

    key = jax.random.PRNGKey(0)
    k1, k2, k3, k4, k5 = jax.random.split(key, 5)

    # Deterministic synthetic parameters (shapes match nn.Conv2d / nn.BatchNorm2d).
    w1 = 0.1 * jax.random.normal(k1, (3, 3, Cin, Cint), jnp.float32)
    b1 = 0.05 * jax.random.normal(k2, (1, Cint), jnp.float32)
    w2 = 0.1 * jax.random.normal(k3, (3, 3, Cint, Cout), jnp.float32)
    b2 = 0.05 * jax.random.normal(k4, (1, Cout), jnp.float32)
    gamma = jnp.ones((1, Cout), jnp.float32)             # BatchNorm2d default weight
    beta = jnp.zeros((1, Cout), jnp.float32)             # BatchNorm2d default bias
    params = (w1, b1, w2, b2, gamma, beta)

    x = jax.random.normal(k5, (N, Cin, H, W), jnp.float32)

    run = jax.jit(conv_block_pallas, static_argnames=("compute_dtype",))

    # 1) f32 compute path: tight check against the pure-f32 reference.
    out_f32 = jax.block_until_ready(run(x, params, compute_dtype=jnp.float32))
    ref_f32 = jax.block_until_ready(conv_block_reference(x, params))
    assert out_f32.shape == (N, Cout, H, W)
    err_f32 = float(jnp.max(jnp.abs(out_f32 - ref_f32)))
    assert err_f32 < 1e-4, f"f32 path mismatch vs reference: {err_f32}"

    # 2) default bf16-MXU path: tight check against a matched-precision reference,
    #    loose drift bound vs the pure-f32 reference.
    out_bf16 = jax.block_until_ready(run(x, params))
    ref_mixed = jax.block_until_ready(
        conv_block_reference(x, params, conv_dtype=jnp.bfloat16))
    err_impl = float(jnp.max(jnp.abs(out_bf16 - ref_mixed)))
    err_drift = float(jnp.max(jnp.abs(out_bf16 - ref_f32)))
    assert err_impl < 5e-3, f"bf16 path mismatch vs matched-precision reference: {err_impl}"
    assert err_drift < 1e-1, f"bf16 path drift vs f32 reference too large: {err_drift}"

    print("KERNEL_OK")
</pallas_src>

<mosaic_0001>
module attributes {stable_mosaic.version = 11 : i64} {
  func.func @_conv_conv_stats_kernel(%arg0: i32, %arg1: memref<2x16x16x4xf32, #tpu.memory_space<vmem>>, %arg2: memref<36x8xf32, #tpu.memory_space<vmem>>, %arg3: memref<1x8xf32, #tpu.memory_space<vmem>>, %arg4: memref<72x4xf32, #tpu.memory_space<vmem>>, %arg5: memref<1x4xf32, #tpu.memory_space<vmem>>, %arg6: memref<512x4xf32, #tpu.memory_space<vmem>>, %arg7: memref<1x2x4xf32, #tpu.memory_space<vmem>>, %arg8: memref<2x18x18x4xf32, #tpu.memory_space<vmem>>, %arg9: memref<2x18x18x8xf32, #tpu.memory_space<vmem>>) attributes {dimension_semantics = [#tpu.dimension_semantics<parallel>], iteration_bounds = array<i64: 1>, scalar_prefetch = 0 : i64, scratch_operands = 2 : i64, tpu.core_type = #tpu.core_type<tc>, window_params = [{transform_indices = @transform_0, window_bounds = array<i64: 2, 16, 16, 4>}, {pipeline_mode = #tpu.pipeline_mode<synchronous>, transform_indices = @transform_1, window_bounds = array<i64: 36, 8>}, {pipeline_mode = #tpu.pipeline_mode<synchronous>, transform_indices = @transform_2, window_bounds = array<i64: 1, 8>}, {pipeline_mode = #tpu.pipeline_mode<synchronous>, transform_indices = @transform_3, window_bounds = array<i64: 72, 4>}, {pipeline_mode = #tpu.pipeline_mode<synchronous>, transform_indices = @transform_4, window_bounds = array<i64: 1, 4>}, {transform_indices = @transform_5, window_bounds = array<i64: 512, 4>}, {transform_indices = @transform_6, window_bounds = array<i64: 1, 2, 4>}]} {
    %cst = arith.constant 0.000000e+00 : f32
    %0 = vector.broadcast %cst : f32 to vector<2x1x18x4xf32>
    %c0 = arith.constant 0 : index
    %c0_0 = arith.constant 0 : index
    %c0_1 = arith.constant 0 : index
    %c0_2 = arith.constant 0 : index
    %1 = vector.load %arg8[%c0, %c0_0, %c0_1, %c0_2] : memref<2x18x18x4xf32, #tpu.memory_space<vmem>>, vector<2x1x18x4xf32>
    tpu.vector_store %arg8[%c0, %c0_0, %c0_1, %c0_2], %0 {strides = array<i32>} : memref<2x18x18x4xf32, #tpu.memory_space<vmem>>, vector<2x1x18x4xf32>,
    %cst_3 = arith.constant 0.000000e+00 : f32
    %2 = vector.broadcast %cst_3 : f32 to vector<2x1x18x4xf32>
    %c0_4 = arith.constant 0 : index
    %c17 = arith.constant 17 : index
    %c0_5 = arith.constant 0 : index
    %c0_6 = arith.constant 0 : index
    %3 = vector.load %arg8[%c0_4, %c17, %c0_5, %c0_6] : memref<2x18x18x4xf32, #tpu.memory_space<vmem>>, vector<2x1x18x4xf32>
    tpu.vector_store %arg8[%c0_4, %c17, %c0_5, %c0_6], %2 {strides = array<i32>} : memref<2x18x18x4xf32, #tpu.memory_space<vmem>>, vector<2x1x18x4xf32>,
    %cst_7 = arith.constant 0.000000e+00 : f32
    %4 = vector.broadcast %cst_7 : f32 to vector<2x18x1x4xf32>
    %c0_8 = arith.constant 0 : index
    %c0_9 = arith.constant 0 : index
    %c0_10 = arith.constant 0 : index
    %c0_11 = arith.constant 0 : index
    %5 = vector.load %arg8[%c0_8, %c0_9, %c0_10, %c0_11] : memref<2x18x18x4xf32, #tpu.memory_space<vmem>>, vector<2x18x1x4xf32>
    tpu.vector_store %arg8[%c0_8, %c0_9, %c0_10, %c0_11], %4 {strides = array<i32>} : memref<2x18x18x4xf32, #tpu.memory_space<vmem>>, vector<2x18x1x4xf32>,
    %cst_12 = arith.constant 0.000000e+00 : f32
    %6 = vector.broadcast %cst_12 : f32 to vector<2x18x1x4xf32>
    %c0_13 = arith.constant 0 : index
    %c0_14 = arith.constant 0 : index
    %c17_15 = arith.constant 17 : index
    %c0_16 = arith.constant 0 : index
    %7 = vector.load %arg8[%c0_13, %c0_14, %c17_15, %c0_16] : memref<2x18x18x4xf32, #tpu.memory_space<vmem>>, vector<2x18x1x4xf32>
    tpu.vector_store %arg8[%c0_13, %c0_14, %c17_15, %c0_16], %6 {strides = array<i32>} : memref<2x18x18x4xf32, #tpu.memory_space<vmem>>, vector<2x18x1x4xf32>,
    %cst_17 = arith.constant 0.000000e+00 : f32
    %8 = vector.broadcast %cst_17 : f32 to vector<2x1x18x8xf32>
    %c0_18 = arith.constant 0 : index
    %c0_19 = arith.constant 0 : index
    %c0_20 = arith.constant 0 : index
    %c0_21 = arith.constant 0 : index
    %9 = vector.load %arg9[%c0_18, %c0_19, %c0_20, %c0_21] : memref<2x18x18x8xf32, #tpu.memory_space<vmem>>, vector<2x1x18x8xf32>
    tpu.vector_store %arg9[%c0_18, %c0_19, %c0_20, %c0_21], %8 {strides = array<i32>} : memref<2x18x18x8xf32, #tpu.memory_space<vmem>>, vector<2x1x18x8xf32>,
    %cst_22 = arith.constant 0.000000e+00 : f32
    %10 = vector.broadcast %cst_22 : f32 to vector<2x1x18x8xf32>
    %c0_23 = arith.constant 0 : index
    %c17_24 = arith.constant 17 : index
    %c0_25 = arith.constant 0 : index
    %c0_26 = arith.constant 0 : index
    %11 = vector.load %arg9[%c0_23, %c17_24, %c0_25, %c0_26] : memref<2x18x18x8xf32, #tpu.memory_space<vmem>>, vector<2x1x18x8xf32>
    tpu.vector_store %arg9[%c0_23, %c17_24, %c0_25, %c0_26], %10 {strides = array<i32>} : memref<2x18x18x8xf32, #tpu.memory_space<vmem>>, vector<2x1x18x8xf32>,
    %cst_27 = arith.constant 0.000000e+00 : f32
    %12 = vector.broadcast %cst_27 : f32 to vector<2x18x1x8xf32>
    %c0_28 = arith.constant 0 : index
    %c0_29 = arith.constant 0 : index
    %c0_30 = arith.constant 0 : index
    %c0_31 = arith.constant 0 : index
    %13 = vector.load %arg9[%c0_28, %c0_29, %c0_30, %c0_31] : memref<2x18x18x8xf32, #tpu.memory_space<vmem>>, vector<2x18x1x8xf32>
    tpu.vector_store %arg9[%c0_28, %c0_29, %c0_30, %c0_31], %12 {strides = array<i32>} : memref<2x18x18x8xf32, #tpu.memory_space<vmem>>, vector<2x18x1x8xf32>,
    %cst_32 = arith.constant 0.000000e+00 : f32
    %14 = vector.broadcast %cst_32 : f32 to vector<2x18x1x8xf32>
    %c0_33 = arith.constant 0 : index
    %c0_34 = arith.constant 0 : index
    %c17_35 = arith.constant 17 : index
    %c0_36 = arith.constant 0 : index
    %15 = vector.load %arg9[%c0_33, %c0_34, %c17_35, %c0_36] : memref<2x18x18x8xf32, #tpu.memory_space<vmem>>, vector<2x18x1x8xf32>
    tpu.vector_store %arg9[%c0_33, %c0_34, %c17_35, %c0_36], %14 {strides = array<i32>} : memref<2x18x18x8xf32, #tpu.memory_space<vmem>>, vector<2x18x1x8xf32>,
    %c0_37 = arith.constant 0 : index
    %c0_38 = arith.constant 0 : index
    %c0_39 = arith.constant 0 : index
    %c0_40 = arith.constant 0 : index
    %16 = vector.load %arg1[%c0_37, %c0_38, %c0_39, %c0_40] : memref<2x16x16x4xf32, #tpu.memory_space<vmem>>, vector<2x16x16x4xf32>
    %c0_41 = arith.constant 0 : index
    %c1 = arith.constant 1 : index
    %c1_42 = arith.constant 1 : index
    %c0_43 = arith.constant 0 : index
    %17 = vector.load %arg8[%c0_41, %c1, %c1_42, %c0_43] : memref<2x18x18x4xf32, #tpu.memory_space<vmem>>, vector<2x16x16x4xf32>
    tpu.vector_store %arg8[%c0_41, %c1, %c1_42, %c0_43], %16 {strides = array<i32>} : memref<2x18x18x4xf32, #tpu.memory_space<vmem>>, vector<2x16x16x4xf32>,
    %c0_44 = arith.constant 0 : index
    %c0_45 = arith.constant 0 : index
    %c0_46 = arith.constant 0 : index
    %c0_47 = arith.constant 0 : index
    %18 = vector.load %arg8[%c0_44, %c0_45, %c0_46, %c0_47] : memref<2x18x18x4xf32, #tpu.memory_space<vmem>>, vector<2x18x18x4xf32>
    %19 = vector.extract_strided_slice %18 {offsets = [0, 0, 0, 0], sizes = [2, 16, 16, 4], strides = [1, 1, 1, 1]} : vector<2x18x18x4xf32> to vector<2x16x16x4xf32>
    %20 = vector.shape_cast %19 : vector<2x16x16x4xf32> to vector<512x4xf32>
    %21 = vector.extract_strided_slice %18 {offsets = [0, 0, 1, 0], sizes = [2, 16, 16, 4], strides = [1, 1, 1, 1]} : vector<2x18x18x4xf32> to vector<2x16x16x4xf32>
    %22 = vector.shape_cast %21 : vector<2x16x16x4xf32> to vector<512x4xf32>
    %23 = vector.extract_strided_slice %18 {offsets = [0, 0, 2, 0], sizes = [2, 16, 16, 4], strides = [1, 1, 1, 1]} : vector<2x18x18x4xf32> to vector<2x16x16x4xf32>
    %24 = vector.shape_cast %23 : vector<2x16x16x4xf32> to vector<512x4xf32>
    %25 = vector.extract_strided_slice %18 {offsets = [0, 1, 0, 0], sizes = [2, 16, 16, 4], strides = [1, 1, 1, 1]} : vector<2x18x18x4xf32> to vector<2x16x16x4xf32>
    %26 = vector.shape_cast %25 : vector<2x16x16x4xf32> to vector<512x4xf32>
    %27 = vector.extract_strided_slice %18 {offsets = [0, 1, 1, 0], sizes = [2, 16, 16, 4], strides = [1, 1, 1, 1]} : vector<2x18x18x4xf32> to vector<2x16x16x4xf32>
    %28 = vector.shape_cast %27 : vector<2x16x16x4xf32> to vector<512x4xf32>
    %29 = vector.extract_strided_slice %18 {offsets = [0, 1, 2, 0], sizes = [2, 16, 16, 4], strides = [1, 1, 1, 1]} : vector<2x18x18x4xf32> to vector<2x16x16x4xf32>
    %30 = vector.shape_cast %29 : vector<2x16x16x4xf32> to vector<512x4xf32>
    %31 = vector.extract_strided_slice %18 {offsets = [0, 2, 0, 0], sizes = [2, 16, 16, 4], strides = [1, 1, 1, 1]} : vector<2x18x18x4xf32> to vector<2x16x16x4xf32>
    %32 = vector.shape_cast %31 : vector<2x16x16x4xf32> to vector<512x4xf32>
    %33 = vector.extract_strided_slice %18 {offsets = [0, 2, 1, 0], sizes = [2, 16, 16, 4], strides = [1, 1, 1, 1]} : vector<2x18x18x4xf32> to vector<2x16x16x4xf32>
    %34 = vector.shape_cast %33 : vector<2x16x16x4xf32> to vector<512x4xf32>
    %35 = vector.extract_strided_slice %18 {offsets = [0, 2, 2, 0], sizes = [2, 16, 16, 4], strides = [1, 1, 1, 1]} : vector<2x18x18x4xf32> to vector<2x16x16x4xf32>
    %36 = vector.shape_cast %35 : vector<2x16x16x4xf32> to vector<512x4xf32>
    %37 = tpu.concatenate %20, %22, %24, %26, %28, %30, %32, %34, %36 in 1 : vector<512x4xf32>, vector<512x4xf32>, vector<512x4xf32>, vector<512x4xf32>, vector<512x4xf32>, vector<512x4xf32>, vector<512x4xf32>, vector<512x4xf32>, vector<512x4xf32> -> vector<512x36xf32>
    %c0_48 = arith.constant 0 : index
    %c0_49 = arith.constant 0 : index
    %38 = vector.load %arg2[%c0_48, %c0_49] : memref<36x8xf32, #tpu.memory_space<vmem>>, vector<36x8xf32>
    %cst_50 = arith.constant dense<0.000000e+00> : vector<512x8xf32>
    %39 = tpu.matmul %37, %38, %cst_50 {dimension_numbers = #tpu.dot_dimension_numbers<[1], [0], [0], [1], [0, 0, 1, 1], [], []>} : vector<512x36xf32>, vector<36x8xf32>, vector<512x8xf32> -> vector<512x8xf32>
    %c0_51 = arith.constant 0 : index
    %c0_52 = arith.constant 0 : index
    %40 = vector.load %arg3[%c0_51, %c0_52] : memref<1x8xf32, #tpu.memory_space<vmem>>, vector<1x8xf32>
    %41 = vector.broadcast %40 : vector<1x8xf32> to vector<512x8xf32>
    %42 = arith.addf %39, %41 : vector<512x8xf32>
    %cst_53 = arith.constant 0.000000e+00 : f32
    %43 = vector.broadcast %cst_53 : f32 to vector<512x8xf32>
    %44 = arith.maximumf %42, %43 : vector<512x8xf32>
    %45 = vector.shape_cast %44 : vector<512x8xf32> to vector<2x16x16x8xf32>
    %c0_54 = arith.constant 0 : index
    %c1_55 = arith.constant 1 : index
    %c1_56 = arith.constant 1 : index
    %c0_57 = arith.constant 0 : index
    %46 = vector.load %arg9[%c0_54, %c1_55, %c1_56, %c0_57] : memref<2x18x18x8xf32, #tpu.memory_space<vmem>>, vector<2x16x16x8xf32>
    tpu.vector_store %arg9[%c0_54, %c1_55, %c1_56, %c0_57], %45 {strides = array<i32>} : memref<2x18x18x8xf32, #tpu.memory_space<vmem>>, vector<2x16x16x8xf32>,
    %c0_58 = arith.constant 0 : index
    %c0_59 = arith.constant 0 : index
    %c0_60 = arith.constant 0 : index
    %c0_61 = arith.constant 0 : index
    %47 = vector.load %arg9[%c0_58, %c0_59, %c0_60, %c0_61] : memref<2x18x18x8xf32, #tpu.memory_space<vmem>>, vector<2x18x18x8xf32>
    %48 = vector.extract_strided_slice %47 {offsets = [0, 0, 0, 0], sizes = [2, 16, 16, 8], strides = [1, 1, 1, 1]} : vector<2x18x18x8xf32> to vector<2x16x16x8xf32>
    %49 = vector.shape_cast %48 : vector<2x16x16x8xf32> to vector<512x8xf32>
    %50 = vector.extract_strided_slice %47 {offsets = [0, 0, 1, 0], sizes = [2, 16, 16, 8], strides = [1, 1, 1, 1]} : vector<2x18x18x8xf32> to vector<2x16x16x8xf32>
    %51 = vector.shape_cast %50 : vector<2x16x16x8xf32> to vector<512x8xf32>
    %52 = vector.extract_strided_slice %47 {offsets = [0, 0, 2, 0], sizes = [2, 16, 16, 8], strides = [1, 1, 1, 1]} : vector<2x18x18x8xf32> to vector<2x16x16x8xf32>
    %53 = vector.shape_cast %52 : vector<2x16x16x8xf32> to vector<512x8xf32>
    %54 = vector.extract_strided_slice %47 {offsets = [0, 1, 0, 0], sizes = [2, 16, 16, 8], strides = [1, 1, 1, 1]} : vector<2x18x18x8xf32> to vector<2x16x16x8xf32>
    %55 = vector.shape_cast %54 : vector<2x16x16x8xf32> to vector<512x8xf32>
    %56 = vector.extract_strided_slice %47 {offsets = [0, 1, 1, 0], sizes = [2, 16, 16, 8], strides = [1, 1, 1, 1]} : vector<2x18x18x8xf32> to vector<2x16x16x8xf32>
    %57 = vector.shape_cast %56 : vector<2x16x16x8xf32> to vector<512x8xf32>
    %58 = vector.extract_strided_slice %47 {offsets = [0, 1, 2, 0], sizes = [2, 16, 16, 8], strides = [1, 1, 1, 1]} : vector<2x18x18x8xf32> to vector<2x16x16x8xf32>
    %59 = vector.shape_cast %58 : vector<2x16x16x8xf32> to vector<512x8xf32>
    %60 = vector.extract_strided_slice %47 {offsets = [0, 2, 0, 0], sizes = [2, 16, 16, 8], strides = [1, 1, 1, 1]} : vector<2x18x18x8xf32> to vector<2x16x16x8xf32>
    %61 = vector.shape_cast %60 : vector<2x16x16x8xf32> to vector<512x8xf32>
    %62 = vector.extract_strided_slice %47 {offsets = [0, 2, 1, 0], sizes = [2, 16, 16, 8], strides = [1, 1, 1, 1]} : vector<2x18x18x8xf32> to vector<2x16x16x8xf32>
    %63 = vector.shape_cast %62 : vector<2x16x16x8xf32> to vector<512x8xf32>
    %64 = vector.extract_strided_slice %47 {offsets = [0, 2, 2, 0], sizes = [2, 16, 16, 8], strides = [1, 1, 1, 1]} : vector<2x18x18x8xf32> to vector<2x16x16x8xf32>
    %65 = vector.shape_cast %64 : vector<2x16x16x8xf32> to vector<512x8xf32>
    %66 = tpu.concatenate %49, %51, %53, %55, %57, %59, %61, %63, %65 in 1 : vector<512x8xf32>, vector<512x8xf32>, vector<512x8xf32>, vector<512x8xf32>, vector<512x8xf32>, vector<512x8xf32>, vector<512x8xf32>, vector<512x8xf32>, vector<512x8xf32> -> vector<512x72xf32>
    %c0_62 = arith.constant 0 : index
    %c0_63 = arith.constant 0 : index
    %67 = vector.load %arg4[%c0_62, %c0_63] : memref<72x4xf32, #tpu.memory_space<vmem>>, vector<72x4xf32>
    %cst_64 = arith.constant dense<0.000000e+00> : vector<512x4xf32>
    %68 = tpu.matmul %66, %67, %cst_64 {dimension_numbers = #tpu.dot_dimension_numbers<[1], [0], [0], [1], [0, 0, 1, 1], [], []>} : vector<512x72xf32>, vector<72x4xf32>, vector<512x4xf32> -> vector<512x4xf32>
    %c0_65 = arith.constant 0 : index
    %c0_66 = arith.constant 0 : index
    %69 = vector.load %arg5[%c0_65, %c0_66] : memref<1x4xf32, #tpu.memory_space<vmem>>, vector<1x4xf32>
    %70 = vector.broadcast %69 : vector<1x4xf32> to vector<512x4xf32>
    %71 = arith.addf %68, %70 : vector<512x4xf32>
    %cst_67 = arith.constant 0.000000e+00 : f32
    %72 = vector.broadcast %cst_67 : f32 to vector<512x4xf32>
    %73 = arith.maximumf %71, %72 : vector<512x4xf32>
    %cst_68 = arith.constant dense<0.000000e+00> : vector<4xf32>
    %74 = vector.multi_reduction <add>, %73, %cst_68 [0] : vector<512x4xf32> to vector<4xf32>
    %75 = vector.shape_cast %74 : vector<4xf32> to vector<1x4xf32>
    %76 = arith.mulf %73, %73 : vector<512x4xf32>
    %cst_69 = arith.constant dense<0.000000e+00> : vector<4xf32>
    %77 = vector.multi_reduction <add>, %76, %cst_69 [0] : vector<512x4xf32> to vector<4xf32>
    %78 = vector.shape_cast %77 : vector<4xf32> to vector<1x4xf32>
    %79 = tpu.concatenate %75, %78 in 0 : vector<1x4xf32>, vector<1x4xf32> -> vector<2x4xf32>
    %80 = vector.shape_cast %79 : vector<2x4xf32> to vector<1x2x4xf32>
    %c0_70 = arith.constant 0 : index
    %c0_71 = arith.constant 0 : index
    %c0_72 = arith.constant 0 : index
    %81 = vector.load %arg7[%c0_70, %c0_71, %c0_72] : memref<1x2x4xf32, #tpu.memory_space<vmem>>, vector<1x2x4xf32>
    tpu.vector_store %arg7[%c0_70, %c0_71, %c0_72], %80 {strides = array<i32>} : memref<1x2x4xf32, #tpu.memory_space<vmem>>, vector<1x2x4xf32>,
    %c0_73 = arith.constant 0 : index
    %c0_74 = arith.constant 0 : index
    %82 = vector.load %arg6[%c0_73, %c0_74] : memref<512x4xf32, #tpu.memory_space<vmem>>, vector<512x4xf32>
    tpu.vector_store %arg6[%c0_73, %c0_74], %73 {strides = array<i32>} : memref<512x4xf32, #tpu.memory_space<vmem>>, vector<512x4xf32>,
    return
  }
  func.func @transform_0(%arg0: i32) -> (i32, i32, i32, i32) {
    %c0_i32 = arith.constant 0 : i32
    %c0_i32_0 = arith.constant 0 : i32
    %c0_i32_1 = arith.constant 0 : i32
    %c0_i32_2 = arith.constant 0 : i32
    return %arg0, %c0_i32, %c0_i32_0, %c0_i32_1 : i32, i32, i32, i32
  }
  func.func @transform_1(%arg0: i32) -> (i32, i32) {
    %c0_i32 = arith.constant 0 : i32
    %c0_i32_0 = arith.constant 0 : i32
    %c0_i32_1 = arith.constant 0 : i32
    return %c0_i32, %c0_i32_0 : i32, i32
  }
  func.func @transform_2(%arg0: i32) -> (i32, i32) {
    %c0_i32 = arith.constant 0 : i32
    %c0_i32_0 = arith.constant 0 : i32
    %c0_i32_1 = arith.constant 0 : i32
    return %c0_i32, %c0_i32_0 : i32, i32
  }
  func.func @transform_3(%arg0: i32) -> (i32, i32) {
    %c0_i32 = arith.constant 0 : i32
    %c0_i32_0 = arith.constant 0 : i32
    %c0_i32_1 = arith.constant 0 : i32
    return %c0_i32, %c0_i32_0 : i32, i32
  }
  func.func @transform_4(%arg0: i32) -> (i32, i32) {
    %c0_i32 = arith.constant 0 : i32
    %c0_i32_0 = arith.constant 0 : i32
    %c0_i32_1 = arith.constant 0 : i32
    return %c0_i32, %c0_i32_0 : i32, i32
  }
  func.func @transform_5(%arg0: i32) -> (i32, i32) {
    %c0_i32 = arith.constant 0 : i32
    %c0_i32_0 = arith.constant 0 : i32
    return %arg0, %c0_i32 : i32, i32
  }
  func.func @transform_6(%arg0: i32) -> (i32, i32, i32) {
    %c0_i32 = arith.constant 0 : i32
    %c0_i32_0 = arith.constant 0 : i32
    %c0_i32_1 = arith.constant 0 : i32
    return %arg0, %c0_i32, %c0_i32_0 : i32, i32, i32
  }
}

module attributes {stable_mosaic.version = 11 : i64} {
  func.func @_bn_apply_kernel(%arg0: i32, %arg1: memref<32x64xf32, #tpu.memory_space<vmem>>, %arg2: memref<1x64xf32, #tpu.memory_space<vmem>>, %arg3: memref<1x64xf32, #tpu.memory_space<vmem>>, %arg4: memref<32x64xf32, #tpu.memory_space<vmem>>) attributes {dimension_semantics = [#tpu.dimension_semantics<parallel>], iteration_bounds = array<i64: 1>, scalar_prefetch = 0 : i64, scratch_operands = 0 : i64, tpu.core_type = #tpu.core_type<tc>, window_params = [{transform_indices = @transform_0, window_bounds = array<i64: 32, 64>}, {pipeline_mode = #tpu.pipeline_mode<synchronous>, transform_indices = @transform_1, window_bounds = array<i64: 1, 64>}, {pipeline_mode = #tpu.pipeline_mode<synchronous>, transform_indices = @transform_2, window_bounds = array<i64: 1, 64>}, {transform_indices = @transform_3, window_bounds = array<i64: 32, 64>}]} {
    %c0 = arith.constant 0 : index
    %c0_0 = arith.constant 0 : index
    %0 = vector.load %arg1[%c0, %c0_0] : memref<32x64xf32, #tpu.memory_space<vmem>>, vector<32x64xf32>
    %c0_1 = arith.constant 0 : index
    %c0_2 = arith.constant 0 : index
    %1 = vector.load %arg2[%c0_1, %c0_2] : memref<1x64xf32, #tpu.memory_space<vmem>>, vector<1x64xf32>
    %2 = vector.broadcast %1 : vector<1x64xf32> to vector<32x64xf32>
    %3 = arith.mulf %0, %2 : vector<32x64xf32>
    %c0_3 = arith.constant 0 : index
    %c0_4 = arith.constant 0 : index
    %4 = vector.load %arg3[%c0_3, %c0_4] : memref<1x64xf32, #tpu.memory_space<vmem>>, vector<1x64xf32>
    %5 = vector.broadcast %4 : vector<1x64xf32> to vector<32x64xf32>
    %6 = arith.addf %3, %5 : vector<32x64xf32>
    %c0_5 = arith.constant 0 : index
    %c0_6 = arith.constant 0 : index
    %7 = vector.load %arg4[%c0_5, %c0_6] : memref<32x64xf32, #tpu.memory_space<vmem>>, vector<32x64xf32>
    tpu.vector_store %arg4[%c0_5, %c0_6], %6 {strides = array<i32>} : memref<32x64xf32, #tpu.memory_space<vmem>>, vector<32x64xf32>,
    return
  }
  func.func @transform_0(%arg0: i32) -> (i32, i32) {
    %c0_i32 = arith.constant 0 : i32
    %c0_i32_0 = arith.constant 0 : i32
    return %arg0, %c0_i32 : i32, i32
  }
  func.func @transform_1(%arg0: i32) -> (i32, i32) {
    %c0_i32 = arith.constant 0 : i32
    %c0_i32_0 = arith.constant 0 : i32
    %c0_i32_1 = arith.constant 0 : i32
    return %c0_i32, %c0_i32_0 : i32, i32
  }
  func.func @transform_2(%arg0: i32) -> (i32, i32) {
    %c0_i32 = arith.constant 0 : i32
    %c0_i32_0 = arith.constant 0 : i32
    %c0_i32_1 = arith.constant 0 : i32
    return %c0_i32, %c0_i32_0 : i32, i32
  }
  func.func @transform_3(%arg0: i32) -> (i32, i32) {
    %c0_i32 = arith.constant 0 : i32
    %c0_i32_0 = arith.constant 0 : i32
    return %arg0, %c0_i32 : i32, i32
  }
}

</mosaic_0001>

<llo_original>
// kernel: tile.13
$region0: #{tile.13}
  #allocation0 [shape = 's32[1]{0}', space=sflag, size = 0x4, scoped, tag = 'scoped memory for tile.13']
  %s0 = inlined_call_operand.vmem [shape: f32[4], index: 0, kind: input, shape index: {}]
  %s1 = inlined_call_operand.vmem [shape: f32[16,4], index: 1, kind: output, shape index: {}]
  // Predicated region
  $region2: #{tile.13} parent=0 // pred_check
    _
  $region3: #{tile.13} parent=0 // pred_check_branch
    %3 = sbr.rel (0) target = $region5
  $region4: #{tile.13} parent=0 // pred_region
    _
  $region5: #{tile.13} parent=0 // pred_fallthru
    _
  %v4 = vld [vmem:[%s0] ss:$0 sm:$0xff]
  %5 = vst [vmem:[%s1] sm:$0xff] %v4
  %s6 = scalar_lea.vmem %s1, 8
  %7 = vst [vmem:[%s6] sm:$0xff] %v4

// kernel: tile.14
$region0: #{tile.14}
  %s0 = inlined_call_operand.vmem [shape: f32[16,4], index: 0, kind: input, shape index: {}]
  %s1 = inlined_call_operand.vmem [shape: f32[1,64], index: 1, kind: output, shape index: {}]
  $region1: #{tile.14} parent=0
    #allocation0 [shape = 'u8[4096]{0}', space=vmem, size = 0x1000, scoped, tag = 'scoped mem for output reshape']
    %v2 = vld [vmem:[%s0] sm:$0x1]
    %vm3 = vcmask 31744
    %4 = vst.msk [vmem:[#allocation0] sm:$0x1] %vm3, %v2
    %s5 = scalar_lea.vmem %s0, 15
    %v6 = vld [vmem:[%s5] sm:$0x1]
    %7 = vrot.lane.b32.xlu0 %v6, 60
    %v8 = vpop.permute.xlu0 %7
    %vm9 = vcmask 523744
    %10 = vst.msk [vmem:[#allocation0] sm:$0x1] %vm9, %v8
    %s11 = scalar_lea.vmem %s0, 14
    %v12 = vld [vmem:[%s11] sm:$0x1]
    %13 = vrot.lane.b32.xlu0 %v12, 56
    %v14 = vpop.permute.xlu0 %13
    %vm15 = vcmask 490944
    %16 = vst.msk [vmem:[#allocation0] sm:$0x1] %vm15, %v14
    %s17 = scalar_lea.vmem %s0, 13
    %v18 = vld [vmem:[%s17] sm:$0x1]
    %19 = vrot.lane.b32.xlu0 %v18, 52
    %v20 = vpop.permute.xlu0 %19
    %vm21 = vcmask 458144
    %22 = vst.msk [vmem:[#allocation0] sm:$0x1] %vm21, %v20
    %s23 = scalar_lea.vmem %s0, 12
    %v24 = vld [vmem:[%s23] sm:$0x1]
    %25 = vrot.lane.b32.xlu0 %v24, 48
    %v26 = vpop.permute.xlu0 %25
    %vm27 = vcmask 425344
    %28 = vst.msk [vmem:[#allocation0] sm:$0x1] %vm27, %v26
    %s29 = scalar_lea.vmem %s0, 11
    %v30 = vld [vmem:[%s29] sm:$0x1]
    %31 = vrot.lane.b32.xlu0 %v30, 44
    %v32 = vpop.permute.xlu0 %31
    %vm33 = vcmask 392544
    %34 = vst.msk [vmem:[#allocation0] sm:$0x1] %vm33, %v32
    %s35 = scalar_lea.vmem %s0, 10
    %v36 = vld [vmem:[%s35] sm:$0x1]
    %37 = vrot.lane.b32.xlu0 %v36, 40
    %v38 = vpop.permute.xlu0 %37
    %vm39 = vcmask 359744
    %40 = vst.msk [vmem:[#allocation0] sm:$0x1] %vm39, %v38
    %s41 = scalar_lea.vmem %s0, 9
    %v42 = vld [vmem:[%s41] sm:$0x1]
    %43 = vrot.lane.b32.xlu0 %v42, 36
    %v44 = vpop.permute.xlu0 %43
    %vm45 = vcmask 326944
    %46 = vst.msk [vmem:[#allocation0] sm:$0x1] %vm45, %v44
    %s47 = scalar_lea.vmem %s0, 8
    %v48 = vld [vmem:[%s47] sm:$0x1]
    %49 = vrot.lane.b32.xlu0 %v48, 32
    %v50 = vpop.permute.xlu0 %49
    %vm51 = vcmask 294144
    %52 = vst.msk [vmem:[#allocation0] sm:$0x1] %vm51, %v50
    %s53 = scalar_lea.vmem %s0, 7
    %v54 = vld [vmem:[%s53] sm:$0x1]
    %55 = vrot.lane.b32.xlu0 %v54, 28
    %v56 = vpop.permute.xlu0 %55
    %vm57 = vcmask 261344
    %58 = vst.msk [vmem:[#allocation0] sm:$0x1] %vm57, %v56
    %s59 = scalar_lea.vmem %s0, 6
    %v60 = vld [vmem:[%s59] sm:$0x1]
    %61 = vrot.lane.b32.xlu0 %v60, 24
    %v62 = vpop.permute.xlu0 %61
    %vm63 = vcmask 228544
    %64 = vst.msk [vmem:[#allocation0] sm:$0x1] %vm63, %v62
    %s65 = scalar_lea.vmem %s0, 5
    %v66 = vld [vmem:[%s65] sm:$0x1]
    %67 = vrot.lane.b32.xlu0 %v66, 20
    %v68 = vpop.permute.xlu0 %67
    %vm69 = vcmask 195744
    %70 = vst.msk [vmem:[#allocation0] sm:$0x1] %vm69, %v68
    %s71 = scalar_lea.vmem %s0, 4
    %v72 = vld [vmem:[%s71] sm:$0x1]
    %73 = vrot.lane.b32.xlu0 %v72, 16
    %v74 = vpop.permute.xlu0 %73
    %vm75 = vcmask 162944
    %76 = vst.msk [vmem:[#allocation0] sm:$0x1] %vm75, %v74
    %s77 = scalar_lea.vmem %s0, 3
    %v78 = vld [vmem:[%s77] sm:$0x1]
    %79 = vrot.lane.b32.xlu0 %v78, 12
    %v80 = vpop.permute.xlu0 %79
    %vm81 = vcmask 130144
    %82 = vst.msk [vmem:[#allocation0] sm:$0x1] %vm81, %v80
    %s83 = scalar_lea.vmem %s0, 2
    %v84 = vld [vmem:[%s83] sm:$0x1]
    %85 = vrot.lane.b32.xlu0 %v84, 8
    %v86 = vpop.permute.xlu0 %85
    %vm87 = vcmask 97344
    %88 = vst.msk [vmem:[#allocation0] sm:$0x1] %vm87, %v86
    %s89 = scalar_lea.vmem %s0, 1
    %v90 = vld [vmem:[%s89] sm:$0x1]
    %91 = vrot.lane.b32.xlu0 %v90, 4
    %v92 = vpop.permute.xlu0 %91
    %vm93 = vcmask 64544
    %94 = vst.msk [vmem:[#allocation0] sm:$0x1] %vm93, %v92
    %s96 = sshll.u32 1, 1
    %s97 = ssub.s32 %s96, 1
    %v99 = vld [vmem:[#allocation0] sm:%s97]
    %s100 = sshll.u32 1, 1
    %s101 = ssub.s32 %s100, 1
    %102 = vst [vmem:[%s1] sm:%s101] %v99

// kernel: conv_block_pallas.3
$region0: #{conv_block_pallas.3}
  #allocation0 [shape = 'u32[]', space=smem, size = 0x4, offset = 0x4, fixed_abs, tag = 'smem constant byte address 0x4 - core index']
  #allocation1 [shape = 'u32[144,128]{1,0:T(1,128)}', space=vmem, size = 0x12000, scoped, tag = 'internal scratch']
  %s0 = inlined_call_operand.vmem [shape: f32[32,64], index: 0, kind: input, shape index: {}, may-alias: {0,3}]
  %s1 = inlined_call_operand.vmem [shape: f32[1,64], index: 1, kind: input, shape index: {}]
  %s2 = inlined_call_operand.vmem [shape: f32[1,64], index: 2, kind: input, shape index: {}]
  %s3 = inlined_call_operand.vmem [shape: f32[32,64], index: 3, kind: output, shape index: {}, may-alias: {0,3}]
  %s4 = sld [smem:[#allocation0]]
  $region22: #{conv_block_pallas.3} parent=0
    _
  %s6 = ssub.s32 1, %s4
  %s7 = scalar_select 0, %s6, %s4
  // Predicated region
  $region2: #{conv_block_pallas.3} parent=0 // pred_check
    _
  $region3: #{conv_block_pallas.3} parent=0 // pred_check_branch
    %9 = sbr.rel (0) target = $region5
  $region4: #{conv_block_pallas.3} parent=0 // pred_region
    _
  $region5: #{conv_block_pallas.3} parent=0 // pred_fallthru
    _
  // Predicated region
  $region6: #{conv_block_pallas.3} parent=0 // pred_check
    _
  $region7: #{conv_block_pallas.3} parent=0 // pred_check_branch
    %11 = sbr.rel (0) target = $region9
  $region8: #{conv_block_pallas.3} parent=0 // pred_region
    _
  $region9: #{conv_block_pallas.3} parent=0 // pred_fallthru
    _
  // Predicated region
  $region10: #{conv_block_pallas.3} parent=0 // pred_check
    _
  $region11: #{conv_block_pallas.3} parent=0 // pred_check_branch
    %13 = sbr.rel (0) target = $region13
  $region12: #{conv_block_pallas.3} parent=0 // pred_region
    _
  $region13: #{conv_block_pallas.3} parent=0 // pred_fallthru
    _
  %v14 = vld [vmem:[%s0] sm:$0xff]
  %v15 = vld [vmem:[%s0 + $0x8] sm:$0xff]
  %v16 = vld [vmem:[%s0 + $0x10] sm:$0xff]
  %v17 = vld [vmem:[%s0 + $0x18] sm:$0xff]
  %v18 = vld [vmem:[%s1] sm:$0x1]
  %v20 = vlaneseq
  %v21 = vshrl.u32 %v20, 7
  %v22 = vsub.s32 0, %v21
  %v23 = vrot.slane %v18, %v22
  %v25 = vmul.f32 %v14, %v23
  %v26 = vmul.f32 %v15, %v23
  %v27 = vmul.f32 %v16, %v23
  %v28 = vmul.f32 %v17, %v23
  %v29 = vld [vmem:[%s2] sm:$0x1]
  %v31 = vlaneseq
  %v32 = vshrl.u32 %v31, 7
  %v33 = vsub.s32 0, %v32
  %v34 = vrot.slane %v29, %v33
  %v36 = vadd.f32 %v25, %v34
  %v37 = vadd.f32 %v26, %v34
  %v38 = vadd.f32 %v27, %v34
  %v39 = vadd.f32 %v28, %v34
  %vm40 = vcmask 523264
  %41 = vst.msk [vmem:[%s3] sm:$0xff] %vm40, %v36
  %42 = vst.msk [vmem:[%s3 + $0x8] sm:$0xff] %vm40, %v37
  %43 = vst.msk [vmem:[%s3 + $0x10] sm:$0xff] %vm40, %v38
  %44 = vst.msk [vmem:[%s3 + $0x18] sm:$0xff] %vm40, %v39
  // Predicated region
  $region14: #{conv_block_pallas.3} parent=0 // pred_check
    _
  $region15: #{conv_block_pallas.3} parent=0 // pred_check_branch
    %46 = sbr.rel (0) target = $region17
  $region16: #{conv_block_pallas.3} parent=0 // pred_region
    _
  $region17: #{conv_block_pallas.3} parent=0 // pred_fallthru
    _
  // Predicated region
  $region18: #{conv_block_pallas.3} parent=0 // pred_check
    _
  $region19: #{conv_block_pallas.3} parent=0 // pred_check_branch
    %48 = sbr.rel (0) target = $region21
  $region20: #{conv_block_pallas.3} parent=0 // pred_region
    _
  $region21: #{conv_block_pallas.3} parent=0 // pred_fallthru
    _

// kernel: conv_block_pallas.2
$region0: #{conv_block_pallas.2}
  #allocation0 [shape = 'u32[]', space=smem, size = 0x4, offset = 0x4, fixed_abs, tag = 'smem constant byte address 0x4 - core index']
  #allocation1 [shape = 'u32[144,128]{1,0:T(1,128)}', space=vmem, size = 0x12000, scoped, tag = 'internal scratch']
  #allocation2 [shape = 'f32[2,18,18,4]{3,2,1,0:T(8,128)}', space=vmem, size = 0x6c000, scoped, tag = 'scratch operand']
  #allocation3 [shape = 'f32[2,18,18,8]{3,2,1,0:T(8,128)}', space=vmem, size = 0x6c000, scoped, tag = 'scratch operand']
  %s0 = inlined_call_operand.vmem [shape: f32[2,16,16,4], index: 0, kind: input, shape index: {}]
  %s1 = inlined_call_operand.vmem [shape: f32[36,8], index: 1, kind: input, shape index: {}]
  %s2 = inlined_call_operand.vmem [shape: f32[1,8], index: 2, kind: input, shape index: {}]
  %s3 = inlined_call_operand.vmem [shape: f32[72,4], index: 3, kind: input, shape index: {}]
  %s4 = inlined_call_operand.vmem [shape: f32[1,4], index: 4, kind: input, shape index: {}]
  %s5 = inlined_call_operand.vmem [shape: f32[512,4], index: 5, kind: output, shape index: {0}]
  %s6 = inlined_call_operand.vmem [shape: f32[1,2,4], index: 6, kind: output, shape index: {1}]
  %7 = xla_tuple %s5, %s6
  %s8 = sld [smem:[#allocation0]]
  $region38: #{conv_block_pallas.2} parent=0
    _
  %s10 = ssub.s32 1, %s8
  %s11 = scalar_select 0, %s10, %s8
  // Predicated region
  $region2: #{conv_block_pallas.2} parent=0 // pred_check
    _
  $region3: #{conv_block_pallas.2} parent=0 // pred_check_branch
    %13 = sbr.rel (0) target = $region5
  $region4: #{conv_block_pallas.2} parent=0 // pred_region
    _
  $region5: #{conv_block_pallas.2} parent=0 // pred_fallthru
    _
  // Predicated region
  $region6: #{conv_block_pallas.2} parent=0 // pred_check
    _
  $region7: #{conv_block_pallas.2} parent=0 // pred_check_branch
    %15 = sbr.rel (0) target = $region9
  $region8: #{conv_block_pallas.2} parent=0 // pred_region
    _
  $region9: #{conv_block_pallas.2} parent=0 // pred_fallthru
    _
  // Predicated region
  $region10: #{conv_block_pallas.2} parent=0 // pred_check
    _
  $region11: #{conv_block_pallas.2} parent=0 // pred_check_branch
    %17 = sbr.rel (0) target = $region13
  $region12: #{conv_block_pallas.2} parent=0 // pred_region
    _
  $region13: #{conv_block_pallas.2} parent=0 // pred_fallthru
    _
  // Predicated region
  $region14: #{conv_block_pallas.2} parent=0 // pred_check
    _
  $region15: #{conv_block_pallas.2} parent=0 // pred_check_branch
    %19 = sbr.rel (0) target = $region17
  $region16: #{conv_block_pallas.2} parent=0 // pred_region
    _
  $region17: #{conv_block_pallas.2} parent=0 // pred_fallthru
    _
  // Predicated region
  $region18: #{conv_block_pallas.2} parent=0 // pred_check
    _
  $region19: #{conv_block_pallas.2} parent=0 // pred_check_branch
    %21 = sbr.rel (0) target = $region21
  $region20: #{conv_block_pallas.2} parent=0 // pred_region
    _
  $region21: #{conv_block_pallas.2} parent=0 // pred_fallthru
    _
  %vm22 = vcmask 31744
  %23 = vst.msk [vmem:[#allocation2] sm:$0xff] %vm22, 0.0
  %24 = vst.msk [vmem:[#allocation2 + $0x8] sm:$0xff] %vm22, 0.0
  %vm25 = vcmask 25600
  %26 = vst.msk [vmem:[#allocation2 + $0x10] sm:$0x3] %vm25, 0.0
  %27 = vst.msk [vmem:[#allocation2 + $0x1b0] sm:$0xff] %vm22, 0.0
  %28 = vst.msk [vmem:[#allocation2 + $0x1b8] sm:$0xff] %vm22, 0.0
  %29 = vst.msk [vmem:[#allocation2 + $0x1c0] sm:$0x3] %vm25, 0.0
  %s30 = scalar_lea.vmem [#allocation2], 408
  %31 = vst.msk [vmem:[%s30] sm:$0xff] %vm22, 0.0
  %32 = vst.msk [vmem:[%s30 + $0x8] sm:$0xff] %vm22, 0.0
  %33 = vst.msk [vmem:[%s30 + $0x10] sm:$0x3] %vm25, 0.0
  %34 = vst.msk [vmem:[%s30 + $0x1b0] sm:$0xff] %vm22, 0.0
  %35 = vst.msk [vmem:[%s30 + $0x1b8] sm:$0xff] %vm22, 0.0
  %36 = vst.msk [vmem:[%s30 + $0x1c0] sm:$0x3] %vm25, 0.0
  %vm37 = vcmask 24576
  %38 = vst.msk [vmem:[#allocation2] sm:$0x1] %vm37, 0.0
  %39 = vst.msk [vmem:[#allocation2 + $0x18] sm:$0x1] %vm37, 0.0
  %40 = vst.msk [vmem:[#allocation2 + $0x30] sm:$0x1] %vm37, 0.0
  %41 = vst.msk [vmem:[#allocation2 + $0x48] sm:$0x1] %vm37, 0.0
  %42 = vst.msk [vmem:[#allocation2 + $0x60] sm:$0x1] %vm37, 0.0
  %43 = vst.msk [vmem:[#allocation2 + $0x78] sm:$0x1] %vm37, 0.0
  %44 = vst.msk [vmem:[#allocation2 + $0x90] sm:$0x1] %vm37, 0.0
  %45 = vst.msk [vmem:[#allocation2 + $0xa8] sm:$0x1] %vm37, 0.0
  %46 = vst.msk [vmem:[#allocation2 + $0xc0] sm:$0x1] %vm37, 0.0
  %47 = vst.msk [vmem:[#allocation2 + $0xd8] sm:$0x1] %vm37, 0.0
  %48 = vst.msk [vmem:[#allocation2 + $0xf0] sm:$0x1] %vm37, 0.0
  %49 = vst.msk [vmem:[#allocation2 + $0x108] sm:$0x1] %vm37, 0.0
  %50 = vst.msk [vmem:[#allocation2 + $0x120] sm:$0x1] %vm37, 0.0
  %51 = vst.msk [vmem:[#allocation2 + $0x138] sm:$0x1] %vm37, 0.0
  %52 = vst.msk [vmem:[#allocation2 + $0x150] sm:$0x1] %vm37, 0.0
  %53 = vst.msk [vmem:[#allocation2 + $0x168] sm:$0x1] %vm37, 0.0
  %54 = vst.msk [vmem:[#allocation2 + $0x180] sm:$0x1] %vm37, 0.0
  %55 = vst.msk [vmem:[#allocation2 + $0x198] sm:$0x1] %vm37, 0.0
  %56 = vst.msk [vmem:[#allocation2 + $0x1b0] sm:$0x1] %vm37, 0.0
  %57 = vst.msk [vmem:[#allocation2 + $0x1c8] sm:$0x1] %vm37, 0.0
  %58 = vst.msk [vmem:[#allocation2 + $0x1e0] sm:$0x1] %vm37, 0.0
  %59 = vst.msk [vmem:[#allocation2 + $0x1f8] sm:$0x1] %vm37, 0.0
  %60 = vst.msk [vmem:[#allocation2 + $0x210] sm:$0x1] %vm37, 0.0
  %61 = vst.msk [vmem:[#allocation2 + $0x228] sm:$0x1] %vm37, 0.0
  %62 = vst.msk [vmem:[#allocation2 + $0x240] sm:$0x1] %vm37, 0.0
  %63 = vst.msk [vmem:[#allocation2 + $0x258] sm:$0x1] %vm37, 0.0
  %64 = vst.msk [vmem:[#allocation2 + $0x270] sm:$0x1] %vm37, 0.0
  %65 = vst.msk [vmem:[#allocation2 + $0x288] sm:$0x1] %vm37, 0.0
  %66 = vst.msk [vmem:[#allocation2 + $0x2a0] sm:$0x1] %vm37, 0.0
  %67 = vst.msk [vmem:[#allocation2 + $0x2b8] sm:$0x1] %vm37, 0.0
  %68 = vst.msk [vmem:[#allocation2 + $0x2d0] sm:$0x1] %vm37, 0.0
  %69 = vst.msk [vmem:[#allocation2 + $0x2e8] sm:$0x1] %vm37, 0.0
  %70 = vst.msk [vmem:[#allocation2 + $0x300] sm:$0x1] %vm37, 0.0
  %71 = vst.msk [vmem:[#allocation2 + $0x318] sm:$0x1] %vm37, 0.0
  %72 = vst.msk [vmem:[#allocation2 + $0x330] sm:$0x1] %vm37, 0.0
  %73 = vst.msk [vmem:[#allocation2 + $0x348] sm:$0x1] %vm37, 0.0
  %74 = vst.msk [vmem:[#allocation2 + $0x11] sm:$0x1] %vm37, 0.0
  %75 = vst.msk [vmem:[#allocation2 + $0x29] sm:$0x1] %vm37, 0.0
  %76 = vst.msk [vmem:[#allocation2 + $0x41] sm:$0x1] %vm37, 0.0
  %77 = vst.msk [vmem:[#allocation2 + $0x59] sm:$0x1] %vm37, 0.0
  %78 = vst.msk [vmem:[#allocation2 + $0x71] sm:$0x1] %vm37, 0.0
  %79 = vst.msk [vmem:[#allocation2 + $0x89] sm:$0x1] %vm37, 0.0
  %80 = vst.msk [vmem:[#allocation2 + $0xa1] sm:$0x1] %vm37, 0.0
  %81 = vst.msk [vmem:[#allocation2 + $0xb9] sm:$0x1] %vm37, 0.0
  %82 = vst.msk [vmem:[#allocation2 + $0xd1] sm:$0x1] %vm37, 0.0
  %83 = vst.msk [vmem:[#allocation2 + $0xe9] sm:$0x1] %vm37, 0.0
  %84 = vst.msk [vmem:[#allocation2 + $0x101] sm:$0x1] %vm37, 0.0
  %85 = vst.msk [vmem:[#allocation2 + $0x119] sm:$0x1] %vm37, 0.0
  %86 = vst.msk [vmem:[#allocation2 + $0x131] sm:$0x1] %vm37, 0.0
  %87 = vst.msk [vmem:[#allocation2 + $0x149] sm:$0x1] %vm37, 0.0
  %88 = vst.msk [vmem:[#allocation2 + $0x161] sm:$0x1] %vm37, 0.0
  %89 = vst.msk [vmem:[#allocation2 + $0x179] sm:$0x1] %vm37, 0.0
  %90 = vst.msk [vmem:[#allocation2 + $0x191] sm:$0x1] %vm37, 0.0
  %91 = vst.msk [vmem:[#allocation2 + $0x1a9] sm:$0x1] %vm37, 0.0
  %92 = vst.msk [vmem:[#allocation2 + $0x1c1] sm:$0x1] %vm37, 0.0
  %93 = vst.msk [vmem:[#allocation2 + $0x1d9] sm:$0x1] %vm37, 0.0
  %94 = vst.msk [vmem:[#allocation2 + $0x1f1] sm:$0x1] %vm37, 0.0
  %95 = vst.msk [vmem:[#allocation2 + $0x209] sm:$0x1] %vm37, 0.0
  %96 = vst.msk [vmem:[#allocation2 + $0x221] sm:$0x1] %vm37, 0.0
  %97 = vst.msk [vmem:[#allocation2 + $0x239] sm:$0x1] %vm37, 0.0
  %98 = vst.msk [vmem:[#allocation2 + $0x251] sm:$0x1] %vm37, 0.0
  %99 = vst.msk [vmem:[#allocation2 + $0x269] sm:$0x1] %vm37, 0.0
  %100 = vst.msk [vmem:[#allocation2 + $0x281] sm:$0x1] %vm37, 0.0
  %101 = vst.msk [vmem:[#allocation2 + $0x299] sm:$0x1] %vm37, 0.0
  %102 = vst.msk [vmem:[#allocation2 + $0x2b1] sm:$0x1] %vm37, 0.0
  %103 = vst.msk [vmem:[#allocation2 + $0x2c9] sm:$0x1] %vm37, 0.0
  %104 = vst.msk [vmem:[#allocation2 + $0x2e1] sm:$0x1] %vm37, 0.0
  %105 = vst.msk [vmem:[#allocation2 + $0x2f9] sm:$0x1] %vm37, 0.0
  %106 = vst.msk [vmem:[#allocation2 + $0x311] sm:$0x1] %vm37, 0.0
  %107 = vst.msk [vmem:[#allocation2 + $0x329] sm:$0x1] %vm37, 0.0
  %108 = vst.msk [vmem:[#allocation2 + $0x341] sm:$0x1] %vm37, 0.0
  %109 = vst.msk [vmem:[#allocation2 + $0x359] sm:$0x1] %vm37, 0.0
  %vm110 = vcmask 64512
  %111 = vst.msk [vmem:[#allocation3] sm:$0xff] %vm110, 0.0
  %112 = vst.msk [vmem:[#allocation3 + $0x8] sm:$0xff] %vm110, 0.0
  %vm113 = vcmask 58368
  %114 = vst.msk [vmem:[#allocation3 + $0x10] sm:$0x3] %vm113, 0.0
  %115 = vst.msk [vmem:[#allocation3 + $0x1b0] sm:$0xff] %vm110, 0.0
  %116 = vst.msk [vmem:[#allocation3 + $0x1b8] sm:$0xff] %vm110, 0.0
  %117 = vst.msk [vmem:[#allocation3 + $0x1c0] sm:$0x3] %vm113, 0.0
  %s118 = scalar_lea.vmem [#allocation3], 408
  %119 = vst.msk [vmem:[%s118] sm:$0xff] %vm110, 0.0
  %120 = vst.msk [vmem:[%s118 + $0x8] sm:$0xff] %vm110, 0.0
  %121 = vst.msk [vmem:[%s118 + $0x10] sm:$0x3] %vm113, 0.0
  %122 = vst.msk [vmem:[%s118 + $0x1b0] sm:$0xff] %vm110, 0.0
  %123 = vst.msk [vmem:[%s118 + $0x1b8] sm:$0xff] %vm110, 0.0
  %124 = vst.msk [vmem:[%s118 + $0x1c0] sm:$0x3] %vm113, 0.0
  %vm125 = vcmask 57344
  %126 = vst.msk [vmem:[#allocation3] sm:$0x1] %vm125, 0.0
  %127 = vst.msk [vmem:[#allocation3 + $0x18] sm:$0x1] %vm125, 0.0
  %128 = vst.msk [vmem:[#allocation3 + $0x30] sm:$0x1] %vm125, 0.0
  %129 = vst.msk [vmem:[#allocation3 + $0x48] sm:$0x1] %vm125, 0.0
  %130 = vst.msk [vmem:[#allocation3 + $0x60] sm:$0x1] %vm125, 0.0
  %131 = vst.msk [vmem:[#allocation3 + $0x78] sm:$0x1] %vm125, 0.0
  %132 = vst.msk [vmem:[#allocation3 + $0x90] sm:$0x1] %vm125, 0.0
  %133 = vst.msk [vmem:[#allocation3 + $0xa8] sm:$0x1] %vm125, 0.0
  %134 = vst.msk [vmem:[#allocation3 + $0xc0] sm:$0x1] %vm125, 0.0
  %135 = vst.msk [vmem:[#allocation3 + $0xd8] sm:$0x1] %vm125, 0.0
  %136 = vst.msk [vmem:[#allocation3 + $0xf0] sm:$0x1] %vm125, 0.0
  %137 = vst.msk [vmem:[#allocation3 + $0x108] sm:$0x1] %vm125, 0.0
  %138 = vst.msk [vmem:[#allocation3 + $0x120] sm:$0x1] %vm125, 0.0
  %139 = vst.msk [vmem:[#allocation3 + $0x138] sm:$0x1] %vm125, 0.0
  %140 = vst.msk [vmem:[#allocation3 + $0x150] sm:$0x1] %vm125, 0.0
  %141 = vst.msk [vmem:[#allocation3 + $0x168] sm:$0x1] %vm125, 0.0
  %142 = vst.msk [vmem:[#allocation3 + $0x180] sm:$0x1] %vm125, 0.0
  %143 = vst.msk [vmem:[#allocation3 + $0x198] sm:$0x1] %vm125, 0.0
  %144 = vst.msk [vmem:[#allocation3 + $0x1b0] sm:$0x1] %vm125, 0.0
  %145 = vst.msk [vmem:[#allocation3 + $0x1c8] sm:$0x1] %vm125, 0.0
  %146 = vst.msk [vmem:[#allocation3 + $0x1e0] sm:$0x1] %vm125, 0.0
  %147 = vst.msk [vmem:[#allocation3 + $0x1f8] sm:$0x1] %vm125, 0.0
  %148 = vst.msk [vmem:[#allocation3 + $0x210] sm:$0x1] %vm125, 0.0
  %149 = vst.msk [vmem:[#allocation3 + $0x228] sm:$0x1] %vm125, 0.0
  %150 = vst.msk [vmem:[#allocation3 + $0x240] sm:$0x1] %vm125, 0.0
  %151 = vst.msk [vmem:[#allocation3 + $0x258] sm:$0x1] %vm125, 0.0
  %152 = vst.msk [vmem:[#allocation3 + $0x270] sm:$0x1] %vm125, 0.0
  %153 = vst.msk [vmem:[#allocation3 + $0x288] sm:$0x1] %vm125, 0.0
  %154 = vst.msk [vmem:[#allocation3 + $0x2a0] sm:$0x1] %vm125, 0.0
  %155 = vst.msk [vmem:[#allocation3 + $0x2b8] sm:$0x1] %vm125, 0.0
  %156 = vst.msk [vmem:[#allocation3 + $0x2d0] sm:$0x1] %vm125, 0.0
  %157 = vst.msk [vmem:[#allocation3 + $0x2e8] sm:$0x1] %vm125, 0.0
  %158 = vst.msk [vmem:[#allocation3 + $0x300] sm:$0x1] %vm125, 0.0
  %159 = vst.msk [vmem:[#allocation3 + $0x318] sm:$0x1] %vm125, 0.0
  %160 = vst.msk [vmem:[#allocation3 + $0x330] sm:$0x1] %vm125, 0.0
  %161 = vst.msk [vmem:[#allocation3 + $0x348] sm:$0x1] %vm125, 0.0
  %162 = vst.msk [vmem:[#allocation3 + $0x11] sm:$0x1] %vm125, 0.0
  %163 = vst.msk [vmem:[#allocation3 + $0x29] sm:$0x1] %vm125, 0.0
  %164 = vst.msk [vmem:[#allocation3 + $0x41] sm:$0x1] %vm125, 0.0
  %165 = vst.msk [vmem:[#allocation3 + $0x59] sm:$0x1] %vm125, 0.0
  %166 = vst.msk [vmem:[#allocation3 + $0x71] sm:$0x1] %vm125, 0.0
  %167 = vst.msk [vmem:[#allocation3 + $0x89] sm:$0x1] %vm125, 0.0
  %168 = vst.msk [vmem:[#allocation3 + $0xa1] sm:$0x1] %vm125, 0.0
  %169 = vst.msk [vmem:[#allocation3 + $0xb9] sm:$0x1] %vm125, 0.0
  %170 = vst.msk [vmem:[#allocation3 + $0xd1] sm:$0x1] %vm125, 0.0
  %171 = vst.msk [vmem:[#allocation3 + $0xe9] sm:$0x1] %vm125, 0.0
  %172 = vst.msk [vmem:[#allocation3 + $0x101] sm:$0x1] %vm125, 0.0
  %173 = vst.msk [vmem:[#allocation3 + $0x119] sm:$0x1] %vm125, 0.0
  %174 = vst.msk [vmem:[#allocation3 + $0x131] sm:$0x1] %vm125, 0.0
  %175 = vst.msk [vmem:[#allocation3 + $0x149] sm:$0x1] %vm125, 0.0
  %176 = vst.msk [vmem:[#allocation3 + $0x161] sm:$0x1] %vm125, 0.0
  %177 = vst.msk [vmem:[#allocation3 + $0x179] sm:$0x1] %vm125, 0.0
  %178 = vst.msk [vmem:[#allocation3 + $0x191] sm:$0x1] %vm125, 0.0
  %179 = vst.msk [vmem:[#allocation3 + $0x1a9] sm:$0x1] %vm125, 0.0
  %180 = vst.msk [vmem:[#allocation3 + $0x1c1] sm:$0x1] %vm125, 0.0
  %181 = vst.msk [vmem:[#allocation3 + $0x1d9] sm:$0x1] %vm125, 0.0
  %182 = vst.msk [vmem:[#allocation3 + $0x1f1] sm:$0x1] %vm125, 0.0
  %183 = vst.msk [vmem:[#allocation3 + $0x209] sm:$0x1] %vm125, 0.0
  %184 = vst.msk [vmem:[#allocation3 + $0x221] sm:$0x1] %vm125, 0.0
  %185 = vst.msk [vmem:[#allocation3 + $0x239] sm:$0x1] %vm125, 0.0
  %186 = vst.msk [vmem:[#allocation3 + $0x251] sm:$0x1] %vm125, 0.0
  %187 = vst.msk [vmem:[#allocation3 + $0x269] sm:$0x1] %vm125, 0.0
  %188 = vst.msk [vmem:[#allocation3 + $0x281] sm:$0x1] %vm125, 0.0
  %189 = vst.msk [vmem:[#allocation3 + $0x299] sm:$0x1] %vm125, 0.0
  %190 = vst.msk [vmem:[#allocation3 + $0x2b1] sm:$0x1] %vm125, 0.0
  %191 = vst.msk [vmem:[#allocation3 + $0x2c9] sm:$0x1] %vm125, 0.0
  %192 = vst.msk [vmem:[#allocation3 + $0x2e1] sm:$0x1] %vm125, 0.0
  %193 = vst.msk [vmem:[#allocation3 + $0x2f9] sm:$0x1] %vm125, 0.0
  %194 = vst.msk [vmem:[#allocation3 + $0x311] sm:$0x1] %vm125, 0.0
  %195 = vst.msk [vmem:[#allocation3 + $0x329] sm:$0x1] %vm125, 0.0
  %196 = vst.msk [vmem:[#allocation3 + $0x341] sm:$0x1] %vm125, 0.0
  %197 = vst.msk [vmem:[#allocation3 + $0x359] sm:$0x1] %vm125, 0.0
  %v198 = vld [vmem:[%s0] sm:$0xff]
  %v199 = vld [vmem:[%s0 + $0x8] sm:$0xff]
  %v200 = vld [vmem:[%s0 + $0x10] sm:$0xff]
  %v201 = vld [vmem:[%s0 + $0x18] sm:$0xff]
  %v202 = vld [vmem:[%s0 + $0x20] sm:$0xff]
  %v203 = vld [vmem:[%s0 + $0x28] sm:$0xff]
  %v204 = vld [vmem:[%s0 + $0x30] sm:$0xff]
  %v205 = vld [vmem:[%s0 + $0x38] sm:$0xff]
  %v206 = vld [vmem:[%s0 + $0x40] sm:$0xff]
  %v207 = vld [vmem:[%s0 + $0x48] sm:$0xff]
  %v208 = vld [vmem:[%s0 + $0x50] sm:$0xff]
  %v209 = vld [vmem:[%s0 + $0x58] sm:$0xff]
  %v210 = vld [vmem:[%s0 + $0x60] sm:$0xff]
  %v211 = vld [vmem:[%s0 + $0x68] sm:$0xff]
  %v212 = vld [vmem:[%s0 + $0x70] sm:$0xff]
  %v213 = vld [vmem:[%s0 + $0x78] sm:$0xff]
  %v214 = vld [vmem:[%s0 + $0x80] sm:$0xff]
  %v215 = vld [vmem:[%s0 + $0x88] sm:$0xff]
  %v216 = vld [vmem:[%s0 + $0x90] sm:$0xff]
  %v217 = vld [vmem:[%s0 + $0x98] sm:$0xff]
  %v218 = vld [vmem:[%s0 + $0xa0] sm:$0xff]
  %v219 = vld [vmem:[%s0 + $0xa8] sm:$0xff]
  %v220 = vld [vmem:[%s0 + $0xb0] sm:$0xff]
  %v221 = vld [vmem:[%s0 + $0xb8] sm:$0xff]
  %v222 = vld [vmem:[%s0 + $0xc0] sm:$0xff]
  %v223 = vld [vmem:[%s0 + $0xc8] sm:$0xff]
  %v224 = vld [vmem:[%s0 + $0xd0] sm:$0xff]
  %v225 = vld [vmem:[%s0 + $0xd8] sm:$0xff]
  %v226 = vld [vmem:[%s0 + $0xe0] sm:$0xff]
  %v227 = vld [vmem:[%s0 + $0xe8] sm:$0xff]
  %v228 = vld [vmem:[%s0 + $0xf0] sm:$0xff]
  %v229 = vld [vmem:[%s0 + $0xf8] sm:$0xff]
  %v230 = vld [vmem:[%s0 + $0x100] sm:$0xff]
  %v231 = vld [vmem:[%s0 + $0x108] sm:$0xff]
  %v232 = vld [vmem:[%s0 + $0x110] sm:$0xff]
  %v233 = vld [vmem:[%s0 + $0x118] sm:$0xff]
  %v234 = vld [vmem:[%s0 + $0x120] sm:$0xff]
  %v235 = vld [vmem:[%s0 + $0x128] sm:$0xff]
  %v236 = vld [vmem:[%s0 + $0x130] sm:$0xff]
  %v237 = vld [vmem:[%s0 + $0x138] sm:$0xff]
  %v238 = vld [vmem:[%s0 + $0x140] sm:$0xff]
  %v239 = vld [vmem:[%s0 + $0x148] sm:$0xff]
  %v240 = vld [vmem:[%s0 + $0x150] sm:$0xff]
  %v241 = vld [vmem:[%s0 + $0x158] sm:$0xff]
  %v242 = vld [vmem:[%s0 + $0x160] sm:$0xff]
  %v243 = vld [vmem:[%s0 + $0x168] sm:$0xff]
  %v244 = vld [vmem:[%s0 + $0x170] sm:$0xff]
  %v245 = vld [vmem:[%s0 + $0x178] sm:$0xff]
  %v246 = vld [vmem:[%s0 + $0x180] sm:$0xff]
  %v247 = vld [vmem:[%s0 + $0x188] sm:$0xff]
  %v248 = vld [vmem:[%s0 + $0x190] sm:$0xff]
  %v249 = vld [vmem:[%s0 + $0x198] sm:$0xff]
  %v250 = vld [vmem:[%s0 + $0x1a0] sm:$0xff]
  %v251 = vld [vmem:[%s0 + $0x1a8] sm:$0xff]
  %v252 = vld [vmem:[%s0 + $0x1b0] sm:$0xff]
  %v253 = vld [vmem:[%s0 + $0x1b8] sm:$0xff]
  %v254 = vld [vmem:[%s0 + $0x1c0] sm:$0xff]
  %v255 = vld [vmem:[%s0 + $0x1c8] sm:$0xff]
  %v256 = vld [vmem:[%s0 + $0x1d0] sm:$0xff]
  %v257 = vld [vmem:[%s0 + $0x1d8] sm:$0xff]
  %v258 = vld [vmem:[%s0 + $0x1e0] sm:$0xff]
  %v259 = vld [vmem:[%s0 + $0x1e8] sm:$0xff]
  %v260 = vld [vmem:[%s0 + $0x1f0] sm:$0xff]
  %v261 = vld [vmem:[%s0 + $0x1f8] sm:$0xff]
  %s262 = scalar_lea.vmem [#allocation2], 24
  %263 = vst.msk [vmem:[%s262 + $0x1] sm:$0xff] %vm22, %v198
  %264 = vst.msk [vmem:[%s262 + $0x9] sm:$0xff] %vm22, %v199
  %265 = vst.msk [vmem:[%s262 + $0x19] sm:$0xff] %vm22, %v200
  %266 = vst.msk [vmem:[%s262 + $0x21] sm:$0xff] %vm22, %v201
  %267 = vst.msk [vmem:[%s262 + $0x31] sm:$0xff] %vm22, %v202
  %268 = vst.msk [vmem:[%s262 + $0x39] sm:$0xff] %vm22, %v203
  %269 = vst.msk [vmem:[%s262 + $0x49] sm:$0xff] %vm22, %v204
  %270 = vst.msk [vmem:[%s262 + $0x51] sm:$0xff] %vm22, %v205
  %271 = vst.msk [vmem:[%s262 + $0x61] sm:$0xff] %vm22, %v206
  %272 = vst.msk [vmem:[%s262 + $0x69] sm:$0xff] %vm22, %v207
  %273 = vst.msk [vmem:[%s262 + $0x79] sm:$0xff] %vm22, %v208
  %274 = vst.msk [vmem:[%s262 + $0x81] sm:$0xff] %vm22, %v209
  %275 = vst.msk [vmem:[%s262 + $0x91] sm:$0xff] %vm22, %v210
  %276 = vst.msk [vmem:[%s262 + $0x99] sm:$0xff] %vm22, %v211
  %277 = vst.msk [vmem:[%s262 + $0xa9] sm:$0xff] %vm22, %v212
  %278 = vst.msk [vmem:[%s262 + $0xb1] sm:$0xff] %vm22, %v213
  %279 = vst.msk [vmem:[%s262 + $0xc1] sm:$0xff] %vm22, %v214
  %280 = vst.msk [vmem:[%s262 + $0xc9] sm:$0xff] %vm22, %v215
  %281 = vst.msk [vmem:[%s262 + $0xd9] sm:$0xff] %vm22, %v216
  %282 = vst.msk [vmem:[%s262 + $0xe1] sm:$0xff] %vm22, %v217
  %283 = vst.msk [vmem:[%s262 + $0xf1] sm:$0xff] %vm22, %v218
  %284 = vst.msk [vmem:[%s262 + $0xf9] sm:$0xff] %vm22, %v219
  %285 = vst.msk [vmem:[%s262 + $0x109] sm:$0xff] %vm22, %v220
  %286 = vst.msk [vmem:[%s262 + $0x111] sm:$0xff] %vm22, %v221
  %287 = vst.msk [vmem:[%s262 + $0x121] sm:$0xff] %vm22, %v222
  %288 = vst.msk [vmem:[%s262 + $0x129] sm:$0xff] %vm22, %v223
  %289 = vst.msk [vmem:[%s262 + $0x139] sm:$0xff] %vm22, %v224
  %290 = vst.msk [vmem:[%s262 + $0x141] sm:$0xff] %vm22, %v225
  %291 = vst.msk [vmem:[%s262 + $0x151] sm:$0xff] %vm22, %v226
  %292 = vst.msk [vmem:[%s262 + $0x159] sm:$0xff] %vm22, %v227
  %293 = vst.msk [vmem:[%s262 + $0x169] sm:$0xff] %vm22, %v228
  %294 = vst.msk [vmem:[%s262 + $0x171] sm:$0xff] %vm22, %v229
  %295 = vst.msk [vmem:[%s262 + $0x1b1] sm:$0xff] %vm22, %v230
  %296 = vst.msk [vmem:[%s262 + $0x1b9] sm:$0xff] %vm22, %v231
  %297 = vst.msk [vmem:[%s262 + $0x1c9] sm:$0xff] %vm22, %v232
  %298 = vst.msk [vmem:[%s262 + $0x1d1] sm:$0xff] %vm22, %v233
  %299 = vst.msk [vmem:[%s262 + $0x1e1] sm:$0xff] %vm22, %v234
  %300 = vst.msk [vmem:[%s262 + $0x1e9] sm:$0xff] %vm22, %v235
  %301 = vst.msk [vmem:[%s262 + $0x1f9] sm:$0xff] %vm22, %v236
  %302 = vst.msk [vmem:[%s262 + $0x201] sm:$0xff] %vm22, %v237
  %303 = vst.msk [vmem:[%s262 + $0x211] sm:$0xff] %vm22, %v238
  %304 = vst.msk [vmem:[%s262 + $0x219] sm:$0xff] %vm22, %v239
  %305 = vst.msk [vmem:[%s262 + $0x229] sm:$0xff] %vm22, %v240
  %306 = vst.msk [vmem:[%s262 + $0x231] sm:$0xff] %vm22, %v241
  %307 = vst.msk [vmem:[%s262 + $0x241] sm:$0xff] %vm22, %v242
  %308 = vst.msk [vmem:[%s262 + $0x249] sm:$0xff] %vm22, %v243
  %309 = vst.msk [vmem:[%s262 + $0x259] sm:$0xff] %vm22, %v244
  %310 = vst.msk [vmem:[%s262 + $0x261] sm:$0xff] %vm22, %v245
  %311 = vst.msk [vmem:[%s262 + $0x271] sm:$0xff] %vm22, %v246
  %312 = vst.msk [vmem:[%s262 + $0x279] sm:$0xff] %vm22, %v247
  %313 = vst.msk [vmem:[%s262 + $0x289] sm:$0xff] %vm22, %v248
  %314 = vst.msk [vmem:[%s262 + $0x291] sm:$0xff] %vm22, %v249
  %315 = vst.msk [vmem:[%s262 + $0x2a1] sm:$0xff] %vm22, %v250
  %316 = vst.msk [vmem:[%s262 + $0x2a9] sm:$0xff] %vm22, %v251
  %317 = vst.msk [vmem:[%s262 + $0x2b9] sm:$0xff] %vm22, %v252
  %318 = vst.msk [vmem:[%s262 + $0x2c1] sm:$0xff] %vm22, %v253
  %319 = vst.msk [vmem:[%s262 + $0x2d1] sm:$0xff] %vm22, %v254
  %320 = vst.msk [vmem:[%s262 + $0x2d9] sm:$0xff] %vm22, %v255
  %321 = vst.msk [vmem:[%s262 + $0x2e9] sm:$0xff] %vm22, %v256
  %322 = vst.msk [vmem:[%s262 + $0x2f1] sm:$0xff] %vm22, %v257
  %323 = vst.msk [vmem:[%s262 + $0x301] sm:$0xff] %vm22, %v258
  %324 = vst.msk [vmem:[%s262 + $0x309] sm:$0xff] %vm22, %v259
  %325 = vst.msk [vmem:[%s262 + $0x319] sm:$0xff] %vm22, %v260
  %326 = vst.msk [vmem:[%s262 + $0x321] sm:$0xff] %vm22, %v261
  %v327 = vld [vmem:[#allocation2] sm:$0xff]
  %v328 = vld [vmem:[#allocation2 + $0x8] sm:$0xff]
  %v329 = vld [vmem:[#allocation2 + $0x10] sm:$0x3]
  %v330 = vld [vmem:[#allocation2 + $0x18] sm:$0xff]
  %v331 = vld [vmem:[#allocation2 + $0x20] sm:$0xff]
  %v332 = vld [vmem:[#allocation2 + $0x28] sm:$0x3]
  %v333 = vld [vmem:[#allocation2 + $0x30] sm:$0xff]
  %v334 = vld [vmem:[#allocation2 + $0x38] sm:$0xff]
  %v335 = vld [vmem:[#allocation2 + $0x40] sm:$0x3]
  %v336 = vld [vmem:[#allocation2 + $0x48] sm:$0xff]
  %v337 = vld [vmem:[#allocation2 + $0x50] sm:$0xff]
  %v338 = vld [vmem:[#allocation2 + $0x58] sm:$0x3]
  %v339 = vld [vmem:[#allocation2 + $0x60] sm:$0xff]
  %v340 = vld [vmem:[#allocation2 + $0x68] sm:$0xff]
  %v341 = vld [vmem:[#allocation2 + $0x70] sm:$0x3]
  %v342 = vld [vmem:[#allocation2 + $0x78] sm:$0xff]
  %v343 = vld [vmem:[#allocation2 + $0x80] sm:$0xff]
  %v344 = vld [vmem:[#allocation2 + $0x88] sm:$0x3]
  %v345 = vld [vmem:[#allocation2 + $0x90] sm:$0xff]
  %v346 = vld [vmem:[#allocation2 + $0x98] sm:$0xff]
  %v347 = vld [vmem:[#allocation2 + $0xa0] sm:$0x3]
  %v348 = vld [vmem:[#allocation2 + $0xa8] sm:$0xff]
  %v349 = vld [vmem:[#allocation2 + $0xb0] sm:$0xff]
  %v350 = vld [vmem:[#allocation2 + $0xb8] sm:$0x3]
  %v351 = vld [vmem:[#allocation2 + $0xc0] sm:$0xff]
  %v352 = vld [vmem:[#allocation2 + $0xc8] sm:$0xff]
  %v353 = vld [vmem:[#allocation2 + $0xd0] sm:$0x3]
  %v354 = vld [vmem:[#allocation2 + $0xd8] sm:$0xff]
  %v355 = vld [vmem:[#allocation2 + $0xe0] sm:$0xff]
  %v356 = vld [vmem:[#allocation2 + $0xe8] sm:$0x3]
  %v357 = vld [vmem:[#allocation2 + $0xf0] sm:$0xff]
  %v358 = vld [vmem:[#allocation2 + $0xf8] sm:$0xff]
  %v359 = vld [vmem:[#allocation2 + $0x100] sm:$0x3]
  %v360 = vld [vmem:[#allocation2 + $0x108] sm:$0xff]
  %v361 = vld [vmem:[#allocation2 + $0x110] sm:$0xff]
  %v362 = vld [vmem:[#allocation2 + $0x118] sm:$0x3]
  %v363 = vld [vmem:[#allocation2 + $0x120] sm:$0xff]
  %v364 = vld [vmem:[#allocation2 + $0x128] sm:$0xff]
  %v365 = vld [vmem:[#allocation2 + $0x130] sm:$0x3]
  %v366 = vld [vmem:[#allocation2 + $0x138] sm:$0xff]
  %v367 = vld [vmem:[#allocation2 + $0x140] sm:$0xff]
  %v368 = vld [vmem:[#allocation2 + $0x148] sm:$0x3]
  %v369 = vld [vmem:[#allocation2 + $0x150] sm:$0xff]
  %v370 = vld [vmem:[#allocation2 + $0x158] sm:$0xff]
  %v371 = vld [vmem:[#allocation2 + $0x160] sm:$0x3]
  %v372 = vld [vmem:[#allocation2 + $0x168] sm:$0xff]
  %v373 = vld [vmem:[#allocation2 + $0x170] sm:$0xff]
  %v374 = vld [vmem:[#allocation2 + $0x178] sm:$0x3]
  %v375 = vld [vmem:[#allocation2 + $0x180] sm:$0xff]
  %v376 = vld [vmem:[#allocation2 + $0x188] sm:$0xff]
  %v377 = vld [vmem:[#allocation2 + $0x190] sm:$0x3]
  %v378 = vld [vmem:[#allocation2 + $0x198] sm:$0xff]
  %v379 = vld [vmem:[#allocation2 + $0x1a0] sm:$0xff]
  %v380 = vld [vmem:[#allocation2 + $0x1a8] sm:$0x3]
  %v381 = vld [vmem:[#allocation2 + $0x1b0] sm:$0xff]
  %v382 = vld [vmem:[#allocation2 + $0x1b8] sm:$0xff]
  %v383 = vld [vmem:[#allocation2 + $0x1c0] sm:$0x3]
  %v384 = vld [vmem:[#allocation2 + $0x1c8] sm:$0xff]
  %v385 = vld [vmem:[#allocation2 + $0x1d0] sm:$0xff]
  %v386 = vld [vmem:[#allocation2 + $0x1d8] sm:$0x3]
  %v387 = vld [vmem:[#allocation2 + $0x1e0] sm:$0xff]
  %v388 = vld [vmem:[#allocation2 + $0x1e8] sm:$0xff]
  %v389 = vld [vmem:[#allocation2 + $0x1f0] sm:$0x3]
  %v390 = vld [vmem:[#allocation2 + $0x1f8] sm:$0xff]
  %v391 = vld [vmem:[#allocation2 + $0x200] sm:$0xff]
  %v392 = vld [vmem:[#allocation2 + $0x208] sm:$0x3]
  %v393 = vld [vmem:[#allocation2 + $0x210] sm:$0xff]
  %v394 = vld [vmem:[#allocation2 + $0x218] sm:$0xff]
  %v395 = vld [vmem:[#allocation2 + $0x220] sm:$0x3]
  %v396 = vld [vmem:[#allocation2 + $0x228] sm:$0xff]
  %v397 = vld [vmem:[#allocation2 + $0x230] sm:$0xff]
  %v398 = vld [vmem:[#allocation2 + $0x238] sm:$0x3]
  %v399 = vld [vmem:[#allocation2 + $0x240] sm:$0xff]
  %v400 = vld [vmem:[#allocation2 + $0x248] sm:$0xff]
  %v401 = vld [vmem:[#allocation2 + $0x250] sm:$0x3]
  %v402 = vld [vmem:[#allocation2 + $0x258] sm:$0xff]
  %v403 = vld [vmem:[#allocation2 + $0x260] sm:$0xff]
  %v404 = vld [vmem:[#allocation2 + $0x268] sm:$0x3]
  %v405 = vld [vmem:[#allocation2 + $0x270] sm:$0xff]
  %v406 = vld [vmem:[#allocation2 + $0x278] sm:$0xff]
  %v407 = vld [vmem:[#allocation2 + $0x280] sm:$0x3]
  %v408 = vld [vmem:[#allocation2 + $0x288] sm:$0xff]
  %v409 = vld [vmem:[#allocation2 + $0x290] sm:$0xff]
  %v410 = vld [vmem:[#allocation2 + $0x298] sm:$0x3]
  %v411 = vld [vmem:[#allocation2 + $0x2a0] sm:$0xff]
  %v412 = vld [vmem:[#allocation2 + $0x2a8] sm:$0xff]
  %v413 = vld [vmem:[#allocation2 + $0x2b0] sm:$0x3]
  %v414 = vld [vmem:[#allocation2 + $0x2b8] sm:$0xff]
  %v415 = vld [vmem:[#allocation2 + $0x2c0] sm:$0xff]
  %v416 = vld [vmem:[#allocation2 + $0x2c8] sm:$0x3]
  %v417 = vld [vmem:[#allocation2 + $0x2d0] sm:$0xff]
  %v418 = vld [vmem:[#allocation2 + $0x2d8] sm:$0xff]
  %v419 = vld [vmem:[#allocation2 + $0x2e0] sm:$0x3]
  %v420 = vld [vmem:[#allocation2 + $0x2e8] sm:$0xff]
  %v421 = vld [vmem:[#allocation2 + $0x2f0] sm:$0xff]
  %v422 = vld [vmem:[#allocation2 + $0x2f8] sm:$0x3]
  %v423 = vld [vmem:[#allocation2 + $0x300] sm:$0xff]
  %v424 = vld [vmem:[#allocation2 + $0x308] sm:$0xff]
  %v425 = vld [vmem:[#allocation2 + $0x310] sm:$0x3]
  %v426 = vld [vmem:[#allocation2 + $0x318] sm:$0xff]
  %v427 = vld [vmem:[#allocation2 + $0x320] sm:$0xff]
  %v428 = vld [vmem:[#allocation2 + $0x328] sm:$0x3]
  %v429 = vld [vmem:[#allocation2 + $0x330] sm:$0xff]
  %v430 = vld [vmem:[#allocation2 + $0x338] sm:$0xff]
  %v431 = vld [vmem:[#allocation2 + $0x340] sm:$0x3]
  %v432 = vld [vmem:[#allocation2 + $0x348] sm:$0xff]
  %v433 = vld [vmem:[#allocation2 + $0x350] sm:$0xff]
  %v434 = vld [vmem:[#allocation2 + $0x358] sm:$0x3]
  %vm531 = vcmask 1046528
  %v532 = vrot.slane %v327, 1
  %v533 = vrot.slane %v328, 1
  %v534 = vsel %vm531, %v532, %v533
  %v535 = vrot.slane %v329, 1
  %v536 = vsel %vm531, %v533, %v535
  %v537 = vrot.slane %v330, 1
  %v538 = vrot.slane %v331, 1
  %v539 = vsel %vm531, %v537, %v538
  %v540 = vrot.slane %v332, 1
  %v541 = vsel %vm531, %v538, %v540
  %v542 = vrot.slane %v333, 1
  %v543 = vrot.slane %v334, 1
  %v544 = vsel %vm531, %v542, %v543
  %v545 = vrot.slane %v335, 1
  %v546 = vsel %vm531, %v543, %v545
  %v547 = vrot.slane %v336, 1
  %v548 = vrot.slane %v337, 1
  %v549 = vsel %vm531, %v547, %v548
  %v550 = vrot.slane %v338, 1
  %v551 = vsel %vm531, %v548, %v550
  %v552 = vrot.slane %v339, 1
  %v553 = vrot.slane %v340, 1
  %v554 = vsel %vm531, %v552, %v553
  %v555 = vrot.slane %v341, 1
  %v556 = vsel %vm531, %v553, %v555
  %v557 = vrot.slane %v342, 1
  %v558 = vrot.slane %v343, 1
  %v559 = vsel %vm531, %v557, %v558
  %v560 = vrot.slane %v344, 1
  %v561 = vsel %vm531, %v558, %v560
  %v562 = vrot.slane %v345, 1
  %v563 = vrot.slane %v346, 1
  %v564 = vsel %vm531, %v562, %v563
  %v565 = vrot.slane %v347, 1
  %v566 = vsel %vm531, %v563, %v565
  %v567 = vrot.slane %v348, 1
  %v568 = vrot.slane %v349, 1
  %v569 = vsel %vm531, %v567, %v568
  %v570 = vrot.slane %v350, 1
  %v571 = vsel %vm531, %v568, %v570
  %v572 = vrot.slane %v351, 1
  %v573 = vrot.slane %v352, 1
  %v574 = vsel %vm531, %v572, %v573
  %v575 = vrot.slane %v353, 1
  %v576 = vsel %vm531, %v573, %v575
  %v577 = vrot.slane %v354, 1
  %v578 = vrot.slane %v355, 1
  %v579 = vsel %vm531, %v577, %v578
  %v580 = vrot.slane %v356, 1
  %v581 = vsel %vm531, %v578, %v580
  %v582 = vrot.slane %v357, 1
  %v583 = vrot.slane %v358, 1
  %v584 = vsel %vm531, %v582, %v583
  %v585 = vrot.slane %v359, 1
  %v586 = vsel %vm531, %v583, %v585
  %v587 = vrot.slane %v360, 1
  %v588 = vrot.slane %v361, 1
  %v589 = vsel %vm531, %v587, %v588
  %v590 = vrot.slane %v362, 1
  %v591 = vsel %vm531, %v588, %v590
  %v592 = vrot.slane %v363, 1
  %v593 = vrot.slane %v364, 1
  %v594 = vsel %vm531, %v592, %v593
  %v595 = vrot.slane %v365, 1
  %v596 = vsel %vm531, %v593, %v595
  %v597 = vrot.slane %v366, 1
  %v598 = vrot.slane %v367, 1
  %v599 = vsel %vm531, %v597, %v598
  %v600 = vrot.slane %v368, 1
  %v601 = vsel %vm531, %v598, %v600
  %v602 = vrot.slane %v369, 1
  %v603 = vrot.slane %v370, 1
  %v604 = vsel %vm531, %v602, %v603
  %v605 = vrot.slane %v371, 1
  %v606 = vsel %vm531, %v603, %v605
  %v607 = vrot.slane %v372, 1
  %v608 = vrot.slane %v373, 1
  %v609 = vsel %vm531, %v607, %v608
  %v610 = vrot.slane %v374, 1
  %v611 = vsel %vm531, %v608, %v610
  %v612 = vrot.slane %v381, 1
  %v613 = vrot.slane %v382, 1
  %v614 = vsel %vm531, %v612, %v613
  %v615 = vrot.slane %v383, 1
  %v616 = vsel %vm531, %v613, %v615
  %v617 = vrot.slane %v384, 1
  %v618 = vrot.slane %v385, 1
  %v619 = vsel %vm531, %v617, %v618
  %v620 = vrot.slane %v386, 1
  %v621 = vsel %vm531, %v618, %v620
  %v622 = vrot.slane %v387, 1
  %v623 = vrot.slane %v388, 1
  %v624 = vsel %vm531, %v622, %v623
  %v625 = vrot.slane %v389, 1
  %v626 = vsel %vm531, %v623, %v625
  %v627 = vrot.slane %v390, 1
  %v628 = vrot.slane %v391, 1
  %v629 = vsel %vm531, %v627, %v628
  %v630 = vrot.slane %v392, 1
  %v631 = vsel %vm531, %v628, %v630
  %v632 = vrot.slane %v393, 1
  %v633 = vrot.slane %v394, 1
  %v634 = vsel %vm531, %v632, %v633
  %v635 = vrot.slane %v395, 1
  %v636 = vsel %vm531, %v633, %v635
  %v637 = vrot.slane %v396, 1
  %v638 = vrot.slane %v397, 1
  %v639 = vsel %vm531, %v637, %v638
  %v640 = vrot.slane %v398, 1
  %v641 = vsel %vm531, %v638, %v640
  %v642 = vrot.slane %v399, 1
  %v643 = vrot.slane %v400, 1
  %v644 = vsel %vm531, %v642, %v643
  %v645 = vrot.slane %v401, 1
  %v646 = vsel %vm531, %v643, %v645
  %v647 = vrot.slane %v402, 1
  %v648 = vrot.slane %v403, 1
  %v649 = vsel %vm531, %v647, %v648
  %v650 = vrot.slane %v404, 1
  %v651 = vsel %vm531, %v648, %v650
  %v652 = vrot.slane %v405, 1
  %v653 = vrot.slane %v406, 1
  %v654 = vsel %vm531, %v652, %v653
  %v655 = vrot.slane %v407, 1
  %v656 = vsel %vm531, %v653, %v655
  %v657 = vrot.slane %v408, 1
  %v658 = vrot.slane %v409, 1
  %v659 = vsel %vm531, %v657, %v658
  %v660 = vrot.slane %v410, 1
  %v661 = vsel %vm531, %v658, %v660
  %v662 = vrot.slane %v411, 1
  %v663 = vrot.slane %v412, 1
  %v664 = vsel %vm531, %v662, %v663
  %v665 = vrot.slane %v413, 1
  %v666 = vsel %vm531, %v663, %v665
  %v667 = vrot.slane %v414, 1
  %v668 = vrot.slane %v415, 1
  %v669 = vsel %vm531, %v667, %v668
  %v670 = vrot.slane %v416, 1
  %v671 = vsel %vm531, %v668, %v670
  %v672 = vrot.slane %v417, 1
  %v673 = vrot.slane %v418, 1
  %v674 = vsel %vm531, %v672, %v673
  %v675 = vrot.slane %v419, 1
  %v676 = vsel %vm531, %v673, %v675
  %v677 = vrot.slane %v420, 1
  %v678 = vrot.slane %v421, 1
  %v679 = vsel %vm531, %v677, %v678
  %v680 = vrot.slane %v422, 1
  %v681 = vsel %vm531, %v678, %v680
  %v682 = vrot.slane %v423, 1
  %v683 = vrot.slane %v424, 1
  %v684 = vsel %vm531, %v682, %v683
  %v685 = vrot.slane %v425, 1
  %v686 = vsel %vm531, %v683, %v685
  %v687 = vrot.slane %v426, 1
  %v688 = vrot.slane %v427, 1
  %v689 = vsel %vm531, %v687, %v688
  %v690 = vrot.slane %v428, 1
  %v691 = vsel %vm531, %v688, %v690
  %vm692 = vcmask 1045504
  %v693 = vrot.slane %v327, 2
  %v694 = vrot.slane %v328, 2
  %v695 = vsel %vm692, %v693, %v694
  %v696 = vrot.slane %v329, 2
  %v697 = vsel %vm692, %v694, %v696
  %v698 = vrot.slane %v330, 2
  %v699 = vrot.slane %v331, 2
  %v700 = vsel %vm692, %v698, %v699
  %v701 = vrot.slane %v332, 2
  %v702 = vsel %vm692, %v699, %v701
  %v703 = vrot.slane %v333, 2
  %v704 = vrot.slane %v334, 2
  %v705 = vsel %vm692, %v703, %v704
  %v706 = vrot.slane %v335, 2
  %v707 = vsel %vm692, %v704, %v706
  %v708 = vrot.slane %v336, 2
  %v709 = vrot.slane %v337, 2
  %v710 = vsel %vm692, %v708, %v709
  %v711 = vrot.slane %v338, 2
  %v712 = vsel %vm692, %v709, %v711
  %v713 = vrot.slane %v339, 2
  %v714 = vrot.slane %v340, 2
  %v715 = vsel %vm692, %v713, %v714
  %v716 = vrot.slane %v341, 2
  %v717 = vsel %vm692, %v714, %v716
  %v718 = vrot.slane %v342, 2
  %v719 = vrot.slane %v343, 2
  %v720 = vsel %vm692, %v718, %v719
  %v721 = vrot.slane %v344, 2
  %v722 = vsel %vm692, %v719, %v721
  %v723 = vrot.slane %v345, 2
  %v724 = vrot.slane %v346, 2
  %v725 = vsel %vm692, %v723, %v724
  %v726 = vrot.slane %v347, 2
  %v727 = vsel %vm692, %v724, %v726
  %v728 = vrot.slane %v348, 2
  %v729 = vrot.slane %v349, 2
  %v730 = vsel %vm692, %v728, %v729
  %v731 = vrot.slane %v350, 2
  %v732 = vsel %vm692, %v729, %v731
  %v733 = vrot.slane %v351, 2
  %v734 = vrot.slane %v352, 2
  %v735 = vsel %vm692, %v733, %v734
  %v736 = vrot.slane %v353, 2
  %v737 = vsel %vm692, %v734, %v736
  %v738 = vrot.slane %v354, 2
  %v739 = vrot.slane %v355, 2
  %v740 = vsel %vm692, %v738, %v739
  %v741 = vrot.slane %v356, 2
  %v742 = vsel %vm692, %v739, %v741
  %v743 = vrot.slane %v357, 2
  %v744 = vrot.slane %v358, 2
  %v745 = vsel %vm692, %v743, %v744
  %v746 = vrot.slane %v359, 2
  %v747 = vsel %vm692, %v744, %v746
  %v748 = vrot.slane %v360, 2
  %v749 = vrot.slane %v361, 2
  %v750 = vsel %vm692, %v748, %v749
  %v751 = vrot.slane %v362, 2
  %v752 = vsel %vm692, %v749, %v751
  %v753 = vrot.slane %v363, 2
  %v754 = vrot.slane %v364, 2
  %v755 = vsel %vm692, %v753, %v754
  %v756 = vrot.slane %v365, 2
  %v757 = vsel %vm692, %v754, %v756
  %v758 = vrot.slane %v366, 2
  %v759 = vrot.slane %v367, 2
  %v760 = vsel %vm692, %v758, %v759
  %v761 = vrot.slane %v368, 2
  %v762 = vsel %vm692, %v759, %v761
  %v763 = vrot.slane %v369, 2
  %v764 = vrot.slane %v370, 2
  %v765 = vsel %vm692, %v763, %v764
  %v766 = vrot.slane %v371, 2
  %v767 = vsel %vm692, %v764, %v766
  %v768 = vrot.slane %v372, 2
  %v769 = vrot.slane %v373, 2
  %v770 = vsel %vm692, %v768, %v769
  %v771 = vrot.slane %v374, 2
  %v772 = vsel %vm692, %v769, %v771
  %v773 = vrot.slane %v381, 2
  %v774 = vrot.slane %v382, 2
  %v775 = vsel %vm692, %v773, %v774
  %v776 = vrot.slane %v383, 2
  %v777 = vsel %vm692, %v774, %v776
  %v778 = vrot.slane %v384, 2
  %v779 = vrot.slane %v385, 2
  %v780 = vsel %vm692, %v778, %v779
  %v781 = vrot.slane %v386, 2
  %v782 = vsel %vm692, %v779, %v781
  %v783 = vrot.slane %v387, 2
  %v784 = vrot.slane %v388, 2
  %v785 = vsel %vm692, %v783, %v784
  %v786 = vrot.slane %v389, 2
  %v787 = vsel %vm692, %v784, %v786
  %v788 = vrot.slane %v390, 2
  %v789 = vrot.slane %v391, 2
  %v790 = vsel %vm692, %v788, %v789
  %v791 = vrot.slane %v392, 2
  %v792 = vsel %vm692, %v789, %v791
  %v793 = vrot.slane %v393, 2
  %v794 = vrot.slane %v394, 2
  %v795 = vsel %vm692, %v793, %v794
  %v796 = vrot.slane %v395, 2
  %v797 = vsel %vm692, %v794, %v796
  %v798 = vrot.slane %v396, 2
  %v799 = vrot.slane %v397, 2
  %v800 = vsel %vm692, %v798, %v799
  %v801 = vrot.slane %v398, 2
  %v802 = vsel %vm692, %v799, %v801
  %v803 = vrot.slane %v399, 2
  %v804 = vrot.slane %v400, 2
  %v805 = vsel %vm692, %v803, %v804
  %v806 = vrot.slane %v401, 2
  %v807 = vsel %vm692, %v804, %v806
  %v808 = vrot.slane %v402, 2
  %v809 = vrot.slane %v403, 2
  %v810 = vsel %vm692, %v808, %v809
  %v811 = vrot.slane %v404, 2
  %v812 = vsel %vm692, %v809, %v811
  %v813 = vrot.slane %v405, 2
  %v814 = vrot.slane %v406, 2
  %v815 = vsel %vm692, %v813, %v814
  %v816 = vrot.slane %v407, 2
  %v817 = vsel %vm692, %v814, %v816
  %v818 = vrot.slane %v408, 2
  %v819 = vrot.slane %v409, 2
  %v820 = vsel %vm692, %v818, %v819
  %v821 = vrot.slane %v410, 2
  %v822 = vsel %vm692, %v819, %v821
  %v823 = vrot.slane %v411, 2
  %v824 = vrot.slane %v412, 2
  %v825 = vsel %vm692, %v823, %v824
  %v826 = vrot.slane %v413, 2
  %v827 = vsel %vm692, %v824, %v826
  %v828 = vrot.slane %v414, 2
  %v829 = vrot.slane %v415, 2
  %v830 = vsel %vm692, %v828, %v829
  %v831 = vrot.slane %v416, 2
  %v832 = vsel %vm692, %v829, %v831
  %v833 = vrot.slane %v417, 2
  %v834 = vrot.slane %v418, 2
  %v835 = vsel %vm692, %v833, %v834
  %v836 = vrot.slane %v419, 2
  %v837 = vsel %vm692, %v834, %v836
  %v838 = vrot.slane %v420, 2
  %v839 = vrot.slane %v421, 2
  %v840 = vsel %vm692, %v838, %v839
  %v841 = vrot.slane %v422, 2
  %v842 = vsel %vm692, %v839, %v841
  %v843 = vrot.slane %v423, 2
  %v844 = vrot.slane %v424, 2
  %v845 = vsel %vm692, %v843, %v844
  %v846 = vrot.slane %v425, 2
  %v847 = vsel %vm692, %v844, %v846
  %v848 = vrot.slane %v426, 2
  %v849 = vrot.slane %v427, 2
  %v850 = vsel %vm692, %v848, %v849
  %v851 = vrot.slane %v428, 2
  %v852 = vsel %vm692, %v849, %v851
  %v859 = vrot.slane %v375, 1
  %v860 = vrot.slane %v376, 1
  %v861 = vsel %vm531, %v859, %v860
  %v862 = vrot.slane %v377, 1
  %v863 = vsel %vm531, %v860, %v862
  %v864 = vrot.slane %v429, 1
  %v865 = vrot.slane %v430, 1
  %v866 = vsel %vm531, %v864, %v865
  %v867 = vrot.slane %v431, 1
  %v868 = vsel %vm531, %v865, %v867
  %v869 = vrot.slane %v375, 2
  %v870 = vrot.slane %v376, 2
  %v871 = vsel %vm692, %v869, %v870
  %v872 = vrot.slane %v377, 2
  %v873 = vsel %vm692, %v870, %v872
  %v874 = vrot.slane %v429, 2
  %v875 = vrot.slane %v430, 2
  %v876 = vsel %vm692, %v874, %v875
  %v877 = vrot.slane %v431, 2
  %v878 = vsel %vm692, %v875, %v877
  %v885 = vrot.slane %v378, 1
  %v886 = vrot.slane %v379, 1
  %v887 = vsel %vm531, %v885, %v886
  %v888 = vrot.slane %v380, 1
  %v889 = vsel %vm531, %v886, %v888
  %v890 = vrot.slane %v432, 1
  %v891 = vrot.slane %v433, 1
  %v892 = vsel %vm531, %v890, %v891
  %v893 = vrot.slane %v434, 1
  %v894 = vsel %vm531, %v891, %v893
  %v895 = vrot.slane %v378, 2
  %v896 = vrot.slane %v379, 2
  %v897 = vsel %vm692, %v895, %v896
  %v898 = vrot.slane %v380, 2
  %v899 = vsel %vm692, %v896, %v898
  %v900 = vrot.slane %v432, 2
  %v901 = vrot.slane %v433, 2
  %v902 = vsel %vm692, %v900, %v901
  %v903 = vrot.slane %v434, 2
  %v904 = vsel %vm692, %v901, %v903
  %905 = vrot.lane.b32.xlu0 %v534, 4
  %v906 = vpop.permute.xlu0 %905
  %907 = vrot.lane.b32.xlu0 %v536, 4
  %v908 = vpop.permute.xlu0 %907
  %909 = vrot.lane.b32.xlu0 %v539, 4
  %v910 = vpop.permute.xlu0 %909
  %911 = vrot.lane.b32.xlu0 %v541, 4
  %v912 = vpop.permute.xlu0 %911
  %913 = vrot.lane.b32.xlu0 %v544, 4
  %v914 = vpop.permute.xlu0 %913
  %915 = vrot.lane.b32.xlu0 %v546, 4
  %v916 = vpop.permute.xlu0 %915
  %917 = vrot.lane.b32.xlu0 %v549, 4
  %v918 = vpop.permute.xlu0 %917
  %919 = vrot.lane.b32.xlu0 %v551, 4
  %v920 = vpop.permute.xlu0 %919
  %921 = vrot.lane.b32.xlu0 %v554, 4
  %v922 = vpop.permute.xlu0 %921
  %923 = vrot.lane.b32.xlu0 %v556, 4
  %v924 = vpop.permute.xlu0 %923
  %925 = vrot.lane.b32.xlu0 %v559, 4
  %v926 = vpop.permute.xlu0 %925
  %927 = vrot.lane.b32.xlu0 %v561, 4
  %v928 = vpop.permute.xlu0 %927
  %929 = vrot.lane.b32.xlu0 %v564, 4
  %v930 = vpop.permute.xlu0 %929
  %931 = vrot.lane.b32.xlu0 %v566, 4
  %v932 = vpop.permute.xlu0 %931
  %933 = vrot.lane.b32.xlu0 %v569, 4
  %v934 = vpop.permute.xlu0 %933
  %935 = vrot.lane.b32.xlu0 %v571, 4
  %v936 = vpop.permute.xlu0 %935
  %937 = vrot.lane.b32.xlu0 %v574, 4
  %v938 = vpop.permute.xlu0 %937
  %939 = vrot.lane.b32.xlu0 %v576, 4
  %v940 = vpop.permute.xlu0 %939
  %941 = vrot.lane.b32.xlu0 %v579, 4
  %v942 = vpop.permute.xlu0 %941
  %943 = vrot.lane.b32.xlu0 %v581, 4
  %v944 = vpop.permute.xlu0 %943
  %945 = vrot.lane.b32.xlu0 %v584, 4
  %v946 = vpop.permute.xlu0 %945
  %947 = vrot.lane.b32.xlu0 %v586, 4
  %v948 = vpop.permute.xlu0 %947
  %949 = vrot.lane.b32.xlu0 %v589, 4
  %v950 = vpop.permute.xlu0 %949
  %951 = vrot.lane.b32.xlu0 %v591, 4
  %v952 = vpop.permute.xlu0 %951
  %953 = vrot.lane.b32.xlu0 %v594, 4
  %v954 = vpop.permute.xlu0 %953
  %955 = vrot.lane.b32.xlu0 %v596, 4
  %v956 = vpop.permute.xlu0 %955
  %957 = vrot.lane.b32.xlu0 %v599, 4
  %v958 = vpop.permute.xlu0 %957
  %959 = vrot.lane.b32.xlu0 %v601, 4
  %v960 = vpop.permute.xlu0 %959
  %961 = vrot.lane.b32.xlu0 %v604, 4
  %v962 = vpop.permute.xlu0 %961
  %963 = vrot.lane.b32.xlu0 %v606, 4
  %v964 = vpop.permute.xlu0 %963
  %965 = vrot.lane.b32.xlu0 %v609, 4
  %v966 = vpop.permute.xlu0 %965
  %967 = vrot.lane.b32.xlu0 %v611, 4
  %v968 = vpop.permute.xlu0 %967
  %969 = vrot.lane.b32.xlu0 %v614, 4
  %v970 = vpop.permute.xlu0 %969
  %971 = vrot.lane.b32.xlu0 %v616, 4
  %v972 = vpop.permute.xlu0 %971
  %973 = vrot.lane.b32.xlu0 %v619, 4
  %v974 = vpop.permute.xlu0 %973
  %975 = vrot.lane.b32.xlu0 %v621, 4
  %v976 = vpop.permute.xlu0 %975
  %977 = vrot.lane.b32.xlu0 %v624, 4
  %v978 = vpop.permute.xlu0 %977
  %979 = vrot.lane.b32.xlu0 %v626, 4
  %v980 = vpop.permute.xlu0 %979
  %981 = vrot.lane.b32.xlu0 %v629, 4
  %v982 = vpop.permute.xlu0 %981
  %983 = vrot.lane.b32.xlu0 %v631, 4
  %v984 = vpop.permute.xlu0 %983
  %985 = vrot.lane.b32.xlu0 %v634, 4
  %v986 = vpop.permute.xlu0 %985
  %987 = vrot.lane.b32.xlu0 %v636, 4
  %v988 = vpop.permute.xlu0 %987
  %989 = vrot.lane.b32.xlu0 %v639, 4
  %v990 = vpop.permute.xlu0 %989
  %991 = vrot.lane.b32.xlu0 %v641, 4
  %v992 = vpop.permute.xlu0 %991
  %993 = vrot.lane.b32.xlu0 %v644, 4
  %v994 = vpop.permute.xlu0 %993
  %995 = vrot.lane.b32.xlu0 %v646, 4
  %v996 = vpop.permute.xlu0 %995
  %997 = vrot.lane.b32.xlu0 %v649, 4
  %v998 = vpop.permute.xlu0 %997
  %999 = vrot.lane.b32.xlu0 %v651, 4
  %v1000 = vpop.permute.xlu0 %999
  %1001 = vrot.lane.b32.xlu0 %v654, 4
  %v1002 = vpop.permute.xlu0 %1001
  %1003 = vrot.lane.b32.xlu0 %v656, 4
  %v1004 = vpop.permute.xlu0 %1003
  %1005 = vrot.lane.b32.xlu0 %v659, 4
  %v1006 = vpop.permute.xlu0 %1005
  %1007 = vrot.lane.b32.xlu0 %v661, 4
  %v1008 = vpop.permute.xlu0 %1007
  %1009 = vrot.lane.b32.xlu0 %v664, 4
  %v1010 = vpop.permute.xlu0 %1009
  %1011 = vrot.lane.b32.xlu0 %v666, 4
  %v1012 = vpop.permute.xlu0 %1011
  %1013 = vrot.lane.b32.xlu0 %v669, 4
  %v1014 = vpop.permute.xlu0 %1013
  %1015 = vrot.lane.b32.xlu0 %v671, 4
  %v1016 = vpop.permute.xlu0 %1015
  %1017 = vrot.lane.b32.xlu0 %v674, 4
  %v1018 = vpop.permute.xlu0 %1017
  %1019 = vrot.lane.b32.xlu0 %v676, 4
  %v1020 = vpop.permute.xlu0 %1019
  %1021 = vrot.lane.b32.xlu0 %v679, 4
  %v1022 = vpop.permute.xlu0 %1021
  %1023 = vrot.lane.b32.xlu0 %v681, 4
  %v1024 = vpop.permute.xlu0 %1023
  %1025 = vrot.lane.b32.xlu0 %v684, 4
  %v1026 = vpop.permute.xlu0 %1025
  %1027 = vrot.lane.b32.xlu0 %v686, 4
  %v1028 = vpop.permute.xlu0 %1027
  %1029 = vrot.lane.b32.xlu0 %v689, 4
  %v1030 = vpop.permute.xlu0 %1029
  %1031 = vrot.lane.b32.xlu0 %v691, 4
  %v1032 = vpop.permute.xlu0 %1031
  %1097 = vrot.lane.b32.xlu0 %v695, 8
  %v1098 = vpop.permute.xlu0 %1097
  %1099 = vrot.lane.b32.xlu0 %v697, 8
  %v1100 = vpop.permute.xlu0 %1099
  %1101 = vrot.lane.b32.xlu0 %v700, 8
  %v1102 = vpop.permute.xlu0 %1101
  %1103 = vrot.lane.b32.xlu0 %v702, 8
  %v1104 = vpop.permute.xlu0 %1103
  %1105 = vrot.lane.b32.xlu0 %v705, 8
  %v1106 = vpop.permute.xlu0 %1105
  %1107 = vrot.lane.b32.xlu0 %v707, 8
  %v1108 = vpop.permute.xlu0 %1107
  %1109 = vrot.lane.b32.xlu0 %v710, 8
  %v1110 = vpop.permute.xlu0 %1109
  %1111 = vrot.lane.b32.xlu0 %v712, 8
  %v1112 = vpop.permute.xlu0 %1111
  %1113 = vrot.lane.b32.xlu0 %v715, 8
  %v1114 = vpop.permute.xlu0 %1113
  %1115 = vrot.lane.b32.xlu0 %v717, 8
  %v1116 = vpop.permute.xlu0 %1115
  %1117 = vrot.lane.b32.xlu0 %v720, 8
  %v1118 = vpop.permute.xlu0 %1117
  %1119 = vrot.lane.b32.xlu0 %v722, 8
  %v1120 = vpop.permute.xlu0 %1119
  %1121 = vrot.lane.b32.xlu0 %v725, 8
  %v1122 = vpop.permute.xlu0 %1121
  %1123 = vrot.lane.b32.xlu0 %v727, 8
  %v1124 = vpop.permute.xlu0 %1123
  %1125 = vrot.lane.b32.xlu0 %v730, 8
  %v1126 = vpop.permute.xlu0 %1125
  %1127 = vrot.lane.b32.xlu0 %v732, 8
  %v1128 = vpop.permute.xlu0 %1127
  %1129 = vrot.lane.b32.xlu0 %v735, 8
  %v1130 = vpop.permute.xlu0 %1129
  %1131 = vrot.lane.b32.xlu0 %v737, 8
  %v1132 = vpop.permute.xlu0 %1131
  %1133 = vrot.lane.b32.xlu0 %v740, 8
  %v1134 = vpop.permute.xlu0 %1133
  %1135 = vrot.lane.b32.xlu0 %v742, 8
  %v1136 = vpop.permute.xlu0 %1135
  %1137 = vrot.lane.b32.xlu0 %v745, 8
  %v1138 = vpop.permute.xlu0 %1137
  %1139 = vrot.lane.b32.xlu0 %v747, 8
  %v1140 = vpop.permute.xlu0 %1139
  %1141 = vrot.lane.b32.xlu0 %v750, 8
  %v1142 = vpop.permute.xlu0 %1141
  %1143 = vrot.lane.b32.xlu0 %v752, 8
  %v1144 = vpop.permute.xlu0 %1143
  %1145 = vrot.lane.b32.xlu0 %v755, 8
  %v1146 = vpop.permute.xlu0 %1145
  %1147 = vrot.lane.b32.xlu0 %v757, 8
  %v1148 = vpop.permute.xlu0 %1147
  %1149 = vrot.lane.b32.xlu0 %v760, 8
  %v1150 = vpop.permute.xlu0 %1149
  %1151 = vrot.lane.b32.xlu0 %v762, 8
  %v1152 = vpop.permute.xlu0 %1151
  %1153 = vrot.lane.b32.xlu0 %v765, 8
  %v1154 = vpop.permute.xlu0 %1153
  %1155 = vrot.lane.b32.xlu0 %v767, 8
  %v1156 = vpop.permute.xlu0 %1155
  %1157 = vrot.lane.b32.xlu0 %v770, 8
  %v1158 = vpop.permute.xlu0 %1157
  %1159 = vrot.lane.b32.xlu0 %v772, 8
  %v1160 = vpop.permute.xlu0 %1159
  %1161 = vrot.lane.b32.xlu0 %v775, 8
  %v1162 = vpop.permute.xlu0 %1161
  %1163 = vrot.lane.b32.xlu0 %v777, 8
  %v1164 = vpop.permute.xlu0 %1163
  %1165 = vrot.lane.b32.xlu0 %v780, 8
  %v1166 = vpop.permute.xlu0 %1165
  %1167 = vrot.lane.b32.xlu0 %v782, 8
  %v1168 = vpop.permute.xlu0 %1167
  %1169 = vrot.lane.b32.xlu0 %v785, 8
  %v1170 = vpop.permute.xlu0 %1169
  %1171 = vrot.lane.b32.xlu0 %v787, 8
  %v1172 = vpop.permute.xlu0 %1171
  %1173 = vrot.lane.b32.xlu0 %v790, 8
  %v1174 = vpop.permute.xlu0 %1173
  %1175 = vrot.lane.b32.xlu0 %v792, 8
  %v1176 = vpop.permute.xlu0 %1175
  %1177 = vrot.lane.b32.xlu0 %v795, 8
  %v1178 = vpop.permute.xlu0 %1177
  %1179 = vrot.lane.b32.xlu0 %v797, 8
  %v1180 = vpop.permute.xlu0 %1179
  %1181 = vrot.lane.b32.xlu0 %v800, 8
  %v1182 = vpop.permute.xlu0 %1181
  %1183 = vrot.lane.b32.xlu0 %v802, 8
  %v1184 = vpop.permute.xlu0 %1183
  %1185 = vrot.lane.b32.xlu0 %v805, 8
  %v1186 = vpop.permute.xlu0 %1185
  %1187 = vrot.lane.b32.xlu0 %v807, 8
  %v1188 = vpop.permute.xlu0 %1187
  %1189 = vrot.lane.b32.xlu0 %v810, 8
  %v1190 = vpop.permute.xlu0 %1189
  %1191 = vrot.lane.b32.xlu0 %v812, 8
  %v1192 = vpop.permute.xlu0 %1191
  %1193 = vrot.lane.b32.xlu0 %v815, 8
  %v1194 = vpop.permute.xlu0 %1193
  %1195 = vrot.lane.b32.xlu0 %v817, 8
  %v1196 = vpop.permute.xlu0 %1195
  %1197 = vrot.lane.b32.xlu0 %v820, 8
  %v1198 = vpop.permute.xlu0 %1197
  %1199 = vrot.lane.b32.xlu0 %v822, 8
  %v1200 = vpop.permute.xlu0 %1199
  %1201 = vrot.lane.b32.xlu0 %v825, 8
  %v1202 = vpop.permute.xlu0 %1201
  %1203 = vrot.lane.b32.xlu0 %v827, 8
  %v1204 = vpop.permute.xlu0 %1203
  %1205 = vrot.lane.b32.xlu0 %v830, 8
  %v1206 = vpop.permute.xlu0 %1205
  %1207 = vrot.lane.b32.xlu0 %v832, 8
  %v1208 = vpop.permute.xlu0 %1207
  %1209 = vrot.lane.b32.xlu0 %v835, 8
  %v1210 = vpop.permute.xlu0 %1209
  %1211 = vrot.lane.b32.xlu0 %v837, 8
  %v1212 = vpop.permute.xlu0 %1211
  %1213 = vrot.lane.b32.xlu0 %v840, 8
  %v1214 = vpop.permute.xlu0 %1213
  %1215 = vrot.lane.b32.xlu0 %v842, 8
  %v1216 = vpop.permute.xlu0 %1215
  %1217 = vrot.lane.b32.xlu0 %v845, 8
  %v1218 = vpop.permute.xlu0 %1217
  %1219 = vrot.lane.b32.xlu0 %v847, 8
  %v1220 = vpop.permute.xlu0 %1219
  %1221 = vrot.lane.b32.xlu0 %v850, 8
  %v1222 = vpop.permute.xlu0 %1221
  %1223 = vrot.lane.b32.xlu0 %v852, 8
  %v1224 = vpop.permute.xlu0 %1223
  %1289 = vrot.lane.b32.xlu0 %v330, 12
  %v1290 = vpop.permute.xlu0 %1289
  %1291 = vrot.lane.b32.xlu0 %v331, 12
  %v1292 = vpop.permute.xlu0 %1291
  %1293 = vrot.lane.b32.xlu0 %v333, 12
  %v1294 = vpop.permute.xlu0 %1293
  %1295 = vrot.lane.b32.xlu0 %v334, 12
  %v1296 = vpop.permute.xlu0 %1295
  %1297 = vrot.lane.b32.xlu0 %v336, 12
  %v1298 = vpop.permute.xlu0 %1297
  %1299 = vrot.lane.b32.xlu0 %v337, 12
  %v1300 = vpop.permute.xlu0 %1299
  %1301 = vrot.lane.b32.xlu0 %v339, 12
  %v1302 = vpop.permute.xlu0 %1301
  %1303 = vrot.lane.b32.xlu0 %v340, 12
  %v1304 = vpop.permute.xlu0 %1303
  %1305 = vrot.lane.b32.xlu0 %v342, 12
  %v1306 = vpop.permute.xlu0 %1305
  %1307 = vrot.lane.b32.xlu0 %v343, 12
  %v1308 = vpop.permute.xlu0 %1307
  %1309 = vrot.lane.b32.xlu0 %v345, 12
  %v1310 = vpop.permute.xlu0 %1309
  %1311 = vrot.lane.b32.xlu0 %v346, 12
  %v1312 = vpop.permute.xlu0 %1311
  %1313 = vrot.lane.b32.xlu0 %v348, 12
  %v1314 = vpop.permute.xlu0 %1313
  %1315 = vrot.lane.b32.xlu0 %v349, 12
  %v1316 = vpop.permute.xlu0 %1315
  %1317 = vrot.lane.b32.xlu0 %v351, 12
  %v1318 = vpop.permute.xlu0 %1317
  %1319 = vrot.lane.b32.xlu0 %v352, 12
  %v1320 = vpop.permute.xlu0 %1319
  %1321 = vrot.lane.b32.xlu0 %v354, 12
  %v1322 = vpop.permute.xlu0 %1321
  %1323 = vrot.lane.b32.xlu0 %v355, 12
  %v1324 = vpop.permute.xlu0 %1323
  %1325 = vrot.lane.b32.xlu0 %v357, 12
  %v1326 = vpop.permute.xlu0 %1325
  %1327 = vrot.lane.b32.xlu0 %v358, 12
  %v1328 = vpop.permute.xlu0 %1327
  %1329 = vrot.lane.b32.xlu0 %v360, 12
  %v1330 = vpop.permute.xlu0 %1329
  %1331 = vrot.lane.b32.xlu0 %v361, 12
  %v1332 = vpop.permute.xlu0 %1331
  %1333 = vrot.lane.b32.xlu0 %v363, 12
  %v1334 = vpop.permute.xlu0 %1333
  %1335 = vrot.lane.b32.xlu0 %v364, 12
  %v1336 = vpop.permute.xlu0 %1335
  %1337 = vrot.lane.b32.xlu0 %v366, 12
  %v1338 = vpop.permute.xlu0 %1337
  %1339 = vrot.lane.b32.xlu0 %v367, 12
  %v1340 = vpop.permute.xlu0 %1339
  %1341 = vrot.lane.b32.xlu0 %v369, 12
  %v1342 = vpop.permute.xlu0 %1341
  %1343 = vrot.lane.b32.xlu0 %v370, 12
  %v1344 = vpop.permute.xlu0 %1343
  %1345 = vrot.lane.b32.xlu0 %v372, 12
  %v1346 = vpop.permute.xlu0 %1345
  %1347 = vrot.lane.b32.xlu0 %v373, 12
  %v1348 = vpop.permute.xlu0 %1347
  %1349 = vrot.lane.b32.xlu0 %v375, 12
  %v1350 = vpop.permute.xlu0 %1349
  %1351 = vrot.lane.b32.xlu0 %v376, 12
  %v1352 = vpop.permute.xlu0 %1351
  %1353 = vrot.lane.b32.xlu0 %v384, 12
  %v1354 = vpop.permute.xlu0 %1353
  %1355 = vrot.lane.b32.xlu0 %v385, 12
  %v1356 = vpop.permute.xlu0 %1355
  %1357 = vrot.lane.b32.xlu0 %v387, 12
  %v1358 = vpop.permute.xlu0 %1357
  %1359 = vrot.lane.b32.xlu0 %v388, 12
  %v1360 = vpop.permute.xlu0 %1359
  %1361 = vrot.lane.b32.xlu0 %v390, 12
  %v1362 = vpop.permute.xlu0 %1361
  %1363 = vrot.lane.b32.xlu0 %v391, 12
  %v1364 = vpop.permute.xlu0 %1363
  %1365 = vrot.lane.b32.xlu0 %v393, 12
  %v1366 = vpop.permute.xlu0 %1365
  %1367 = vrot.lane.b32.xlu0 %v394, 12
  %v1368 = vpop.permute.xlu0 %1367
  %1369 = vrot.lane.b32.xlu0 %v396, 12
  %v1370 = vpop.permute.xlu0 %1369
  %1371 = vrot.lane.b32.xlu0 %v397, 12
  %v1372 = vpop.permute.xlu0 %1371
  %1373 = vrot.lane.b32.xlu0 %v399, 12
  %v1374 = vpop.permute.xlu0 %1373
  %1375 = vrot.lane.b32.xlu0 %v400, 12
  %v1376 = vpop.permute.xlu0 %1375
  %1377 = vrot.lane.b32.xlu0 %v402, 12
  %v1378 = vpop.permute.xlu0 %1377
  %1379 = vrot.lane.b32.xlu0 %v403, 12
  %v1380 = vpop.permute.xlu0 %1379
  %1381 = vrot.lane.b32.xlu0 %v405, 12
  %v1382 = vpop.permute.xlu0 %1381
  %1383 = vrot.lane.b32.xlu0 %v406, 12
  %v1384 = vpop.permute.xlu0 %1383
  %1385 = vrot.lane.b32.xlu0 %v408, 12
  %v1386 = vpop.permute.xlu0 %1385
  %1387 = vrot.lane.b32.xlu0 %v409, 12
  %v1388 = vpop.permute.xlu0 %1387
  %1389 = vrot.lane.b32.xlu0 %v411, 12
  %v1390 = vpop.permute.xlu0 %1389
  %1391 = vrot.lane.b32.xlu0 %v412, 12
  %v1392 = vpop.permute.xlu0 %1391
  %1393 = vrot.lane.b32.xlu0 %v414, 12
  %v1394 = vpop.permute.xlu0 %1393
  %1395 = vrot.lane.b32.xlu0 %v415, 12
  %v1396 = vpop.permute.xlu0 %1395
  %1397 = vrot.lane.b32.xlu0 %v417, 12
  %v1398 = vpop.permute.xlu0 %1397
  %1399 = vrot.lane.b32.xlu0 %v418, 12
  %v1400 = vpop.permute.xlu0 %1399
  %1401 = vrot.lane.b32.xlu0 %v420, 12
  %v1402 = vpop.permute.xlu0 %1401
  %1403 = vrot.lane.b32.xlu0 %v421, 12
  %v1404 = vpop.permute.xlu0 %1403
  %1405 = vrot.lane.b32.xlu0 %v423, 12
  %v1406 = vpop.permute.xlu0 %1405
  %1407 = vrot.lane.b32.xlu0 %v424, 12
  %v1408 = vpop.permute.xlu0 %1407
  %1409 = vrot.lane.b32.xlu0 %v426, 12
  %v1410 = vpop.permute.xlu0 %1409
  %1411 = vrot.lane.b32.xlu0 %v427, 12
  %v1412 = vpop.permute.xlu0 %1411
  %1413 = vrot.lane.b32.xlu0 %v429, 12
  %v1414 = vpop.permute.xlu0 %1413
  %1415 = vrot.lane.b32.xlu0 %v430, 12
  %v1416 = vpop.permute.xlu0 %1415
  %1481 = vrot.lane.b32.xlu0 %v539, 16
  %v1482 = vpop.permute.xlu0 %1481
  %1483 = vrot.lane.b32.xlu0 %v541, 16
  %v1484 = vpop.permute.xlu0 %1483
  %1485 = vrot.lane.b32.xlu0 %v544, 16
  %v1486 = vpop.permute.xlu0 %1485
  %1487 = vrot.lane.b32.xlu0 %v546, 16
  %v1488 = vpop.permute.xlu0 %1487
  %1489 = vrot.lane.b32.xlu0 %v549, 16
  %v1490 = vpop.permute.xlu0 %1489
  %1491 = vrot.lane.b32.xlu0 %v551, 16
  %v1492 = vpop.permute.xlu0 %1491
  %1493 = vrot.lane.b32.xlu0 %v554, 16
  %v1494 = vpop.permute.xlu0 %1493
  %1495 = vrot.lane.b32.xlu0 %v556, 16
  %v1496 = vpop.permute.xlu0 %1495
  %1497 = vrot.lane.b32.xlu0 %v559, 16
  %v1498 = vpop.permute.xlu0 %1497
  %1499 = vrot.lane.b32.xlu0 %v561, 16
  %v1500 = vpop.permute.xlu0 %1499
  %1501 = vrot.lane.b32.xlu0 %v564, 16
  %v1502 = vpop.permute.xlu0 %1501
  %1503 = vrot.lane.b32.xlu0 %v566, 16
  %v1504 = vpop.permute.xlu0 %1503
  %1505 = vrot.lane.b32.xlu0 %v569, 16
  %v1506 = vpop.permute.xlu0 %1505
  %1507 = vrot.lane.b32.xlu0 %v571, 16
  %v1508 = vpop.permute.xlu0 %1507
  %1509 = vrot.lane.b32.xlu0 %v574, 16
  %v1510 = vpop.permute.xlu0 %1509
  %1511 = vrot.lane.b32.xlu0 %v576, 16
  %v1512 = vpop.permute.xlu0 %1511
  %1513 = vrot.lane.b32.xlu0 %v579, 16
  %v1514 = vpop.permute.xlu0 %1513
  %1515 = vrot.lane.b32.xlu0 %v581, 16
  %v1516 = vpop.permute.xlu0 %1515
  %1517 = vrot.lane.b32.xlu0 %v584, 16
  %v1518 = vpop.permute.xlu0 %1517
  %1519 = vrot.lane.b32.xlu0 %v586, 16
  %v1520 = vpop.permute.xlu0 %1519
  %1521 = vrot.lane.b32.xlu0 %v589, 16
  %v1522 = vpop.permute.xlu0 %1521
  %1523 = vrot.lane.b32.xlu0 %v591, 16
  %v1524 = vpop.permute.xlu0 %1523
  %1525 = vrot.lane.b32.xlu0 %v594, 16
  %v1526 = vpop.permute.xlu0 %1525
  %1527 = vrot.lane.b32.xlu0 %v596, 16
  %v1528 = vpop.permute.xlu0 %1527
  %1529 = vrot.lane.b32.xlu0 %v599, 16
  %v1530 = vpop.permute.xlu0 %1529
  %1531 = vrot.lane.b32.xlu0 %v601, 16
  %v1532 = vpop.permute.xlu0 %1531
  %1533 = vrot.lane.b32.xlu0 %v604, 16
  %v1534 = vpop.permute.xlu0 %1533
  %1535 = vrot.lane.b32.xlu0 %v606, 16
  %v1536 = vpop.permute.xlu0 %1535
  %1537 = vrot.lane.b32.xlu0 %v609, 16
  %v1538 = vpop.permute.xlu0 %1537
  %1539 = vrot.lane.b32.xlu0 %v611, 16
  %v1540 = vpop.permute.xlu0 %1539
  %1541 = vrot.lane.b32.xlu0 %v861, 16
  %v1542 = vpop.permute.xlu0 %1541
  %1543 = vrot.lane.b32.xlu0 %v863, 16
  %v1544 = vpop.permute.xlu0 %1543
  %1545 = vrot.lane.b32.xlu0 %v619, 16
  %v1546 = vpop.permute.xlu0 %1545
  %1547 = vrot.lane.b32.xlu0 %v621, 16
  %v1548 = vpop.permute.xlu0 %1547
  %1549 = vrot.lane.b32.xlu0 %v624, 16
  %v1550 = vpop.permute.xlu0 %1549
  %1551 = vrot.lane.b32.xlu0 %v626, 16
  %v1552 = vpop.permute.xlu0 %1551
  %1553 = vrot.lane.b32.xlu0 %v629, 16
  %v1554 = vpop.permute.xlu0 %1553
  %1555 = vrot.lane.b32.xlu0 %v631, 16
  %v1556 = vpop.permute.xlu0 %1555
  %1557 = vrot.lane.b32.xlu0 %v634, 16
  %v1558 = vpop.permute.xlu0 %1557
  %1559 = vrot.lane.b32.xlu0 %v636, 16
  %v1560 = vpop.permute.xlu0 %1559
  %1561 = vrot.lane.b32.xlu0 %v639, 16
  %v1562 = vpop.permute.xlu0 %1561
  %1563 = vrot.lane.b32.xlu0 %v641, 16
  %v1564 = vpop.permute.xlu0 %1563
  %1565 = vrot.lane.b32.xlu0 %v644, 16
  %v1566 = vpop.permute.xlu0 %1565
  %1567 = vrot.lane.b32.xlu0 %v646, 16
  %v1568 = vpop.permute.xlu0 %1567
  %1569 = vrot.lane.b32.xlu0 %v649, 16
  %v1570 = vpop.permute.xlu0 %1569
  %1571 = vrot.lane.b32.xlu0 %v651, 16
  %v1572 = vpop.permute.xlu0 %1571
  %1573 = vrot.lane.b32.xlu0 %v654, 16
  %v1574 = vpop.permute.xlu0 %1573
  %1575 = vrot.lane.b32.xlu0 %v656, 16
  %v1576 = vpop.permute.xlu0 %1575
  %1577 = vrot.lane.b32.xlu0 %v659, 16
  %v1578 = vpop.permute.xlu0 %1577
  %1579 = vrot.lane.b32.xlu0 %v661, 16
  %v1580 = vpop.permute.xlu0 %1579
  %1581 = vrot.lane.b32.xlu0 %v664, 16
  %v1582 = vpop.permute.xlu0 %1581
  %1583 = vrot.lane.b32.xlu0 %v666, 16
  %v1584 = vpop.permute.xlu0 %1583
  %1585 = vrot.lane.b32.xlu0 %v669, 16
  %v1586 = vpop.permute.xlu0 %1585
  %1587 = vrot.lane.b32.xlu0 %v671, 16
  %v1588 = vpop.permute.xlu0 %1587
  %1589 = vrot.lane.b32.xlu0 %v674, 16
  %v1590 = vpop.permute.xlu0 %1589
  %1591 = vrot.lane.b32.xlu0 %v676, 16
  %v1592 = vpop.permute.xlu0 %1591
  %1593 = vrot.lane.b32.xlu0 %v679, 16
  %v1594 = vpop.permute.xlu0 %1593
  %1595 = vrot.lane.b32.xlu0 %v681, 16
  %v1596 = vpop.permute.xlu0 %1595
  %1597 = vrot.lane.b32.xlu0 %v684, 16
  %v1598 = vpop.permute.xlu0 %1597
  %1599 = vrot.lane.b32.xlu0 %v686, 16
  %v1600 = vpop.permute.xlu0 %1599
  %1601 = vrot.lane.b32.xlu0 %v689, 16
  %v1602 = vpop.permute.xlu0 %1601
  %1603 = vrot.lane.b32.xlu0 %v691, 16
  %v1604 = vpop.permute.xlu0 %1603
  %1605 = vrot.lane.b32.xlu0 %v866, 16
  %v1606 = vpop.permute.xlu0 %1605
  %1607 = vrot.lane.b32.xlu0 %v868, 16
  %v1608 = vpop.permute.xlu0 %1607
  %1673 = vrot.lane.b32.xlu0 %v700, 20
  %v1674 = vpop.permute.xlu0 %1673
  %1675 = vrot.lane.b32.xlu0 %v702, 20
  %v1676 = vpop.permute.xlu0 %1675
  %1677 = vrot.lane.b32.xlu0 %v705, 20
  %v1678 = vpop.permute.xlu0 %1677
  %1679 = vrot.lane.b32.xlu0 %v707, 20
  %v1680 = vpop.permute.xlu0 %1679
  %1681 = vrot.lane.b32.xlu0 %v710, 20
  %v1682 = vpop.permute.xlu0 %1681
  %1683 = vrot.lane.b32.xlu0 %v712, 20
  %v1684 = vpop.permute.xlu0 %1683
  %1685 = vrot.lane.b32.xlu0 %v715, 20
  %v1686 = vpop.permute.xlu0 %1685
  %1687 = vrot.lane.b32.xlu0 %v717, 20
  %v1688 = vpop.permute.xlu0 %1687
  %1689 = vrot.lane.b32.xlu0 %v720, 20
  %v1690 = vpop.permute.xlu0 %1689
  %1691 = vrot.lane.b32.xlu0 %v722, 20
  %v1692 = vpop.permute.xlu0 %1691
  %1693 = vrot.lane.b32.xlu0 %v725, 20
  %v1694 = vpop.permute.xlu0 %1693
  %1695 = vrot.lane.b32.xlu0 %v727, 20
  %v1696 = vpop.permute.xlu0 %1695
  %1697 = vrot.lane.b32.xlu0 %v730, 20
  %v1698 = vpop.permute.xlu0 %1697
  %1699 = vrot.lane.b32.xlu0 %v732, 20
  %v1700 = vpop.permute.xlu0 %1699
  %1701 = vrot.lane.b32.xlu0 %v735, 20
  %v1702 = vpop.permute.xlu0 %1701
  %1703 = vrot.lane.b32.xlu0 %v737, 20
  %v1704 = vpop.permute.xlu0 %1703
  %1705 = vrot.lane.b32.xlu0 %v740, 20
  %v1706 = vpop.permute.xlu0 %1705
  %1707 = vrot.lane.b32.xlu0 %v742, 20
  %v1708 = vpop.permute.xlu0 %1707
  %1709 = vrot.lane.b32.xlu0 %v745, 20
  %v1710 = vpop.permute.xlu0 %1709
  %1711 = vrot.lane.b32.xlu0 %v747, 20
  %v1712 = vpop.permute.xlu0 %1711
  %1713 = vrot.lane.b32.xlu0 %v750, 20
  %v1714 = vpop.permute.xlu0 %1713
  %1715 = vrot.lane.b32.xlu0 %v752, 20
  %v1716 = vpop.permute.xlu0 %1715
  %1717 = vrot.lane.b32.xlu0 %v755, 20
  %v1718 = vpop.permute.xlu0 %1717
  %1719 = vrot.lane.b32.xlu0 %v757, 20
  %v1720 = vpop.permute.xlu0 %1719
  %1721 = vrot.lane.b32.xlu0 %v760, 20
  %v1722 = vpop.permute.xlu0 %1721
  %1723 = vrot.lane.b32.xlu0 %v762, 20
  %v1724 = vpop.permute.xlu0 %1723
  %1725 = vrot.lane.b32.xlu0 %v765, 20
  %v1726 = vpop.permute.xlu0 %1725
  %1727 = vrot.lane.b32.xlu0 %v767, 20
  %v1728 = vpop.permute.xlu0 %1727
  %1729 = vrot.lane.b32.xlu0 %v770, 20
  %v1730 = vpop.permute.xlu0 %1729
  %1731 = vrot.lane.b32.xlu0 %v772, 20
  %v1732 = vpop.permute.xlu0 %1731
  %1733 = vrot.lane.b32.xlu0 %v871, 20
  %v1734 = vpop.permute.xlu0 %1733
  %1735 = vrot.lane.b32.xlu0 %v873, 20
  %v1736 = vpop.permute.xlu0 %1735
  %1737 = vrot.lane.b32.xlu0 %v780, 20
  %v1738 = vpop.permute.xlu0 %1737
  %1739 = vrot.lane.b32.xlu0 %v782, 20
  %v1740 = vpop.permute.xlu0 %1739
  %1741 = vrot.lane.b32.xlu0 %v785, 20
  %v1742 = vpop.permute.xlu0 %1741
  %1743 = vrot.lane.b32.xlu0 %v787, 20
  %v1744 = vpop.permute.xlu0 %1743
  %1745 = vrot.lane.b32.xlu0 %v790, 20
  %v1746 = vpop.permute.xlu0 %1745
  %1747 = vrot.lane.b32.xlu0 %v792, 20
  %v1748 = vpop.permute.xlu0 %1747
  %1749 = vrot.lane.b32.xlu0 %v795, 20
  %v1750 = vpop.permute.xlu0 %1749
  %1751 = vrot.lane.b32.xlu0 %v797, 20
  %v1752 = vpop.permute.xlu0 %1751
  %1753 = vrot.lane.b32.xlu0 %v800, 20
  %v1754 = vpop.permute.xlu0 %1753
  %1755 = vrot.lane.b32.xlu0 %v802, 20
  %v1756 = vpop.permute.xlu0 %1755
  %1757 = vrot.lane.b32.xlu0 %v805, 20
  %v1758 = vpop.permute.xlu0 %1757
  %1759 = vrot.lane.b32.xlu0 %v807, 20
  %v1760 = vpop.permute.xlu0 %1759
  %1761 = vrot.lane.b32.xlu0 %v810, 20
  %v1762 = vpop.permute.xlu0 %1761
  %1763 = vrot.lane.b32.xlu0 %v812, 20
  %v1764 = vpop.permute.xlu0 %1763
  %1765 = vrot.lane.b32.xlu0 %v815, 20
  %v1766 = vpop.permute.xlu0 %1765
  %1767 = vrot.lane.b32.xlu0 %v817, 20
  %v1768 = vpop.permute.xlu0 %1767
  %1769 = vrot.lane.b32.xlu0 %v820, 20
  %v1770 = vpop.permute.xlu0 %1769
  %1771 = vrot.lane.b32.xlu0 %v822, 20
  %v1772 = vpop.permute.xlu0 %1771
  %1773 = vrot.lane.b32.xlu0 %v825, 20
  %v1774 = vpop.permute.xlu0 %1773
  %1775 = vrot.lane.b32.xlu0 %v827, 20
  %v1776 = vpop.permute.xlu0 %1775
  %1777 = vrot.lane.b32.xlu0 %v830, 20
  %v1778 = vpop.permute.xlu0 %1777
  %1779 = vrot.lane.b32.xlu0 %v832, 20
  %v1780 = vpop.permute.xlu0 %1779
  %1781 = vrot.lane.b32.xlu0 %v835, 20
  %v1782 = vpop.permute.xlu0 %1781
  %1783 = vrot.lane.b32.xlu0 %v837, 20
  %v1784 = vpop.permute.xlu0 %1783
  %1785 = vrot.lane.b32.xlu0 %v840, 20
  %v1786 = vpop.permute.xlu0 %1785
  %1787 = vrot.lane.b32.xlu0 %v842, 20
  %v1788 = vpop.permute.xlu0 %1787
  %1789 = vrot.lane.b32.xlu0 %v845, 20
  %v1790 = vpop.permute.xlu0 %1789
  %1791 = vrot.lane.b32.xlu0 %v847, 20
  %v1792 = vpop.permute.xlu0 %1791
  %1793 = vrot.lane.b32.xlu0 %v850, 20
  %v1794 = vpop.permute.xlu0 %1793
  %1795 = vrot.lane.b32.xlu0 %v852, 20
  %v1796 = vpop.permute.xlu0 %1795
  %1797 = vrot.lane.b32.xlu0 %v876, 20
  %v1798 = vpop.permute.xlu0 %1797
  %1799 = vrot.lane.b32.xlu0 %v878, 20
  %v1800 = vpop.permute.xlu0 %1799
  %1865 = vrot.lane.b32.xlu0 %v333, 24
  %v1866 = vpop.permute.xlu0 %1865
  %1867 = vrot.lane.b32.xlu0 %v334, 24
  %v1868 = vpop.permute.xlu0 %1867
  %1869 = vrot.lane.b32.xlu0 %v336, 24
  %v1870 = vpop.permute.xlu0 %1869
  %1871 = vrot.lane.b32.xlu0 %v337, 24
  %v1872 = vpop.permute.xlu0 %1871
  %1873 = vrot.lane.b32.xlu0 %v339, 24
  %v1874 = vpop.permute.xlu0 %1873
  %1875 = vrot.lane.b32.xlu0 %v340, 24
  %v1876 = vpop.permute.xlu0 %1875
  %1877 = vrot.lane.b32.xlu0 %v342, 24
  %v1878 = vpop.permute.xlu0 %1877
  %1879 = vrot.lane.b32.xlu0 %v343, 24
  %v1880 = vpop.permute.xlu0 %1879
  %1881 = vrot.lane.b32.xlu0 %v345, 24
  %v1882 = vpop.permute.xlu0 %1881
  %1883 = vrot.lane.b32.xlu0 %v346, 24
  %v1884 = vpop.permute.xlu0 %1883
  %1885 = vrot.lane.b32.xlu0 %v348, 24
  %v1886 = vpop.permute.xlu0 %1885
  %1887 = vrot.lane.b32.xlu0 %v349, 24
  %v1888 = vpop.permute.xlu0 %1887
  %1889 = vrot.lane.b32.xlu0 %v351, 24
  %v1890 = vpop.permute.xlu0 %1889
  %1891 = vrot.lane.b32.xlu0 %v352, 24
  %v1892 = vpop.permute.xlu0 %1891
  %1893 = vrot.lane.b32.xlu0 %v354, 24
  %v1894 = vpop.permute.xlu0 %1893
  %1895 = vrot.lane.b32.xlu0 %v355, 24
  %v1896 = vpop.permute.xlu0 %1895
  %1897 = vrot.lane.b32.xlu0 %v357, 24
  %v1898 = vpop.permute.xlu0 %1897
  %1899 = vrot.lane.b32.xlu0 %v358, 24
  %v1900 = vpop.permute.xlu0 %1899
  %1901 = vrot.lane.b32.xlu0 %v360, 24
  %v1902 = vpop.permute.xlu0 %1901
  %1903 = vrot.lane.b32.xlu0 %v361, 24
  %v1904 = vpop.permute.xlu0 %1903
  %1905 = vrot.lane.b32.xlu0 %v363, 24
  %v1906 = vpop.permute.xlu0 %1905
  %1907 = vrot.lane.b32.xlu0 %v364, 24
  %v1908 = vpop.permute.xlu0 %1907
  %1909 = vrot.lane.b32.xlu0 %v366, 24
  %v1910 = vpop.permute.xlu0 %1909
  %1911 = vrot.lane.b32.xlu0 %v367, 24
  %v1912 = vpop.permute.xlu0 %1911
  %1913 = vrot.lane.b32.xlu0 %v369, 24
  %v1914 = vpop.permute.xlu0 %1913
  %1915 = vrot.lane.b32.xlu0 %v370, 24
  %v1916 = vpop.permute.xlu0 %1915
  %1917 = vrot.lane.b32.xlu0 %v372, 24
  %v1918 = vpop.permute.xlu0 %1917
  %1919 = vrot.lane.b32.xlu0 %v373, 24
  %v1920 = vpop.permute.xlu0 %1919
  %1921 = vrot.lane.b32.xlu0 %v375, 24
  %v1922 = vpop.permute.xlu0 %1921
  %1923 = vrot.lane.b32.xlu0 %v376, 24
  %v1924 = vpop.permute.xlu0 %1923
  %1925 = vrot.lane.b32.xlu0 %v378, 24
  %v1926 = vpop.permute.xlu0 %1925
  %1927 = vrot.lane.b32.xlu0 %v379, 24
  %v1928 = vpop.permute.xlu0 %1927
  %1929 = vrot.lane.b32.xlu0 %v387, 24
  %v1930 = vpop.permute.xlu0 %1929
  %1931 = vrot.lane.b32.xlu0 %v388, 24
  %v1932 = vpop.permute.xlu0 %1931
  %1933 = vrot.lane.b32.xlu0 %v390, 24
  %v1934 = vpop.permute.xlu0 %1933
  %1935 = vrot.lane.b32.xlu0 %v391, 24
  %v1936 = vpop.permute.xlu0 %1935
  %1937 = vrot.lane.b32.xlu0 %v393, 24
  %v1938 = vpop.permute.xlu0 %1937
  %1939 = vrot.lane.b32.xlu0 %v394, 24
  %v1940 = vpop.permute.xlu0 %1939
  %1941 = vrot.lane.b32.xlu0 %v396, 24
  %v1942 = vpop.permute.xlu0 %1941
  %1943 = vrot.lane.b32.xlu0 %v397, 24
  %v1944 = vpop.permute.xlu0 %1943
  %1945 = vrot.lane.b32.xlu0 %v399, 24
  %v1946 = vpop.permute.xlu0 %1945
  %1947 = vrot.lane.b32.xlu0 %v400, 24
  %v1948 = vpop.permute.xlu0 %1947
  %1949 = vrot.lane.b32.xlu0 %v402, 24
  %v1950 = vpop.permute.xlu0 %1949
  %1951 = vrot.lane.b32.xlu0 %v403, 24
  %v1952 = vpop.permute.xlu0 %1951
  %1953 = vrot.lane.b32.xlu0 %v405, 24
  %v1954 = vpop.permute.xlu0 %1953
  %1955 = vrot.lane.b32.xlu0 %v406, 24
  %v1956 = vpop.permute.xlu0 %1955
  %1957 = vrot.lane.b32.xlu0 %v408, 24
  %v1958 = vpop.permute.xlu0 %1957
  %1959 = vrot.lane.b32.xlu0 %v409, 24
  %v1960 = vpop.permute.xlu0 %1959
  %1961 = vrot.lane.b32.xlu0 %v411, 24
  %v1962 = vpop.permute.xlu0 %1961
  %1963 = vrot.lane.b32.xlu0 %v412, 24
  %v1964 = vpop.permute.xlu0 %1963
  %1965 = vrot.lane.b32.xlu0 %v414, 24
  %v1966 = vpop.permute.xlu0 %1965
  %1967 = vrot.lane.b32.xlu0 %v415, 24
  %v1968 = vpop.permute.xlu0 %1967
  %1969 = vrot.lane.b32.xlu0 %v417, 24
  %v1970 = vpop.permute.xlu0 %1969
  %1971 = vrot.lane.b32.xlu0 %v418, 24
  %v1972 = vpop.permute.xlu0 %1971
  %1973 = vrot.lane.b32.xlu0 %v420, 24
  %v1974 = vpop.permute.xlu0 %1973
  %1975 = vrot.lane.b32.xlu0 %v421, 24
  %v1976 = vpop.permute.xlu0 %1975
  %1977 = vrot.lane.b32.xlu0 %v423, 24
  %v1978 = vpop.permute.xlu0 %1977
  %1979 = vrot.lane.b32.xlu0 %v424, 24
  %v1980 = vpop.permute.xlu0 %1979
  %1981 = vrot.lane.b32.xlu0 %v426, 24
  %v1982 = vpop.permute.xlu0 %1981
  %1983 = vrot.lane.b32.xlu0 %v427, 24
  %v1984 = vpop.permute.xlu0 %1983
  %1985 = vrot.lane.b32.xlu0 %v429, 24
  %v1986 = vpop.permute.xlu0 %1985
  %1987 = vrot.lane.b32.xlu0 %v430, 24
  %v1988 = vpop.permute.xlu0 %1987
  %1989 = vrot.lane.b32.xlu0 %v432, 24
  %v1990 = vpop.permute.xlu0 %1989
  %1991 = vrot.lane.b32.xlu0 %v433, 24
  %v1992 = vpop.permute.xlu0 %1991
  %2057 = vrot.lane.b32.xlu0 %v544, 28
  %v2058 = vpop.permute.xlu0 %2057
  %2059 = vrot.lane.b32.xlu0 %v546, 28
  %v2060 = vpop.permute.xlu0 %2059
  %2061 = vrot.lane.b32.xlu0 %v549, 28
  %v2062 = vpop.permute.xlu0 %2061
  %2063 = vrot.lane.b32.xlu0 %v551, 28
  %v2064 = vpop.permute.xlu0 %2063
  %2065 = vrot.lane.b32.xlu0 %v554, 28
  %v2066 = vpop.permute.xlu0 %2065
  %2067 = vrot.lane.b32.xlu0 %v556, 28
  %v2068 = vpop.permute.xlu0 %2067
  %2069 = vrot.lane.b32.xlu0 %v559, 28
  %v2070 = vpop.permute.xlu0 %2069
  %2071 = vrot.lane.b32.xlu0 %v561, 28
  %v2072 = vpop.permute.xlu0 %2071
  %2073 = vrot.lane.b32.xlu0 %v564, 28
  %v2074 = vpop.permute.xlu0 %2073
  %2075 = vrot.lane.b32.xlu0 %v566, 28
  %v2076 = vpop.permute.xlu0 %2075
  %2077 = vrot.lane.b32.xlu0 %v569, 28
  %v2078 = vpop.permute.xlu0 %2077
  %2079 = vrot.lane.b32.xlu0 %v571, 28
  %v2080 = vpop.permute.xlu0 %2079
  %2081 = vrot.lane.b32.xlu0 %v574, 28
  %v2082 = vpop.permute.xlu0 %2081
  %2083 = vrot.lane.b32.xlu0 %v576, 28
  %v2084 = vpop.permute.xlu0 %2083
  %2085 = vrot.lane.b32.xlu0 %v579, 28
  %v2086 = vpop.permute.xlu0 %2085
  %2087 = vrot.lane.b32.xlu0 %v581, 28
  %v2088 = vpop.permute.xlu0 %2087
  %2089 = vrot.lane.b32.xlu0 %v584, 28
  %v2090 = vpop.permute.xlu0 %2089
  %2091 = vrot.lane.b32.xlu0 %v586, 28
  %v2092 = vpop.permute.xlu0 %2091
  %2093 = vrot.lane.b32.xlu0 %v589, 28
  %v2094 = vpop.permute.xlu0 %2093
  %2095 = vrot.lane.b32.xlu0 %v591, 28
  %v2096 = vpop.permute.xlu0 %2095
  %2097 = vrot.lane.b32.xlu0 %v594, 28
  %v2098 = vpop.permute.xlu0 %2097
  %2099 = vrot.lane.b32.xlu0 %v596, 28
  %v2100 = vpop.permute.xlu0 %2099
  %2101 = vrot.lane.b32.xlu0 %v599, 28
  %v2102 = vpop.permute.xlu0 %2101
  %2103 = vrot.lane.b32.xlu0 %v601, 28
  %v2104 = vpop.permute.xlu0 %2103
  %2105 = vrot.lane.b32.xlu0 %v604, 28
  %v2106 = vpop.permute.xlu0 %2105
  %2107 = vrot.lane.b32.xlu0 %v606, 28
  %v2108 = vpop.permute.xlu0 %2107
  %2109 = vrot.lane.b32.xlu0 %v609, 28
  %v2110 = vpop.permute.xlu0 %2109
  %2111 = vrot.lane.b32.xlu0 %v611, 28
  %v2112 = vpop.permute.xlu0 %2111
  %2113 = vrot.lane.b32.xlu0 %v861, 28
  %v2114 = vpop.permute.xlu0 %2113
  %2115 = vrot.lane.b32.xlu0 %v863, 28
  %v2116 = vpop.permute.xlu0 %2115
  %2117 = vrot.lane.b32.xlu0 %v887, 28
  %v2118 = vpop.permute.xlu0 %2117
  %2119 = vrot.lane.b32.xlu0 %v889, 28
  %v2120 = vpop.permute.xlu0 %2119
  %2121 = vrot.lane.b32.xlu0 %v624, 28
  %v2122 = vpop.permute.xlu0 %2121
  %2123 = vrot.lane.b32.xlu0 %v626, 28
  %v2124 = vpop.permute.xlu0 %2123
  %2125 = vrot.lane.b32.xlu0 %v629, 28
  %v2126 = vpop.permute.xlu0 %2125
  %2127 = vrot.lane.b32.xlu0 %v631, 28
  %v2128 = vpop.permute.xlu0 %2127
  %2129 = vrot.lane.b32.xlu0 %v634, 28
  %v2130 = vpop.permute.xlu0 %2129
  %2131 = vrot.lane.b32.xlu0 %v636, 28
  %v2132 = vpop.permute.xlu0 %2131
  %2133 = vrot.lane.b32.xlu0 %v639, 28
  %v2134 = vpop.permute.xlu0 %2133
  %2135 = vrot.lane.b32.xlu0 %v641, 28
  %v2136 = vpop.permute.xlu0 %2135
  %2137 = vrot.lane.b32.xlu0 %v644, 28
  %v2138 = vpop.permute.xlu0 %2137
  %2139 = vrot.lane.b32.xlu0 %v646, 28
  %v2140 = vpop.permute.xlu0 %2139
  %2141 = vrot.lane.b32.xlu0 %v649, 28
  %v2142 = vpop.permute.xlu0 %2141
  %2143 = vrot.lane.b32.xlu0 %v651, 28
  %v2144 = vpop.permute.xlu0 %2143
  %2145 = vrot.lane.b32.xlu0 %v654, 28
  %v2146 = vpop.permute.xlu0 %2145
  %2147 = vrot.lane.b32.xlu0 %v656, 28
  %v2148 = vpop.permute.xlu0 %2147
  %2149 = vrot.lane.b32.xlu0 %v659, 28
  %v2150 = vpop.permute.xlu0 %2149
  %2151 = vrot.lane.b32.xlu0 %v661, 28
  %v2152 = vpop.permute.xlu0 %2151
  %2153 = vrot.lane.b32.xlu0 %v664, 28
  %v2154 = vpop.permute.xlu0 %2153
  %2155 = vrot.lane.b32.xlu0 %v666, 28
  %v2156 = vpop.permute.xlu0 %2155
  %2157 = vrot.lane.b32.xlu0 %v669, 28
  %v2158 = vpop.permute.xlu0 %2157
  %2159 = vrot.lane.b32.xlu0 %v671, 28
  %v2160 = vpop.permute.xlu0 %2159
  %2161 = vrot.lane.b32.xlu0 %v674, 28
  %v2162 = vpop.permute.xlu0 %2161
  %2163 = vrot.lane.b32.xlu0 %v676, 28
  %v2164 = vpop.permute.xlu0 %2163
  %2165 = vrot.lane.b32.xlu0 %v679, 28
  %v2166 = vpop.permute.xlu0 %2165
  %2167 = vrot.lane.b32.xlu0 %v681, 28
  %v2168 = vpop.permute.xlu0 %2167
  %2169 = vrot.lane.b32.xlu0 %v684, 28
  %v2170 = vpop.permute.xlu0 %2169
  %2171 = vrot.lane.b32.xlu0 %v686, 28
  %v2172 = vpop.permute.xlu0 %2171
  %2173 = vrot.lane.b32.xlu0 %v689, 28
  %v2174 = vpop.permute.xlu0 %2173
  %2175 = vrot.lane.b32.xlu0 %v691, 28
  %v2176 = vpop.permute.xlu0 %2175
  %2177 = vrot.lane.b32.xlu0 %v866, 28
  %v2178 = vpop.permute.xlu0 %2177
  %2179 = vrot.lane.b32.xlu0 %v868, 28
  %v2180 = vpop.permute.xlu0 %2179
  %2181 = vrot.lane.b32.xlu0 %v892, 28
  %v2182 = vpop.permute.xlu0 %2181
  %2183 = vrot.lane.b32.xlu0 %v894, 28
  %v2184 = vpop.permute.xlu0 %2183
  %2249 = vrot.lane.b32.xlu0 %v705, 32
  %v2250 = vpop.permute.xlu0 %2249
  %2251 = vrot.lane.b32.xlu0 %v707, 32
  %v2252 = vpop.permute.xlu0 %2251
  %2253 = vrot.lane.b32.xlu0 %v710, 32
  %v2254 = vpop.permute.xlu0 %2253
  %2255 = vrot.lane.b32.xlu0 %v712, 32
  %v2256 = vpop.permute.xlu0 %2255
  %2257 = vrot.lane.b32.xlu0 %v715, 32
  %v2258 = vpop.permute.xlu0 %2257
  %2259 = vrot.lane.b32.xlu0 %v717, 32
  %v2260 = vpop.permute.xlu0 %2259
  %2261 = vrot.lane.b32.xlu0 %v720, 32
  %v2262 = vpop.permute.xlu0 %2261
  %2263 = vrot.lane.b32.xlu0 %v722, 32
  %v2264 = vpop.permute.xlu0 %2263
  %2265 = vrot.lane.b32.xlu0 %v725, 32
  %v2266 = vpop.permute.xlu0 %2265
  %2267 = vrot.lane.b32.xlu0 %v727, 32
  %v2268 = vpop.permute.xlu0 %2267
  %2269 = vrot.lane.b32.xlu0 %v730, 32
  %v2270 = vpop.permute.xlu0 %2269
  %2271 = vrot.lane.b32.xlu0 %v732, 32
  %v2272 = vpop.permute.xlu0 %2271
  %2273 = vrot.lane.b32.xlu0 %v735, 32
  %v2274 = vpop.permute.xlu0 %2273
  %2275 = vrot.lane.b32.xlu0 %v737, 32
  %v2276 = vpop.permute.xlu0 %2275
  %2277 = vrot.lane.b32.xlu0 %v740, 32
  %v2278 = vpop.permute.xlu0 %2277
  %2279 = vrot.lane.b32.xlu0 %v742, 32
  %v2280 = vpop.permute.xlu0 %2279
  %2281 = vrot.lane.b32.xlu0 %v745, 32
  %v2282 = vpop.permute.xlu0 %2281
  %2283 = vrot.lane.b32.xlu0 %v747, 32
  %v2284 = vpop.permute.xlu0 %2283
  %2285 = vrot.lane.b32.xlu0 %v750, 32
  %v2286 = vpop.permute.xlu0 %2285
  %2287 = vrot.lane.b32.xlu0 %v752, 32
  %v2288 = vpop.permute.xlu0 %2287
  %2289 = vrot.lane.b32.xlu0 %v755, 32
  %v2290 = vpop.permute.xlu0 %2289
  %2291 = vrot.lane.b32.xlu0 %v757, 32
  %v2292 = vpop.permute.xlu0 %2291
  %2293 = vrot.lane.b32.xlu0 %v760, 32
  %v2294 = vpop.permute.xlu0 %2293
  %2295 = vrot.lane.b32.xlu0 %v762, 32
  %v2296 = vpop.permute.xlu0 %2295
  %2297 = vrot.lane.b32.xlu0 %v765, 32
  %v2298 = vpop.permute.xlu0 %2297
  %2299 = vrot.lane.b32.xlu0 %v767, 32
  %v2300 = vpop.permute.xlu0 %2299
  %2301 = vrot.lane.b32.xlu0 %v770, 32
  %v2302 = vpop.permute.xlu0 %2301
  %2303 = vrot.lane.b32.xlu0 %v772, 32
  %v2304 = vpop.permute.xlu0 %2303
  %2305 = vrot.lane.b32.xlu0 %v871, 32
  %v2306 = vpop.permute.xlu0 %2305
  %2307 = vrot.lane.b32.xlu0 %v873, 32
  %v2308 = vpop.permute.xlu0 %2307
  %2309 = vrot.lane.b32.xlu0 %v897, 32
  %v2310 = vpop.permute.xlu0 %2309
  %2311 = vrot.lane.b32.xlu0 %v899, 32
  %v2312 = vpop.permute.xlu0 %2311
  %2313 = vrot.lane.b32.xlu0 %v785, 32
  %v2314 = vpop.permute.xlu0 %2313
  %2315 = vrot.lane.b32.xlu0 %v787, 32
  %v2316 = vpop.permute.xlu0 %2315
  %2317 = vrot.lane.b32.xlu0 %v790, 32
  %v2318 = vpop.permute.xlu0 %2317
  %2319 = vrot.lane.b32.xlu0 %v792, 32
  %v2320 = vpop.permute.xlu0 %2319
  %2321 = vrot.lane.b32.xlu0 %v795, 32
  %v2322 = vpop.permute.xlu0 %2321
  %2323 = vrot.lane.b32.xlu0 %v797, 32
  %v2324 = vpop.permute.xlu0 %2323
  %2325 = vrot.lane.b32.xlu0 %v800, 32
  %v2326 = vpop.permute.xlu0 %2325
  %2327 = vrot.lane.b32.xlu0 %v802, 32
  %v2328 = vpop.permute.xlu0 %2327
  %2329 = vrot.lane.b32.xlu0 %v805, 32
  %v2330 = vpop.permute.xlu0 %2329
  %2331 = vrot.lane.b32.xlu0 %v807, 32
  %v2332 = vpop.permute.xlu0 %2331
  %2333 = vrot.lane.b32.xlu0 %v810, 32
  %v2334 = vpop.permute.xlu0 %2333
  %2335 = vrot.lane.b32.xlu0 %v812, 32
  %v2336 = vpop.permute.xlu0 %2335
  %2337 = vrot.lane.b32.xlu0 %v815, 32
  %v2338 = vpop.permute.xlu0 %2337
  %2339 = vrot.lane.b32.xlu0 %v817, 32
  %v2340 = vpop.permute.xlu0 %2339
  %2341 = vrot.lane.b32.xlu0 %v820, 32
  %v2342 = vpop.permute.xlu0 %2341
  %2343 = vrot.lane.b32.xlu0 %v822, 32
  %v2344 = vpop.permute.xlu0 %2343
  %2345 = vrot.lane.b32.xlu0 %v825, 32
  %v2346 = vpop.permute.xlu0 %2345
  %2347 = vrot.lane.b32.xlu0 %v827, 32
  %v2348 = vpop.permute.xlu0 %2347
  %2349 = vrot.lane.b32.xlu0 %v830, 32
  %v2350 = vpop.permute.xlu0 %2349
  %2351 = vrot.lane.b32.xlu0 %v832, 32
  %v2352 = vpop.permute.xlu0 %2351
  %2353 = vrot.lane.b32.xlu0 %v835, 32
  %v2354 = vpop.permute.xlu0 %2353
  %2355 = vrot.lane.b32.xlu0 %v837, 32
  %v2356 = vpop.permute.xlu0 %2355
  %2357 = vrot.lane.b32.xlu0 %v840, 32
  %v2358 = vpop.permute.xlu0 %2357
  %2359 = vrot.lane.b32.xlu0 %v842, 32
  %v2360 = vpop.permute.xlu0 %2359
  %2361 = vrot.lane.b32.xlu0 %v845, 32
  %v2362 = vpop.permute.xlu0 %2361
  %2363 = vrot.lane.b32.xlu0 %v847, 32
  %v2364 = vpop.permute.xlu0 %2363
  %2365 = vrot.lane.b32.xlu0 %v850, 32
  %v2366 = vpop.permute.xlu0 %2365
  %2367 = vrot.lane.b32.xlu0 %v852, 32
  %v2368 = vpop.permute.xlu0 %2367
  %2369 = vrot.lane.b32.xlu0 %v876, 32
  %v2370 = vpop.permute.xlu0 %2369
  %2371 = vrot.lane.b32.xlu0 %v878, 32
  %v2372 = vpop.permute.xlu0 %2371
  %2373 = vrot.lane.b32.xlu0 %v902, 32
  %v2374 = vpop.permute.xlu0 %2373
  %2375 = vrot.lane.b32.xlu0 %v904, 32
  %v2376 = vpop.permute.xlu0 %2375
  %v2441 = vsel %vm22, %v327, %v906
  %v2442 = vsel %vm22, %v328, %v908
  %v2443 = vsel %vm22, %v330, %v910
  %v2444 = vsel %vm22, %v331, %v912
  %v2445 = vsel %vm22, %v333, %v914
  %v2446 = vsel %vm22, %v334, %v916
  %v2447 = vsel %vm22, %v336, %v918
  %v2448 = vsel %vm22, %v337, %v920
  %v2449 = vsel %vm22, %v339, %v922
  %v2450 = vsel %vm22, %v340, %v924
  %v2451 = vsel %vm22, %v342, %v926
  %v2452 = vsel %vm22, %v343, %v928
  %v2453 = vsel %vm22, %v345, %v930
  %v2454 = vsel %vm22, %v346, %v932
  %v2455 = vsel %vm22, %v348, %v934
  %v2456 = vsel %vm22, %v349, %v936
  %v2457 = vsel %vm22, %v351, %v938
  %v2458 = vsel %vm22, %v352, %v940
  %v2459 = vsel %vm22, %v354, %v942
  %v2460 = vsel %vm22, %v355, %v944
  %v2461 = vsel %vm22, %v357, %v946
  %v2462 = vsel %vm22, %v358, %v948
  %v2463 = vsel %vm22, %v360, %v950
  %v2464 = vsel %vm22, %v361, %v952
  %v2465 = vsel %vm22, %v363, %v954
  %v2466 = vsel %vm22, %v364, %v956
  %v2467 = vsel %vm22, %v366, %v958
  %v2468 = vsel %vm22, %v367, %v960
  %v2469 = vsel %vm22, %v369, %v962
  %v2470 = vsel %vm22, %v370, %v964
  %v2471 = vsel %vm22, %v372, %v966
  %v2472 = vsel %vm22, %v373, %v968
  %v2473 = vsel %vm22, %v381, %v970
  %v2474 = vsel %vm22, %v382, %v972
  %v2475 = vsel %vm22, %v384, %v974
  %v2476 = vsel %vm22, %v385, %v976
  %v2477 = vsel %vm22, %v387, %v978
  %v2478 = vsel %vm22, %v388, %v980
  %v2479 = vsel %vm22, %v390, %v982
  %v2480 = vsel %vm22, %v391, %v984
  %v2481 = vsel %vm22, %v393, %v986
  %v2482 = vsel %vm22, %v394, %v988
  %v2483 = vsel %vm22, %v396, %v990
  %v2484 = vsel %vm22, %v397, %v992
  %v2485 = vsel %vm22, %v399, %v994
  %v2486 = vsel %vm22, %v400, %v996
  %v2487 = vsel %vm22, %v402, %v998
  %v2488 = vsel %vm22, %v403, %v1000
  %v2489 = vsel %vm22, %v405, %v1002
  %v2490 = vsel %vm22, %v406, %v1004
  %v2491 = vsel %vm22, %v408, %v1006
  %v2492 = vsel %vm22, %v409, %v1008
  %v2493 = vsel %vm22, %v411, %v1010
  %v2494 = vsel %vm22, %v412, %v1012
  %v2495 = vsel %vm22, %v414, %v1014
  %v2496 = vsel %vm22, %v415, %v1016
  %v2497 = vsel %vm22, %v417, %v1018
  %v2498 = vsel %vm22, %v418, %v1020
  %v2499 = vsel %vm22, %v420, %v1022
  %v2500 = vsel %vm22, %v421, %v1024
  %v2501 = vsel %vm22, %v423, %v1026
  %v2502 = vsel %vm22, %v424, %v1028
  %v2503 = vsel %vm22, %v426, %v1030
  %v2504 = vsel %vm22, %v427, %v1032
  %v2505 = vsel %vm110, %v2441, %v1098
  %v2506 = vsel %vm110, %v2442, %v1100
  %v2507 = vsel %vm110, %v2443, %v1102
  %v2508 = vsel %vm110, %v2444, %v1104
  %v2509 = vsel %vm110, %v2445, %v1106
  %v2510 = vsel %vm110, %v2446, %v1108
  %v2511 = vsel %vm110, %v2447, %v1110
  %v2512 = vsel %vm110, %v2448, %v1112
  %v2513 = vsel %vm110, %v2449, %v1114
  %v2514 = vsel %vm110, %v2450, %v1116
  %v2515 = vsel %vm110, %v2451, %v1118
  %v2516 = vsel %vm110, %v2452, %v1120
  %v2517 = vsel %vm110, %v2453, %v1122
  %v2518 = vsel %vm110, %v2454, %v1124
  %v2519 = vsel %vm110, %v2455, %v1126
  %v2520 = vsel %vm110, %v2456, %v1128
  %v2521 = vsel %vm110, %v2457, %v1130
  %v2522 = vsel %vm110, %v2458, %v1132
  %v2523 = vsel %vm110, %v2459, %v1134
  %v2524 = vsel %vm110, %v2460, %v1136
  %v2525 = vsel %vm110, %v2461, %v1138
  %v2526 = vsel %vm110, %v2462, %v1140
  %v2527 = vsel %vm110, %v2463, %v1142
  %v2528 = vsel %vm110, %v2464, %v1144
  %v2529 = vsel %vm110, %v2465, %v1146
  %v2530 = vsel %vm110, %v2466, %v1148
  %v2531 = vsel %vm110, %v2467, %v1150
  %v2532 = vsel %vm110, %v2468, %v1152
  %v2533 = vsel %vm110, %v2469, %v1154
  %v2534 = vsel %vm110, %v2470, %v1156
  %v2535 = vsel %vm110, %v2471, %v1158
  %v2536 = vsel %vm110, %v2472, %v1160
  %v2537 = vsel %vm110, %v2473, %v1162
  %v2538 = vsel %vm110, %v2474, %v1164
  %v2539 = vsel %vm110, %v2475, %v1166
  %v2540 = vsel %vm110, %v2476, %v1168
  %v2541 = vsel %vm110, %v2477, %v1170
  %v2542 = vsel %vm110, %v2478, %v1172
  %v2543 = vsel %vm110, %v2479, %v1174
  %v2544 = vsel %vm110, %v2480, %v1176
  %v2545 = vsel %vm110, %v2481, %v1178
  %v2546 = vsel %vm110, %v2482, %v1180
  %v2547 = vsel %vm110, %v2483, %v1182
  %v2548 = vsel %vm110, %v2484, %v1184
  %v2549 = vsel %vm110, %v2485, %v1186
  %v2550 = vsel %vm110, %v2486, %v1188
  %v2551 = vsel %vm110, %v2487, %v1190
  %v2552 = vsel %vm110, %v2488, %v1192
  %v2553 = vsel %vm110, %v2489, %v1194
  %v2554 = vsel %vm110, %v2490, %v1196
  %v2555 = vsel %vm110, %v2491, %v1198
  %v2556 = vsel %vm110, %v2492, %v1200
  %v2557 = vsel %vm110, %v2493, %v1202
  %v2558 = vsel %vm110, %v2494, %v1204
  %v2559 = vsel %vm110, %v2495, %v1206
  %v2560 = vsel %vm110, %v2496, %v1208
  %v2561 = vsel %vm110, %v2497, %v1210
  %v2562 = vsel %vm110, %v2498, %v1212
  %v2563 = vsel %vm110, %v2499, %v1214
  %v2564 = vsel %vm110, %v2500, %v1216
  %v2565 = vsel %vm110, %v2501, %v1218
  %v2566 = vsel %vm110, %v2502, %v1220
  %v2567 = vsel %vm110, %v2503, %v1222
  %v2568 = vsel %vm110, %v2504, %v1224
  %vm2569 = vcmask 97280
  %v2570 = vsel %vm2569, %v2505, %v1290
  %v2571 = vsel %vm2569, %v2506, %v1292
  %v2572 = vsel %vm2569, %v2507, %v1294
  %v2573 = vsel %vm2569, %v2508, %v1296
  %v2574 = vsel %vm2569, %v2509, %v1298
  %v2575 = vsel %vm2569, %v2510, %v1300
  %v2576 = vsel %vm2569, %v2511, %v1302
  %v2577 = vsel %vm2569, %v2512, %v1304
  %v2578 = vsel %vm2569, %v2513, %v1306
  %v2579 = vsel %vm2569, %v2514, %v1308
  %v2580 = vsel %vm2569, %v2515, %v1310
  %v2581 = vsel %vm2569, %v2516, %v1312
  %v2582 = vsel %vm2569, %v2517, %v1314
  %v2583 = vsel %vm2569, %v2518, %v1316
  %v2584 = vsel %vm2569, %v2519, %v1318
  %v2585 = vsel %vm2569, %v2520, %v1320
  %v2586 = vsel %vm2569, %v2521, %v1322
  %v2587 = vsel %vm2569, %v2522, %v1324
  %v2588 = vsel %vm2569, %v2523, %v1326
  %v2589 = vsel %vm2569, %v2524, %v1328
  %v2590 = vsel %vm2569, %v2525, %v1330
  %v2591 = vsel %vm2569, %v2526, %v1332
  %v2592 = vsel %vm2569, %v2527, %v1334
  %v2593 = vsel %vm2569, %v2528, %v1336
  %v2594 = vsel %vm2569, %v2529, %v1338
  %v2595 = vsel %vm2569, %v2530, %v1340
  %v2596 = vsel %vm2569, %v2531, %v1342
  %v2597 = vsel %vm2569, %v2532, %v1344
  %v2598 = vsel %vm2569, %v2533, %v1346
  %v2599 = vsel %vm2569, %v2534, %v1348
  %v2600 = vsel %vm2569, %v2535, %v1350
  %v2601 = vsel %vm2569, %v2536, %v1352
  %v2602 = vsel %vm2569, %v2537, %v1354
  %v2603 = vsel %vm2569, %v2538, %v1356
  %v2604 = vsel %vm2569, %v2539, %v1358
  %v2605 = vsel %vm2569, %v2540, %v1360
  %v2606 = vsel %vm2569, %v2541, %v1362
  %v2607 = vsel %vm2569, %v2542, %v1364
  %v2608 = vsel %vm2569, %v2543, %v1366
  %v2609 = vsel %vm2569, %v2544, %v1368
  %v2610 = vsel %vm2569, %v2545, %v1370
  %v2611 = vsel %vm2569, %v2546, %v1372
  %v2612 = vsel %vm2569, %v2547, %v1374
  %v2613 = vsel %vm2569, %v2548, %v1376
  %v2614 = vsel %vm2569, %v2549, %v1378
  %v2615 = vsel %vm2569, %v2550, %v1380
  %v2616 = vsel %vm2569, %v2551, %v1382
  %v2617 = vsel %vm2569, %v2552, %v1384
  %v2618 = vsel %vm2569, %v2553, %v1386
  %v2619 = vsel %vm2569, %v2554, %v1388
  %v2620 = vsel %vm2569, %v2555, %v1390
  %v2621 = vsel %vm2569, %v2556, %v1392
  %v2622 = vsel %vm2569, %v2557, %v1394
  %v2623 = vsel %vm2569, %v2558, %v1396
  %v2624 = vsel %vm2569, %v2559, %v1398
  %v2625 = vsel %vm2569, %v2560, %v1400
  %v2626 = vsel %vm2569, %v2561, %v1402
  %v2627 = vsel %vm2569, %v2562, %v1404
  %v2628 = vsel %vm2569, %v2563, %v1406
  %v2629 = vsel %vm2569, %v2564, %v1408
  %v2630 = vsel %vm2569, %v2565, %v1410
  %v2631 = vsel %vm2569, %v2566, %v1412
  %v2632 = vsel %vm2569, %v2567, %v1414
  %v2633 = vsel %vm2569, %v2568, %v1416
  %vm2634 = vcmask 130048
  %v2635 = vsel %vm2634, %v2570, %v1482
  %v2636 = vsel %vm2634, %v2571, %v1484
  %v2637 = vsel %vm2634, %v2572, %v1486
  %v2638 = vsel %vm2634, %v2573, %v1488
  %v2639 = vsel %vm2634, %v2574, %v1490
  %v2640 = vsel %vm2634, %v2575, %v1492
  %v2641 = vsel %vm2634, %v2576, %v1494
  %v2642 = vsel %vm2634, %v2577, %v1496
  %v2643 = vsel %vm2634, %v2578, %v1498
  %v2644 = vsel %vm2634, %v2579, %v1500
  %v2645 = vsel %vm2634, %v2580, %v1502
  %v2646 = vsel %vm2634, %v2581, %v1504
  %v2647 = vsel %vm2634, %v2582, %v1506
  %v2648 = vsel %vm2634, %v2583, %v1508
  %v2649 = vsel %vm2634, %v2584, %v1510
  %v2650 = vsel %vm2634, %v2585, %v1512
  %v2651 = vsel %vm2634, %v2586, %v1514
  %v2652 = vsel %vm2634, %v2587, %v1516
  %v2653 = vsel %vm2634, %v2588, %v1518
  %v2654 = vsel %vm2634, %v2589, %v1520
  %v2655 = vsel %vm2634, %v2590, %v1522
  %v2656 = vsel %vm2634, %v2591, %v1524
  %v2657 = vsel %vm2634, %v2592, %v1526
  %v2658 = vsel %vm2634, %v2593, %v1528
  %v2659 = vsel %vm2634, %v2594, %v1530
  %v2660 = vsel %vm2634, %v2595, %v1532
  %v2661 = vsel %vm2634, %v2596, %v1534
  %v2662 = vsel %vm2634, %v2597, %v1536
  %v2663 = vsel %vm2634, %v2598, %v1538
  %v2664 = vsel %vm2634, %v2599, %v1540
  %v2665 = vsel %vm2634, %v2600, %v1542
  %v2666 = vsel %vm2634, %v2601, %v1544
  %v2667 = vsel %vm2634, %v2602, %v1546
  %v2668 = vsel %vm2634, %v2603, %v1548
  %v2669 = vsel %vm2634, %v2604, %v1550
  %v2670 = vsel %vm2634, %v2605, %v1552
  %v2671 = vsel %vm2634, %v2606, %v1554
  %v2672 = vsel %vm2634, %v2607, %v1556
  %v2673 = vsel %vm2634, %v2608, %v1558
  %v2674 = vsel %vm2634, %v2609, %v1560
  %v2675 = vsel %vm2634, %v2610, %v1562
  %v2676 = vsel %vm2634, %v2611, %v1564
  %v2677 = vsel %vm2634, %v2612, %v1566
  %v2678 = vsel %vm2634, %v2613, %v1568
  %v2679 = vsel %vm2634, %v2614, %v1570
  %v2680 = vsel %vm2634, %v2615, %v1572
  %v2681 = vsel %vm2634, %v2616, %v1574
  %v2682 = vsel %vm2634, %v2617, %v1576
  %v2683 = vsel %vm2634, %v2618, %v1578
  %v2684 = vsel %vm2634, %v2619, %v1580
  %v2685 = vsel %vm2634, %v2620, %v1582
  %v2686 = vsel %vm2634, %v2621, %v1584
  %v2687 = vsel %vm2634, %v2622, %v1586
  %v2688 = vsel %vm2634, %v2623, %v1588
  %v2689 = vsel %vm2634, %v2624, %v1590
  %v2690 = vsel %vm2634, %v2625, %v1592
  %v2691 = vsel %vm2634, %v2626, %v1594
  %v2692 = vsel %vm2634, %v2627, %v1596
  %v2693 = vsel %vm2634, %v2628, %v1598
  %v2694 = vsel %vm2634, %v2629, %v1600
  %v2695 = vsel %vm2634, %v2630, %v1602
  %v2696 = vsel %vm2634, %v2631, %v1604
  %v2697 = vsel %vm2634, %v2632, %v1606
  %v2698 = vsel %vm2634, %v2633, %v1608
  %vm2699 = vcmask 162816
  %v2700 = vsel %vm2699, %v2635, %v1674
  %v2701 = vsel %vm2699, %v2636, %v1676
  %v2702 = vsel %vm2699, %v2637, %v1678
  %v2703 = vsel %vm2699, %v2638, %v1680
  %v2704 = vsel %vm2699, %v2639, %v1682
  %v2705 = vsel %vm2699, %v2640, %v1684
  %v2706 = vsel %vm2699, %v2641, %v1686
  %v2707 = vsel %vm2699, %v2642, %v1688
  %v2708 = vsel %vm2699, %v2643, %v1690
  %v2709 = vsel %vm2699, %v2644, %v1692
  %v2710 = vsel %vm2699, %v2645, %v1694
  %v2711 = vsel %vm2699, %v2646, %v1696
  %v2712 = vsel %vm2699, %v2647, %v1698
  %v2713 = vsel %vm2699, %v2648, %v1700
  %v2714 = vsel %vm2699, %v2649, %v1702
  %v2715 = vsel %vm2699, %v2650, %v1704
  %v2716 = vsel %vm2699, %v2651, %v1706
  %v2717 = vsel %vm2699, %v2652, %v1708
  %v2718 = vsel %vm2699, %v2653, %v1710
  %v2719 = vsel %vm2699, %v2654, %v1712
  %v2720 = vsel %vm2699, %v2655, %v1714
  %v2721 = vsel %vm2699, %v2656, %v1716
  %v2722 = vsel %vm2699, %v2657, %v1718
  %v2723 = vsel %vm2699, %v2658, %v1720
  %v2724 = vsel %vm2699, %v2659, %v1722
  %v2725 = vsel %vm2699, %v2660, %v1724
  %v2726 = vsel %vm2699, %v2661, %v1726
  %v2727 = vsel %vm2699, %v2662, %v1728
  %v2728 = vsel %vm2699, %v2663, %v1730
  %v2729 = vsel %vm2699, %v2664, %v1732
  %v2730 = vsel %vm2699, %v2665, %v1734
  %v2731 = vsel %vm2699, %v2666, %v1736
  %v2732 = vsel %vm2699, %v2667, %v1738
  %v2733 = vsel %vm2699, %v2668, %v1740
  %v2734 = vsel %vm2699, %v2669, %v1742
  %v2735 = vsel %vm2699, %v2670, %v1744
  %v2736 = vsel %vm2699, %v2671, %v1746
  %v2737 = vsel %vm2699, %v2672, %v1748
  %v2738 = vsel %vm2699, %v2673, %v1750
  %v2739 = vsel %vm2699, %v2674, %v1752
  %v2740 = vsel %vm2699, %v2675, %v1754
  %v2741 = vsel %vm2699, %v2676, %v1756
  %v2742 = vsel %vm2699, %v2677, %v1758
  %v2743 = vsel %vm2699, %v2678, %v1760
  %v2744 = vsel %vm2699, %v2679, %v1762
  %v2745 = vsel %vm2699, %v2680, %v1764
  %v2746 = vsel %vm2699, %v2681, %v1766
  %v2747 = vsel %vm2699, %v2682, %v1768
  %v2748 = vsel %vm2699, %v2683, %v1770
  %v2749 = vsel %vm2699, %v2684, %v1772
  %v2750 = vsel %vm2699, %v2685, %v1774
  %v2751 = vsel %vm2699, %v2686, %v1776
  %v2752 = vsel %vm2699, %v2687, %v1778
  %v2753 = vsel %vm2699, %v2688, %v1780
  %v2754 = vsel %vm2699, %v2689, %v1782
  %v2755 = vsel %vm2699, %v2690, %v1784
  %v2756 = vsel %vm2699, %v2691, %v1786
  %v2757 = vsel %vm2699, %v2692, %v1788
  %v2758 = vsel %vm2699, %v2693, %v1790
  %v2759 = vsel %vm2699, %v2694, %v1792
  %v2760 = vsel %vm2699, %v2695, %v1794
  %v2761 = vsel %vm2699, %v2696, %v1796
  %v2762 = vsel %vm2699, %v2697, %v1798
  %v2763 = vsel %vm2699, %v2698, %v1800
  %vm2764 = vcmask 195584
  %v2765 = vsel %vm2764, %v2700, %v1866
  %v2766 = vsel %vm2764, %v2701, %v1868
  %v2767 = vsel %vm2764, %v2702, %v1870
  %v2768 = vsel %vm2764, %v2703, %v1872
  %v2769 = vsel %vm2764, %v2704, %v1874
  %v2770 = vsel %vm2764, %v2705, %v1876
  %v2771 = vsel %vm2764, %v2706, %v1878
  %v2772 = vsel %vm2764, %v2707, %v1880
  %v2773 = vsel %vm2764, %v2708, %v1882
  %v2774 = vsel %vm2764, %v2709, %v1884
  %v2775 = vsel %vm2764, %v2710, %v1886
  %v2776 = vsel %vm2764, %v2711, %v1888
  %v2777 = vsel %vm2764, %v2712, %v1890
  %v2778 = vsel %vm2764, %v2713, %v1892
  %v2779 = vsel %vm2764, %v2714, %v1894
  %v2780 = vsel %vm2764, %v2715, %v1896
  %v2781 = vsel %vm2764, %v2716, %v1898
  %v2782 = vsel %vm2764, %v2717, %v1900
  %v2783 = vsel %vm2764, %v2718, %v1902
  %v2784 = vsel %vm2764, %v2719, %v1904
  %v2785 = vsel %vm2764, %v2720, %v1906
  %v2786 = vsel %vm2764, %v2721, %v1908
  %v2787 = vsel %vm2764, %v2722, %v1910
  %v2788 = vsel %vm2764, %v2723, %v1912
  %v2789 = vsel %vm2764, %v2724, %v1914
  %v2790 = vsel %vm2764, %v2725, %v1916
  %v2791 = vsel %vm2764, %v2726, %v1918
  %v2792 = vsel %vm2764, %v2727, %v1920
  %v2793 = vsel %vm2764, %v2728, %v1922
  %v2794 = vsel %vm2764, %v2729, %v1924
  %v2795 = vsel %vm2764, %v2730, %v1926
  %v2796 = vsel %vm2764, %v2731, %v1928
  %v2797 = vsel %vm2764, %v2732, %v1930
  %v2798 = vsel %vm2764, %v2733, %v1932
  %v2799 = vsel %vm2764, %v2734, %v1934
  %v2800 = vsel %vm2764, %v2735, %v1936
  %v2801 = vsel %vm2764, %v2736, %v1938
  %v2802 = vsel %vm2764, %v2737, %v1940
  %v2803 = vsel %vm2764, %v2738, %v1942
  %v2804 = vsel %vm2764, %v2739, %v1944
  %v2805 = vsel %vm2764, %v2740, %v1946
  %v2806 = vsel %vm2764, %v2741, %v1948
  %v2807 = vsel %vm2764, %v2742, %v1950
  %v2808 = vsel %vm2764, %v2743, %v1952
  %v2809 = vsel %vm2764, %v2744, %v1954
  %v2810 = vsel %vm2764, %v2745, %v1956
  %v2811 = vsel %vm2764, %v2746, %v1958
  %v2812 = vsel %vm2764, %v2747, %v1960
  %v2813 = vsel %vm2764, %v2748, %v1962
  %v2814 = vsel %vm2764, %v2749, %v1964
  %v2815 = vsel %vm2764, %v2750, %v1966
  %v2816 = vsel %vm2764, %v2751, %v1968
  %v2817 = vsel %vm2764, %v2752, %v1970
  %v2818 = vsel %vm2764, %v2753, %v1972
  %v2819 = vsel %vm2764, %v2754, %v1974
  %v2820 = vsel %vm2764, %v2755, %v1976
  %v2821 = vsel %vm2764, %v2756, %v1978
  %v2822 = vsel %vm2764, %v2757, %v1980
  %v2823 = vsel %vm2764, %v2758, %v1982
  %v2824 = vsel %vm2764, %v2759, %v1984
  %v2825 = vsel %vm2764, %v2760, %v1986
  %v2826 = vsel %vm2764, %v2761, %v1988
  %v2827 = vsel %vm2764, %v2762, %v1990
  %v2828 = vsel %vm2764, %v2763, %v1992
  %vm2829 = vcmask 228352
  %v2830 = vsel %vm2829, %v2765, %v2058
  %v2831 = vsel %vm2829, %v2766, %v2060
  %v2832 = vsel %vm2829, %v2767, %v2062
  %v2833 = vsel %vm2829, %v2768, %v2064
  %v2834 = vsel %vm2829, %v2769, %v2066
  %v2835 = vsel %vm2829, %v2770, %v2068
  %v2836 = vsel %vm2829, %v2771, %v2070
  %v2837 = vsel %vm2829, %v2772, %v2072
  %v2838 = vsel %vm2829, %v2773, %v2074
  %v2839 = vsel %vm2829, %v2774, %v2076
  %v2840 = vsel %vm2829, %v2775, %v2078
  %v2841 = vsel %vm2829, %v2776, %v2080
  %v2842 = vsel %vm2829, %v2777, %v2082
  %v2843 = vsel %vm2829, %v2778, %v2084
  %v2844 = vsel %vm2829, %v2779, %v2086
  %v2845 = vsel %vm2829, %v2780, %v2088
  %v2846 = vsel %vm2829, %v2781, %v2090
  %v2847 = vsel %vm2829, %v2782, %v2092
  %v2848 = vsel %vm2829, %v2783, %v2094
  %v2849 = vsel %vm2829, %v2784, %v2096
  %v2850 = vsel %vm2829, %v2785, %v2098
  %v2851 = vsel %vm2829, %v2786, %v2100
  %v2852 = vsel %vm2829, %v2787, %v2102
  %v2853 = vsel %vm2829, %v2788, %v2104
  %v2854 = vsel %vm2829, %v2789, %v2106
  %v2855 = vsel %vm2829, %v2790, %v2108
  %v2856 = vsel %vm2829, %v2791, %v2110
  %v2857 = vsel %vm2829, %v2792, %v2112
  %v2858 = vsel %vm2829, %v2793, %v2114
  %v2859 = vsel %vm2829, %v2794, %v2116
  %v2860 = vsel %vm2829, %v2795, %v2118
  %v2861 = vsel %vm2829, %v2796, %v2120
  %v2862 = vsel %vm2829, %v2797, %v2122
  %v2863 = vsel %vm2829, %v2798, %v2124
  %v2864 = vsel %vm2829, %v2799, %v2126
  %v2865 = vsel %vm2829, %v2800, %v2128
  %v2866 = vsel %vm2829, %v2801, %v2130
  %v2867 = vsel %vm2829, %v2802, %v2132
  %v2868 = vsel %vm2829, %v2803, %v2134
  %v2869 = vsel %vm2829, %v2804, %v2136
  %v2870 = vsel %vm2829, %v2805, %v2138
  %v2871 = vsel %vm2829, %v2806, %v2140
  %v2872 = vsel %vm2829, %v2807, %v2142
  %v2873 = vsel %vm2829, %v2808, %v2144
  %v2874 = vsel %vm2829, %v2809, %v2146
  %v2875 = vsel %vm2829, %v2810, %v2148
  %v2876 = vsel %vm2829, %v2811, %v2150
  %v2877 = vsel %vm2829, %v2812, %v2152
  %v2878 = vsel %vm2829, %v2813, %v2154
  %v2879 = vsel %vm2829, %v2814, %v2156
  %v2880 = vsel %vm2829, %v2815, %v2158
  %v2881 = vsel %vm2829, %v2816, %v2160
  %v2882 = vsel %vm2829, %v2817, %v2162
  %v2883 = vsel %vm2829, %v2818, %v2164
  %v2884 = vsel %vm2829, %v2819, %v2166
  %v2885 = vsel %vm2829, %v2820, %v2168
  %v2886 = vsel %vm2829, %v2821, %v2170
  %v2887 = vsel %vm2829, %v2822, %v2172
  %v2888 = vsel %vm2829, %v2823, %v2174
  %v2889 = vsel %vm2829, %v2824, %v2176
  %v2890 = vsel %vm2829, %v2825, %v2178
  %v2891 = vsel %vm2829, %v2826, %v2180
  %v2892 = vsel %vm2829, %v2827, %v2182
  %v2893 = vsel %vm2829, %v2828, %v2184
  %vm2894 = vcmask 261120
  %v2895 = vsel %vm2894, %v2830, %v2250
  %v2896 = vsel %vm2894, %v2831, %v2252
  %v2897 = vsel %vm2894, %v2832, %v2254
  %v2898 = vsel %vm2894, %v2833, %v2256
  %v2899 = vsel %vm2894, %v2834, %v2258
  %v2900 = vsel %vm2894, %v2835, %v2260
  %v2901 = vsel %vm2894, %v2836, %v2262
  %v2902 = vsel %vm2894, %v2837, %v2264
  %v2903 = vsel %vm2894, %v2838, %v2266
  %v2904 = vsel %vm2894, %v2839, %v2268
  %v2905 = vsel %vm2894, %v2840, %v2270
  %v2906 = vsel %vm2894, %v2841, %v2272
  %v2907 = vsel %vm2894, %v2842, %v2274
  %v2908 = vsel %vm2894, %v2843, %v2276
  %v2909 = vsel %vm2894, %v2844, %v2278
  %v2910 = vsel %vm2894, %v2845, %v2280
  %v2911 = vsel %vm2894, %v2846, %v2282
  %v2912 = vsel %vm2894, %v2847, %v2284
  %v2913 = vsel %vm2894, %v2848, %v2286
  %v2914 = vsel %vm2894, %v2849, %v2288
  %v2915 = vsel %vm2894, %v2850, %v2290
  %v2916 = vsel %vm2894, %v2851, %v2292
  %v2917 = vsel %vm2894, %v2852, %v2294
  %v2918 = vsel %vm2894, %v2853, %v2296
  %v2919 = vsel %vm2894, %v2854, %v2298
  %v2920 = vsel %vm2894, %v2855, %v2300
  %v2921 = vsel %vm2894, %v2856, %v2302
  %v2922 = vsel %vm2894, %v2857, %v2304
  %v2923 = vsel %vm2894, %v2858, %v2306
  %v2924 = vsel %vm2894, %v2859, %v2308
  %v2925 = vsel %vm2894, %v2860, %v2310
  %v2926 = vsel %vm2894, %v2861, %v2312
  %v2927 = vsel %vm2894, %v2862, %v2314
  %v2928 = vsel %vm2894, %v2863, %v2316
  %v2929 = vsel %vm2894, %v2864, %v2318
  %v2930 = vsel %vm2894, %v2865, %v2320
  %v2931 = vsel %vm2894, %v2866, %v2322
  %v2932 = vsel %vm2894, %v2867, %v2324
  %v2933 = vsel %vm2894, %v2868, %v2326
  %v2934 = vsel %vm2894, %v2869, %v2328
  %v2935 = vsel %vm2894, %v2870, %v2330
  %v2936 = vsel %vm2894, %v2871, %v2332
  %v2937 = vsel %vm2894, %v2872, %v2334
  %v2938 = vsel %vm2894, %v2873, %v2336
  %v2939 = vsel %vm2894, %v2874, %v2338
  %v2940 = vsel %vm2894, %v2875, %v2340
  %v2941 = vsel %vm2894, %v2876, %v2342
  %v2942 = vsel %vm2894, %v2877, %v2344
  %v2943 = vsel %vm2894, %v2878, %v2346
  %v2944 = vsel %vm2894, %v2879, %v2348
  %v2945 = vsel %vm2894, %v2880, %v2350
  %v2946 = vsel %vm2894, %v2881, %v2352
  %v2947 = vsel %vm2894, %v2882, %v2354
  %v2948 = vsel %vm2894, %v2883, %v2356
  %v2949 = vsel %vm2894, %v2884, %v2358
  %v2950 = vsel %vm2894, %v2885, %v2360
  %v2951 = vsel %vm2894, %v2886, %v2362
  %v2952 = vsel %vm2894, %v2887, %v2364
  %v2953 = vsel %vm2894, %v2888, %v2366
  %v2954 = vsel %vm2894, %v2889, %v2368
  %v2955 = vsel %vm2894, %v2890, %v2370
  %v2956 = vsel %vm2894, %v2891, %v2372
  %v2957 = vsel %vm2894, %v2892, %v2374
  %v2958 = vsel %vm2894, %v2893, %v2376
  %v2959 = vld [vmem:[%s1] sm:$0xff]
  %v2960 = vld [vmem:[%s1 + $0x8] sm:$0xff]
  %v2961 = vld [vmem:[%s1 + $0x10] sm:$0xff]
  %v2962 = vld [vmem:[%s1 + $0x18] sm:$0xff]
  %v2963 = vld [vmem:[%s1 + $0x20] sm:$0xf]
  %v2964 = vld [vmem:[%s2] sm:$0x1]
  %v2966 = vlaneseq
  %v2967 = vshrl.u32 %v2966, 7
  %v2968 = vsub.s32 0, %v2967
  %v2969 = vrot.slane %v2964, %v2968
  %vm2971 = vcmask 293888
  %v2973 = vsel %vm2971, %v2895, 0
  %v2976 = vsel %vm2971, %v2896, 0
  %v2979 = vsel %vm2971, %v2897, 0
  %v2982 = vsel %vm2971, %v2898, 0
  %v2985 = vsel %vm2971, %v2899, 0
  %v2988 = vsel %vm2971, %v2900, 0
  %v2991 = vsel %vm2971, %v2901, 0
  %v2994 = vsel %vm2971, %v2902, 0
  %v2997 = vsel %vm2971, %v2903, 0
  %v3000 = vsel %vm2971, %v2904, 0
  %v3003 = vsel %vm2971, %v2905, 0
  %v3006 = vsel %vm2971, %v2906, 0
  %v3009 = vsel %vm2971, %v2907, 0
  %v3012 = vsel %vm2971, %v2908, 0
  %v3015 = vsel %vm2971, %v2909, 0
  %v3018 = vsel %vm2971, %v2910, 0
  %v3021 = vsel %vm2971, %v2911, 0
  %v3024 = vsel %vm2971, %v2912, 0
  %v3027 = vsel %vm2971, %v2913, 0
  %v3030 = vsel %vm2971, %v2914, 0
  %v3033 = vsel %vm2971, %v2915, 0
  %v3036 = vsel %vm2971, %v2916, 0
  %v3039 = vsel %vm2971, %v2917, 0
  %v3042 = vsel %vm2971, %v2918, 0
  %v3045 = vsel %vm2971, %v2919, 0
  %v3048 = vsel %vm2971, %v2920, 0
  %v3051 = vsel %vm2971, %v2921, 0
  %v3054 = vsel %vm2971, %v2922, 0
  %v3057 = vsel %vm2971, %v2923, 0
  %v3060 = vsel %vm2971, %v2924, 0
  %v3063 = vsel %vm2971, %v2925, 0
  %v3066 = vsel %vm2971, %v2926, 0
  %v3069 = vsel %vm2971, %v2927, 0
  %v3072 = vsel %vm2971, %v2928, 0
  %v3075 = vsel %vm2971, %v2929, 0
  %v3078 = vsel %vm2971, %v2930, 0
  %v3081 = vsel %vm2971, %v2931, 0
  %v3084 = vsel %vm2971, %v2932, 0
  %v3087 = vsel %vm2971, %v2933, 0
  %v3090 = vsel %vm2971, %v2934, 0
  %v3093 = vsel %vm2971, %v2935, 0
  %v3096 = vsel %vm2971, %v2936, 0
  %v3099 = vsel %vm2971, %v2937, 0
  %v3102 = vsel %vm2971, %v2938, 0
  %v3105 = vsel %vm2971, %v2939, 0
  %v3108 = vsel %vm2971, %v2940, 0
  %v3111 = vsel %vm2971, %v2941, 0
  %v3114 = vsel %vm2971, %v2942, 0
  %v3117 = vsel %vm2971, %v2943, 0
  %v3120 = vsel %vm2971, %v2944, 0
  %v3123 = vsel %vm2971, %v2945, 0
  %v3126 = vsel %vm2971, %v2946, 0
  %v3129 = vsel %vm2971, %v2947, 0
  %v3132 = vsel %vm2971, %v2948, 0
  %v3135 = vsel %vm2971, %v2949, 0
  %v3138 = vsel %vm2971, %v2950, 0
  %v3141 = vsel %vm2971, %v2951, 0
  %v3144 = vsel %vm2971, %v2952, 0
  %v3147 = vsel %vm2971, %v2953, 0
  %v3150 = vsel %vm2971, %v2954, 0
  %v3153 = vsel %vm2971, %v2955, 0
  %v3156 = vsel %vm2971, %v2956, 0
  %v3159 = vsel %vm2971, %v2957, 0
  %v3162 = vsel %vm2971, %v2958, 0
  %vm3164 = vcmask 1043456
  %v3166 = vsel %vm3164, %v2963, 0
  %3168 = vmatprep.subr.mxu0 0.0
  %3169 = vmatpush1.msra.mxu0 0.0
  %3170 = vmatprep.subr.mxu0 0.0
  %3171 = vmatpush1.msra.mxu0 0.0
  %3172 = vmatprep.subr.mxu0 0.0
  %3173 = vmatpush1.msra.mxu0 0.0
  %3174 = vmatprep.subr.mxu0 0.0
  %3175 = vmatpush1.msra.mxu0 0.0
  %3176 = vmatprep.subr.mxu0 0.0
  %3177 = vmatpush1.msra.mxu0 0.0
  %3178 = vmatprep.subr.mxu0 0.0
  %3179 = vmatpush1.msra.mxu0 0.0
  %3180 = vmatprep.subr.mxu0 0.0
  %3181 = vmatpush1.msra.mxu0 0.0
  %3182 = vmatprep.subr.mxu0 0.0
  %3183 = vmatpush1.msra.mxu0 0.0
  %3184 = vmatprep.subr.mxu0 0.0
  %3185 = vmatpush1.msra.mxu0 0.0
  %3186 = vmatprep.subr.mxu0 0.0
  %3187 = vmatpush1.msra.mxu0 0.0
  %3188 = vmatprep.subr.mxu0 0.0
  %3189 = vmatpush1.msra.mxu0 0.0
  %3190 = vmatprep.subr.mxu0 0.0
  %3191 = vmatpush1.msra.mxu0 %v3166
  %3192 = vmatprep.subr.mxu0 0.0
  %3193 = vmatpush1.msra.mxu0 %v2962
  %3194 = vmatprep.subr.mxu0 0.0
  %3195 = vmatpush1.msra.mxu0 %v2961
  %3196 = vmatprep.subr.mxu0 0.0
  %3197 = vmatpush1.msra.mxu0 %v2960
  %3198 = vmatprep.subr.mxu0 0.0
  %3199 = vmatpush1.msra.mxu0 %v2959
  %3200 = vmatprep.subr.mxu0 0.0
  %3201 = vmatpush2.msra.mxu0 0.0
  %3202 = vmatprep.subr.mxu0 0.0
  %3203 = vmatpush2.msra.mxu0 0.0
  %3204 = vmatprep.subr.mxu0 0.0
  %3205 = vmatpush2.msra.mxu0 0.0
  %3206 = vmatprep.subr.mxu0 0.0
  %3207 = vmatpush2.msra.mxu0 0.0
  %3208 = vmatprep.subr.mxu0 0.0
  %3209 = vmatpush2.msra.mxu0 0.0
  %3210 = vmatprep.subr.mxu0 0.0
  %3211 = vmatpush2.msra.mxu0 0.0
  %3212 = vmatprep.subr.mxu0 0.0
  %3213 = vmatpush2.msra.mxu0 0.0
  %3214 = vmatprep.subr.mxu0 0.0
  %3215 = vmatpush2.msra.mxu0 0.0
  %3216 = vmatprep.subr.mxu0 0.0
  %3217 = vmatpush2.msra.mxu0 0.0
  %3218 = vmatprep.subr.mxu0 0.0
  %3219 = vmatpush2.msra.mxu0 0.0
  %3220 = vmatprep.subr.mxu0 0.0
  %3221 = vmatpush2.msra.mxu0 0.0
  %3222 = vmatprep.subr.mxu0 0.0
  %3223 = vmatpush2.msra.mxu0 0.0
  %3224 = vmatprep.subr.mxu0 0.0
  %3225 = vmatpush2.msra.mxu0 0.0
  %3226 = vmatprep.subr.mxu0 0.0
  %3227 = vmatpush2.msra.mxu0 0.0
  %3228 = vmatprep.subr.mxu0 0.0
  %3229 = vmatpush2.msra.mxu0 0.0
  %3230 = vmatprep.subr.mxu0 0.0
  %3231 = vmatpush2.msra.mxu0 0.0
  %3232 = vmatprep.mubr.f32.mxu0 0.0
  %3233 = vmatmul.mubr.f32.gmra.mxu0 %v2973
  %v3234 = vpop.f32.mrf.mxu0
  %v3235 = vadd.f32 %v2969, %v3234
  %v3236 = vpop.f32.mrf.mxu0
  %3237 = vmatprep.mubr.f32.mxu0 0.0
  %3238 = vmatmul.mubr.f32.gmra.mxu0 %v2976
  %v3239 = vpop.f32.mrf.mxu0
  %v3240 = vadd.f32 %v2969, %v3239
  %v3241 = vpop.f32.mrf.mxu0
  %3242 = vmatprep.mubr.f32.mxu0 0.0
  %3243 = vmatmul.mubr.f32.gmra.mxu0 %v2979
  %v3244 = vpop.f32.mrf.mxu0
  %v3245 = vadd.f32 %v2969, %v3244
  %v3246 = vpop.f32.mrf.mxu0
  %3247 = vmatprep.mubr.f32.mxu0 0.0
  %3248 = vmatmul.mubr.f32.gmra.mxu0 %v2982
  %v3249 = vpop.f32.mrf.mxu0
  %v3250 = vadd.f32 %v2969, %v3249
  %v3251 = vpop.f32.mrf.mxu0
  %3252 = vmatprep.mubr.f32.mxu0 0.0
  %3253 = vmatmul.mubr.f32.gmra.mxu0 %v2985
  %v3254 = vpop.f32.mrf.mxu0
  %v3255 = vadd.f32 %v2969, %v3254
  %v3256 = vpop.f32.mrf.mxu0
  %3257 = vmatprep.mubr.f32.mxu0 0.0
  %3258 = vmatmul.mubr.f32.gmra.mxu0 %v2988
  %v3259 = vpop.f32.mrf.mxu0
  %v3260 = vadd.f32 %v2969, %v3259
  %v3261 = vpop.f32.mrf.mxu0
  %3262 = vmatprep.mubr.f32.mxu0 0.0
  %3263 = vmatmul.mubr.f32.gmra.mxu0 %v2991
  %v3264 = vpop.f32.mrf.mxu0
  %v3265 = vadd.f32 %v2969, %v3264
  %v3266 = vpop.f32.mrf.mxu0
  %3267 = vmatprep.mubr.f32.mxu0 0.0
  %3268 = vmatmul.mubr.f32.gmra.mxu0 %v2994
  %v3269 = vpop.f32.mrf.mxu0
  %v3270 = vadd.f32 %v2969, %v3269
  %v3271 = vpop.f32.mrf.mxu0
  %3272 = vmatprep.mubr.f32.mxu0 0.0
  %3273 = vmatmul.mubr.f32.gmra.mxu0 %v2997
  %v3274 = vpop.f32.mrf.mxu0
  %v3275 = vadd.f32 %v2969, %v3274
  %v3276 = vpop.f32.mrf.mxu0
  %3277 = vmatprep.mubr.f32.mxu0 0.0
  %3278 = vmatmul.mubr.f32.gmra.mxu0 %v3000
  %v3279 = vpop.f32.mrf.mxu0
  %v3280 = vadd.f32 %v2969, %v3279
  %v3281 = vpop.f32.mrf.mxu0
  %3282 = vmatprep.mubr.f32.mxu0 0.0
  %3283 = vmatmul.mubr.f32.gmra.mxu0 %v3003
  %v3284 = vpop.f32.mrf.mxu0
  %v3285 = vadd.f32 %v2969, %v3284
  %v3286 = vpop.f32.mrf.mxu0
  %3287 = vmatprep.mubr.f32.mxu0 0.0
  %3288 = vmatmul.mubr.f32.gmra.mxu0 %v3006
  %v3289 = vpop.f32.mrf.mxu0
  %v3290 = vadd.f32 %v2969, %v3289
  %v3291 = vpop.f32.mrf.mxu0
  %3292 = vmatprep.mubr.f32.mxu0 0.0
  %3293 = vmatmul.mubr.f32.gmra.mxu0 %v3009
  %v3294 = vpop.f32.mrf.mxu0
  %v3295 = vadd.f32 %v2969, %v3294
  %v3296 = vpop.f32.mrf.mxu0
  %3297 = vmatprep.mubr.f32.mxu0 0.0
  %3298 = vmatmul.mubr.f32.gmra.mxu0 %v3012
  %v3299 = vpop.f32.mrf.mxu0
  %v3300 = vadd.f32 %v2969, %v3299
  %v3301 = vpop.f32.mrf.mxu0
  %3302 = vmatprep.mubr.f32.mxu0 0.0
  %3303 = vmatmul.mubr.f32.gmra.mxu0 %v3015
  %v3304 = vpop.f32.mrf.mxu0
  %v3305 = vadd.f32 %v2969, %v3304
  %v3306 = vpop.f32.mrf.mxu0
  %3307 = vmatprep.mubr.f32.mxu0 0.0
  %3308 = vmatmul.mubr.f32.gmra.mxu0 %v3018
  %v3309 = vpop.f32.mrf.mxu0
  %v3310 = vadd.f32 %v2969, %v3309
  %v3311 = vpop.f32.mrf.mxu0
  %3312 = vmatprep.mubr.f32.mxu0 0.0
  %3313 = vmatmul.mubr.f32.gmra.mxu0 %v3021
  %v3314 = vpop.f32.mrf.mxu0
  %v3315 = vadd.f32 %v2969, %v3314
  %v3316 = vpop.f32.mrf.mxu0
  %3317 = vmatprep.mubr.f32.mxu0 0.0
  %3318 = vmatmul.mubr.f32.gmra.mxu0 %v3024
  %v3319 = vpop.f32.mrf.mxu0
  %v3320 = vadd.f32 %v2969, %v3319
  %v3321 = vpop.f32.mrf.mxu0
  %3322 = vmatprep.mubr.f32.mxu0 0.0
  %3323 = vmatmul.mubr.f32.gmra.mxu0 %v3027
  %v3324 = vpop.f32.mrf.mxu0
  %v3325 = vadd.f32 %v2969, %v3324
  %v3326 = vpop.f32.mrf.mxu0
  %3327 = vmatprep.mubr.f32.mxu0 0.0
  %3328 = vmatmul.mubr.f32.gmra.mxu0 %v3030
  %v3329 = vpop.f32.mrf.mxu0
  %v3330 = vadd.f32 %v2969, %v3329
  %v3331 = vpop.f32.mrf.mxu0
  %3332 = vmatprep.mubr.f32.mxu0 0.0
  %3333 = vmatmul.mubr.f32.gmra.mxu0 %v3033
  %v3334 = vpop.f32.mrf.mxu0
  %v3335 = vadd.f32 %v2969, %v3334
  %v3336 = vpop.f32.mrf.mxu0
  %3337 = vmatprep.mubr.f32.mxu0 0.0
  %3338 = vmatmul.mubr.f32.gmra.mxu0 %v3036
  %v3339 = vpop.f32.mrf.mxu0
  %v3340 = vadd.f32 %v2969, %v3339
  %v3341 = vpop.f32.mrf.mxu0
  %3342 = vmatprep.mubr.f32.mxu0 0.0
  %3343 = vmatmul.mubr.f32.gmra.mxu0 %v3039
  %v3344 = vpop.f32.mrf.mxu0
  %v3345 = vadd.f32 %v2969, %v3344
  %v3346 = vpop.f32.mrf.mxu0
  %3347 = vmatprep.mubr.f32.mxu0 0.0
  %3348 = vmatmul.mubr.f32.gmra.mxu0 %v3042
  %v3349 = vpop.f32.mrf.mxu0
  %v3350 = vadd.f32 %v2969, %v3349
  %v3351 = vpop.f32.mrf.mxu0
  %3352 = vmatprep.mubr.f32.mxu0 0.0
  %3353 = vmatmul.mubr.f32.gmra.mxu0 %v3045
  %v3354 = vpop.f32.mrf.mxu0
  %v3355 = vadd.f32 %v2969, %v3354
  %v3356 = vpop.f32.mrf.mxu0
  %3357 = vmatprep.mubr.f32.mxu0 0.0
  %3358 = vmatmul.mubr.f32.gmra.mxu0 %v3048
  %v3359 = vpop.f32.mrf.mxu0
  %v3360 = vadd.f32 %v2969, %v3359
  %v3361 = vpop.f32.mrf.mxu0
  %3362 = vmatprep.mubr.f32.mxu0 0.0
  %3363 = vmatmul.mubr.f32.gmra.mxu0 %v3051
  %v3364 = vpop.f32.mrf.mxu0
  %v3365 = vadd.f32 %v2969, %v3364
  %v3366 = vpop.f32.mrf.mxu0
  %3367 = vmatprep.mubr.f32.mxu0 0.0
  %3368 = vmatmul.mubr.f32.gmra.mxu0 %v3054
  %v3369 = vpop.f32.mrf.mxu0
  %v3370 = vadd.f32 %v2969, %v3369
  %v3371 = vpop.f32.mrf.mxu0
  %3372 = vmatprep.mubr.f32.mxu0 0.0
  %3373 = vmatmul.mubr.f32.gmra.mxu0 %v3057
  %v3374 = vpop.f32.mrf.mxu0
  %v3375 = vadd.f32 %v2969, %v3374
  %v3376 = vpop.f32.mrf.mxu0
  %3377 = vmatprep.mubr.f32.mxu0 0.0
  %3378 = vmatmul.mubr.f32.gmra.mxu0 %v3060
  %v3379 = vpop.f32.mrf.mxu0
  %v3380 = vadd.f32 %v2969, %v3379
  %v3381 = vpop.f32.mrf.mxu0
  %3382 = vmatprep.mubr.f32.mxu0 0.0
  %3383 = vmatmul.mubr.f32.gmra.mxu0 %v3063
  %v3384 = vpop.f32.mrf.mxu0
  %v3385 = vadd.f32 %v2969, %v3384
  %v3386 = vpop.f32.mrf.mxu0
  %3387 = vmatprep.mubr.f32.mxu0 0.0
  %3388 = vmatmul.mubr.f32.gmra.mxu0 %v3066
  %v3389 = vpop.f32.mrf.mxu0
  %v3390 = vadd.f32 %v2969, %v3389
  %v3391 = vpop.f32.mrf.mxu0
  %3392 = vmatprep.mubr.f32.mxu0 0.0
  %3393 = vmatmul.mubr.f32.gmra.mxu0 %v3069
  %v3394 = vpop.f32.mrf.mxu0
  %v3395 = vadd.f32 %v2969, %v3394
  %v3396 = vpop.f32.mrf.mxu0
  %3397 = vmatprep.mubr.f32.mxu0 0.0
  %3398 = vmatmul.mubr.f32.gmra.mxu0 %v3072
  %v3399 = vpop.f32.mrf.mxu0
  %v3400 = vadd.f32 %v2969, %v3399
  %v3401 = vpop.f32.mrf.mxu0
  %3402 = vmatprep.mubr.f32.mxu0 0.0
  %3403 = vmatmul.mubr.f32.gmra.mxu0 %v3075
  %v3404 = vpop.f32.mrf.mxu0
  %v3405 = vadd.f32 %v2969, %v3404
  %v3406 = vpop.f32.mrf.mxu0
  %3407 = vmatprep.mubr.f32.mxu0 0.0
  %3408 = vmatmul.mubr.f32.gmra.mxu0 %v3078
  %v3409 = vpop.f32.mrf.mxu0
  %v3410 = vadd.f32 %v2969, %v3409
  %v3411 = vpop.f32.mrf.mxu0
  %3412 = vmatprep.mubr.f32.mxu0 0.0
  %3413 = vmatmul.mubr.f32.gmra.mxu0 %v3081
  %v3414 = vpop.f32.mrf.mxu0
  %v3415 = vadd.f32 %v2969, %v3414
  %v3416 = vpop.f32.mrf.mxu0
  %3417 = vmatprep.mubr.f32.mxu0 0.0
  %3418 = vmatmul.mubr.f32.gmra.mxu0 %v3084
  %v3419 = vpop.f32.mrf.mxu0
  %v3420 = vadd.f32 %v2969, %v3419
  %v3421 = vpop.f32.mrf.mxu0
  %3422 = vmatprep.mubr.f32.mxu0 0.0
  %3423 = vmatmul.mubr.f32.gmra.mxu0 %v3087
  %v3424 = vpop.f32.mrf.mxu0
  %v3425 = vadd.f32 %v2969, %v3424
  %v3426 = vpop.f32.mrf.mxu0
  %3427 = vmatprep.mubr.f32.mxu0 0.0
  %3428 = vmatmul.mubr.f32.gmra.mxu0 %v3090
  %v3429 = vpop.f32.mrf.mxu0
  %v3430 = vadd.f32 %v2969, %v3429
  %v3431 = vpop.f32.mrf.mxu0
  %3432 = vmatprep.mubr.f32.mxu0 0.0
  %3433 = vmatmul.mubr.f32.gmra.mxu0 %v3093
  %v3434 = vpop.f32.mrf.mxu0
  %v3435 = vadd.f32 %v2969, %v3434
  %v3436 = vpop.f32.mrf.mxu0
  %3437 = vmatprep.mubr.f32.mxu0 0.0
  %3438 = vmatmul.mubr.f32.gmra.mxu0 %v3096
  %v3439 = vpop.f32.mrf.mxu0
  %v3440 = vadd.f32 %v2969, %v3439
  %v3441 = vpop.f32.mrf.mxu0
  %3442 = vmatprep.mubr.f32.mxu0 0.0
  %3443 = vmatmul.mubr.f32.gmra.mxu0 %v3099
  %v3444 = vpop.f32.mrf.mxu0
  %v3445 = vadd.f32 %v2969, %v3444
  %v3446 = vpop.f32.mrf.mxu0
  %3447 = vmatprep.mubr.f32.mxu0 0.0
  %3448 = vmatmul.mubr.f32.gmra.mxu0 %v3102
  %v3449 = vpop.f32.mrf.mxu0
  %v3450 = vadd.f32 %v2969, %v3449
  %v3451 = vpop.f32.mrf.mxu0
  %3452 = vmatprep.mubr.f32.mxu0 0.0
  %3453 = vmatmul.mubr.f32.gmra.mxu0 %v3105
  %v3454 = vpop.f32.mrf.mxu0
  %v3455 = vadd.f32 %v2969, %v3454
  %v3456 = vpop.f32.mrf.mxu0
  %3457 = vmatprep.mubr.f32.mxu0 0.0
  %3458 = vmatmul.mubr.f32.gmra.mxu0 %v3108
  %v3459 = vpop.f32.mrf.mxu0
  %v3460 = vadd.f32 %v2969, %v3459
  %v3461 = vpop.f32.mrf.mxu0
  %3462 = vmatprep.mubr.f32.mxu0 0.0
  %3463 = vmatmul.mubr.f32.gmra.mxu0 %v3111
  %v3464 = vpop.f32.mrf.mxu0
  %v3465 = vadd.f32 %v2969, %v3464
  %v3466 = vpop.f32.mrf.mxu0
  %3467 = vmatprep.mubr.f32.mxu0 0.0
  %3468 = vmatmul.mubr.f32.gmra.mxu0 %v3114
  %v3469 = vpop.f32.mrf.mxu0
  %v3470 = vadd.f32 %v2969, %v3469
  %v3471 = vpop.f32.mrf.mxu0
  %3472 = vmatprep.mubr.f32.mxu0 0.0
  %3473 = vmatmul.mubr.f32.gmra.mxu0 %v3117
  %v3474 = vpop.f32.mrf.mxu0
  %v3475 = vadd.f32 %v2969, %v3474
  %v3476 = vpop.f32.mrf.mxu0
  %3477 = vmatprep.mubr.f32.mxu0 0.0
  %3478 = vmatmul.mubr.f32.gmra.mxu0 %v3120
  %v3479 = vpop.f32.mrf.mxu0
  %v3480 = vadd.f32 %v2969, %v3479
  %v3481 = vpop.f32.mrf.mxu0
  %3482 = vmatprep.mubr.f32.mxu0 0.0
  %3483 = vmatmul.mubr.f32.gmra.mxu0 %v3123
  %v3484 = vpop.f32.mrf.mxu0
  %v3485 = vadd.f32 %v2969, %v3484
  %v3486 = vpop.f32.mrf.mxu0
  %3487 = vmatprep.mubr.f32.mxu0 0.0
  %3488 = vmatmul.mubr.f32.gmra.mxu0 %v3126
  %v3489 = vpop.f32.mrf.mxu0
  %v3490 = vadd.f32 %v2969, %v3489
  %v3491 = vpop.f32.mrf.mxu0
  %3492 = vmatprep.mubr.f32.mxu0 0.0
  %3493 = vmatmul.mubr.f32.gmra.mxu0 %v3129
  %v3494 = vpop.f32.mrf.mxu0
  %v3495 = vadd.f32 %v2969, %v3494
  %v3496 = vpop.f32.mrf.mxu0
  %3497 = vmatprep.mubr.f32.mxu0 0.0
  %3498 = vmatmul.mubr.f32.gmra.mxu0 %v3132
  %v3499 = vpop.f32.mrf.mxu0
  %v3500 = vadd.f32 %v2969, %v3499
  %v3501 = vpop.f32.mrf.mxu0
  %3502 = vmatprep.mubr.f32.mxu0 0.0
  %3503 = vmatmul.mubr.f32.gmra.mxu0 %v3135
  %v3504 = vpop.f32.mrf.mxu0
  %v3505 = vadd.f32 %v2969, %v3504
  %v3506 = vpop.f32.mrf.mxu0
  %3507 = vmatprep.mubr.f32.mxu0 0.0
  %3508 = vmatmul.mubr.f32.gmra.mxu0 %v3138
  %v3509 = vpop.f32.mrf.mxu0
  %v3510 = vadd.f32 %v2969, %v3509
  %v3511 = vpop.f32.mrf.mxu0
  %3512 = vmatprep.mubr.f32.mxu0 0.0
  %3513 = vmatmul.mubr.f32.gmra.mxu0 %v3141
  %v3514 = vpop.f32.mrf.mxu0
  %v3515 = vadd.f32 %v2969, %v3514
  %v3516 = vpop.f32.mrf.mxu0
  %3517 = vmatprep.mubr.f32.mxu0 0.0
  %3518 = vmatmul.mubr.f32.gmra.mxu0 %v3144
  %v3519 = vpop.f32.mrf.mxu0
  %v3520 = vadd.f32 %v2969, %v3519
  %v3521 = vpop.f32.mrf.mxu0
  %3522 = vmatprep.mubr.f32.mxu0 0.0
  %3523 = vmatmul.mubr.f32.gmra.mxu0 %v3147
  %v3524 = vpop.f32.mrf.mxu0
  %v3525 = vadd.f32 %v2969, %v3524
  %v3526 = vpop.f32.mrf.mxu0
  %3527 = vmatprep.mubr.f32.mxu0 0.0
  %3528 = vmatmul.mubr.f32.gmra.mxu0 %v3150
  %v3529 = vpop.f32.mrf.mxu0
  %v3530 = vadd.f32 %v2969, %v3529
  %v3531 = vpop.f32.mrf.mxu0
  %3532 = vmatprep.mubr.f32.mxu0 0.0
  %3533 = vmatmul.mubr.f32.gmra.mxu0 %v3153
  %v3534 = vpop.f32.mrf.mxu0
  %v3535 = vadd.f32 %v2969, %v3534
  %v3536 = vpop.f32.mrf.mxu0
  %3537 = vmatprep.mubr.f32.mxu0 0.0
  %3538 = vmatmul.mubr.f32.gmra.mxu0 %v3156
  %v3539 = vpop.f32.mrf.mxu0
  %v3540 = vadd.f32 %v2969, %v3539
  %v3541 = vpop.f32.mrf.mxu0
  %3542 = vmatprep.mubr.f32.mxu0 0.0
  %3543 = vmatmul.mubr.f32.gmra.mxu0 %v3159
  %v3544 = vpop.f32.mrf.mxu0
  %v3545 = vadd.f32 %v2969, %v3544
  %v3546 = vpop.f32.mrf.mxu0
  %3547 = vmatprep.mubr.f32.mxu0 0.0
  %3548 = vmatmul.mubr.f32.gmra.mxu0 %v3162
  %v3549 = vpop.f32.mrf.mxu0
  %v3550 = vadd.f32 %v2969, %v3549
  %v3551 = vpop.f32.mrf.mxu0
  %3552 = vdwg.mxu0
  %v3553 = vmax.f32 %v3235, 0.0
  %v3554 = vmax.f32 %v3240, 0.0
  %v3555 = vmax.f32 %v3245, 0.0
  %v3556 = vmax.f32 %v3250, 0.0
  %v3557 = vmax.f32 %v3255, 0.0
  %v3558 = vmax.f32 %v3260, 0.0
  %v3559 = vmax.f32 %v3265, 0.0
  %v3560 = vmax.f32 %v3270, 0.0
  %v3561 = vmax.f32 %v3275, 0.0
  %v3562 = vmax.f32 %v3280, 0.0
  %v3563 = vmax.f32 %v3285, 0.0
  %v3564 = vmax.f32 %v3290, 0.0
  %v3565 = vmax.f32 %v3295, 0.0
  %v3566 = vmax.f32 %v3300, 0.0
  %v3567 = vmax.f32 %v3305, 0.0
  %v3568 = vmax.f32 %v3310, 0.0
  %v3569 = vmax.f32 %v3315, 0.0
  %v3570 = vmax.f32 %v3320, 0.0
  %v3571 = vmax.f32 %v3325, 0.0
  %v3572 = vmax.f32 %v3330, 0.0
  %v3573 = vmax.f32 %v3335, 0.0
  %v3574 = vmax.f32 %v3340, 0.0
  %v3575 = vmax.f32 %v3345, 0.0
  %v3576 = vmax.f32 %v3350, 0.0
  %v3577 = vmax.f32 %v3355, 0.0
  %v3578 = vmax.f32 %v3360, 0.0
  %v3579 = vmax.f32 %v3365, 0.0
  %v3580 = vmax.f32 %v3370, 0.0
  %v3581 = vmax.f32 %v3375, 0.0
  %v3582 = vmax.f32 %v3380, 0.0
  %v3583 = vmax.f32 %v3385, 0.0
  %v3584 = vmax.f32 %v3390, 0.0
  %v3585 = vmax.f32 %v3395, 0.0
  %v3586 = vmax.f32 %v3400, 0.0
  %v3587 = vmax.f32 %v3405, 0.0
  %v3588 = vmax.f32 %v3410, 0.0
  %v3589 = vmax.f32 %v3415, 0.0
  %v3590 = vmax.f32 %v3420, 0.0
  %v3591 = vmax.f32 %v3425, 0.0
  %v3592 = vmax.f32 %v3430, 0.0
  %v3593 = vmax.f32 %v3435, 0.0
  %v3594 = vmax.f32 %v3440, 0.0
  %v3595 = vmax.f32 %v3445, 0.0
  %v3596 = vmax.f32 %v3450, 0.0
  %v3597 = vmax.f32 %v3455, 0.0
  %v3598 = vmax.f32 %v3460, 0.0
  %v3599 = vmax.f32 %v3465, 0.0
  %v3600 = vmax.f32 %v3470, 0.0
  %v3601 = vmax.f32 %v3475, 0.0
  %v3602 = vmax.f32 %v3480, 0.0
  %v3603 = vmax.f32 %v3485, 0.0
  %v3604 = vmax.f32 %v3490, 0.0
  %v3605 = vmax.f32 %v3495, 0.0
  %v3606 = vmax.f32 %v3500, 0.0
  %v3607 = vmax.f32 %v3505, 0.0
  %v3608 = vmax.f32 %v3510, 0.0
  %v3609 = vmax.f32 %v3515, 0.0
  %v3610 = vmax.f32 %v3520, 0.0
  %v3611 = vmax.f32 %v3525, 0.0
  %v3612 = vmax.f32 %v3530, 0.0
  %v3613 = vmax.f32 %v3535, 0.0
  %v3614 = vmax.f32 %v3540, 0.0
  %v3615 = vmax.f32 %v3545, 0.0
  %v3616 = vmax.f32 %v3550, 0.0
  %s3617 = scalar_lea.vmem [#allocation3], 24
  %3618 = vst.msk [vmem:[%s3617 + $0x1] sm:$0xff] %vm110, %v3553
  %3619 = vst.msk [vmem:[%s3617 + $0x9] sm:$0xff] %vm110, %v3554
  %3620 = vst.msk [vmem:[%s3617 + $0x19] sm:$0xff] %vm110, %v3555
  %3621 = vst.msk [vmem:[%s3617 + $0x21] sm:$0xff] %vm110, %v3556
  %3622 = vst.msk [vmem:[%s3617 + $0x31] sm:$0xff] %vm110, %v3557
  %3623 = vst.msk [vmem:[%s3617 + $0x39] sm:$0xff] %vm110, %v3558
  %3624 = vst.msk [vmem:[%s3617 + $0x49] sm:$0xff] %vm110, %v3559
  %3625 = vst.msk [vmem:[%s3617 + $0x51] sm:$0xff] %vm110, %v3560
  %3626 = vst.msk [vmem:[%s3617 + $0x61] sm:$0xff] %vm110, %v3561
  %3627 = vst.msk [vmem:[%s3617 + $0x69] sm:$0xff] %vm110, %v3562
  %3628 = vst.msk [vmem:[%s3617 + $0x79] sm:$0xff] %vm110, %v3563
  %3629 = vst.msk [vmem:[%s3617 + $0x81] sm:$0xff] %vm110, %v3564
  %3630 = vst.msk [vmem:[%s3617 + $0x91] sm:$0xff] %vm110, %v3565
  %3631 = vst.msk [vmem:[%s3617 + $0x99] sm:$0xff] %vm110, %v3566
  %3632 = vst.msk [vmem:[%s3617 + $0xa9] sm:$0xff] %vm110, %v3567
  %3633 = vst.msk [vmem:[%s3617 + $0xb1] sm:$0xff] %vm110, %v3568
  %3634 = vst.msk [vmem:[%s3617 + $0xc1] sm:$0xff] %vm110, %v3569
  %3635 = vst.msk [vmem:[%s3617 + $0xc9] sm:$0xff] %vm110, %v3570
  %3636 = vst.msk [vmem:[%s3617 + $0xd9] sm:$0xff] %vm110, %v3571
  %3637 = vst.msk [vmem:[%s3617 + $0xe1] sm:$0xff] %vm110, %v3572
  %3638 = vst.msk [vmem:[%s3617 + $0xf1] sm:$0xff] %vm110, %v3573
  %3639 = vst.msk [vmem:[%s3617 + $0xf9] sm:$0xff] %vm110, %v3574
  %3640 = vst.msk [vmem:[%s3617 + $0x109] sm:$0xff] %vm110, %v3575
  %3641 = vst.msk [vmem:[%s3617 + $0x111] sm:$0xff] %vm110, %v3576
  %3642 = vst.msk [vmem:[%s3617 + $0x121] sm:$0xff] %vm110, %v3577
  %3643 = vst.msk [vmem:[%s3617 + $0x129] sm:$0xff] %vm110, %v3578
  %3644 = vst.msk [vmem:[%s3617 + $0x139] sm:$0xff] %vm110, %v3579
  %3645 = vst.msk [vmem:[%s3617 + $0x141] sm:$0xff] %vm110, %v3580
  %3646 = vst.msk [vmem:[%s3617 + $0x151] sm:$0xff] %vm110, %v3581
  %3647 = vst.msk [vmem:[%s3617 + $0x159] sm:$0xff] %vm110, %v3582
  %3648 = vst.msk [vmem:[%s3617 + $0x169] sm:$0xff] %vm110, %v3583
  %3649 = vst.msk [vmem:[%s3617 + $0x171] sm:$0xff] %vm110, %v3584
  %3650 = vst.msk [vmem:[%s3617 + $0x1b1] sm:$0xff] %vm110, %v3585
  %3651 = vst.msk [vmem:[%s3617 + $0x1b9] sm:$0xff] %vm110, %v3586
  %3652 = vst.msk [vmem:[%s3617 + $0x1c9] sm:$0xff] %vm110, %v3587
  %3653 = vst.msk [vmem:[%s3617 + $0x1d1] sm:$0xff] %vm110, %v3588
  %3654 = vst.msk [vmem:[%s3617 + $0x1e1] sm:$0xff] %vm110, %v3589
  %3655 = vst.msk [vmem:[%s3617 + $0x1e9] sm:$0xff] %vm110, %v3590
  %3656 = vst.msk [vmem:[%s3617 + $0x1f9] sm:$0xff] %vm110, %v3591
  %3657 = vst.msk [vmem:[%s3617 + $0x201] sm:$0xff] %vm110, %v3592
  %3658 = vst.msk [vmem:[%s3617 + $0x211] sm:$0xff] %vm110, %v3593
  %3659 = vst.msk [vmem:[%s3617 + $0x219] sm:$0xff] %vm110, %v3594
  %3660 = vst.msk [vmem:[%s3617 + $0x229] sm:$0xff] %vm110, %v3595
  %3661 = vst.msk [vmem:[%s3617 + $0x231] sm:$0xff] %vm110, %v3596
  %3662 = vst.msk [vmem:[%s3617 + $0x241] sm:$0xff] %vm110, %v3597
  %3663 = vst.msk [vmem:[%s3617 + $0x249] sm:$0xff] %vm110, %v3598
  %3664 = vst.msk [vmem:[%s3617 + $0x259] sm:$0xff] %vm110, %v3599
  %3665 = vst.msk [vmem:[%s3617 + $0x261] sm:$0xff] %vm110, %v3600
  %3666 = vst.msk [vmem:[%s3617 + $0x271] sm:$0xff] %vm110, %v3601
  %3667 = vst.msk [vmem:[%s3617 + $0x279] sm:$0xff] %vm110, %v3602
  %3668 = vst.msk [vmem:[%s3617 + $0x289] sm:$0xff] %vm110, %v3603
  %3669 = vst.msk [vmem:[%s3617 + $0x291] sm:$0xff] %vm110, %v3604
  %3670 = vst.msk [vmem:[%s3617 + $0x2a1] sm:$0xff] %vm110, %v3605
  %3671 = vst.msk [vmem:[%s3617 + $0x2a9] sm:$0xff] %vm110, %v3606
  %3672 = vst.msk [vmem:[%s3617 + $0x2b9] sm:$0xff] %vm110, %v3607
  %3673 = vst.msk [vmem:[%s3617 + $0x2c1] sm:$0xff] %vm110, %v3608
  %3674 = vst.msk [vmem:[%s3617 + $0x2d1] sm:$0xff] %vm110, %v3609
  %3675 = vst.msk [vmem:[%s3617 + $0x2d9] sm:$0xff] %vm110, %v3610
  %3676 = vst.msk [vmem:[%s3617 + $0x2e9] sm:$0xff] %vm110, %v3611
  %3677 = vst.msk [vmem:[%s3617 + $0x2f1] sm:$0xff] %vm110, %v3612
  %3678 = vst.msk [vmem:[%s3617 + $0x301] sm:$0xff] %vm110, %v3613
  %3679 = vst.msk [vmem:[%s3617 + $0x309] sm:$0xff] %vm110, %v3614
  %3680 = vst.msk [vmem:[%s3617 + $0x319] sm:$0xff] %vm110, %v3615
  %3681 = vst.msk [vmem:[%s3617 + $0x321] sm:$0xff] %vm110, %v3616
  %v3682 = vld [vmem:[#allocation3] sm:$0xff]
  %v3683 = vld [vmem:[#allocation3 + $0x8] sm:$0xff]
  %v3684 = vld [vmem:[#allocation3 + $0x10] sm:$0x3]
  %v3685 = vld [vmem:[#allocation3 + $0x18] sm:$0xff]
  %v3686 = vld [vmem:[#allocation3 + $0x20] sm:$0xff]
  %v3687 = vld [vmem:[#allocation3 + $0x28] sm:$0x3]
  %v3688 = vld [vmem:[#allocation3 + $0x30] sm:$0xff]
  %v3689 = vld [vmem:[#allocation3 + $0x38] sm:$0xff]
  %v3690 = vld [vmem:[#allocation3 + $0x40] sm:$0x3]
  %v3691 = vld [vmem:[#allocation3 + $0x48] sm:$0xff]
  %v3692 = vld [vmem:[#allocation3 + $0x50] sm:$0xff]
  %v3693 = vld [vmem:[#allocation3 + $0x58] sm:$0x3]
  %v3694 = vld [vmem:[#allocation3 + $0x60] sm:$0xff]
  %v3695 = vld [vmem:[#allocation3 + $0x68] sm:$0xff]
  %v3696 = vld [vmem:[#allocation3 + $0x70] sm:$0x3]
  %v3697 = vld [vmem:[#allocation3 + $0x78] sm:$0xff]
  %v3698 = vld [vmem:[#allocation3 + $0x80] sm:$0xff]
  %v3699 = vld [vmem:[#allocation3 + $0x88] sm:$0x3]
  %v3700 = vld [vmem:[#allocation3 + $0x90] sm:$0xff]
  %v3701 = vld [vmem:[#allocation3 + $0x98] sm:$0xff]
  %v3702 = vld [vmem:[#allocation3 + $0xa0] sm:$0x3]
  %v3703 = vld [vmem:[#allocation3 + $0xa8] sm:$0xff]
  %v3704 = vld [vmem:[#allocation3 + $0xb0] sm:$0xff]
  %v3705 = vld [vmem:[#allocation3 + $0xb8] sm:$0x3]
  %v3706 = vld [vmem:[#allocation3 + $0xc0] sm:$0xff]
  %v3707 = vld [vmem:[#allocation3 + $0xc8] sm:$0xff]
  %v3708 = vld [vmem:[#allocation3 + $0xd0] sm:$0x3]
  %v3709 = vld [vmem:[#allocation3 + $0xd8] sm:$0xff]
  %v3710 = vld [vmem:[#allocation3 + $0xe0] sm:$0xff]
  %v3711 = vld [vmem:[#allocation3 + $0xe8] sm:$0x3]
  %v3712 = vld [vmem:[#allocation3 + $0xf0] sm:$0xff]
  %v3713 = vld [vmem:[#allocation3 + $0xf8] sm:$0xff]
  %v3714 = vld [vmem:[#allocation3 + $0x100] sm:$0x3]
  %v3715 = vld [vmem:[#allocation3 + $0x108] sm:$0xff]
  %v3716 = vld [vmem:[#allocation3 + $0x110] sm:$0xff]
  %v3717 = vld [vmem:[#allocation3 + $0x118] sm:$0x3]
  %v3718 = vld [vmem:[#allocation3 + $0x120] sm:$0xff]
  %v3719 = vld [vmem:[#allocation3 + $0x128] sm:$0xff]
  %v3720 = vld [vmem:[#allocation3 + $0x130] sm:$0x3]
  %v3721 = vld [vmem:[#allocation3 + $0x138] sm:$0xff]
  %v3722 = vld [vmem:[#allocation3 + $0x140] sm:$0xff]
  %v3723 = vld [vmem:[#allocation3 + $0x148] sm:$0x3]
  %v3724 = vld [vmem:[#allocation3 + $0x150] sm:$0xff]
  %v3725 = vld [vmem:[#allocation3 + $0x158] sm:$0xff]
  %v3726 = vld [vmem:[#allocation3 + $0x160] sm:$0x3]
  %v3727 = vld [vmem:[#allocation3 + $0x168] sm:$0xff]
  %v3728 = vld [vmem:[#allocation3 + $0x170] sm:$0xff]
  %v3729 = vld [vmem:[#allocation3 + $0x178] sm:$0x3]
  %v3730 = vld [vmem:[#allocation3 + $0x180] sm:$0xff]
  %v3731 = vld [vmem:[#allocation3 + $0x188] sm:$0xff]
  %v3732 = vld [vmem:[#allocation3 + $0x190] sm:$0x3]
  %v3733 = vld [vmem:[#allocation3 + $0x198] sm:$0xff]
  %v3734 = vld [vmem:[#allocation3 + $0x1a0] sm:$0xff]
  %v3735 = vld [vmem:[#allocation3 + $0x1a8] sm:$0x3]
  %v3736 = vld [vmem:[#allocation3 + $0x1b0] sm:$0xff]
  %v3737 = vld [vmem:[#allocation3 + $0x1b8] sm:$0xff]
  %v3738 = vld [vmem:[#allocation3 + $0x1c0] sm:$0x3]
  %v3739 = vld [vmem:[#allocation3 + $0x1c8] sm:$0xff]
  %v3740 = vld [vmem:[#allocation3 + $0x1d0] sm:$0xff]
  %v3741 = vld [vmem:[#allocation3 + $0x1d8] sm:$0x3]
  %v3742 = vld [vmem:[#allocation3 + $0x1e0] sm:$0xff]
  %v3743 = vld [vmem:[#allocation3 + $0x1e8] sm:$0xff]
  %v3744 = vld [vmem:[#allocation3 + $0x1f0] sm:$0x3]
  %v3745 = vld [vmem:[#allocation3 + $0x1f8] sm:$0xff]
  %v3746 = vld [vmem:[#allocation3 + $0x200] sm:$0xff]
  %v3747 = vld [vmem:[#allocation3 + $0x208] sm:$0x3]
  %v3748 = vld [vmem:[#allocation3 + $0x210] sm:$0xff]
  %v3749 = vld [vmem:[#allocation3 + $0x218] sm:$0xff]
  %v3750 = vld [vmem:[#allocation3 + $0x220] sm:$0x3]
  %v3751 = vld [vmem:[#allocation3 + $0x228] sm:$0xff]
  %v3752 = vld [vmem:[#allocation3 + $0x230] sm:$0xff]
  %v3753 = vld [vmem:[#allocation3 + $0x238] sm:$0x3]
  %v3754 = vld [vmem:[#allocation3 + $0x240] sm:$0xff]
  %v3755 = vld [vmem:[#allocation3 + $0x248] sm:$0xff]
  %v3756 = vld [vmem:[#allocation3 + $0x250] sm:$0x3]
  %v3757 = vld [vmem:[#allocation3 + $0x258] sm:$0xff]
  %v3758 = vld [vmem:[#allocation3 + $0x260] sm:$0xff]
  %v3759 = vld [vmem:[#allocation3 + $0x268] sm:$0x3]
  %v3760 = vld [vmem:[#allocation3 + $0x270] sm:$0xff]
  %v3761 = vld [vmem:[#allocation3 + $0x278] sm:$0xff]
  %v3762 = vld [vmem:[#allocation3 + $0x280] sm:$0x3]
  %v3763 = vld [vmem:[#allocation3 + $0x288] sm:$0xff]
  %v3764 = vld [vmem:[#allocation3 + $0x290] sm:$0xff]
  %v3765 = vld [vmem:[#allocation3 + $0x298] sm:$0x3]
  %v3766 = vld [vmem:[#allocation3 + $0x2a0] sm:$0xff]
  %v3767 = vld [vmem:[#allocation3 + $0x2a8] sm:$0xff]
  %v3768 = vld [vmem:[#allocation3 + $0x2b0] sm:$0x3]
  %v3769 = vld [vmem:[#allocation3 + $0x2b8] sm:$0xff]
  %v3770 = vld [vmem:[#allocation3 + $0x2c0] sm:$0xff]
  %v3771 = vld [vmem:[#allocation3 + $0x2c8] sm:$0x3]
  %v3772 = vld [vmem:[#allocation3 + $0x2d0] sm:$0xff]
  %v3773 = vld [vmem:[#allocation3 + $0x2d8] sm:$0xff]
  %v3774 = vld [vmem:[#allocation3 + $0x2e0] sm:$0x3]
  %v3775 = vld [vmem:[#allocation3 + $0x2e8] sm:$0xff]
  %v3776 = vld [vmem:[#allocation3 + $0x2f0] sm:$0xff]
  %v3777 = vld [vmem:[#allocation3 + $0x2f8] sm:$0x3]
  %v3778 = vld [vmem:[#allocation3 + $0x300] sm:$0xff]
  %v3779 = vld [vmem:[#allocation3 + $0x308] sm:$0xff]
  %v3780 = vld [vmem:[#allocation3 + $0x310] sm:$0x3]
  %v3781 = vld [vmem:[#allocation3 + $0x318] sm:$0xff]
  %v3782 = vld [vmem:[#allocation3 + $0x320] sm:$0xff]
  %v3783 = vld [vmem:[#allocation3 + $0x328] sm:$0x3]
  %v3784 = vld [vmem:[#allocation3 + $0x330] sm:$0xff]
  %v3785 = vld [vmem:[#allocation3 + $0x338] sm:$0xff]
  %v3786 = vld [vmem:[#allocation3 + $0x340] sm:$0x3]
  %v3787 = vld [vmem:[#allocation3 + $0x348] sm:$0xff]
  %v3788 = vld [vmem:[#allocation3 + $0x350] sm:$0xff]
  %v3789 = vld [vmem:[#allocation3 + $0x358] sm:$0x3]
  %v3886 = vrot.slane %v3682, 1
  %v3887 = vrot.slane %v3683, 1
  %v3888 = vsel %vm531, %v3886, %v3887
  %v3889 = vrot.slane %v3684, 1
  %v3890 = vsel %vm531, %v3887, %v3889
  %v3891 = vrot.slane %v3685, 1
  %v3892 = vrot.slane %v3686, 1
  %v3893 = vsel %vm531, %v3891, %v3892
  %v3894 = vrot.slane %v3687, 1
  %v3895 = vsel %vm531, %v3892, %v3894
  %v3896 = vrot.slane %v3688, 1
  %v3897 = vrot.slane %v3689, 1
  %v3898 = vsel %vm531, %v3896, %v3897
  %v3899 = vrot.slane %v3690, 1
  %v3900 = vsel %vm531, %v3897, %v3899
  %v3901 = vrot.slane %v3691, 1
  %v3902 = vrot.slane %v3692, 1
  %v3903 = vsel %vm531, %v3901, %v3902
  %v3904 = vrot.slane %v3693, 1
  %v3905 = vsel %vm531, %v3902, %v3904
  %v3906 = vrot.slane %v3694, 1
  %v3907 = vrot.slane %v3695, 1
  %v3908 = vsel %vm531, %v3906, %v3907
  %v3909 = vrot.slane %v3696, 1
  %v3910 = vsel %vm531, %v3907, %v3909
  %v3911 = vrot.slane %v3697, 1
  %v3912 = vrot.slane %v3698, 1
  %v3913 = vsel %vm531, %v3911, %v3912
  %v3914 = vrot.slane %v3699, 1
  %v3915 = vsel %vm531, %v3912, %v3914
  %v3916 = vrot.slane %v3700, 1
  %v3917 = vrot.slane %v3701, 1
  %v3918 = vsel %vm531, %v3916, %v3917
  %v3919 = vrot.slane %v3702, 1
  %v3920 = vsel %vm531, %v3917, %v3919
  %v3921 = vrot.slane %v3703, 1
  %v3922 = vrot.slane %v3704, 1
  %v3923 = vsel %vm531, %v3921, %v3922
  %v3924 = vrot.slane %v3705, 1
  %v3925 = vsel %vm531, %v3922, %v3924
  %v3926 = vrot.slane %v3706, 1
  %v3927 = vrot.slane %v3707, 1
  %v3928 = vsel %vm531, %v3926, %v3927
  %v3929 = vrot.slane %v3708, 1
  %v3930 = vsel %vm531, %v3927, %v3929
  %v3931 = vrot.slane %v3709, 1
  %v3932 = vrot.slane %v3710, 1
  %v3933 = vsel %vm531, %v3931, %v3932
  %v3934 = vrot.slane %v3711, 1
  %v3935 = vsel %vm531, %v3932, %v3934
  %v3936 = vrot.slane %v3712, 1
  %v3937 = vrot.slane %v3713, 1
  %v3938 = vsel %vm531, %v3936, %v3937
  %v3939 = vrot.slane %v3714, 1
  %v3940 = vsel %vm531, %v3937, %v3939
  %v3941 = vrot.slane %v3715, 1
  %v3942 = vrot.slane %v3716, 1
  %v3943 = vsel %vm531, %v3941, %v3942
  %v3944 = vrot.slane %v3717, 1
  %v3945 = vsel %vm531, %v3942, %v3944
  %v3946 = vrot.slane %v3718, 1
  %v3947 = vrot.slane %v3719, 1
  %v3948 = vsel %vm531, %v3946, %v3947
  %v3949 = vrot.slane %v3720, 1
  %v3950 = vsel %vm531, %v3947, %v3949
  %v3951 = vrot.slane %v3721, 1
  %v3952 = vrot.slane %v3722, 1
  %v3953 = vsel %vm531, %v3951, %v3952
  %v3954 = vrot.slane %v3723, 1
  %v3955 = vsel %vm531, %v3952, %v3954
  %v3956 = vrot.slane %v3724, 1
  %v3957 = vrot.slane %v3725, 1
  %v3958 = vsel %vm531, %v3956, %v3957
  %v3959 = vrot.slane %v3726, 1
  %v3960 = vsel %vm531, %v3957, %v3959
  %v3961 = vrot.slane %v3727, 1
  %v3962 = vrot.slane %v3728, 1
  %v3963 = vsel %vm531, %v3961, %v3962
  %v3964 = vrot.slane %v3729, 1
  %v3965 = vsel %vm531, %v3962, %v3964
  %v3966 = vrot.slane %v3736, 1
  %v3967 = vrot.slane %v3737, 1
  %v3968 = vsel %vm531, %v3966, %v3967
  %v3969 = vrot.slane %v3738, 1
  %v3970 = vsel %vm531, %v3967, %v3969
  %v3971 = vrot.slane %v3739, 1
  %v3972 = vrot.slane %v3740, 1
  %v3973 = vsel %vm531, %v3971, %v3972
  %v3974 = vrot.slane %v3741, 1
  %v3975 = vsel %vm531, %v3972, %v3974
  %v3976 = vrot.slane %v3742, 1
  %v3977 = vrot.slane %v3743, 1
  %v3978 = vsel %vm531, %v3976, %v3977
  %v3979 = vrot.slane %v3744, 1
  %v3980 = vsel %vm531, %v3977, %v3979
  %v3981 = vrot.slane %v3745, 1
  %v3982 = vrot.slane %v3746, 1
  %v3983 = vsel %vm531, %v3981, %v3982
  %v3984 = vrot.slane %v3747, 1
  %v3985 = vsel %vm531, %v3982, %v3984
  %v3986 = vrot.slane %v3748, 1
  %v3987 = vrot.slane %v3749, 1
  %v3988 = vsel %vm531, %v3986, %v3987
  %v3989 = vrot.slane %v3750, 1
  %v3990 = vsel %vm531, %v3987, %v3989
  %v3991 = vrot.slane %v3751, 1
  %v3992 = vrot.slane %v3752, 1
  %v3993 = vsel %vm531, %v3991, %v3992
  %v3994 = vrot.slane %v3753, 1
  %v3995 = vsel %vm531, %v3992, %v3994
  %v3996 = vrot.slane %v3754, 1
  %v3997 = vrot.slane %v3755, 1
  %v3998 = vsel %vm531, %v3996, %v3997
  %v3999 = vrot.slane %v3756, 1
  %v4000 = vsel %vm531, %v3997, %v3999
  %v4001 = vrot.slane %v3757, 1
  %v4002 = vrot.slane %v3758, 1
  %v4003 = vsel %vm531, %v4001, %v4002
  %v4004 = vrot.slane %v3759, 1
  %v4005 = vsel %vm531, %v4002, %v4004
  %v4006 = vrot.slane %v3760, 1
  %v4007 = vrot.slane %v3761, 1
  %v4008 = vsel %vm531, %v4006, %v4007
  %v4009 = vrot.slane %v3762, 1
  %v4010 = vsel %vm531, %v4007, %v4009
  %v4011 = vrot.slane %v3763, 1
  %v4012 = vrot.slane %v3764, 1
  %v4013 = vsel %vm531, %v4011, %v4012
  %v4014 = vrot.slane %v3765, 1
  %v4015 = vsel %vm531, %v4012, %v4014
  %v4016 = vrot.slane %v3766, 1
  %v4017 = vrot.slane %v3767, 1
  %v4018 = vsel %vm531, %v4016, %v4017
  %v4019 = vrot.slane %v3768, 1
  %v4020 = vsel %vm531, %v4017, %v4019
  %v4021 = vrot.slane %v3769, 1
  %v4022 = vrot.slane %v3770, 1
  %v4023 = vsel %vm531, %v4021, %v4022
  %v4024 = vrot.slane %v3771, 1
  %v4025 = vsel %vm531, %v4022, %v4024
  %v4026 = vrot.slane %v3772, 1
  %v4027 = vrot.slane %v3773, 1
  %v4028 = vsel %vm531, %v4026, %v4027
  %v4029 = vrot.slane %v3774, 1
  %v4030 = vsel %vm531, %v4027, %v4029
  %v4031 = vrot.slane %v3775, 1
  %v4032 = vrot.slane %v3776, 1
  %v4033 = vsel %vm531, %v4031, %v4032
  %v4034 = vrot.slane %v3777, 1
  %v4035 = vsel %vm531, %v4032, %v4034
  %v4036 = vrot.slane %v3778, 1
  %v4037 = vrot.slane %v3779, 1
  %v4038 = vsel %vm531, %v4036, %v4037
  %v4039 = vrot.slane %v3780, 1
  %v4040 = vsel %vm531, %v4037, %v4039
  %v4041 = vrot.slane %v3781, 1
  %v4042 = vrot.slane %v3782, 1
  %v4043 = vsel %vm531, %v4041, %v4042
  %v4044 = vrot.slane %v3783, 1
  %v4045 = vsel %vm531, %v4042, %v4044
  %v4046 = vrot.slane %v3682, 2
  %v4047 = vrot.slane %v3683, 2
  %v4048 = vsel %vm692, %v4046, %v4047
  %v4049 = vrot.slane %v3684, 2
  %v4050 = vsel %vm692, %v4047, %v4049
  %v4051 = vrot.slane %v3685, 2
  %v4052 = vrot.slane %v3686, 2
  %v4053 = vsel %vm692, %v4051, %v4052
  %v4054 = vrot.slane %v3687, 2
  %v4055 = vsel %vm692, %v4052, %v4054
  %v4056 = vrot.slane %v3688, 2
  %v4057 = vrot.slane %v3689, 2
  %v4058 = vsel %vm692, %v4056, %v4057
  %v4059 = vrot.slane %v3690, 2
  %v4060 = vsel %vm692, %v4057, %v4059
  %v4061 = vrot.slane %v3691, 2
  %v4062 = vrot.slane %v3692, 2
  %v4063 = vsel %vm692, %v4061, %v4062
  %v4064 = vrot.slane %v3693, 2
  %v4065 = vsel %vm692, %v4062, %v4064
  %v4066 = vrot.slane %v3694, 2
  %v4067 = vrot.slane %v3695, 2
  %v4068 = vsel %vm692, %v4066, %v4067
  %v4069 = vrot.slane %v3696, 2
  %v4070 = vsel %vm692, %v4067, %v4069
  %v4071 = vrot.slane %v3697, 2
  %v4072 = vrot.slane %v3698, 2
  %v4073 = vsel %vm692, %v4071, %v4072
  %v4074 = vrot.slane %v3699, 2
  %v4075 = vsel %vm692, %v4072, %v4074
  %v4076 = vrot.slane %v3700, 2
  %v4077 = vrot.slane %v3701, 2
  %v4078 = vsel %vm692, %v4076, %v4077
  %v4079 = vrot.slane %v3702, 2
  %v4080 = vsel %vm692, %v4077, %v4079
  %v4081 = vrot.slane %v3703, 2
  %v4082 = vrot.slane %v3704, 2
  %v4083 = vsel %vm692, %v4081, %v4082
  %v4084 = vrot.slane %v3705, 2
  %v4085 = vsel %vm692, %v4082, %v4084
  %v4086 = vrot.slane %v3706, 2
  %v4087 = vrot.slane %v3707, 2
  %v4088 = vsel %vm692, %v4086, %v4087
  %v4089 = vrot.slane %v3708, 2
  %v4090 = vsel %vm692, %v4087, %v4089
  %v4091 = vrot.slane %v3709, 2
  %v4092 = vrot.slane %v3710, 2
  %v4093 = vsel %vm692, %v4091, %v4092
  %v4094 = vrot.slane %v3711, 2
  %v4095 = vsel %vm692, %v4092, %v4094
  %v4096 = vrot.slane %v3712, 2
  %v4097 = vrot.slane %v3713, 2
  %v4098 = vsel %vm692, %v4096, %v4097
  %v4099 = vrot.slane %v3714, 2
  %v4100 = vsel %vm692, %v4097, %v4099
  %v4101 = vrot.slane %v3715, 2
  %v4102 = vrot.slane %v3716, 2
  %v4103 = vsel %vm692, %v4101, %v4102
  %v4104 = vrot.slane %v3717, 2
  %v4105 = vsel %vm692, %v4102, %v4104
  %v4106 = vrot.slane %v3718, 2
  %v4107 = vrot.slane %v3719, 2
  %v4108 = vsel %vm692, %v4106, %v4107
  %v4109 = vrot.slane %v3720, 2
  %v4110 = vsel %vm692, %v4107, %v4109
  %v4111 = vrot.slane %v3721, 2
  %v4112 = vrot.slane %v3722, 2
  %v4113 = vsel %vm692, %v4111, %v4112
  %v4114 = vrot.slane %v3723, 2
  %v4115 = vsel %vm692, %v4112, %v4114
  %v4116 = vrot.slane %v3724, 2
  %v4117 = vrot.slane %v3725, 2
  %v4118 = vsel %vm692, %v4116, %v4117
  %v4119 = vrot.slane %v3726, 2
  %v4120 = vsel %vm692, %v4117, %v4119
  %v4121 = vrot.slane %v3727, 2
  %v4122 = vrot.slane %v3728, 2
  %v4123 = vsel %vm692, %v4121, %v4122
  %v4124 = vrot.slane %v3729, 2
  %v4125 = vsel %vm692, %v4122, %v4124
  %v4126 = vrot.slane %v3736, 2
  %v4127 = vrot.slane %v3737, 2
  %v4128 = vsel %vm692, %v4126, %v4127
  %v4129 = vrot.slane %v3738, 2
  %v4130 = vsel %vm692, %v4127, %v4129
  %v4131 = vrot.slane %v3739, 2
  %v4132 = vrot.slane %v3740, 2
  %v4133 = vsel %vm692, %v4131, %v4132
  %v4134 = vrot.slane %v3741, 2
  %v4135 = vsel %vm692, %v4132, %v4134
  %v4136 = vrot.slane %v3742, 2
  %v4137 = vrot.slane %v3743, 2
  %v4138 = vsel %vm692, %v4136, %v4137
  %v4139 = vrot.slane %v3744, 2
  %v4140 = vsel %vm692, %v4137, %v4139
  %v4141 = vrot.slane %v3745, 2
  %v4142 = vrot.slane %v3746, 2
  %v4143 = vsel %vm692, %v4141, %v4142
  %v4144 = vrot.slane %v3747, 2
  %v4145 = vsel %vm692, %v4142, %v4144
  %v4146 = vrot.slane %v3748, 2
  %v4147 = vrot.slane %v3749, 2
  %v4148 = vsel %vm692, %v4146, %v4147
  %v4149 = vrot.slane %v3750, 2
  %v4150 = vsel %vm692, %v4147, %v4149
  %v4151 = vrot.slane %v3751, 2
  %v4152 = vrot.slane %v3752, 2
  %v4153 = vsel %vm692, %v4151, %v4152
  %v4154 = vrot.slane %v3753, 2
  %v4155 = vsel %vm692, %v4152, %v4154
  %v4156 = vrot.slane %v3754, 2
  %v4157 = vrot.slane %v3755, 2
  %v4158 = vsel %vm692, %v4156, %v4157
  %v4159 = vrot.slane %v3756, 2
  %v4160 = vsel %vm692, %v4157, %v4159
  %v4161 = vrot.slane %v3757, 2
  %v4162 = vrot.slane %v3758, 2
  %v4163 = vsel %vm692, %v4161, %v4162
  %v4164 = vrot.slane %v3759, 2
  %v4165 = vsel %vm692, %v4162, %v4164
  %v4166 = vrot.slane %v3760, 2
  %v4167 = vrot.slane %v3761, 2
  %v4168 = vsel %vm692, %v4166, %v4167
  %v4169 = vrot.slane %v3762, 2
  %v4170 = vsel %vm692, %v4167, %v4169
  %v4171 = vrot.slane %v3763, 2
  %v4172 = vrot.slane %v3764, 2
  %v4173 = vsel %vm692, %v4171, %v4172
  %v4174 = vrot.slane %v3765, 2
  %v4175 = vsel %vm692, %v4172, %v4174
  %v4176 = vrot.slane %v3766, 2
  %v4177 = vrot.slane %v3767, 2
  %v4178 = vsel %vm692, %v4176, %v4177
  %v4179 = vrot.slane %v3768, 2
  %v4180 = vsel %vm692, %v4177, %v4179
  %v4181 = vrot.slane %v3769, 2
  %v4182 = vrot.slane %v3770, 2
  %v4183 = vsel %vm692, %v4181, %v4182
  %v4184 = vrot.slane %v3771, 2
  %v4185 = vsel %vm692, %v4182, %v4184
  %v4186 = vrot.slane %v3772, 2
  %v4187 = vrot.slane %v3773, 2
  %v4188 = vsel %vm692, %v4186, %v4187
  %v4189 = vrot.slane %v3774, 2
  %v4190 = vsel %vm692, %v4187, %v4189
  %v4191 = vrot.slane %v3775, 2
  %v4192 = vrot.slane %v3776, 2
  %v4193 = vsel %vm692, %v4191, %v4192
  %v4194 = vrot.slane %v3777, 2
  %v4195 = vsel %vm692, %v4192, %v4194
  %v4196 = vrot.slane %v3778, 2
  %v4197 = vrot.slane %v3779, 2
  %v4198 = vsel %vm692, %v4196, %v4197
  %v4199 = vrot.slane %v3780, 2
  %v4200 = vsel %vm692, %v4197, %v4199
  %v4201 = vrot.slane %v3781, 2
  %v4202 = vrot.slane %v3782, 2
  %v4203 = vsel %vm692, %v4201, %v4202
  %v4204 = vrot.slane %v3783, 2
  %v4205 = vsel %vm692, %v4202, %v4204
  %v4212 = vrot.slane %v3730, 1
  %v4213 = vrot.slane %v3731, 1
  %v4214 = vsel %vm531, %v4212, %v4213
  %v4215 = vrot.slane %v3732, 1
  %v4216 = vsel %vm531, %v4213, %v4215
  %v4217 = vrot.slane %v3784, 1
  %v4218 = vrot.slane %v3785, 1
  %v4219 = vsel %vm531, %v4217, %v4218
  %v4220 = vrot.slane %v3786, 1
  %v4221 = vsel %vm531, %v4218, %v4220
  %v4222 = vrot.slane %v3730, 2
  %v4223 = vrot.slane %v3731, 2
  %v4224 = vsel %vm692, %v4222, %v4223
  %v4225 = vrot.slane %v3732, 2
  %v4226 = vsel %vm692, %v4223, %v4225
  %v4227 = vrot.slane %v3784, 2
  %v4228 = vrot.slane %v3785, 2
  %v4229 = vsel %vm692, %v4227, %v4228
  %v4230 = vrot.slane %v3786, 2
  %v4231 = vsel %vm692, %v4228, %v4230
  %v4238 = vrot.slane %v3733, 1
  %v4239 = vrot.slane %v3734, 1
  %v4240 = vsel %vm531, %v4238, %v4239
  %v4241 = vrot.slane %v3735, 1
  %v4242 = vsel %vm531, %v4239, %v4241
  %v4243 = vrot.slane %v3787, 1
  %v4244 = vrot.slane %v3788, 1
  %v4245 = vsel %vm531, %v4243, %v4244
  %v4246 = vrot.slane %v3789, 1
  %v4247 = vsel %vm531, %v4244, %v4246
  %v4248 = vrot.slane %v3733, 2
  %v4249 = vrot.slane %v3734, 2
  %v4250 = vsel %vm692, %v4248, %v4249
  %v4251 = vrot.slane %v3735, 2
  %v4252 = vsel %vm692, %v4249, %v4251
  %v4253 = vrot.slane %v3787, 2
  %v4254 = vrot.slane %v3788, 2
  %v4255 = vsel %vm692, %v4253, %v4254
  %v4256 = vrot.slane %v3789, 2
  %v4257 = vsel %vm692, %v4254, %v4256
  %4258 = vrot.lane.b32.xlu0 %v3888, 8
  %v4259 = vpop.permute.xlu0 %4258
  %4260 = vrot.lane.b32.xlu0 %v3890, 8
  %v4261 = vpop.permute.xlu0 %4260
  %4262 = vrot.lane.b32.xlu0 %v3893, 8
  %v4263 = vpop.permute.xlu0 %4262
  %4264 = vrot.lane.b32.xlu0 %v3895, 8
  %v4265 = vpop.permute.xlu0 %4264
  %4266 = vrot.lane.b32.xlu0 %v3898, 8
  %v4267 = vpop.permute.xlu0 %4266
  %4268 = vrot.lane.b32.xlu0 %v3900, 8
  %v4269 = vpop.permute.xlu0 %4268
  %4270 = vrot.lane.b32.xlu0 %v3903, 8
  %v4271 = vpop.permute.xlu0 %4270
  %4272 = vrot.lane.b32.xlu0 %v3905, 8
  %v4273 = vpop.permute.xlu0 %4272
  %4274 = vrot.lane.b32.xlu0 %v3908, 8
  %v4275 = vpop.permute.xlu0 %4274
  %4276 = vrot.lane.b32.xlu0 %v3910, 8
  %v4277 = vpop.permute.xlu0 %4276
  %4278 = vrot.lane.b32.xlu0 %v3913, 8
  %v4279 = vpop.permute.xlu0 %4278
  %4280 = vrot.lane.b32.xlu0 %v3915, 8
  %v4281 = vpop.permute.xlu0 %4280
  %4282 = vrot.lane.b32.xlu0 %v3918, 8
  %v4283 = vpop.permute.xlu0 %4282
  %4284 = vrot.lane.b32.xlu0 %v3920, 8
  %v4285 = vpop.permute.xlu0 %4284
  %4286 = vrot.lane.b32.xlu0 %v3923, 8
  %v4287 = vpop.permute.xlu0 %4286
  %4288 = vrot.lane.b32.xlu0 %v3925, 8
  %v4289 = vpop.permute.xlu0 %4288
  %4290 = vrot.lane.b32.xlu0 %v3928, 8
  %v4291 = vpop.permute.xlu0 %4290
  %4292 = vrot.lane.b32.xlu0 %v3930, 8
  %v4293 = vpop.permute.xlu0 %4292
  %4294 = vrot.lane.b32.xlu0 %v3933, 8
  %v4295 = vpop.permute.xlu0 %4294
  %4296 = vrot.lane.b32.xlu0 %v3935, 8
  %v4297 = vpop.permute.xlu0 %4296
  %4298 = vrot.lane.b32.xlu0 %v3938, 8
  %v4299 = vpop.permute.xlu0 %4298
  %4300 = vrot.lane.b32.xlu0 %v3940, 8
  %v4301 = vpop.permute.xlu0 %4300
  %4302 = vrot.lane.b32.xlu0 %v3943, 8
  %v4303 = vpop.permute.xlu0 %4302
  %4304 = vrot.lane.b32.xlu0 %v3945, 8
  %v4305 = vpop.permute.xlu0 %4304
  %4306 = vrot.lane.b32.xlu0 %v3948, 8
  %v4307 = vpop.permute.xlu0 %4306
  %4308 = vrot.lane.b32.xlu0 %v3950, 8
  %v4309 = vpop.permute.xlu0 %4308
  %4310 = vrot.lane.b32.xlu0 %v3953, 8
  %v4311 = vpop.permute.xlu0 %4310
  %4312 = vrot.lane.b32.xlu0 %v3955, 8
  %v4313 = vpop.permute.xlu0 %4312
  %4314 = vrot.lane.b32.xlu0 %v3958, 8
  %v4315 = vpop.permute.xlu0 %4314
  %4316 = vrot.lane.b32.xlu0 %v3960, 8
  %v4317 = vpop.permute.xlu0 %4316
  %4318 = vrot.lane.b32.xlu0 %v3963, 8
  %v4319 = vpop.permute.xlu0 %4318
  %4320 = vrot.lane.b32.xlu0 %v3965, 8
  %v4321 = vpop.permute.xlu0 %4320
  %4322 = vrot.lane.b32.xlu0 %v3968, 8
  %v4323 = vpop.permute.xlu0 %4322
  %4324 = vrot.lane.b32.xlu0 %v3970, 8
  %v4325 = vpop.permute.xlu0 %4324
  %4326 = vrot.lane.b32.xlu0 %v3973, 8
  %v4327 = vpop.permute.xlu0 %4326
  %4328 = vrot.lane.b32.xlu0 %v3975, 8
  %v4329 = vpop.permute.xlu0 %4328
  %4330 = vrot.lane.b32.xlu0 %v3978, 8
  %v4331 = vpop.permute.xlu0 %4330
  %4332 = vrot.lane.b32.xlu0 %v3980, 8
  %v4333 = vpop.permute.xlu0 %4332
  %4334 = vrot.lane.b32.xlu0 %v3983, 8
  %v4335 = vpop.permute.xlu0 %4334
  %4336 = vrot.lane.b32.xlu0 %v3985, 8
  %v4337 = vpop.permute.xlu0 %4336
  %4338 = vrot.lane.b32.xlu0 %v3988, 8
  %v4339 = vpop.permute.xlu0 %4338
  %4340 = vrot.lane.b32.xlu0 %v3990, 8
  %v4341 = vpop.permute.xlu0 %4340
  %4342 = vrot.lane.b32.xlu0 %v3993, 8
  %v4343 = vpop.permute.xlu0 %4342
  %4344 = vrot.lane.b32.xlu0 %v3995, 8
  %v4345 = vpop.permute.xlu0 %4344
  %4346 = vrot.lane.b32.xlu0 %v3998, 8
  %v4347 = vpop.permute.xlu0 %4346
  %4348 = vrot.lane.b32.xlu0 %v4000, 8
  %v4349 = vpop.permute.xlu0 %4348
  %4350 = vrot.lane.b32.xlu0 %v4003, 8
  %v4351 = vpop.permute.xlu0 %4350
  %4352 = vrot.lane.b32.xlu0 %v4005, 8
  %v4353 = vpop.permute.xlu0 %4352
  %4354 = vrot.lane.b32.xlu0 %v4008, 8
  %v4355 = vpop.permute.xlu0 %4354
  %4356 = vrot.lane.b32.xlu0 %v4010, 8
  %v4357 = vpop.permute.xlu0 %4356
  %4358 = vrot.lane.b32.xlu0 %v4013, 8
  %v4359 = vpop.permute.xlu0 %4358
  %4360 = vrot.lane.b32.xlu0 %v4015, 8
  %v4361 = vpop.permute.xlu0 %4360
  %4362 = vrot.lane.b32.xlu0 %v4018, 8
  %v4363 = vpop.permute.xlu0 %4362
  %4364 = vrot.lane.b32.xlu0 %v4020, 8
  %v4365 = vpop.permute.xlu0 %4364
  %4366 = vrot.lane.b32.xlu0 %v4023, 8
  %v4367 = vpop.permute.xlu0 %4366
  %4368 = vrot.lane.b32.xlu0 %v4025, 8
  %v4369 = vpop.permute.xlu0 %4368
  %4370 = vrot.lane.b32.xlu0 %v4028, 8
  %v4371 = vpop.permute.xlu0 %4370
  %4372 = vrot.lane.b32.xlu0 %v4030, 8
  %v4373 = vpop.permute.xlu0 %4372
  %4374 = vrot.lane.b32.xlu0 %v4033, 8
  %v4375 = vpop.permute.xlu0 %4374
  %4376 = vrot.lane.b32.xlu0 %v4035, 8
  %v4377 = vpop.permute.xlu0 %4376
  %4378 = vrot.lane.b32.xlu0 %v4038, 8
  %v4379 = vpop.permute.xlu0 %4378
  %4380 = vrot.lane.b32.xlu0 %v4040, 8
  %v4381 = vpop.permute.xlu0 %4380
  %4382 = vrot.lane.b32.xlu0 %v4043, 8
  %v4383 = vpop.permute.xlu0 %4382
  %4384 = vrot.lane.b32.xlu0 %v4045, 8
  %v4385 = vpop.permute.xlu0 %4384
  %4450 = vrot.lane.b32.xlu0 %v4048, 16
  %v4451 = vpop.permute.xlu0 %4450
  %4452 = vrot.lane.b32.xlu0 %v4050, 16
  %v4453 = vpop.permute.xlu0 %4452
  %4454 = vrot.lane.b32.xlu0 %v4053, 16
  %v4455 = vpop.permute.xlu0 %4454
  %4456 = vrot.lane.b32.xlu0 %v4055, 16
  %v4457 = vpop.permute.xlu0 %4456
  %4458 = vrot.lane.b32.xlu0 %v4058, 16
  %v4459 = vpop.permute.xlu0 %4458
  %4460 = vrot.lane.b32.xlu0 %v4060, 16
  %v4461 = vpop.permute.xlu0 %4460
  %4462 = vrot.lane.b32.xlu0 %v4063, 16
  %v4463 = vpop.permute.xlu0 %4462
  %4464 = vrot.lane.b32.xlu0 %v4065, 16
  %v4465 = vpop.permute.xlu0 %4464
  %4466 = vrot.lane.b32.xlu0 %v4068, 16
  %v4467 = vpop.permute.xlu0 %4466
  %4468 = vrot.lane.b32.xlu0 %v4070, 16
  %v4469 = vpop.permute.xlu0 %4468
  %4470 = vrot.lane.b32.xlu0 %v4073, 16
  %v4471 = vpop.permute.xlu0 %4470
  %4472 = vrot.lane.b32.xlu0 %v4075, 16
  %v4473 = vpop.permute.xlu0 %4472
  %4474 = vrot.lane.b32.xlu0 %v4078, 16
  %v4475 = vpop.permute.xlu0 %4474
  %4476 = vrot.lane.b32.xlu0 %v4080, 16
  %v4477 = vpop.permute.xlu0 %4476
  %4478 = vrot.lane.b32.xlu0 %v4083, 16
  %v4479 = vpop.permute.xlu0 %4478
  %4480 = vrot.lane.b32.xlu0 %v4085, 16
  %v4481 = vpop.permute.xlu0 %4480
  %4482 = vrot.lane.b32.xlu0 %v4088, 16
  %v4483 = vpop.permute.xlu0 %4482
  %4484 = vrot.lane.b32.xlu0 %v4090, 16
  %v4485 = vpop.permute.xlu0 %4484
  %4486 = vrot.lane.b32.xlu0 %v4093, 16
  %v4487 = vpop.permute.xlu0 %4486
  %4488 = vrot.lane.b32.xlu0 %v4095, 16
  %v4489 = vpop.permute.xlu0 %4488
  %4490 = vrot.lane.b32.xlu0 %v4098, 16
  %v4491 = vpop.permute.xlu0 %4490
  %4492 = vrot.lane.b32.xlu0 %v4100, 16
  %v4493 = vpop.permute.xlu0 %4492
  %4494 = vrot.lane.b32.xlu0 %v4103, 16
  %v4495 = vpop.permute.xlu0 %4494
  %4496 = vrot.lane.b32.xlu0 %v4105, 16
  %v4497 = vpop.permute.xlu0 %4496
  %4498 = vrot.lane.b32.xlu0 %v4108, 16
  %v4499 = vpop.permute.xlu0 %4498
  %4500 = vrot.lane.b32.xlu0 %v4110, 16
  %v4501 = vpop.permute.xlu0 %4500
  %4502 = vrot.lane.b32.xlu0 %v4113, 16
  %v4503 = vpop.permute.xlu0 %4502
  %4504 = vrot.lane.b32.xlu0 %v4115, 16
  %v4505 = vpop.permute.xlu0 %4504
  %4506 = vrot.lane.b32.xlu0 %v4118, 16
  %v4507 = vpop.permute.xlu0 %4506
  %4508 = vrot.lane.b32.xlu0 %v4120, 16
  %v4509 = vpop.permute.xlu0 %4508
  %4510 = vrot.lane.b32.xlu0 %v4123, 16
  %v4511 = vpop.permute.xlu0 %4510
  %4512 = vrot.lane.b32.xlu0 %v4125, 16
  %v4513 = vpop.permute.xlu0 %4512
  %4514 = vrot.lane.b32.xlu0 %v4128, 16
  %v4515 = vpop.permute.xlu0 %4514
  %4516 = vrot.lane.b32.xlu0 %v4130, 16
  %v4517 = vpop.permute.xlu0 %4516
  %4518 = vrot.lane.b32.xlu0 %v4133, 16
  %v4519 = vpop.permute.xlu0 %4518
  %4520 = vrot.lane.b32.xlu0 %v4135, 16
  %v4521 = vpop.permute.xlu0 %4520
  %4522 = vrot.lane.b32.xlu0 %v4138, 16
  %v4523 = vpop.permute.xlu0 %4522
  %4524 = vrot.lane.b32.xlu0 %v4140, 16
  %v4525 = vpop.permute.xlu0 %4524
  %4526 = vrot.lane.b32.xlu0 %v4143, 16
  %v4527 = vpop.permute.xlu0 %4526
  %4528 = vrot.lane.b32.xlu0 %v4145, 16
  %v4529 = vpop.permute.xlu0 %4528
  %4530 = vrot.lane.b32.xlu0 %v4148, 16
  %v4531 = vpop.permute.xlu0 %4530
  %4532 = vrot.lane.b32.xlu0 %v4150, 16
  %v4533 = vpop.permute.xlu0 %4532
  %4534 = vrot.lane.b32.xlu0 %v4153, 16
  %v4535 = vpop.permute.xlu0 %4534
  %4536 = vrot.lane.b32.xlu0 %v4155, 16
  %v4537 = vpop.permute.xlu0 %4536
  %4538 = vrot.lane.b32.xlu0 %v4158, 16
  %v4539 = vpop.permute.xlu0 %4538
  %4540 = vrot.lane.b32.xlu0 %v4160, 16
  %v4541 = vpop.permute.xlu0 %4540
  %4542 = vrot.lane.b32.xlu0 %v4163, 16
  %v4543 = vpop.permute.xlu0 %4542
  %4544 = vrot.lane.b32.xlu0 %v4165, 16
  %v4545 = vpop.permute.xlu0 %4544
  %4546 = vrot.lane.b32.xlu0 %v4168, 16
  %v4547 = vpop.permute.xlu0 %4546
  %4548 = vrot.lane.b32.xlu0 %v4170, 16
  %v4549 = vpop.permute.xlu0 %4548
  %4550 = vrot.lane.b32.xlu0 %v4173, 16
  %v4551 = vpop.permute.xlu0 %4550
  %4552 = vrot.lane.b32.xlu0 %v4175, 16
  %v4553 = vpop.permute.xlu0 %4552
  %4554 = vrot.lane.b32.xlu0 %v4178, 16
  %v4555 = vpop.permute.xlu0 %4554
  %4556 = vrot.lane.b32.xlu0 %v4180, 16
  %v4557 = vpop.permute.xlu0 %4556
  %4558 = vrot.lane.b32.xlu0 %v4183, 16
  %v4559 = vpop.permute.xlu0 %4558
  %4560 = vrot.lane.b32.xlu0 %v4185, 16
  %v4561 = vpop.permute.xlu0 %4560
  %4562 = vrot.lane.b32.xlu0 %v4188, 16
  %v4563 = vpop.permute.xlu0 %4562
  %4564 = vrot.lane.b32.xlu0 %v4190, 16
  %v4565 = vpop.permute.xlu0 %4564
  %4566 = vrot.lane.b32.xlu0 %v4193, 16
  %v4567 = vpop.permute.xlu0 %4566
  %4568 = vrot.lane.b32.xlu0 %v4195, 16
  %v4569 = vpop.permute.xlu0 %4568
  %4570 = vrot.lane.b32.xlu0 %v4198, 16
  %v4571 = vpop.permute.xlu0 %4570
  %4572 = vrot.lane.b32.xlu0 %v4200, 16
  %v4573 = vpop.permute.xlu0 %4572
  %4574 = vrot.lane.b32.xlu0 %v4203, 16
  %v4575 = vpop.permute.xlu0 %4574
  %4576 = vrot.lane.b32.xlu0 %v4205, 16
  %v4577 = vpop.permute.xlu0 %4576
  %4642 = vrot.lane.b32.xlu0 %v3685, 24
  %v4643 = vpop.permute.xlu0 %4642
  %4644 = vrot.lane.b32.xlu0 %v3686, 24
  %v4645 = vpop.permute.xlu0 %4644
  %4646 = vrot.lane.b32.xlu0 %v3688, 24
  %v4647 = vpop.permute.xlu0 %4646
  %4648 = vrot.lane.b32.xlu0 %v3689, 24
  %v4649 = vpop.permute.xlu0 %4648
  %4650 = vrot.lane.b32.xlu0 %v3691, 24
  %v4651 = vpop.permute.xlu0 %4650
  %4652 = vrot.lane.b32.xlu0 %v3692, 24
  %v4653 = vpop.permute.xlu0 %4652
  %4654 = vrot.lane.b32.xlu0 %v3694, 24
  %v4655 = vpop.permute.xlu0 %4654
  %4656 = vrot.lane.b32.xlu0 %v3695, 24
  %v4657 = vpop.permute.xlu0 %4656
  %4658 = vrot.lane.b32.xlu0 %v3697, 24
  %v4659 = vpop.permute.xlu0 %4658
  %4660 = vrot.lane.b32.xlu0 %v3698, 24
  %v4661 = vpop.permute.xlu0 %4660
  %4662 = vrot.lane.b32.xlu0 %v3700, 24
  %v4663 = vpop.permute.xlu0 %4662
  %4664 = vrot.lane.b32.xlu0 %v3701, 24
  %v4665 = vpop.permute.xlu0 %4664
  %4666 = vrot.lane.b32.xlu0 %v3703, 24
  %v4667 = vpop.permute.xlu0 %4666
  %4668 = vrot.lane.b32.xlu0 %v3704, 24
  %v4669 = vpop.permute.xlu0 %4668
  %4670 = vrot.lane.b32.xlu0 %v3706, 24
  %v4671 = vpop.permute.xlu0 %4670
  %4672 = vrot.lane.b32.xlu0 %v3707, 24
  %v4673 = vpop.permute.xlu0 %4672
  %4674 = vrot.lane.b32.xlu0 %v3709, 24
  %v4675 = vpop.permute.xlu0 %4674
  %4676 = vrot.lane.b32.xlu0 %v3710, 24
  %v4677 = vpop.permute.xlu0 %4676
  %4678 = vrot.lane.b32.xlu0 %v3712, 24
  %v4679 = vpop.permute.xlu0 %4678
  %4680 = vrot.lane.b32.xlu0 %v3713, 24
  %v4681 = vpop.permute.xlu0 %4680
  %4682 = vrot.lane.b32.xlu0 %v3715, 24
  %v4683 = vpop.permute.xlu0 %4682
  %4684 = vrot.lane.b32.xlu0 %v3716, 24
  %v4685 = vpop.permute.xlu0 %4684
  %4686 = vrot.lane.b32.xlu0 %v3718, 24
  %v4687 = vpop.permute.xlu0 %4686
  %4688 = vrot.lane.b32.xlu0 %v3719, 24
  %v4689 = vpop.permute.xlu0 %4688
  %4690 = vrot.lane.b32.xlu0 %v3721, 24
  %v4691 = vpop.permute.xlu0 %4690
  %4692 = vrot.lane.b32.xlu0 %v3722, 24
  %v4693 = vpop.permute.xlu0 %4692
  %4694 = vrot.lane.b32.xlu0 %v3724, 24
  %v4695 = vpop.permute.xlu0 %4694
  %4696 = vrot.lane.b32.xlu0 %v3725, 24
  %v4697 = vpop.permute.xlu0 %4696
  %4698 = vrot.lane.b32.xlu0 %v3727, 24
  %v4699 = vpop.permute.xlu0 %4698
  %4700 = vrot.lane.b32.xlu0 %v3728, 24
  %v4701 = vpop.permute.xlu0 %4700
  %4702 = vrot.lane.b32.xlu0 %v3730, 24
  %v4703 = vpop.permute.xlu0 %4702
  %4704 = vrot.lane.b32.xlu0 %v3731, 24
  %v4705 = vpop.permute.xlu0 %4704
  %4706 = vrot.lane.b32.xlu0 %v3739, 24
  %v4707 = vpop.permute.xlu0 %4706
  %4708 = vrot.lane.b32.xlu0 %v3740, 24
  %v4709 = vpop.permute.xlu0 %4708
  %4710 = vrot.lane.b32.xlu0 %v3742, 24
  %v4711 = vpop.permute.xlu0 %4710
  %4712 = vrot.lane.b32.xlu0 %v3743, 24
  %v4713 = vpop.permute.xlu0 %4712
  %4714 = vrot.lane.b32.xlu0 %v3745, 24
  %v4715 = vpop.permute.xlu0 %4714
  %4716 = vrot.lane.b32.xlu0 %v3746, 24
  %v4717 = vpop.permute.xlu0 %4716
  %4718 = vrot.lane.b32.xlu0 %v3748, 24
  %v4719 = vpop.permute.xlu0 %4718
  %4720 = vrot.lane.b32.xlu0 %v3749, 24
  %v4721 = vpop.permute.xlu0 %4720
  %4722 = vrot.lane.b32.xlu0 %v3751, 24
  %v4723 = vpop.permute.xlu0 %4722
  %4724 = vrot.lane.b32.xlu0 %v3752, 24
  %v4725 = vpop.permute.xlu0 %4724
  %4726 = vrot.lane.b32.xlu0 %v3754, 24
  %v4727 = vpop.permute.xlu0 %4726
  %4728 = vrot.lane.b32.xlu0 %v3755, 24
  %v4729 = vpop.permute.xlu0 %4728
  %4730 = vrot.lane.b32.xlu0 %v3757, 24
  %v4731 = vpop.permute.xlu0 %4730
  %4732 = vrot.lane.b32.xlu0 %v3758, 24
  %v4733 = vpop.permute.xlu0 %4732
  %4734 = vrot.lane.b32.xlu0 %v3760, 24
  %v4735 = vpop.permute.xlu0 %4734
  %4736 = vrot.lane.b32.xlu0 %v3761, 24
  %v4737 = vpop.permute.xlu0 %4736
  %4738 = vrot.lane.b32.xlu0 %v3763, 24
  %v4739 = vpop.permute.xlu0 %4738
  %4740 = vrot.lane.b32.xlu0 %v3764, 24
  %v4741 = vpop.permute.xlu0 %4740
  %4742 = vrot.lane.b32.xlu0 %v3766, 24
  %v4743 = vpop.permute.xlu0 %4742
  %4744 = vrot.lane.b32.xlu0 %v3767, 24
  %v4745 = vpop.permute.xlu0 %4744
  %4746 = vrot.lane.b32.xlu0 %v3769, 24
  %v4747 = vpop.permute.xlu0 %4746
  %4748 = vrot.lane.b32.xlu0 %v3770, 24
  %v4749 = vpop.permute.xlu0 %4748
  %4750 = vrot.lane.b32.xlu0 %v3772, 24
  %v4751 = vpop.permute.xlu0 %4750
  %4752 = vrot.lane.b32.xlu0 %v3773, 24
  %v4753 = vpop.permute.xlu0 %4752
  %4754 = vrot.lane.b32.xlu0 %v3775, 24
  %v4755 = vpop.permute.xlu0 %4754
  %4756 = vrot.lane.b32.xlu0 %v3776, 24
  %v4757 = vpop.permute.xlu0 %4756
  %4758 = vrot.lane.b32.xlu0 %v3778, 24
  %v4759 = vpop.permute.xlu0 %4758
  %4760 = vrot.lane.b32.xlu0 %v3779, 24
  %v4761 = vpop.permute.xlu0 %4760
  %4762 = vrot.lane.b32.xlu0 %v3781, 24
  %v4763 = vpop.permute.xlu0 %4762
  %4764 = vrot.lane.b32.xlu0 %v3782, 24
  %v4765 = vpop.permute.xlu0 %4764
  %4766 = vrot.lane.b32.xlu0 %v3784, 24
  %v4767 = vpop.permute.xlu0 %4766
  %4768 = vrot.lane.b32.xlu0 %v3785, 24
  %v4769 = vpop.permute.xlu0 %4768
  %4834 = vrot.lane.b32.xlu0 %v3893, 32
  %v4835 = vpop.permute.xlu0 %4834
  %4836 = vrot.lane.b32.xlu0 %v3895, 32
  %v4837 = vpop.permute.xlu0 %4836
  %4838 = vrot.lane.b32.xlu0 %v3898, 32
  %v4839 = vpop.permute.xlu0 %4838
  %4840 = vrot.lane.b32.xlu0 %v3900, 32
  %v4841 = vpop.permute.xlu0 %4840
  %4842 = vrot.lane.b32.xlu0 %v3903, 32
  %v4843 = vpop.permute.xlu0 %4842
  %4844 = vrot.lane.b32.xlu0 %v3905, 32
  %v4845 = vpop.permute.xlu0 %4844
  %4846 = vrot.lane.b32.xlu0 %v3908, 32
  %v4847 = vpop.permute.xlu0 %4846
  %4848 = vrot.lane.b32.xlu0 %v3910, 32
  %v4849 = vpop.permute.xlu0 %4848
  %4850 = vrot.lane.b32.xlu0 %v3913, 32
  %v4851 = vpop.permute.xlu0 %4850
  %4852 = vrot.lane.b32.xlu0 %v3915, 32
  %v4853 = vpop.permute.xlu0 %4852
  %4854 = vrot.lane.b32.xlu0 %v3918, 32
  %v4855 = vpop.permute.xlu0 %4854
  %4856 = vrot.lane.b32.xlu0 %v3920, 32
  %v4857 = vpop.permute.xlu0 %4856
  %4858 = vrot.lane.b32.xlu0 %v3923, 32
  %v4859 = vpop.permute.xlu0 %4858
  %4860 = vrot.lane.b32.xlu0 %v3925, 32
  %v4861 = vpop.permute.xlu0 %4860
  %4862 = vrot.lane.b32.xlu0 %v3928, 32
  %v4863 = vpop.permute.xlu0 %4862
  %4864 = vrot.lane.b32.xlu0 %v3930, 32
  %v4865 = vpop.permute.xlu0 %4864
  %4866 = vrot.lane.b32.xlu0 %v3933, 32
  %v4867 = vpop.permute.xlu0 %4866
  %4868 = vrot.lane.b32.xlu0 %v3935, 32
  %v4869 = vpop.permute.xlu0 %4868
  %4870 = vrot.lane.b32.xlu0 %v3938, 32
  %v4871 = vpop.permute.xlu0 %4870
  %4872 = vrot.lane.b32.xlu0 %v3940, 32
  %v4873 = vpop.permute.xlu0 %4872
  %4874 = vrot.lane.b32.xlu0 %v3943, 32
  %v4875 = vpop.permute.xlu0 %4874
  %4876 = vrot.lane.b32.xlu0 %v3945, 32
  %v4877 = vpop.permute.xlu0 %4876
  %4878 = vrot.lane.b32.xlu0 %v3948, 32
  %v4879 = vpop.permute.xlu0 %4878
  %4880 = vrot.lane.b32.xlu0 %v3950, 32
  %v4881 = vpop.permute.xlu0 %4880
  %4882 = vrot.lane.b32.xlu0 %v3953, 32
  %v4883 = vpop.permute.xlu0 %4882
  %4884 = vrot.lane.b32.xlu0 %v3955, 32
  %v4885 = vpop.permute.xlu0 %4884
  %4886 = vrot.lane.b32.xlu0 %v3958, 32
  %v4887 = vpop.permute.xlu0 %4886
  %4888 = vrot.lane.b32.xlu0 %v3960, 32
  %v4889 = vpop.permute.xlu0 %4888
  %4890 = vrot.lane.b32.xlu0 %v3963, 32
  %v4891 = vpop.permute.xlu0 %4890
  %4892 = vrot.lane.b32.xlu0 %v3965, 32
  %v4893 = vpop.permute.xlu0 %4892
  %4894 = vrot.lane.b32.xlu0 %v4214, 32
  %v4895 = vpop.permute.xlu0 %4894
  %4896 = vrot.lane.b32.xlu0 %v4216, 32
  %v4897 = vpop.permute.xlu0 %4896
  %4898 = vrot.lane.b32.xlu0 %v3973, 32
  %v4899 = vpop.permute.xlu0 %4898
  %4900 = vrot.lane.b32.xlu0 %v3975, 32
  %v4901 = vpop.permute.xlu0 %4900
  %4902 = vrot.lane.b32.xlu0 %v3978, 32
  %v4903 = vpop.permute.xlu0 %4902
  %4904 = vrot.lane.b32.xlu0 %v3980, 32
  %v4905 = vpop.permute.xlu0 %4904
  %4906 = vrot.lane.b32.xlu0 %v3983, 32
  %v4907 = vpop.permute.xlu0 %4906
  %4908 = vrot.lane.b32.xlu0 %v3985, 32
  %v4909 = vpop.permute.xlu0 %4908
  %4910 = vrot.lane.b32.xlu0 %v3988, 32
  %v4911 = vpop.permute.xlu0 %4910
  %4912 = vrot.lane.b32.xlu0 %v3990, 32
  %v4913 = vpop.permute.xlu0 %4912
  %4914 = vrot.lane.b32.xlu0 %v3993, 32
  %v4915 = vpop.permute.xlu0 %4914
  %4916 = vrot.lane.b32.xlu0 %v3995, 32
  %v4917 = vpop.permute.xlu0 %4916
  %4918 = vrot.lane.b32.xlu0 %v3998, 32
  %v4919 = vpop.permute.xlu0 %4918
  %4920 = vrot.lane.b32.xlu0 %v4000, 32
  %v4921 = vpop.permute.xlu0 %4920
  %4922 = vrot.lane.b32.xlu0 %v4003, 32
  %v4923 = vpop.permute.xlu0 %4922
  %4924 = vrot.lane.b32.xlu0 %v4005, 32
  %v4925 = vpop.permute.xlu0 %4924
  %4926 = vrot.lane.b32.xlu0 %v4008, 32
  %v4927 = vpop.permute.xlu0 %4926
  %4928 = vrot.lane.b32.xlu0 %v4010, 32
  %v4929 = vpop.permute.xlu0 %4928
  %4930 = vrot.lane.b32.xlu0 %v4013, 32
  %v4931 = vpop.permute.xlu0 %4930
  %4932 = vrot.lane.b32.xlu0 %v4015, 32
  %v4933 = vpop.permute.xlu0 %4932
  %4934 = vrot.lane.b32.xlu0 %v4018, 32
  %v4935 = vpop.permute.xlu0 %4934
  %4936 = vrot.lane.b32.xlu0 %v4020, 32
  %v4937 = vpop.permute.xlu0 %4936
  %4938 = vrot.lane.b32.xlu0 %v4023, 32
  %v4939 = vpop.permute.xlu0 %4938
  %4940 = vrot.lane.b32.xlu0 %v4025, 32
  %v4941 = vpop.permute.xlu0 %4940
  %4942 = vrot.lane.b32.xlu0 %v4028, 32
  %v4943 = vpop.permute.xlu0 %4942
  %4944 = vrot.lane.b32.xlu0 %v4030, 32
  %v4945 = vpop.permute.xlu0 %4944
  %4946 = vrot.lane.b32.xlu0 %v4033, 32
  %v4947 = vpop.permute.xlu0 %4946
  %4948 = vrot.lane.b32.xlu0 %v4035, 32
  %v4949 = vpop.permute.xlu0 %4948
  %4950 = vrot.lane.b32.xlu0 %v4038, 32
  %v4951 = vpop.permute.xlu0 %4950
  %4952 = vrot.lane.b32.xlu0 %v4040, 32
  %v4953 = vpop.permute.xlu0 %4952
  %4954 = vrot.lane.b32.xlu0 %v4043, 32
  %v4955 = vpop.permute.xlu0 %4954
  %4956 = vrot.lane.b32.xlu0 %v4045, 32
  %v4957 = vpop.permute.xlu0 %4956
  %4958 = vrot.lane.b32.xlu0 %v4219, 32
  %v4959 = vpop.permute.xlu0 %4958
  %4960 = vrot.lane.b32.xlu0 %v4221, 32
  %v4961 = vpop.permute.xlu0 %4960
  %5026 = vrot.lane.b32.xlu0 %v4053, 40
  %v5027 = vpop.permute.xlu0 %5026
  %5028 = vrot.lane.b32.xlu0 %v4055, 40
  %v5029 = vpop.permute.xlu0 %5028
  %5030 = vrot.lane.b32.xlu0 %v4058, 40
  %v5031 = vpop.permute.xlu0 %5030
  %5032 = vrot.lane.b32.xlu0 %v4060, 40
  %v5033 = vpop.permute.xlu0 %5032
  %5034 = vrot.lane.b32.xlu0 %v4063, 40
  %v5035 = vpop.permute.xlu0 %5034
  %5036 = vrot.lane.b32.xlu0 %v4065, 40
  %v5037 = vpop.permute.xlu0 %5036
  %5038 = vrot.lane.b32.xlu0 %v4068, 40
  %v5039 = vpop.permute.xlu0 %5038
  %5040 = vrot.lane.b32.xlu0 %v4070, 40
  %v5041 = vpop.permute.xlu0 %5040
  %5042 = vrot.lane.b32.xlu0 %v4073, 40
  %v5043 = vpop.permute.xlu0 %5042
  %5044 = vrot.lane.b32.xlu0 %v4075, 40
  %v5045 = vpop.permute.xlu0 %5044
  %5046 = vrot.lane.b32.xlu0 %v4078, 40
  %v5047 = vpop.permute.xlu0 %5046
  %5048 = vrot.lane.b32.xlu0 %v4080, 40
  %v5049 = vpop.permute.xlu0 %5048
  %5050 = vrot.lane.b32.xlu0 %v4083, 40
  %v5051 = vpop.permute.xlu0 %5050
  %5052 = vrot.lane.b32.xlu0 %v4085, 40
  %v5053 = vpop.permute.xlu0 %5052
  %5054 = vrot.lane.b32.xlu0 %v4088, 40
  %v5055 = vpop.permute.xlu0 %5054
  %5056 = vrot.lane.b32.xlu0 %v4090, 40
  %v5057 = vpop.permute.xlu0 %5056
  %5058 = vrot.lane.b32.xlu0 %v4093, 40
  %v5059 = vpop.permute.xlu0 %5058
  %5060 = vrot.lane.b32.xlu0 %v4095, 40
  %v5061 = vpop.permute.xlu0 %5060
  %5062 = vrot.lane.b32.xlu0 %v4098, 40
  %v5063 = vpop.permute.xlu0 %5062
  %5064 = vrot.lane.b32.xlu0 %v4100, 40
  %v5065 = vpop.permute.xlu0 %5064
  %5066 = vrot.lane.b32.xlu0 %v4103, 40
  %v5067 = vpop.permute.xlu0 %5066
  %5068 = vrot.lane.b32.xlu0 %v4105, 40
  %v5069 = vpop.permute.xlu0 %5068
  %5070 = vrot.lane.b32.xlu0 %v4108, 40
  %v5071 = vpop.permute.xlu0 %5070
  %5072 = vrot.lane.b32.xlu0 %v4110, 40
  %v5073 = vpop.permute.xlu0 %5072
  %5074 = vrot.lane.b32.xlu0 %v4113, 40
  %v5075 = vpop.permute.xlu0 %5074
  %5076 = vrot.lane.b32.xlu0 %v4115, 40
  %v5077 = vpop.permute.xlu0 %5076
  %5078 = vrot.lane.b32.xlu0 %v4118, 40
  %v5079 = vpop.permute.xlu0 %5078
  %5080 = vrot.lane.b32.xlu0 %v4120, 40
  %v5081 = vpop.permute.xlu0 %5080
  %5082 = vrot.lane.b32.xlu0 %v4123, 40
  %v5083 = vpop.permute.xlu0 %5082
  %5084 = vrot.lane.b32.xlu0 %v4125, 40
  %v5085 = vpop.permute.xlu0 %5084
  %5086 = vrot.lane.b32.xlu0 %v4224, 40
  %v5087 = vpop.permute.xlu0 %5086
  %5088 = vrot.lane.b32.xlu0 %v4226, 40
  %v5089 = vpop.permute.xlu0 %5088
  %5090 = vrot.lane.b32.xlu0 %v4133, 40
  %v5091 = vpop.permute.xlu0 %5090
  %5092 = vrot.lane.b32.xlu0 %v4135, 40
  %v5093 = vpop.permute.xlu0 %5092
  %5094 = vrot.lane.b32.xlu0 %v4138, 40
  %v5095 = vpop.permute.xlu0 %5094
  %5096 = vrot.lane.b32.xlu0 %v4140, 40
  %v5097 = vpop.permute.xlu0 %5096
  %5098 = vrot.lane.b32.xlu0 %v4143, 40
  %v5099 = vpop.permute.xlu0 %5098
  %5100 = vrot.lane.b32.xlu0 %v4145, 40
  %v5101 = vpop.permute.xlu0 %5100
  %5102 = vrot.lane.b32.xlu0 %v4148, 40
  %v5103 = vpop.permute.xlu0 %5102
  %5104 = vrot.lane.b32.xlu0 %v4150, 40
  %v5105 = vpop.permute.xlu0 %5104
  %5106 = vrot.lane.b32.xlu0 %v4153, 40
  %v5107 = vpop.permute.xlu0 %5106
  %5108 = vrot.lane.b32.xlu0 %v4155, 40
  %v5109 = vpop.permute.xlu0 %5108
  %5110 = vrot.lane.b32.xlu0 %v4158, 40
  %v5111 = vpop.permute.xlu0 %5110
  %5112 = vrot.lane.b32.xlu0 %v4160, 40
  %v5113 = vpop.permute.xlu0 %5112
  %5114 = vrot.lane.b32.xlu0 %v4163, 40
  %v5115 = vpop.permute.xlu0 %5114
  %5116 = vrot.lane.b32.xlu0 %v4165, 40
  %v5117 = vpop.permute.xlu0 %5116
  %5118 = vrot.lane.b32.xlu0 %v4168, 40
  %v5119 = vpop.permute.xlu0 %5118
  %5120 = vrot.lane.b32.xlu0 %v4170, 40
  %v5121 = vpop.permute.xlu0 %5120
  %5122 = vrot.lane.b32.xlu0 %v4173, 40
  %v5123 = vpop.permute.xlu0 %5122
  %5124 = vrot.lane.b32.xlu0 %v4175, 40
  %v5125 = vpop.permute.xlu0 %5124
  %5126 = vrot.lane.b32.xlu0 %v4178, 40
  %v5127 = vpop.permute.xlu0 %5126
  %5128 = vrot.lane.b32.xlu0 %v4180, 40
  %v5129 = vpop.permute.xlu0 %5128
  %5130 = vrot.lane.b32.xlu0 %v4183, 40
  %v5131 = vpop.permute.xlu0 %5130
  %5132 = vrot.lane.b32.xlu0 %v4185, 40
  %v5133 = vpop.permute.xlu0 %5132
  %5134 = vrot.lane.b32.xlu0 %v4188, 40
  %v5135 = vpop.permute.xlu0 %5134
  %5136 = vrot.lane.b32.xlu0 %v4190, 40
  %v5137 = vpop.permute.xlu0 %5136
  %5138 = vrot.lane.b32.xlu0 %v4193, 40
  %v5139 = vpop.permute.xlu0 %5138
  %5140 = vrot.lane.b32.xlu0 %v4195, 40
  %v5141 = vpop.permute.xlu0 %5140
  %5142 = vrot.lane.b32.xlu0 %v4198, 40
  %v5143 = vpop.permute.xlu0 %5142
  %5144 = vrot.lane.b32.xlu0 %v4200, 40
  %v5145 = vpop.permute.xlu0 %5144
  %5146 = vrot.lane.b32.xlu0 %v4203, 40
  %v5147 = vpop.permute.xlu0 %5146
  %5148 = vrot.lane.b32.xlu0 %v4205, 40
  %v5149 = vpop.permute.xlu0 %5148
  %5150 = vrot.lane.b32.xlu0 %v4229, 40
  %v5151 = vpop.permute.xlu0 %5150
  %5152 = vrot.lane.b32.xlu0 %v4231, 40
  %v5153 = vpop.permute.xlu0 %5152
  %5218 = vrot.lane.b32.xlu0 %v3688, 48
  %v5219 = vpop.permute.xlu0 %5218
  %5220 = vrot.lane.b32.xlu0 %v3689, 48
  %v5221 = vpop.permute.xlu0 %5220
  %5222 = vrot.lane.b32.xlu0 %v3691, 48
  %v5223 = vpop.permute.xlu0 %5222
  %5224 = vrot.lane.b32.xlu0 %v3692, 48
  %v5225 = vpop.permute.xlu0 %5224
  %5226 = vrot.lane.b32.xlu0 %v3694, 48
  %v5227 = vpop.permute.xlu0 %5226
  %5228 = vrot.lane.b32.xlu0 %v3695, 48
  %v5229 = vpop.permute.xlu0 %5228
  %5230 = vrot.lane.b32.xlu0 %v3697, 48
  %v5231 = vpop.permute.xlu0 %5230
  %5232 = vrot.lane.b32.xlu0 %v3698, 48
  %v5233 = vpop.permute.xlu0 %5232
  %5234 = vrot.lane.b32.xlu0 %v3700, 48
  %v5235 = vpop.permute.xlu0 %5234
  %5236 = vrot.lane.b32.xlu0 %v3701, 48
  %v5237 = vpop.permute.xlu0 %5236
  %5238 = vrot.lane.b32.xlu0 %v3703, 48
  %v5239 = vpop.permute.xlu0 %5238
  %5240 = vrot.lane.b32.xlu0 %v3704, 48
  %v5241 = vpop.permute.xlu0 %5240
  %5242 = vrot.lane.b32.xlu0 %v3706, 48
  %v5243 = vpop.permute.xlu0 %5242
  %5244 = vrot.lane.b32.xlu0 %v3707, 48
  %v5245 = vpop.permute.xlu0 %5244
  %5246 = vrot.lane.b32.xlu0 %v3709, 48
  %v5247 = vpop.permute.xlu0 %5246
  %5248 = vrot.lane.b32.xlu0 %v3710, 48
  %v5249 = vpop.permute.xlu0 %5248
  %5250 = vrot.lane.b32.xlu0 %v3712, 48
  %v5251 = vpop.permute.xlu0 %5250
  %5252 = vrot.lane.b32.xlu0 %v3713, 48
  %v5253 = vpop.permute.xlu0 %5252
  %5254 = vrot.lane.b32.xlu0 %v3715, 48
  %v5255 = vpop.permute.xlu0 %5254
  %5256 = vrot.lane.b32.xlu0 %v3716, 48
  %v5257 = vpop.permute.xlu0 %5256
  %5258 = vrot.lane.b32.xlu0 %v3718, 48
  %v5259 = vpop.permute.xlu0 %5258
  %5260 = vrot.lane.b32.xlu0 %v3719, 48
  %v5261 = vpop.permute.xlu0 %5260
  %5262 = vrot.lane.b32.xlu0 %v3721, 48
  %v5263 = vpop.permute.xlu0 %5262
  %5264 = vrot.lane.b32.xlu0 %v3722, 48
  %v5265 = vpop.permute.xlu0 %5264
  %5266 = vrot.lane.b32.xlu0 %v3724, 48
  %v5267 = vpop.permute.xlu0 %5266
  %5268 = vrot.lane.b32.xlu0 %v3725, 48
  %v5269 = vpop.permute.xlu0 %5268
  %5270 = vrot.lane.b32.xlu0 %v3727, 48
  %v5271 = vpop.permute.xlu0 %5270
  %5272 = vrot.lane.b32.xlu0 %v3728, 48
  %v5273 = vpop.permute.xlu0 %5272
  %5274 = vrot.lane.b32.xlu0 %v3730, 48
  %v5275 = vpop.permute.xlu0 %5274
  %5276 = vrot.lane.b32.xlu0 %v3731, 48
  %v5277 = vpop.permute.xlu0 %5276
  %5278 = vrot.lane.b32.xlu0 %v3733, 48
  %v5279 = vpop.permute.xlu0 %5278
  %5280 = vrot.lane.b32.xlu0 %v3734, 48
  %v5281 = vpop.permute.xlu0 %5280
  %5282 = vrot.lane.b32.xlu0 %v3742, 48
  %v5283 = vpop.permute.xlu0 %5282
  %5284 = vrot.lane.b32.xlu0 %v3743, 48
  %v5285 = vpop.permute.xlu0 %5284
  %5286 = vrot.lane.b32.xlu0 %v3745, 48
  %v5287 = vpop.permute.xlu0 %5286
  %5288 = vrot.lane.b32.xlu0 %v3746, 48
  %v5289 = vpop.permute.xlu0 %5288
  %5290 = vrot.lane.b32.xlu0 %v3748, 48
  %v5291 = vpop.permute.xlu0 %5290
  %5292 = vrot.lane.b32.xlu0 %v3749, 48
  %v5293 = vpop.permute.xlu0 %5292
  %5294 = vrot.lane.b32.xlu0 %v3751, 48
  %v5295 = vpop.permute.xlu0 %5294
  %5296 = vrot.lane.b32.xlu0 %v3752, 48
  %v5297 = vpop.permute.xlu0 %5296
  %5298 = vrot.lane.b32.xlu0 %v3754, 48
  %v5299 = vpop.permute.xlu0 %5298
  %5300 = vrot.lane.b32.xlu0 %v3755, 48
  %v5301 = vpop.permute.xlu0 %5300
  %5302 = vrot.lane.b32.xlu0 %v3757, 48
  %v5303 = vpop.permute.xlu0 %5302
  %5304 = vrot.lane.b32.xlu0 %v3758, 48
  %v5305 = vpop.permute.xlu0 %5304
  %5306 = vrot.lane.b32.xlu0 %v3760, 48
  %v5307 = vpop.permute.xlu0 %5306
  %5308 = vrot.lane.b32.xlu0 %v3761, 48
  %v5309 = vpop.permute.xlu0 %5308
  %5310 = vrot.lane.b32.xlu0 %v3763, 48
  %v5311 = vpop.permute.xlu0 %5310
  %5312 = vrot.lane.b32.xlu0 %v3764, 48
  %v5313 = vpop.permute.xlu0 %5312
  %5314 = vrot.lane.b32.xlu0 %v3766, 48
  %v5315 = vpop.permute.xlu0 %5314
  %5316 = vrot.lane.b32.xlu0 %v3767, 48
  %v5317 = vpop.permute.xlu0 %5316
  %5318 = vrot.lane.b32.xlu0 %v3769, 48
  %v5319 = vpop.permute.xlu0 %5318
  %5320 = vrot.lane.b32.xlu0 %v3770, 48
  %v5321 = vpop.permute.xlu0 %5320
  %5322 = vrot.lane.b32.xlu0 %v3772, 48
  %v5323 = vpop.permute.xlu0 %5322
  %5324 = vrot.lane.b32.xlu0 %v3773, 48
  %v5325 = vpop.permute.xlu0 %5324
  %5326 = vrot.lane.b32.xlu0 %v3775, 48
  %v5327 = vpop.permute.xlu0 %5326
  %5328 = vrot.lane.b32.xlu0 %v3776, 48
  %v5329 = vpop.permute.xlu0 %5328
  %5330 = vrot.lane.b32.xlu0 %v3778, 48
  %v5331 = vpop.permute.xlu0 %5330
  %5332 = vrot.lane.b32.xlu0 %v3779, 48
  %v5333 = vpop.permute.xlu0 %5332
  %5334 = vrot.lane.b32.xlu0 %v3781, 48
  %v5335 = vpop.permute.xlu0 %5334
  %5336 = vrot.lane.b32.xlu0 %v3782, 48
  %v5337 = vpop.permute.xlu0 %5336
  %5338 = vrot.lane.b32.xlu0 %v3784, 48
  %v5339 = vpop.permute.xlu0 %5338
  %5340 = vrot.lane.b32.xlu0 %v3785, 48
  %v5341 = vpop.permute.xlu0 %5340
  %5342 = vrot.lane.b32.xlu0 %v3787, 48
  %v5343 = vpop.permute.xlu0 %5342
  %5344 = vrot.lane.b32.xlu0 %v3788, 48
  %v5345 = vpop.permute.xlu0 %5344
  %5410 = vrot.lane.b32.xlu0 %v3898, 56
  %v5411 = vpop.permute.xlu0 %5410
  %5412 = vrot.lane.b32.xlu0 %v3900, 56
  %v5413 = vpop.permute.xlu0 %5412
  %5414 = vrot.lane.b32.xlu0 %v3903, 56
  %v5415 = vpop.permute.xlu0 %5414
  %5416 = vrot.lane.b32.xlu0 %v3905, 56
  %v5417 = vpop.permute.xlu0 %5416
  %5418 = vrot.lane.b32.xlu0 %v3908, 56
  %v5419 = vpop.permute.xlu0 %5418
  %5420 = vrot.lane.b32.xlu0 %v3910, 56
  %v5421 = vpop.permute.xlu0 %5420
  %5422 = vrot.lane.b32.xlu0 %v3913, 56
  %v5423 = vpop.permute.xlu0 %5422
  %5424 = vrot.lane.b32.xlu0 %v3915, 56
  %v5425 = vpop.permute.xlu0 %5424
  %5426 = vrot.lane.b32.xlu0 %v3918, 56
  %v5427 = vpop.permute.xlu0 %5426
  %5428 = vrot.lane.b32.xlu0 %v3920, 56
  %v5429 = vpop.permute.xlu0 %5428
  %5430 = vrot.lane.b32.xlu0 %v3923, 56
  %v5431 = vpop.permute.xlu0 %5430
  %5432 = vrot.lane.b32.xlu0 %v3925, 56
  %v5433 = vpop.permute.xlu0 %5432
  %5434 = vrot.lane.b32.xlu0 %v3928, 56
  %v5435 = vpop.permute.xlu0 %5434
  %5436 = vrot.lane.b32.xlu0 %v3930, 56
  %v5437 = vpop.permute.xlu0 %5436
  %5438 = vrot.lane.b32.xlu0 %v3933, 56
  %v5439 = vpop.permute.xlu0 %5438
  %5440 = vrot.lane.b32.xlu0 %v3935, 56
  %v5441 = vpop.permute.xlu0 %5440
  %5442 = vrot.lane.b32.xlu0 %v3938, 56
  %v5443 = vpop.permute.xlu0 %5442
  %5444 = vrot.lane.b32.xlu0 %v3940, 56
  %v5445 = vpop.permute.xlu0 %5444
  %5446 = vrot.lane.b32.xlu0 %v3943, 56
  %v5447 = vpop.permute.xlu0 %5446
  %5448 = vrot.lane.b32.xlu0 %v3945, 56
  %v5449 = vpop.permute.xlu0 %5448
  %5450 = vrot.lane.b32.xlu0 %v3948, 56
  %v5451 = vpop.permute.xlu0 %5450
  %5452 = vrot.lane.b32.xlu0 %v3950, 56
  %v5453 = vpop.permute.xlu0 %5452
  %5454 = vrot.lane.b32.xlu0 %v3953, 56
  %v5455 = vpop.permute.xlu0 %5454
  %5456 = vrot.lane.b32.xlu0 %v3955, 56
  %v5457 = vpop.permute.xlu0 %5456
  %5458 = vrot.lane.b32.xlu0 %v3958, 56
  %v5459 = vpop.permute.xlu0 %5458
  %5460 = vrot.lane.b32.xlu0 %v3960, 56
  %v5461 = vpop.permute.xlu0 %5460
  %5462 = vrot.lane.b32.xlu0 %v3963, 56
  %v5463 = vpop.permute.xlu0 %5462
  %5464 = vrot.lane.b32.xlu0 %v3965, 56
  %v5465 = vpop.permute.xlu0 %5464
  %5466 = vrot.lane.b32.xlu0 %v4214, 56
  %v5467 = vpop.permute.xlu0 %5466
  %5468 = vrot.lane.b32.xlu0 %v4216, 56
  %v5469 = vpop.permute.xlu0 %5468
  %5470 = vrot.lane.b32.xlu0 %v4240, 56
  %v5471 = vpop.permute.xlu0 %5470
  %5472 = vrot.lane.b32.xlu0 %v4242, 56
  %v5473 = vpop.permute.xlu0 %5472
  %5474 = vrot.lane.b32.xlu0 %v3978, 56
  %v5475 = vpop.permute.xlu0 %5474
  %5476 = vrot.lane.b32.xlu0 %v3980, 56
  %v5477 = vpop.permute.xlu0 %5476
  %5478 = vrot.lane.b32.xlu0 %v3983, 56
  %v5479 = vpop.permute.xlu0 %5478
  %5480 = vrot.lane.b32.xlu0 %v3985, 56
  %v5481 = vpop.permute.xlu0 %5480
  %5482 = vrot.lane.b32.xlu0 %v3988, 56
  %v5483 = vpop.permute.xlu0 %5482
  %5484 = vrot.lane.b32.xlu0 %v3990, 56
  %v5485 = vpop.permute.xlu0 %5484
  %5486 = vrot.lane.b32.xlu0 %v3993, 56
  %v5487 = vpop.permute.xlu0 %5486
  %5488 = vrot.lane.b32.xlu0 %v3995, 56
  %v5489 = vpop.permute.xlu0 %5488
  %5490 = vrot.lane.b32.xlu0 %v3998, 56
  %v5491 = vpop.permute.xlu0 %5490
  %5492 = vrot.lane.b32.xlu0 %v4000, 56
  %v5493 = vpop.permute.xlu0 %5492
  %5494 = vrot.lane.b32.xlu0 %v4003, 56
  %v5495 = vpop.permute.xlu0 %5494
  %5496 = vrot.lane.b32.xlu0 %v4005, 56
  %v5497 = vpop.permute.xlu0 %5496
  %5498 = vrot.lane.b32.xlu0 %v4008, 56
  %v5499 = vpop.permute.xlu0 %5498
  %5500 = vrot.lane.b32.xlu0 %v4010, 56
  %v5501 = vpop.permute.xlu0 %5500
  %5502 = vrot.lane.b32.xlu0 %v4013, 56
  %v5503 = vpop.permute.xlu0 %5502
  %5504 = vrot.lane.b32.xlu0 %v4015, 56
  %v5505 = vpop.permute.xlu0 %5504
  %5506 = vrot.lane.b32.xlu0 %v4018, 56
  %v5507 = vpop.permute.xlu0 %5506
  %5508 = vrot.lane.b32.xlu0 %v4020, 56
  %v5509 = vpop.permute.xlu0 %5508
  %5510 = vrot.lane.b32.xlu0 %v4023, 56
  %v5511 = vpop.permute.xlu0 %5510
  %5512 = vrot.lane.b32.xlu0 %v4025, 56
  %v5513 = vpop.permute.xlu0 %5512
  %5514 = vrot.lane.b32.xlu0 %v4028, 56
  %v5515 = vpop.permute.xlu0 %5514
  %5516 = vrot.lane.b32.xlu0 %v4030, 56
  %v5517 = vpop.permute.xlu0 %5516
  %5518 = vrot.lane.b32.xlu0 %v4033, 56
  %v5519 = vpop.permute.xlu0 %5518
  %5520 = vrot.lane.b32.xlu0 %v4035, 56
  %v5521 = vpop.permute.xlu0 %5520
  %5522 = vrot.lane.b32.xlu0 %v4038, 56
  %v5523 = vpop.permute.xlu0 %5522
  %5524 = vrot.lane.b32.xlu0 %v4040, 56
  %v5525 = vpop.permute.xlu0 %5524
  %5526 = vrot.lane.b32.xlu0 %v4043, 56
  %v5527 = vpop.permute.xlu0 %5526
  %5528 = vrot.lane.b32.xlu0 %v4045, 56
  %v5529 = vpop.permute.xlu0 %5528
  %5530 = vrot.lane.b32.xlu0 %v4219, 56
  %v5531 = vpop.permute.xlu0 %5530
  %5532 = vrot.lane.b32.xlu0 %v4221, 56
  %v5533 = vpop.permute.xlu0 %5532
  %5534 = vrot.lane.b32.xlu0 %v4245, 56
  %v5535 = vpop.permute.xlu0 %5534
  %5536 = vrot.lane.b32.xlu0 %v4247, 56
  %v5537 = vpop.permute.xlu0 %5536
  %5602 = vrot.lane.b32.xlu0 %v4058, 64
  %v5603 = vpop.permute.xlu0 %5602
  %5604 = vrot.lane.b32.xlu0 %v4060, 64
  %v5605 = vpop.permute.xlu0 %5604
  %5606 = vrot.lane.b32.xlu0 %v4063, 64
  %v5607 = vpop.permute.xlu0 %5606
  %5608 = vrot.lane.b32.xlu0 %v4065, 64
  %v5609 = vpop.permute.xlu0 %5608
  %5610 = vrot.lane.b32.xlu0 %v4068, 64
  %v5611 = vpop.permute.xlu0 %5610
  %5612 = vrot.lane.b32.xlu0 %v4070, 64
  %v5613 = vpop.permute.xlu0 %5612
  %5614 = vrot.lane.b32.xlu0 %v4073, 64
  %v5615 = vpop.permute.xlu0 %5614
  %5616 = vrot.lane.b32.xlu0 %v4075, 64
  %v5617 = vpop.permute.xlu0 %5616
  %5618 = vrot.lane.b32.xlu0 %v4078, 64
  %v5619 = vpop.permute.xlu0 %5618
  %5620 = vrot.lane.b32.xlu0 %v4080, 64
  %v5621 = vpop.permute.xlu0 %5620
  %5622 = vrot.lane.b32.xlu0 %v4083, 64
  %v5623 = vpop.permute.xlu0 %5622
  %5624 = vrot.lane.b32.xlu0 %v4085, 64
  %v5625 = vpop.permute.xlu0 %5624
  %5626 = vrot.lane.b32.xlu0 %v4088, 64
  %v5627 = vpop.permute.xlu0 %5626
  %5628 = vrot.lane.b32.xlu0 %v4090, 64
  %v5629 = vpop.permute.xlu0 %5628
  %5630 = vrot.lane.b32.xlu0 %v4093, 64
  %v5631 = vpop.permute.xlu0 %5630
  %5632 = vrot.lane.b32.xlu0 %v4095, 64
  %v5633 = vpop.permute.xlu0 %5632
  %5634 = vrot.lane.b32.xlu0 %v4098, 64
  %v5635 = vpop.permute.xlu0 %5634
  %5636 = vrot.lane.b32.xlu0 %v4100, 64
  %v5637 = vpop.permute.xlu0 %5636
  %5638 = vrot.lane.b32.xlu0 %v4103, 64
  %v5639 = vpop.permute.xlu0 %5638
  %5640 = vrot.lane.b32.xlu0 %v4105, 64
  %v5641 = vpop.permute.xlu0 %5640
  %5642 = vrot.lane.b32.xlu0 %v4108, 64
  %v5643 = vpop.permute.xlu0 %5642
  %5644 = vrot.lane.b32.xlu0 %v4110, 64
  %v5645 = vpop.permute.xlu0 %5644
  %5646 = vrot.lane.b32.xlu0 %v4113, 64
  %v5647 = vpop.permute.xlu0 %5646
  %5648 = vrot.lane.b32.xlu0 %v4115, 64
  %v5649 = vpop.permute.xlu0 %5648
  %5650 = vrot.lane.b32.xlu0 %v4118, 64
  %v5651 = vpop.permute.xlu0 %5650
  %5652 = vrot.lane.b32.xlu0 %v4120, 64
  %v5653 = vpop.permute.xlu0 %5652
  %5654 = vrot.lane.b32.xlu0 %v4123, 64
  %v5655 = vpop.permute.xlu0 %5654
  %5656 = vrot.lane.b32.xlu0 %v4125, 64
  %v5657 = vpop.permute.xlu0 %5656
  %5658 = vrot.lane.b32.xlu0 %v4224, 64
  %v5659 = vpop.permute.xlu0 %5658
  %5660 = vrot.lane.b32.xlu0 %v4226, 64
  %v5661 = vpop.permute.xlu0 %5660
  %5662 = vrot.lane.b32.xlu0 %v4250, 64
  %v5663 = vpop.permute.xlu0 %5662
  %5664 = vrot.lane.b32.xlu0 %v4252, 64
  %v5665 = vpop.permute.xlu0 %5664
  %5666 = vrot.lane.b32.xlu0 %v4138, 64
  %v5667 = vpop.permute.xlu0 %5666
  %5668 = vrot.lane.b32.xlu0 %v4140, 64
  %v5669 = vpop.permute.xlu0 %5668
  %5670 = vrot.lane.b32.xlu0 %v4143, 64
  %v5671 = vpop.permute.xlu0 %5670
  %5672 = vrot.lane.b32.xlu0 %v4145, 64
  %v5673 = vpop.permute.xlu0 %5672
  %5674 = vrot.lane.b32.xlu0 %v4148, 64
  %v5675 = vpop.permute.xlu0 %5674
  %5676 = vrot.lane.b32.xlu0 %v4150, 64
  %v5677 = vpop.permute.xlu0 %5676
  %5678 = vrot.lane.b32.xlu0 %v4153, 64
  %v5679 = vpop.permute.xlu0 %5678
  %5680 = vrot.lane.b32.xlu0 %v4155, 64
  %v5681 = vpop.permute.xlu0 %5680
  %5682 = vrot.lane.b32.xlu0 %v4158, 64
  %v5683 = vpop.permute.xlu0 %5682
  %5684 = vrot.lane.b32.xlu0 %v4160, 64
  %v5685 = vpop.permute.xlu0 %5684
  %5686 = vrot.lane.b32.xlu0 %v4163, 64
  %v5687 = vpop.permute.xlu0 %5686
  %5688 = vrot.lane.b32.xlu0 %v4165, 64
  %v5689 = vpop.permute.xlu0 %5688
  %5690 = vrot.lane.b32.xlu0 %v4168, 64
  %v5691 = vpop.permute.xlu0 %5690
  %5692 = vrot.lane.b32.xlu0 %v4170, 64
  %v5693 = vpop.permute.xlu0 %5692
  %5694 = vrot.lane.b32.xlu0 %v4173, 64
  %v5695 = vpop.permute.xlu0 %5694
  %5696 = vrot.lane.b32.xlu0 %v4175, 64
  %v5697 = vpop.permute.xlu0 %5696
  %5698 = vrot.lane.b32.xlu0 %v4178, 64
  %v5699 = vpop.permute.xlu0 %5698
  %5700 = vrot.lane.b32.xlu0 %v4180, 64
  %v5701 = vpop.permute.xlu0 %5700
  %5702 = vrot.lane.b32.xlu0 %v4183, 64
  %v5703 = vpop.permute.xlu0 %5702
  %5704 = vrot.lane.b32.xlu0 %v4185, 64
  %v5705 = vpop.permute.xlu0 %5704
  %5706 = vrot.lane.b32.xlu0 %v4188, 64
  %v5707 = vpop.permute.xlu0 %5706
  %5708 = vrot.lane.b32.xlu0 %v4190, 64
  %v5709 = vpop.permute.xlu0 %5708
  %5710 = vrot.lane.b32.xlu0 %v4193, 64
  %v5711 = vpop.permute.xlu0 %5710
  %5712 = vrot.lane.b32.xlu0 %v4195, 64
  %v5713 = vpop.permute.xlu0 %5712
  %5714 = vrot.lane.b32.xlu0 %v4198, 64
  %v5715 = vpop.permute.xlu0 %5714
  %5716 = vrot.lane.b32.xlu0 %v4200, 64
  %v5717 = vpop.permute.xlu0 %5716
  %5718 = vrot.lane.b32.xlu0 %v4203, 64
  %v5719 = vpop.permute.xlu0 %5718
  %5720 = vrot.lane.b32.xlu0 %v4205, 64
  %v5721 = vpop.permute.xlu0 %5720
  %5722 = vrot.lane.b32.xlu0 %v4229, 64
  %v5723 = vpop.permute.xlu0 %5722
  %5724 = vrot.lane.b32.xlu0 %v4231, 64
  %v5725 = vpop.permute.xlu0 %5724
  %5726 = vrot.lane.b32.xlu0 %v4255, 64
  %v5727 = vpop.permute.xlu0 %5726
  %5728 = vrot.lane.b32.xlu0 %v4257, 64
  %v5729 = vpop.permute.xlu0 %5728
  %v5794 = vsel %vm110, %v3682, %v4259
  %v5795 = vsel %vm110, %v3683, %v4261
  %v5796 = vsel %vm110, %v3685, %v4263
  %v5797 = vsel %vm110, %v3686, %v4265
  %v5798 = vsel %vm110, %v3688, %v4267
  %v5799 = vsel %vm110, %v3689, %v4269
  %v5800 = vsel %vm110, %v3691, %v4271
  %v5801 = vsel %vm110, %v3692, %v4273
  %v5802 = vsel %vm110, %v3694, %v4275
  %v5803 = vsel %vm110, %v3695, %v4277
  %v5804 = vsel %vm110, %v3697, %v4279
  %v5805 = vsel %vm110, %v3698, %v4281
  %v5806 = vsel %vm110, %v3700, %v4283
  %v5807 = vsel %vm110, %v3701, %v4285
  %v5808 = vsel %vm110, %v3703, %v4287
  %v5809 = vsel %vm110, %v3704, %v4289
  %v5810 = vsel %vm110, %v3706, %v4291
  %v5811 = vsel %vm110, %v3707, %v4293
  %v5812 = vsel %vm110, %v3709, %v4295
  %v5813 = vsel %vm110, %v3710, %v4297
  %v5814 = vsel %vm110, %v3712, %v4299
  %v5815 = vsel %vm110, %v3713, %v4301
  %v5816 = vsel %vm110, %v3715, %v4303
  %v5817 = vsel %vm110, %v3716, %v4305
  %v5818 = vsel %vm110, %v3718, %v4307
  %v5819 = vsel %vm110, %v3719, %v4309
  %v5820 = vsel %vm110, %v3721, %v4311
  %v5821 = vsel %vm110, %v3722, %v4313
  %v5822 = vsel %vm110, %v3724, %v4315
  %v5823 = vsel %vm110, %v3725, %v4317
  %v5824 = vsel %vm110, %v3727, %v4319
  %v5825 = vsel %vm110, %v3728, %v4321
  %v5826 = vsel %vm110, %v3736, %v4323
  %v5827 = vsel %vm110, %v3737, %v4325
  %v5828 = vsel %vm110, %v3739, %v4327
  %v5829 = vsel %vm110, %v3740, %v4329
  %v5830 = vsel %vm110, %v3742, %v4331
  %v5831 = vsel %vm110, %v3743, %v4333
  %v5832 = vsel %vm110, %v3745, %v4335
  %v5833 = vsel %vm110, %v3746, %v4337
  %v5834 = vsel %vm110, %v3748, %v4339
  %v5835 = vsel %vm110, %v3749, %v4341
  %v5836 = vsel %vm110, %v3751, %v4343
  %v5837 = vsel %vm110, %v3752, %v4345
  %v5838 = vsel %vm110, %v3754, %v4347
  %v5839 = vsel %vm110, %v3755, %v4349
  %v5840 = vsel %vm110, %v3757, %v4351
  %v5841 = vsel %vm110, %v3758, %v4353
  %v5842 = vsel %vm110, %v3760, %v4355
  %v5843 = vsel %vm110, %v3761, %v4357
  %v5844 = vsel %vm110, %v3763, %v4359
  %v5845 = vsel %vm110, %v3764, %v4361
  %v5846 = vsel %vm110, %v3766, %v4363
  %v5847 = vsel %vm110, %v3767, %v4365
  %v5848 = vsel %vm110, %v3769, %v4367
  %v5849 = vsel %vm110, %v3770, %v4369
  %v5850 = vsel %vm110, %v3772, %v4371
  %v5851 = vsel %vm110, %v3773, %v4373
  %v5852 = vsel %vm110, %v3775, %v4375
  %v5853 = vsel %vm110, %v3776, %v4377
  %v5854 = vsel %vm110, %v3778, %v4379
  %v5855 = vsel %vm110, %v3779, %v4381
  %v5856 = vsel %vm110, %v3781, %v4383
  %v5857 = vsel %vm110, %v3782, %v4385
  %v5858 = vsel %vm2634, %v5794, %v4451
  %v5859 = vsel %vm2634, %v5795, %v4453
  %v5860 = vsel %vm2634, %v5796, %v4455
  %v5861 = vsel %vm2634, %v5797, %v4457
  %v5862 = vsel %vm2634, %v5798, %v4459
  %v5863 = vsel %vm2634, %v5799, %v4461
  %v5864 = vsel %vm2634, %v5800, %v4463
  %v5865 = vsel %vm2634, %v5801, %v4465
  %v5866 = vsel %vm2634, %v5802, %v4467
  %v5867 = vsel %vm2634, %v5803, %v4469
  %v5868 = vsel %vm2634, %v5804, %v4471
  %v5869 = vsel %vm2634, %v5805, %v4473
  %v5870 = vsel %vm2634, %v5806, %v4475
  %v5871 = vsel %vm2634, %v5807, %v4477
  %v5872 = vsel %vm2634, %v5808, %v4479
  %v5873 = vsel %vm2634, %v5809, %v4481
  %v5874 = vsel %vm2634, %v5810, %v4483
  %v5875 = vsel %vm2634, %v5811, %v4485
  %v5876 = vsel %vm2634, %v5812, %v4487
  %v5877 = vsel %vm2634, %v5813, %v4489
  %v5878 = vsel %vm2634, %v5814, %v4491
  %v5879 = vsel %vm2634, %v5815, %v4493
  %v5880 = vsel %vm2634, %v5816, %v4495
  %v5881 = vsel %vm2634, %v5817, %v4497
  %v5882 = vsel %vm2634, %v5818, %v4499
  %v5883 = vsel %vm2634, %v5819, %v4501
  %v5884 = vsel %vm2634, %v5820, %v4503
  %v5885 = vsel %vm2634, %v5821, %v4505
  %v5886 = vsel %vm2634, %v5822, %v4507
  %v5887 = vsel %vm2634, %v5823, %v4509
  %v5888 = vsel %vm2634, %v5824, %v4511
  %v5889 = vsel %vm2634, %v5825, %v4513
  %v5890 = vsel %vm2634, %v5826, %v4515
  %v5891 = vsel %vm2634, %v5827, %v4517
  %v5892 = vsel %vm2634, %v5828, %v4519
  %v5893 = vsel %vm2634, %v5829, %v4521
  %v5894 = vsel %vm2634, %v5830, %v4523
  %v5895 = vsel %vm2634, %v5831, %v4525
  %v5896 = vsel %vm2634, %v5832, %v4527
  %v5897 = vsel %vm2634, %v5833, %v4529
  %v5898 = vsel %vm2634, %v5834, %v4531
  %v5899 = vsel %vm2634, %v5835, %v4533
  %v5900 = vsel %vm2634, %v5836, %v4535
  %v5901 = vsel %vm2634, %v5837, %v4537
  %v5902 = vsel %vm2634, %v5838, %v4539
  %v5903 = vsel %vm2634, %v5839, %v4541
  %v5904 = vsel %vm2634, %v5840, %v4543
  %v5905 = vsel %vm2634, %v5841, %v4545
  %v5906 = vsel %vm2634, %v5842, %v4547
  %v5907 = vsel %vm2634, %v5843, %v4549
  %v5908 = vsel %vm2634, %v5844, %v4551
  %v5909 = vsel %vm2634, %v5845, %v4553
  %v5910 = vsel %vm2634, %v5846, %v4555
  %v5911 = vsel %vm2634, %v5847, %v4557
  %v5912 = vsel %vm2634, %v5848, %v4559
  %v5913 = vsel %vm2634, %v5849, %v4561
  %v5914 = vsel %vm2634, %v5850, %v4563
  %v5915 = vsel %vm2634, %v5851, %v4565
  %v5916 = vsel %vm2634, %v5852, %v4567
  %v5917 = vsel %vm2634, %v5853, %v4569
  %v5918 = vsel %vm2634, %v5854, %v4571
  %v5919 = vsel %vm2634, %v5855, %v4573
  %v5920 = vsel %vm2634, %v5856, %v4575
  %v5921 = vsel %vm2634, %v5857, %v4577
  %v5922 = vsel %vm2764, %v5858, %v4643
  %v5923 = vsel %vm2764, %v5859, %v4645
  %v5924 = vsel %vm2764, %v5860, %v4647
  %v5925 = vsel %vm2764, %v5861, %v4649
  %v5926 = vsel %vm2764, %v5862, %v4651
  %v5927 = vsel %vm2764, %v5863, %v4653
  %v5928 = vsel %vm2764, %v5864, %v4655
  %v5929 = vsel %vm2764, %v5865, %v4657
  %v5930 = vsel %vm2764, %v5866, %v4659
  %v5931 = vsel %vm2764, %v5867, %v4661
  %v5932 = vsel %vm2764, %v5868, %v4663
  %v5933 = vsel %vm2764, %v5869, %v4665
  %v5934 = vsel %vm2764, %v5870, %v4667
  %v5935 = vsel %vm2764, %v5871, %v4669
  %v5936 = vsel %vm2764, %v5872, %v4671
  %v5937 = vsel %vm2764, %v5873, %v4673
  %v5938 = vsel %vm2764, %v5874, %v4675
  %v5939 = vsel %vm2764, %v5875, %v4677
  %v5940 = vsel %vm2764, %v5876, %v4679
  %v5941 = vsel %vm2764, %v5877, %v4681
  %v5942 = vsel %vm2764, %v5878, %v4683
  %v5943 = vsel %vm2764, %v5879, %v4685
  %v5944 = vsel %vm2764, %v5880, %v4687
  %v5945 = vsel %vm2764, %v5881, %v4689
  %v5946 = vsel %vm2764, %v5882, %v4691
  %v5947 = vsel %vm2764, %v5883, %v4693
  %v5948 = vsel %vm2764, %v5884, %v4695
  %v5949 = vsel %vm2764, %v5885, %v4697
  %v5950 = vsel %vm2764, %v5886, %v4699
  %v5951 = vsel %vm2764, %v5887, %v4701
  %v5952 = vsel %vm2764, %v5888, %v4703
  %v5953 = vsel %vm2764, %v5889, %v4705
  %v5954 = vsel %vm2764, %v5890, %v4707
  %v5955 = vsel %vm2764, %v5891, %v4709
  %v5956 = vsel %vm2764, %v5892, %v4711
  %v5957 = vsel %vm2764, %v5893, %v4713
  %v5958 = vsel %vm2764, %v5894, %v4715
  %v5959 = vsel %vm2764, %v5895, %v4717
  %v5960 = vsel %vm2764, %v5896, %v4719
  %v5961 = vsel %vm2764, %v5897, %v4721
  %v5962 = vsel %vm2764, %v5898, %v4723
  %v5963 = vsel %vm2764, %v5899, %v4725
  %v5964 = vsel %vm2764, %v5900, %v4727
  %v5965 = vsel %vm2764, %v5901, %v4729
  %v5966 = vsel %vm2764, %v5902, %v4731
  %v5967 = vsel %vm2764, %v5903, %v4733
  %v5968 = vsel %vm2764, %v5904, %v4735
  %v5969 = vsel %vm2764, %v5905, %v4737
  %v5970 = vsel %vm2764, %v5906, %v4739
  %v5971 = vsel %vm2764, %v5907, %v4741
  %v5972 = vsel %vm2764, %v5908, %v4743
  %v5973 = vsel %vm2764, %v5909, %v4745
  %v5974 = vsel %vm2764, %v5910, %v4747
  %v5975 = vsel %vm2764, %v5911, %v4749
  %v5976 = vsel %vm2764, %v5912, %v4751
  %v5977 = vsel %vm2764, %v5913, %v4753
  %v5978 = vsel %vm2764, %v5914, %v4755
  %v5979 = vsel %vm2764, %v5915, %v4757
  %v5980 = vsel %vm2764, %v5916, %v4759
  %v5981 = vsel %vm2764, %v5917, %v4761
  %v5982 = vsel %vm2764, %v5918, %v4763
  %v5983 = vsel %vm2764, %v5919, %v4765
  %v5984 = vsel %vm2764, %v5920, %v4767
  %v5985 = vsel %vm2764, %v5921, %v4769
  %v5986 = vsel %vm2894, %v5922, %v4835
  %v5987 = vsel %vm2894, %v5923, %v4837
  %v5988 = vsel %vm2894, %v5924, %v4839
  %v5989 = vsel %vm2894, %v5925, %v4841
  %v5990 = vsel %vm2894, %v5926, %v4843
  %v5991 = vsel %vm2894, %v5927, %v4845
  %v5992 = vsel %vm2894, %v5928, %v4847
  %v5993 = vsel %vm2894, %v5929, %v4849
  %v5994 = vsel %vm2894, %v5930, %v4851
  %v5995 = vsel %vm2894, %v5931, %v4853
  %v5996 = vsel %vm2894, %v5932, %v4855
  %v5997 = vsel %vm2894, %v5933, %v4857
  %v5998 = vsel %vm2894, %v5934, %v4859
  %v5999 = vsel %vm2894, %v5935, %v4861
  %v6000 = vsel %vm2894, %v5936, %v4863
  %v6001 = vsel %vm2894, %v5937, %v4865
  %v6002 = vsel %vm2894, %v5938, %v4867
  %v6003 = vsel %vm2894, %v5939, %v4869
  %v6004 = vsel %vm2894, %v5940, %v4871
  %v6005 = vsel %vm2894, %v5941, %v4873
  %v6006 = vsel %vm2894, %v5942, %v4875
  %v6007 = vsel %vm2894, %v5943, %v4877
  %v6008 = vsel %vm2894, %v5944, %v4879
  %v6009 = vsel %vm2894, %v5945, %v4881
  %v6010 = vsel %vm2894, %v5946, %v4883
  %v6011 = vsel %vm2894, %v5947, %v4885
  %v6012 = vsel %vm2894, %v5948, %v4887
  %v6013 = vsel %vm2894, %v5949, %v4889
  %v6014 = vsel %vm2894, %v5950, %v4891
  %v6015 = vsel %vm2894, %v5951, %v4893
  %v6016 = vsel %vm2894, %v5952, %v4895
  %v6017 = vsel %vm2894, %v5953, %v4897
  %v6018 = vsel %vm2894, %v5954, %v4899
  %v6019 = vsel %vm2894, %v5955, %v4901
  %v6020 = vsel %vm2894, %v5956, %v4903
  %v6021 = vsel %vm2894, %v5957, %v4905
  %v6022 = vsel %vm2894, %v5958, %v4907
  %v6023 = vsel %vm2894, %v5959, %v4909
  %v6024 = vsel %vm2894, %v5960, %v4911
  %v6025 = vsel %vm2894, %v5961, %v4913
  %v6026 = vsel %vm2894, %v5962, %v4915
  %v6027 = vsel %vm2894, %v5963, %v4917
  %v6028 = vsel %vm2894, %v5964, %v4919
  %v6029 = vsel %vm2894, %v5965, %v4921
  %v6030 = vsel %vm2894, %v5966, %v4923
  %v6031 = vsel %vm2894, %v5967, %v4925
  %v6032 = vsel %vm2894, %v5968, %v4927
  %v6033 = vsel %vm2894, %v5969, %v4929
  %v6034 = vsel %vm2894, %v5970, %v4931
  %v6035 = vsel %vm2894, %v5971, %v4933
  %v6036 = vsel %vm2894, %v5972, %v4935
  %v6037 = vsel %vm2894, %v5973, %v4937
  %v6038 = vsel %vm2894, %v5974, %v4939
  %v6039 = vsel %vm2894, %v5975, %v4941
  %v6040 = vsel %vm2894, %v5976, %v4943
  %v6041 = vsel %vm2894, %v5977, %v4945
  %v6042 = vsel %vm2894, %v5978, %v4947
  %v6043 = vsel %vm2894, %v5979, %v4949
  %v6044 = vsel %vm2894, %v5980, %v4951
  %v6045 = vsel %vm2894, %v5981, %v4953
  %v6046 = vsel %vm2894, %v5982, %v4955
  %v6047 = vsel %vm2894, %v5983, %v4957
  %v6048 = vsel %vm2894, %v5984, %v4959
  %v6049 = vsel %vm2894, %v5985, %v4961
  %vm6050 = vcmask 326656
  %v6051 = vsel %vm6050, %v5986, %v5027
  %v6052 = vsel %vm6050, %v5987, %v5029
  %v6053 = vsel %vm6050, %v5988, %v5031
  %v6054 = vsel %vm6050, %v5989, %v5033
  %v6055 = vsel %vm6050, %v5990, %v5035
  %v6056 = vsel %vm6050, %v5991, %v5037
  %v6057 = vsel %vm6050, %v5992, %v5039
  %v6058 = vsel %vm6050, %v5993, %v5041
  %v6059 = vsel %vm6050, %v5994, %v5043
  %v6060 = vsel %vm6050, %v5995, %v5045
  %v6061 = vsel %vm6050, %v5996, %v5047
  %v6062 = vsel %vm6050, %v5997, %v5049
  %v6063 = vsel %vm6050, %v5998, %v5051
  %v6064 = vsel %vm6050, %v5999, %v5053
  %v6065 = vsel %vm6050, %v6000, %v5055
  %v6066 = vsel %vm6050, %v6001, %v5057
  %v6067 = vsel %vm6050, %v6002, %v5059
  %v6068 = vsel %vm6050, %v6003, %v5061
  %v6069 = vsel %vm6050, %v6004, %v5063
  %v6070 = vsel %vm6050, %v6005, %v5065
  %v6071 = vsel %vm6050, %v6006, %v5067
  %v6072 = vsel %vm6050, %v6007, %v5069
  %v6073 = vsel %vm6050, %v6008, %v5071
  %v6074 = vsel %vm6050, %v6009, %v5073
  %v6075 = vsel %vm6050, %v6010, %v5075
  %v6076 = vsel %vm6050, %v6011, %v5077
  %v6077 = vsel %vm6050, %v6012, %v5079
  %v6078 = vsel %vm6050, %v6013, %v5081
  %v6079 = vsel %vm6050, %v6014, %v5083
  %v6080 = vsel %vm6050, %v6015, %v5085
  %v6081 = vsel %vm6050, %v6016, %v5087
  %v6082 = vsel %vm6050, %v6017, %v5089
  %v6083 = vsel %vm6050, %v6018, %v5091
  %v6084 = vsel %vm6050, %v6019, %v5093
  %v6085 = vsel %vm6050, %v6020, %v5095
  %v6086 = vsel %vm6050, %v6021, %v5097
  %v6087 = vsel %vm6050, %v6022, %v5099
  %v6088 = vsel %vm6050, %v6023, %v5101
  %v6089 = vsel %vm6050, %v6024, %v5103
  %v6090 = vsel %vm6050, %v6025, %v5105
  %v6091 = vsel %vm6050, %v6026, %v5107
  %v6092 = vsel %vm6050, %v6027, %v5109
  %v6093 = vsel %vm6050, %v6028, %v5111
  %v6094 = vsel %vm6050, %v6029, %v5113
  %v6095 = vsel %vm6050, %v6030, %v5115
  %v6096 = vsel %vm6050, %v6031, %v5117
  %v6097 = vsel %vm6050, %v6032, %v5119
  %v6098 = vsel %vm6050, %v6033, %v5121
  %v6099 = vsel %vm6050, %v6034, %v5123
  %v6100 = vsel %vm6050, %v6035, %v5125
  %v6101 = vsel %vm6050, %v6036, %v5127
  %v6102 = vsel %vm6050, %v6037, %v5129
  %v6103 = vsel %vm6050, %v6038, %v5131
  %v6104 = vsel %vm6050, %v6039, %v5133
  %v6105 = vsel %vm6050, %v6040, %v5135
  %v6106 = vsel %vm6050, %v6041, %v5137
  %v6107 = vsel %vm6050, %v6042, %v5139
  %v6108 = vsel %vm6050, %v6043, %v5141
  %v6109 = vsel %vm6050, %v6044, %v5143
  %v6110 = vsel %vm6050, %v6045, %v5145
  %v6111 = vsel %vm6050, %v6046, %v5147
  %v6112 = vsel %vm6050, %v6047, %v5149
  %v6113 = vsel %vm6050, %v6048, %v5151
  %v6114 = vsel %vm6050, %v6049, %v5153
  %vm6115 = vcmask 392192
  %v6116 = vsel %vm6115, %v6051, %v5219
  %v6117 = vsel %vm6115, %v6052, %v5221
  %v6118 = vsel %vm6115, %v6053, %v5223
  %v6119 = vsel %vm6115, %v6054, %v5225
  %v6120 = vsel %vm6115, %v6055, %v5227
  %v6121 = vsel %vm6115, %v6056, %v5229
  %v6122 = vsel %vm6115, %v6057, %v5231
  %v6123 = vsel %vm6115, %v6058, %v5233
  %v6124 = vsel %vm6115, %v6059, %v5235
  %v6125 = vsel %vm6115, %v6060, %v5237
  %v6126 = vsel %vm6115, %v6061, %v5239
  %v6127 = vsel %vm6115, %v6062, %v5241
  %v6128 = vsel %vm6115, %v6063, %v5243
  %v6129 = vsel %vm6115, %v6064, %v5245
  %v6130 = vsel %vm6115, %v6065, %v5247
  %v6131 = vsel %vm6115, %v6066, %v5249
  %v6132 = vsel %vm6115, %v6067, %v5251
  %v6133 = vsel %vm6115, %v6068, %v5253
  %v6134 = vsel %vm6115, %v6069, %v5255
  %v6135 = vsel %vm6115, %v6070, %v5257
  %v6136 = vsel %vm6115, %v6071, %v5259
  %v6137 = vsel %vm6115, %v6072, %v5261
  %v6138 = vsel %vm6115, %v6073, %v5263
  %v6139 = vsel %vm6115, %v6074, %v5265
  %v6140 = vsel %vm6115, %v6075, %v5267
  %v6141 = vsel %vm6115, %v6076, %v5269
  %v6142 = vsel %vm6115, %v6077, %v5271
  %v6143 = vsel %vm6115, %v6078, %v5273
  %v6144 = vsel %vm6115, %v6079, %v5275
  %v6145 = vsel %vm6115, %v6080, %v5277
  %v6146 = vsel %vm6115, %v6081, %v5279
  %v6147 = vsel %vm6115, %v6082, %v5281
  %v6148 = vsel %vm6115, %v6083, %v5283
  %v6149 = vsel %vm6115, %v6084, %v5285
  %v6150 = vsel %vm6115, %v6085, %v5287
  %v6151 = vsel %vm6115, %v6086, %v5289
  %v6152 = vsel %vm6115, %v6087, %v5291
  %v6153 = vsel %vm6115, %v6088, %v5293
  %v6154 = vsel %vm6115, %v6089, %v5295
  %v6155 = vsel %vm6115, %v6090, %v5297
  %v6156 = vsel %vm6115, %v6091, %v5299
  %v6157 = vsel %vm6115, %v6092, %v5301
  %v6158 = vsel %vm6115, %v6093, %v5303
  %v6159 = vsel %vm6115, %v6094, %v5305
  %v6160 = vsel %vm6115, %v6095, %v5307
  %v6161 = vsel %vm6115, %v6096, %v5309
  %v6162 = vsel %vm6115, %v6097, %v5311
  %v6163 = vsel %vm6115, %v6098, %v5313
  %v6164 = vsel %vm6115, %v6099, %v5315
  %v6165 = vsel %vm6115, %v6100, %v5317
  %v6166 = vsel %vm6115, %v6101, %v5319
  %v6167 = vsel %vm6115, %v6102, %v5321
  %v6168 = vsel %vm6115, %v6103, %v5323
  %v6169 = vsel %vm6115, %v6104, %v5325
  %v6170 = vsel %vm6115, %v6105, %v5327
  %v6171 = vsel %vm6115, %v6106, %v5329
  %v6172 = vsel %vm6115, %v6107, %v5331
  %v6173 = vsel %vm6115, %v6108, %v5333
  %v6174 = vsel %vm6115, %v6109, %v5335
  %v6175 = vsel %vm6115, %v6110, %v5337
  %v6176 = vsel %vm6115, %v6111, %v5339
  %v6177 = vsel %vm6115, %v6112, %v5341
  %v6178 = vsel %vm6115, %v6113, %v5343
  %v6179 = vsel %vm6115, %v6114, %v5345
  %vm6180 = vcmask 457728
  %v6181 = vsel %vm6180, %v6116, %v5411
  %v6182 = vsel %vm6180, %v6117, %v5413
  %v6183 = vsel %vm6180, %v6118, %v5415
  %v6184 = vsel %vm6180, %v6119, %v5417
  %v6185 = vsel %vm6180, %v6120, %v5419
  %v6186 = vsel %vm6180, %v6121, %v5421
  %v6187 = vsel %vm6180, %v6122, %v5423
  %v6188 = vsel %vm6180, %v6123, %v5425
  %v6189 = vsel %vm6180, %v6124, %v5427
  %v6190 = vsel %vm6180, %v6125, %v5429
  %v6191 = vsel %vm6180, %v6126, %v5431
  %v6192 = vsel %vm6180, %v6127, %v5433
  %v6193 = vsel %vm6180, %v6128, %v5435
  %v6194 = vsel %vm6180, %v6129, %v5437
  %v6195 = vsel %vm6180, %v6130, %v5439
  %v6196 = vsel %vm6180, %v6131, %v5441
  %v6197 = vsel %vm6180, %v6132, %v5443
  %v6198 = vsel %vm6180, %v6133, %v5445
  %v6199 = vsel %vm6180, %v6134, %v5447
  %v6200 = vsel %vm6180, %v6135, %v5449
  %v6201 = vsel %vm6180, %v6136, %v5451
  %v6202 = vsel %vm6180, %v6137, %v5453
  %v6203 = vsel %vm6180, %v6138, %v5455
  %v6204 = vsel %vm6180, %v6139, %v5457
  %v6205 = vsel %vm6180, %v6140, %v5459
  %v6206 = vsel %vm6180, %v6141, %v5461
  %v6207 = vsel %vm6180, %v6142, %v5463
  %v6208 = vsel %vm6180, %v6143, %v5465
  %v6209 = vsel %vm6180, %v6144, %v5467
  %v6210 = vsel %vm6180, %v6145, %v5469
  %v6211 = vsel %vm6180, %v6146, %v5471
  %v6212 = vsel %vm6180, %v6147, %v5473
  %v6213 = vsel %vm6180, %v6148, %v5475
  %v6214 = vsel %vm6180, %v6149, %v5477
  %v6215 = vsel %vm6180, %v6150, %v5479
  %v6216 = vsel %vm6180, %v6151, %v5481
  %v6217 = vsel %vm6180, %v6152, %v5483
  %v6218 = vsel %vm6180, %v6153, %v5485
  %v6219 = vsel %vm6180, %v6154, %v5487
  %v6220 = vsel %vm6180, %v6155, %v5489
  %v6221 = vsel %vm6180, %v6156, %v5491
  %v6222 = vsel %vm6180, %v6157, %v5493
  %v6223 = vsel %vm6180, %v6158, %v5495
  %v6224 = vsel %vm6180, %v6159, %v5497
  %v6225 = vsel %vm6180, %v6160, %v5499
  %v6226 = vsel %vm6180, %v6161, %v5501
  %v6227 = vsel %vm6180, %v6162, %v5503
  %v6228 = vsel %vm6180, %v6163, %v5505
  %v6229 = vsel %vm6180, %v6164, %v5507
  %v6230 = vsel %vm6180, %v6165, %v5509
  %v6231 = vsel %vm6180, %v6166, %v5511
  %v6232 = vsel %vm6180, %v6167, %v5513
  %v6233 = vsel %vm6180, %v6168, %v5515
  %v6234 = vsel %vm6180, %v6169, %v5517
  %v6235 = vsel %vm6180, %v6170, %v5519
  %v6236 = vsel %vm6180, %v6171, %v5521
  %v6237 = vsel %vm6180, %v6172, %v5523
  %v6238 = vsel %vm6180, %v6173, %v5525
  %v6239 = vsel %vm6180, %v6174, %v5527
  %v6240 = vsel %vm6180, %v6175, %v5529
  %v6241 = vsel %vm6180, %v6176, %v5531
  %v6242 = vsel %vm6180, %v6177, %v5533
  %v6243 = vsel %vm6180, %v6178, %v5535
  %v6244 = vsel %vm6180, %v6179, %v5537
  %vm6245 = vcmask 523264
  %v6246 = vsel %vm6245, %v6181, %v5603
  %v6247 = vsel %vm6245, %v6182, %v5605
  %v6248 = vsel %vm6245, %v6183, %v5607
  %v6249 = vsel %vm6245, %v6184, %v5609
  %v6250 = vsel %vm6245, %v6185, %v5611
  %v6251 = vsel %vm6245, %v6186, %v5613
  %v6252 = vsel %vm6245, %v6187, %v5615
  %v6253 = vsel %vm6245, %v6188, %v5617
  %v6254 = vsel %vm6245, %v6189, %v5619
  %v6255 = vsel %vm6245, %v6190, %v5621
  %v6256 = vsel %vm6245, %v6191, %v5623
  %v6257 = vsel %vm6245, %v6192, %v5625
  %v6258 = vsel %vm6245, %v6193, %v5627
  %v6259 = vsel %vm6245, %v6194, %v5629
  %v6260 = vsel %vm6245, %v6195, %v5631
  %v6261 = vsel %vm6245, %v6196, %v5633
  %v6262 = vsel %vm6245, %v6197, %v5635
  %v6263 = vsel %vm6245, %v6198, %v5637
  %v6264 = vsel %vm6245, %v6199, %v5639
  %v6265 = vsel %vm6245, %v6200, %v5641
  %v6266 = vsel %vm6245, %v6201, %v5643
  %v6267 = vsel %vm6245, %v6202, %v5645
  %v6268 = vsel %vm6245, %v6203, %v5647
  %v6269 = vsel %vm6245, %v6204, %v5649
  %v6270 = vsel %vm6245, %v6205, %v5651
  %v6271 = vsel %vm6245, %v6206, %v5653
  %v6272 = vsel %vm6245, %v6207, %v5655
  %v6273 = vsel %vm6245, %v6208, %v5657
  %v6274 = vsel %vm6245, %v6209, %v5659
  %v6275 = vsel %vm6245, %v6210, %v5661
  %v6276 = vsel %vm6245, %v6211, %v5663
  %v6277 = vsel %vm6245, %v6212, %v5665
  %v6278 = vsel %vm6245, %v6213, %v5667
  %v6279 = vsel %vm6245, %v6214, %v5669
  %v6280 = vsel %vm6245, %v6215, %v5671
  %v6281 = vsel %vm6245, %v6216, %v5673
  %v6282 = vsel %vm6245, %v6217, %v5675
  %v6283 = vsel %vm6245, %v6218, %v5677
  %v6284 = vsel %vm6245, %v6219, %v5679
  %v6285 = vsel %vm6245, %v6220, %v5681
  %v6286 = vsel %vm6245, %v6221, %v5683
  %v6287 = vsel %vm6245, %v6222, %v5685
  %v6288 = vsel %vm6245, %v6223, %v5687
  %v6289 = vsel %vm6245, %v6224, %v5689
  %v6290 = vsel %vm6245, %v6225, %v5691
  %v6291 = vsel %vm6245, %v6226, %v5693
  %v6292 = vsel %vm6245, %v6227, %v5695
  %v6293 = vsel %vm6245, %v6228, %v5697
  %v6294 = vsel %vm6245, %v6229, %v5699
  %v6295 = vsel %vm6245, %v6230, %v5701
  %v6296 = vsel %vm6245, %v6231, %v5703
  %v6297 = vsel %vm6245, %v6232, %v5705
  %v6298 = vsel %vm6245, %v6233, %v5707
  %v6299 = vsel %vm6245, %v6234, %v5709
  %v6300 = vsel %vm6245, %v6235, %v5711
  %v6301 = vsel %vm6245, %v6236, %v5713
  %v6302 = vsel %vm6245, %v6237, %v5715
  %v6303 = vsel %vm6245, %v6238, %v5717
  %v6304 = vsel %vm6245, %v6239, %v5719
  %v6305 = vsel %vm6245, %v6240, %v5721
  %v6306 = vsel %vm6245, %v6241, %v5723
  %v6307 = vsel %vm6245, %v6242, %v5725
  %v6308 = vsel %vm6245, %v6243, %v5727
  %v6309 = vsel %vm6245, %v6244, %v5729
  %v6310 = vld [vmem:[%s3] sm:$0xff]
  %v6311 = vld [vmem:[%s3 + $0x8] sm:$0xff]
  %v6312 = vld [vmem:[%s3 + $0x10] sm:$0xff]
  %v6313 = vld [vmem:[%s3 + $0x18] sm:$0xff]
  %v6314 = vld [vmem:[%s3 + $0x20] sm:$0xff]
  %v6315 = vld [vmem:[%s3 + $0x28] sm:$0xff]
  %v6316 = vld [vmem:[%s3 + $0x30] sm:$0xff]
  %v6317 = vld [vmem:[%s3 + $0x38] sm:$0xff]
  %v6318 = vld [vmem:[%s3 + $0x40] sm:$0xff]
  %v6319 = vld [vmem:[%s4] sm:$0x1]
  %v6321 = vlaneseq
  %v6322 = vshrl.u32 %v6321, 7
  %v6323 = vsub.s32 0, %v6322
  %v6324 = vrot.slane %v6319, %v6323
  %vm6326 = vcmask 588800
  %v6328 = vsel %vm6326, %v6246, 0
  %v6331 = vsel %vm6326, %v6247, 0
  %v6334 = vsel %vm6326, %v6248, 0
  %v6337 = vsel %vm6326, %v6249, 0
  %v6340 = vsel %vm6326, %v6250, 0
  %v6343 = vsel %vm6326, %v6251, 0
  %v6346 = vsel %vm6326, %v6252, 0
  %v6349 = vsel %vm6326, %v6253, 0
  %v6352 = vsel %vm6326, %v6254, 0
  %v6355 = vsel %vm6326, %v6255, 0
  %v6358 = vsel %vm6326, %v6256, 0
  %v6361 = vsel %vm6326, %v6257, 0
  %v6364 = vsel %vm6326, %v6258, 0
  %v6367 = vsel %vm6326, %v6259, 0
  %v6370 = vsel %vm6326, %v6260, 0
  %v6373 = vsel %vm6326, %v6261, 0
  %v6376 = vsel %vm6326, %v6262, 0
  %v6379 = vsel %vm6326, %v6263, 0
  %v6382 = vsel %vm6326, %v6264, 0
  %v6385 = vsel %vm6326, %v6265, 0
  %v6388 = vsel %vm6326, %v6266, 0
  %v6391 = vsel %vm6326, %v6267, 0
  %v6394 = vsel %vm6326, %v6268, 0
  %v6397 = vsel %vm6326, %v6269, 0
  %v6400 = vsel %vm6326, %v6270, 0
  %v6403 = vsel %vm6326, %v6271, 0
  %v6406 = vsel %vm6326, %v6272, 0
  %v6409 = vsel %vm6326, %v6273, 0
  %v6412 = vsel %vm6326, %v6274, 0
  %v6415 = vsel %vm6326, %v6275, 0
  %v6418 = vsel %vm6326, %v6276, 0
  %v6421 = vsel %vm6326, %v6277, 0
  %v6424 = vsel %vm6326, %v6278, 0
  %v6427 = vsel %vm6326, %v6279, 0
  %v6430 = vsel %vm6326, %v6280, 0
  %v6433 = vsel %vm6326, %v6281, 0
  %v6436 = vsel %vm6326, %v6282, 0
  %v6439 = vsel %vm6326, %v6283, 0
  %v6442 = vsel %vm6326, %v6284, 0
  %v6445 = vsel %vm6326, %v6285, 0
  %v6448 = vsel %vm6326, %v6286, 0
  %v6451 = vsel %vm6326, %v6287, 0
  %v6454 = vsel %vm6326, %v6288, 0
  %v6457 = vsel %vm6326, %v6289, 0
  %v6460 = vsel %vm6326, %v6290, 0
  %v6463 = vsel %vm6326, %v6291, 0
  %v6466 = vsel %vm6326, %v6292, 0
  %v6469 = vsel %vm6326, %v6293, 0
  %v6472 = vsel %vm6326, %v6294, 0
  %v6475 = vsel %vm6326, %v6295, 0
  %v6478 = vsel %vm6326, %v6296, 0
  %v6481 = vsel %vm6326, %v6297, 0
  %v6484 = vsel %vm6326, %v6298, 0
  %v6487 = vsel %vm6326, %v6299, 0
  %v6490 = vsel %vm6326, %v6300, 0
  %v6493 = vsel %vm6326, %v6301, 0
  %v6496 = vsel %vm6326, %v6302, 0
  %v6499 = vsel %vm6326, %v6303, 0
  %v6502 = vsel %vm6326, %v6304, 0
  %v6505 = vsel %vm6326, %v6305, 0
  %v6508 = vsel %vm6326, %v6306, 0
  %v6511 = vsel %vm6326, %v6307, 0
  %v6514 = vsel %vm6326, %v6308, 0
  %v6517 = vsel %vm6326, %v6309, 0
  %6519 = vmatprep.subr.mxu0 0.0
  %6520 = vmatpush1.msra.mxu0 0.0
  %6521 = vmatprep.subr.mxu0 0.0
  %6522 = vmatpush1.msra.mxu0 0.0
  %6523 = vmatprep.subr.mxu0 0.0
  %6524 = vmatpush1.msra.mxu0 0.0
  %6525 = vmatprep.subr.mxu0 0.0
  %6526 = vmatpush1.msra.mxu0 0.0
  %6527 = vmatprep.subr.mxu0 0.0
  %6528 = vmatpush1.msra.mxu0 0.0
  %6529 = vmatprep.subr.mxu0 0.0
  %6530 = vmatpush1.msra.mxu0 0.0
  %6531 = vmatprep.subr.mxu0 0.0
  %6532 = vmatpush1.msra.mxu0 0.0
  %6533 = vmatprep.subr.mxu0 0.0
  %6534 = vmatpush1.msra.mxu0 %v6318
  %6535 = vmatprep.subr.mxu0 0.0
  %6536 = vmatpush1.msra.mxu0 %v6317
  %6537 = vmatprep.subr.mxu0 0.0
  %6538 = vmatpush1.msra.mxu0 %v6316
  %6539 = vmatprep.subr.mxu0 0.0
  %6540 = vmatpush1.msra.mxu0 %v6315
  %6541 = vmatprep.subr.mxu0 0.0
  %6542 = vmatpush1.msra.mxu0 %v6314
  %6543 = vmatprep.subr.mxu0 0.0
  %6544 = vmatpush1.msra.mxu0 %v6313
  %6545 = vmatprep.subr.mxu0 0.0
  %6546 = vmatpush1.msra.mxu0 %v6312
  %6547 = vmatprep.subr.mxu0 0.0
  %6548 = vmatpush1.msra.mxu0 %v6311
  %6549 = vmatprep.subr.mxu0 0.0
  %6550 = vmatpush1.msra.mxu0 %v6310
  %6551 = vmatprep.subr.mxu0 0.0
  %6552 = vmatpush2.msra.mxu0 0.0
  %6553 = vmatprep.subr.mxu0 0.0
  %6554 = vmatpush2.msra.mxu0 0.0
  %6555 = vmatprep.subr.mxu0 0.0
  %6556 = vmatpush2.msra.mxu0 0.0
  %6557 = vmatprep.subr.mxu0 0.0
  %6558 = vmatpush2.msra.mxu0 0.0
  %6559 = vmatprep.subr.mxu0 0.0
  %6560 = vmatpush2.msra.mxu0 0.0
  %6561 = vmatprep.subr.mxu0 0.0
  %6562 = vmatpush2.msra.mxu0 0.0
  %6563 = vmatprep.subr.mxu0 0.0
  %6564 = vmatpush2.msra.mxu0 0.0
  %6565 = vmatprep.subr.mxu0 0.0
  %6566 = vmatpush2.msra.mxu0 0.0
  %6567 = vmatprep.subr.mxu0 0.0
  %6568 = vmatpush2.msra.mxu0 0.0
  %6569 = vmatprep.subr.mxu0 0.0
  %6570 = vmatpush2.msra.mxu0 0.0
  %6571 = vmatprep.subr.mxu0 0.0
  %6572 = vmatpush2.msra.mxu0 0.0
  %6573 = vmatprep.subr.mxu0 0.0
  %6574 = vmatpush2.msra.mxu0 0.0
  %6575 = vmatprep.subr.mxu0 0.0
  %6576 = vmatpush2.msra.mxu0 0.0
  %6577 = vmatprep.subr.mxu0 0.0
  %6578 = vmatpush2.msra.mxu0 0.0
  %6579 = vmatprep.subr.mxu0 0.0
  %6580 = vmatpush2.msra.mxu0 0.0
  %6581 = vmatprep.subr.mxu0 0.0
  %6582 = vmatpush2.msra.mxu0 0.0
  %6583 = vmatprep.mubr.f32.mxu0 0.0
  %6584 = vmatmul.mubr.f32.gmra.mxu0 %v6328
  %v6585 = vpop.f32.mrf.mxu0
  %v6586 = vadd.f32 %v6324, %v6585
  %v6587 = vpop.f32.mrf.mxu0
  %6588 = vmatprep.mubr.f32.mxu0 0.0
  %6589 = vmatmul.mubr.f32.gmra.mxu0 %v6331
  %v6590 = vpop.f32.mrf.mxu0
  %v6591 = vadd.f32 %v6324, %v6590
  %v6592 = vpop.f32.mrf.mxu0
  %6593 = vmatprep.mubr.f32.mxu0 0.0
  %6594 = vmatmul.mubr.f32.gmra.mxu0 %v6334
  %v6595 = vpop.f32.mrf.mxu0
  %v6596 = vadd.f32 %v6324, %v6595
  %v6597 = vpop.f32.mrf.mxu0
  %6598 = vmatprep.mubr.f32.mxu0 0.0
  %6599 = vmatmul.mubr.f32.gmra.mxu0 %v6337
  %v6600 = vpop.f32.mrf.mxu0
  %v6601 = vadd.f32 %v6324, %v6600
  %v6602 = vpop.f32.mrf.mxu0
  %6603 = vmatprep.mubr.f32.mxu0 0.0
  %6604 = vmatmul.mubr.f32.gmra.mxu0 %v6340
  %v6605 = vpop.f32.mrf.mxu0
  %v6606 = vadd.f32 %v6324, %v6605
  %v6607 = vpop.f32.mrf.mxu0
  %6608 = vmatprep.mubr.f32.mxu0 0.0
  %6609 = vmatmul.mubr.f32.gmra.mxu0 %v6343
  %v6610 = vpop.f32.mrf.mxu0
  %v6611 = vadd.f32 %v6324, %v6610
  %v6612 = vpop.f32.mrf.mxu0
  %6613 = vmatprep.mubr.f32.mxu0 0.0
  %6614 = vmatmul.mubr.f32.gmra.mxu0 %v6346
  %v6615 = vpop.f32.mrf.mxu0
  %v6616 = vadd.f32 %v6324, %v6615
  %v6617 = vpop.f32.mrf.mxu0
  %6618 = vmatprep.mubr.f32.mxu0 0.0
  %6619 = vmatmul.mubr.f32.gmra.mxu0 %v6349
  %v6620 = vpop.f32.mrf.mxu0
  %v6621 = vadd.f32 %v6324, %v6620
  %v6622 = vpop.f32.mrf.mxu0
  %6623 = vmatprep.mubr.f32.mxu0 0.0
  %6624 = vmatmul.mubr.f32.gmra.mxu0 %v6352
  %v6625 = vpop.f32.mrf.mxu0
  %v6626 = vadd.f32 %v6324, %v6625
  %v6627 = vpop.f32.mrf.mxu0
  %6628 = vmatprep.mubr.f32.mxu0 0.0
  %6629 = vmatmul.mubr.f32.gmra.mxu0 %v6355
  %v6630 = vpop.f32.mrf.mxu0
  %v6631 = vadd.f32 %v6324, %v6630
  %v6632 = vpop.f32.mrf.mxu0
  %6633 = vmatprep.mubr.f32.mxu0 0.0
  %6634 = vmatmul.mubr.f32.gmra.mxu0 %v6358
  %v6635 = vpop.f32.mrf.mxu0
  %v6636 = vadd.f32 %v6324, %v6635
  %v6637 = vpop.f32.mrf.mxu0
  %6638 = vmatprep.mubr.f32.mxu0 0.0
  %6639 = vmatmul.mubr.f32.gmra.mxu0 %v6361
  %v6640 = vpop.f32.mrf.mxu0
  %v6641 = vadd.f32 %v6324, %v6640
  %v6642 = vpop.f32.mrf.mxu0
  %6643 = vmatprep.mubr.f32.mxu0 0.0
  %6644 = vmatmul.mubr.f32.gmra.mxu0 %v6364
  %v6645 = vpop.f32.mrf.mxu0
  %v6646 = vadd.f32 %v6324, %v6645
  %v6647 = vpop.f32.mrf.mxu0
  %6648 = vmatprep.mubr.f32.mxu0 0.0
  %6649 = vmatmul.mubr.f32.gmra.mxu0 %v6367
  %v6650 = vpop.f32.mrf.mxu0
  %v6651 = vadd.f32 %v6324, %v6650
  %v6652 = vpop.f32.mrf.mxu0
  %6653 = vmatprep.mubr.f32.mxu0 0.0
  %6654 = vmatmul.mubr.f32.gmra.mxu0 %v6370
  %v6655 = vpop.f32.mrf.mxu0
  %v6656 = vadd.f32 %v6324, %v6655
  %v6657 = vpop.f32.mrf.mxu0
  %6658 = vmatprep.mubr.f32.mxu0 0.0
  %6659 = vmatmul.mubr.f32.gmra.mxu0 %v6373
  %v6660 = vpop.f32.mrf.mxu0
  %v6661 = vadd.f32 %v6324, %v6660
  %v6662 = vpop.f32.mrf.mxu0
  %6663 = vmatprep.mubr.f32.mxu0 0.0
  %6664 = vmatmul.mubr.f32.gmra.mxu0 %v6376
  %v6665 = vpop.f32.mrf.mxu0
  %v6666 = vadd.f32 %v6324, %v6665
  %v6667 = vpop.f32.mrf.mxu0
  %6668 = vmatprep.mubr.f32.mxu0 0.0
  %6669 = vmatmul.mubr.f32.gmra.mxu0 %v6379
  %v6670 = vpop.f32.mrf.mxu0
  %v6671 = vadd.f32 %v6324, %v6670
  %v6672 = vpop.f32.mrf.mxu0
  %6673 = vmatprep.mubr.f32.mxu0 0.0
  %6674 = vmatmul.mubr.f32.gmra.mxu0 %v6382
  %v6675 = vpop.f32.mrf.mxu0
  %v6676 = vadd.f32 %v6324, %v6675
  %v6677 = vpop.f32.mrf.mxu0
  %6678 = vmatprep.mubr.f32.mxu0 0.0
  %6679 = vmatmul.mubr.f32.gmra.mxu0 %v6385
  %v6680 = vpop.f32.mrf.mxu0
  %v6681 = vadd.f32 %v6324, %v6680
  %v6682 = vpop.f32.mrf.mxu0
  %6683 = vmatprep.mubr.f32.mxu0 0.0
  %6684 = vmatmul.mubr.f32.gmra.mxu0 %v6388
  %v6685 = vpop.f32.mrf.mxu0
  %v6686 = vadd.f32 %v6324, %v6685
  %v6687 = vpop.f32.mrf.mxu0
  %6688 = vmatprep.mubr.f32.mxu0 0.0
  %6689 = vmatmul.mubr.f32.gmra.mxu0 %v6391
  %v6690 = vpop.f32.mrf.mxu0
  %v6691 = vadd.f32 %v6324, %v6690
  %v6692 = vpop.f32.mrf.mxu0
  %6693 = vmatprep.mubr.f32.mxu0 0.0
  %6694 = vmatmul.mubr.f32.gmra.mxu0 %v6394
  %v6695 = vpop.f32.mrf.mxu0
  %v6696 = vadd.f32 %v6324, %v6695
  %v6697 = vpop.f32.mrf.mxu0
  %6698 = vmatprep.mubr.f32.mxu0 0.0
  %6699 = vmatmul.mubr.f32.gmra.mxu0 %v6397
  %v6700 = vpop.f32.mrf.mxu0
  %v6701 = vadd.f32 %v6324, %v6700
  %v6702 = vpop.f32.mrf.mxu0
  %6703 = vmatprep.mubr.f32.mxu0 0.0
  %6704 = vmatmul.mubr.f32.gmra.mxu0 %v6400
  %v6705 = vpop.f32.mrf.mxu0
  %v6706 = vadd.f32 %v6324, %v6705
  %v6707 = vpop.f32.mrf.mxu0
  %6708 = vmatprep.mubr.f32.mxu0 0.0
  %6709 = vmatmul.mubr.f32.gmra.mxu0 %v6403
  %v6710 = vpop.f32.mrf.mxu0
  %v6711 = vadd.f32 %v6324, %v6710
  %v6712 = vpop.f32.mrf.mxu0
  %6713 = vmatprep.mubr.f32.mxu0 0.0
  %6714 = vmatmul.mubr.f32.gmra.mxu0 %v6406
  %v6715 = vpop.f32.mrf.mxu0
  %v6716 = vadd.f32 %v6324, %v6715
  %v6717 = vpop.f32.mrf.mxu0
  %6718 = vmatprep.mubr.f32.mxu0 0.0
  %6719 = vmatmul.mubr.f32.gmra.mxu0 %v6409
  %v6720 = vpop.f32.mrf.mxu0
  %v6721 = vadd.f32 %v6324, %v6720
  %v6722 = vpop.f32.mrf.mxu0
  %6723 = vmatprep.mubr.f32.mxu0 0.0
  %6724 = vmatmul.mubr.f32.gmra.mxu0 %v6412
  %v6725 = vpop.f32.mrf.mxu0
  %v6726 = vadd.f32 %v6324, %v6725
  %v6727 = vpop.f32.mrf.mxu0
  %6728 = vmatprep.mubr.f32.mxu0 0.0
  %6729 = vmatmul.mubr.f32.gmra.mxu0 %v6415
  %v6730 = vpop.f32.mrf.mxu0
  %v6731 = vadd.f32 %v6324, %v6730
  %v6732 = vpop.f32.mrf.mxu0
  %6733 = vmatprep.mubr.f32.mxu0 0.0
  %6734 = vmatmul.mubr.f32.gmra.mxu0 %v6418
  %v6735 = vpop.f32.mrf.mxu0
  %v6736 = vadd.f32 %v6324, %v6735
  %v6737 = vpop.f32.mrf.mxu0
  %6738 = vmatprep.mubr.f32.mxu0 0.0
  %6739 = vmatmul.mubr.f32.gmra.mxu0 %v6421
  %v6740 = vpop.f32.mrf.mxu0
  %v6741 = vadd.f32 %v6324, %v6740
  %v6742 = vpop.f32.mrf.mxu0
  %6743 = vmatprep.mubr.f32.mxu0 0.0
  %6744 = vmatmul.mubr.f32.gmra.mxu0 %v6424
  %v6745 = vpop.f32.mrf.mxu0
  %v6746 = vadd.f32 %v6324, %v6745
  %v6747 = vpop.f32.mrf.mxu0
  %6748 = vmatprep.mubr.f32.mxu0 0.0
  %6749 = vmatmul.mubr.f32.gmra.mxu0 %v6427
  %v6750 = vpop.f32.mrf.mxu0
  %v6751 = vadd.f32 %v6324, %v6750
  %v6752 = vpop.f32.mrf.mxu0
  %6753 = vmatprep.mubr.f32.mxu0 0.0
  %6754 = vmatmul.mubr.f32.gmra.mxu0 %v6430
  %v6755 = vpop.f32.mrf.mxu0
  %v6756 = vadd.f32 %v6324, %v6755
  %v6757 = vpop.f32.mrf.mxu0
  %6758 = vmatprep.mubr.f32.mxu0 0.0
  %6759 = vmatmul.mubr.f32.gmra.mxu0 %v6433
  %v6760 = vpop.f32.mrf.mxu0
  %v6761 = vadd.f32 %v6324, %v6760
  %v6762 = vpop.f32.mrf.mxu0
  %6763 = vmatprep.mubr.f32.mxu0 0.0
  %6764 = vmatmul.mubr.f32.gmra.mxu0 %v6436
  %v6765 = vpop.f32.mrf.mxu0
  %v6766 = vadd.f32 %v6324, %v6765
  %v6767 = vpop.f32.mrf.mxu0
  %6768 = vmatprep.mubr.f32.mxu0 0.0
  %6769 = vmatmul.mubr.f32.gmra.mxu0 %v6439
  %v6770 = vpop.f32.mrf.mxu0
  %v6771 = vadd.f32 %v6324, %v6770
  %v6772 = vpop.f32.mrf.mxu0
  %6773 = vmatprep.mubr.f32.mxu0 0.0
  %6774 = vmatmul.mubr.f32.gmra.mxu0 %v6442
  %v6775 = vpop.f32.mrf.mxu0
  %v6776 = vadd.f32 %v6324, %v6775
  %v6777 = vpop.f32.mrf.mxu0
  %6778 = vmatprep.mubr.f32.mxu0 0.0
  %6779 = vmatmul.mubr.f32.gmra.mxu0 %v6445
  %v6780 = vpop.f32.mrf.mxu0
  %v6781 = vadd.f32 %v6324, %v6780
  %v6782 = vpop.f32.mrf.mxu0
  %6783 = vmatprep.mubr.f32.mxu0 0.0
  %6784 = vmatmul.mubr.f32.gmra.mxu0 %v6448
  %v6785 = vpop.f32.mrf.mxu0
  %v6786 = vadd.f32 %v6324, %v6785
  %v6787 = vpop.f32.mrf.mxu0
  %6788 = vmatprep.mubr.f32.mxu0 0.0
  %6789 = vmatmul.mubr.f32.gmra.mxu0 %v6451
  %v6790 = vpop.f32.mrf.mxu0
  %v6791 = vadd.f32 %v6324, %v6790
  %v6792 = vpop.f32.mrf.mxu0
  %6793 = vmatprep.mubr.f32.mxu0 0.0
  %6794 = vmatmul.mubr.f32.gmra.mxu0 %v6454
  %v6795 = vpop.f32.mrf.mxu0
  %v6796 = vadd.f32 %v6324, %v6795
  %v6797 = vpop.f32.mrf.mxu0
  %6798 = vmatprep.mubr.f32.mxu0 0.0
  %6799 = vmatmul.mubr.f32.gmra.mxu0 %v6457
  %v6800 = vpop.f32.mrf.mxu0
  %v6801 = vadd.f32 %v6324, %v6800
  %v6802 = vpop.f32.mrf.mxu0
  %6803 = vmatprep.mubr.f32.mxu0 0.0
  %6804 = vmatmul.mubr.f32.gmra.mxu0 %v6460
  %v6805 = vpop.f32.mrf.mxu0
  %v6806 = vadd.f32 %v6324, %v6805
  %v6807 = vpop.f32.mrf.mxu0
  %6808 = vmatprep.mubr.f32.mxu0 0.0
  %6809 = vmatmul.mubr.f32.gmra.mxu0 %v6463
  %v6810 = vpop.f32.mrf.mxu0
  %v6811 = vadd.f32 %v6324, %v6810
  %v6812 = vpop.f32.mrf.mxu0
  %6813 = vmatprep.mubr.f32.mxu0 0.0
  %6814 = vmatmul.mubr.f32.gmra.mxu0 %v6466
  %v6815 = vpop.f32.mrf.mxu0
  %v6816 = vadd.f32 %v6324, %v6815
  %v6817 = vpop.f32.mrf.mxu0
  %6818 = vmatprep.mubr.f32.mxu0 0.0
  %6819 = vmatmul.mubr.f32.gmra.mxu0 %v6469
  %v6820 = vpop.f32.mrf.mxu0
  %v6821 = vadd.f32 %v6324, %v6820
  %v6822 = vpop.f32.mrf.mxu0
  %6823 = vmatprep.mubr.f32.mxu0 0.0
  %6824 = vmatmul.mubr.f32.gmra.mxu0 %v6472
  %v6825 = vpop.f32.mrf.mxu0
  %v6826 = vadd.f32 %v6324, %v6825
  %v6827 = vpop.f32.mrf.mxu0
  %6828 = vmatprep.mubr.f32.mxu0 0.0
  %6829 = vmatmul.mubr.f32.gmra.mxu0 %v6475
  %v6830 = vpop.f32.mrf.mxu0
  %v6831 = vadd.f32 %v6324, %v6830
  %v6832 = vpop.f32.mrf.mxu0
  %6833 = vmatprep.mubr.f32.mxu0 0.0
  %6834 = vmatmul.mubr.f32.gmra.mxu0 %v6478
  %v6835 = vpop.f32.mrf.mxu0
  %v6836 = vadd.f32 %v6324, %v6835
  %v6837 = vpop.f32.mrf.mxu0
  %6838 = vmatprep.mubr.f32.mxu0 0.0
  %6839 = vmatmul.mubr.f32.gmra.mxu0 %v6481
  %v6840 = vpop.f32.mrf.mxu0
  %v6841 = vadd.f32 %v6324, %v6840
  %v6842 = vpop.f32.mrf.mxu0
  %6843 = vmatprep.mubr.f32.mxu0 0.0
  %6844 = vmatmul.mubr.f32.gmra.mxu0 %v6484
  %v6845 = vpop.f32.mrf.mxu0
  %v6846 = vadd.f32 %v6324, %v6845
  %v6847 = vpop.f32.mrf.mxu0
  %6848 = vmatprep.mubr.f32.mxu0 0.0
  %6849 = vmatmul.mubr.f32.gmra.mxu0 %v6487
  %v6850 = vpop.f32.mrf.mxu0
  %v6851 = vadd.f32 %v6324, %v6850
  %v6852 = vpop.f32.mrf.mxu0
  %6853 = vmatprep.mubr.f32.mxu0 0.0
  %6854 = vmatmul.mubr.f32.gmra.mxu0 %v6490
  %v6855 = vpop.f32.mrf.mxu0
  %v6856 = vadd.f32 %v6324, %v6855
  %v6857 = vpop.f32.mrf.mxu0
  %6858 = vmatprep.mubr.f32.mxu0 0.0
  %6859 = vmatmul.mubr.f32.gmra.mxu0 %v6493
  %v6860 = vpop.f32.mrf.mxu0
  %v6861 = vadd.f32 %v6324, %v6860
  %v6862 = vpop.f32.mrf.mxu0
  %6863 = vmatprep.mubr.f32.mxu0 0.0
  %6864 = vmatmul.mubr.f32.gmra.mxu0 %v6496
  %v6865 = vpop.f32.mrf.mxu0
  %v6866 = vadd.f32 %v6324, %v6865
  %v6867 = vpop.f32.mrf.mxu0
  %6868 = vmatprep.mubr.f32.mxu0 0.0
  %6869 = vmatmul.mubr.f32.gmra.mxu0 %v6499
  %v6870 = vpop.f32.mrf.mxu0
  %v6871 = vadd.f32 %v6324, %v6870
  %v6872 = vpop.f32.mrf.mxu0
  %6873 = vmatprep.mubr.f32.mxu0 0.0
  %6874 = vmatmul.mubr.f32.gmra.mxu0 %v6502
  %v6875 = vpop.f32.mrf.mxu0
  %v6876 = vadd.f32 %v6324, %v6875
  %v6877 = vpop.f32.mrf.mxu0
  %6878 = vmatprep.mubr.f32.mxu0 0.0
  %6879 = vmatmul.mubr.f32.gmra.mxu0 %v6505
  %v6880 = vpop.f32.mrf.mxu0
  %v6881 = vadd.f32 %v6324, %v6880
  %v6882 = vpop.f32.mrf.mxu0
  %6883 = vmatprep.mubr.f32.mxu0 0.0
  %6884 = vmatmul.mubr.f32.gmra.mxu0 %v6508
  %v6885 = vpop.f32.mrf.mxu0
  %v6886 = vadd.f32 %v6324, %v6885
  %v6887 = vpop.f32.mrf.mxu0
  %6888 = vmatprep.mubr.f32.mxu0 0.0
  %6889 = vmatmul.mubr.f32.gmra.mxu0 %v6511
  %v6890 = vpop.f32.mrf.mxu0
  %v6891 = vadd.f32 %v6324, %v6890
  %v6892 = vpop.f32.mrf.mxu0
  %6893 = vmatprep.mubr.f32.mxu0 0.0
  %6894 = vmatmul.mubr.f32.gmra.mxu0 %v6514
  %v6895 = vpop.f32.mrf.mxu0
  %v6896 = vadd.f32 %v6324, %v6895
  %v6897 = vpop.f32.mrf.mxu0
  %6898 = vmatprep.mubr.f32.mxu0 0.0
  %6899 = vmatmul.mubr.f32.gmra.mxu0 %v6517
  %v6900 = vpop.f32.mrf.mxu0
  %v6901 = vadd.f32 %v6324, %v6900
  %v6902 = vpop.f32.mrf.mxu0
  %6903 = vdwg.mxu0
  %v6904 = vmax.f32 %v6586, 0.0
  %v6905 = vmax.f32 %v6591, 0.0
  %v6906 = vmax.f32 %v6596, 0.0
  %v6907 = vmax.f32 %v6601, 0.0
  %v6908 = vmax.f32 %v6606, 0.0
  %v6909 = vmax.f32 %v6611, 0.0
  %v6910 = vmax.f32 %v6616, 0.0
  %v6911 = vmax.f32 %v6621, 0.0
  %v6912 = vmax.f32 %v6626, 0.0
  %v6913 = vmax.f32 %v6631, 0.0
  %v6914 = vmax.f32 %v6636, 0.0
  %v6915 = vmax.f32 %v6641, 0.0
  %v6916 = vmax.f32 %v6646, 0.0
  %v6917 = vmax.f32 %v6651, 0.0
  %v6918 = vmax.f32 %v6656, 0.0
  %v6919 = vmax.f32 %v6661, 0.0
  %v6920 = vmax.f32 %v6666, 0.0
  %v6921 = vmax.f32 %v6671, 0.0
  %v6922 = vmax.f32 %v6676, 0.0
  %v6923 = vmax.f32 %v6681, 0.0
  %v6924 = vmax.f32 %v6686, 0.0
  %v6925 = vmax.f32 %v6691, 0.0
  %v6926 = vmax.f32 %v6696, 0.0
  %v6927 = vmax.f32 %v6701, 0.0
  %v6928 = vmax.f32 %v6706, 0.0
  %v6929 = vmax.f32 %v6711, 0.0
  %v6930 = vmax.f32 %v6716, 0.0
  %v6931 = vmax.f32 %v6721, 0.0
  %v6932 = vmax.f32 %v6726, 0.0
  %v6933 = vmax.f32 %v6731, 0.0
  %v6934 = vmax.f32 %v6736, 0.0
  %v6935 = vmax.f32 %v6741, 0.0
  %v6936 = vmax.f32 %v6746, 0.0
  %v6937 = vmax.f32 %v6751, 0.0
  %v6938 = vmax.f32 %v6756, 0.0
  %v6939 = vmax.f32 %v6761, 0.0
  %v6940 = vmax.f32 %v6766, 0.0
  %v6941 = vmax.f32 %v6771, 0.0
  %v6942 = vmax.f32 %v6776, 0.0
  %v6943 = vmax.f32 %v6781, 0.0
  %v6944 = vmax.f32 %v6786, 0.0
  %v6945 = vmax.f32 %v6791, 0.0
  %v6946 = vmax.f32 %v6796, 0.0
  %v6947 = vmax.f32 %v6801, 0.0
  %v6948 = vmax.f32 %v6806, 0.0
  %v6949 = vmax.f32 %v6811, 0.0
  %v6950 = vmax.f32 %v6816, 0.0
  %v6951 = vmax.f32 %v6821, 0.0
  %v6952 = vmax.f32 %v6826, 0.0
  %v6953 = vmax.f32 %v6831, 0.0
  %v6954 = vmax.f32 %v6836, 0.0
  %v6955 = vmax.f32 %v6841, 0.0
  %v6956 = vmax.f32 %v6846, 0.0
  %v6957 = vmax.f32 %v6851, 0.0
  %v6958 = vmax.f32 %v6856, 0.0
  %v6959 = vmax.f32 %v6861, 0.0
  %v6960 = vmax.f32 %v6866, 0.0
  %v6961 = vmax.f32 %v6871, 0.0
  %v6962 = vmax.f32 %v6876, 0.0
  %v6963 = vmax.f32 %v6881, 0.0
  %v6964 = vmax.f32 %v6886, 0.0
  %v6965 = vmax.f32 %v6891, 0.0
  %v6966 = vmax.f32 %v6896, 0.0
  %v6967 = vmax.f32 %v6901, 0.0
  %v6968 = vsel %vm22, %v6904, 0.0
  %v6969 = vsel %vm22, %v6905, 0.0
  %v6970 = vadd.f32 %v6968, %v6969
  %v6971 = vsel %vm22, %v6906, 0.0
  %v6972 = vadd.f32 %v6970, %v6971
  %v6973 = vsel %vm22, %v6907, 0.0
  %v6974 = vadd.f32 %v6972, %v6973
  %v6975 = vsel %vm22, %v6908, 0.0
  %v6976 = vadd.f32 %v6974, %v6975
  %v6977 = vsel %vm22, %v6909, 0.0
  %v6978 = vadd.f32 %v6976, %v6977
  %v6979 = vsel %vm22, %v6910, 0.0
  %v6980 = vadd.f32 %v6978, %v6979
  %v6981 = vsel %vm22, %v6911, 0.0
  %v6982 = vadd.f32 %v6980, %v6981
  %v6983 = vsel %vm22, %v6912, 0.0
  %v6984 = vadd.f32 %v6982, %v6983
  %v6985 = vsel %vm22, %v6913, 0.0
  %v6986 = vadd.f32 %v6984, %v6985
  %v6987 = vsel %vm22, %v6914, 0.0
  %v6988 = vadd.f32 %v6986, %v6987
  %v6989 = vsel %vm22, %v6915, 0.0
  %v6990 = vadd.f32 %v6988, %v6989
  %v6991 = vsel %vm22, %v6916, 0.0
  %v6992 = vadd.f32 %v6990, %v6991
  %v6993 = vsel %vm22, %v6917, 0.0
  %v6994 = vadd.f32 %v6992, %v6993
  %v6995 = vsel %vm22, %v6918, 0.0
  %v6996 = vadd.f32 %v6994, %v6995
  %v6997 = vsel %vm22, %v6919, 0.0
  %v6998 = vadd.f32 %v6996, %v6997
  %v6999 = vsel %vm22, %v6920, 0.0
  %v7000 = vadd.f32 %v6998, %v6999
  %v7001 = vsel %vm22, %v6921, 0.0
  %v7002 = vadd.f32 %v7000, %v7001
  %v7003 = vsel %vm22, %v6922, 0.0
  %v7004 = vadd.f32 %v7002, %v7003
  %v7005 = vsel %vm22, %v6923, 0.0
  %v7006 = vadd.f32 %v7004, %v7005
  %v7007 = vsel %vm22, %v6924, 0.0
  %v7008 = vadd.f32 %v7006, %v7007
  %v7009 = vsel %vm22, %v6925, 0.0
  %v7010 = vadd.f32 %v7008, %v7009
  %v7011 = vsel %vm22, %v6926, 0.0
  %v7012 = vadd.f32 %v7010, %v7011
  %v7013 = vsel %vm22, %v6927, 0.0
  %v7014 = vadd.f32 %v7012, %v7013
  %v7015 = vsel %vm22, %v6928, 0.0
  %v7016 = vadd.f32 %v7014, %v7015
  %v7017 = vsel %vm22, %v6929, 0.0
  %v7018 = vadd.f32 %v7016, %v7017
  %v7019 = vsel %vm22, %v6930, 0.0
  %v7020 = vadd.f32 %v7018, %v7019
  %v7021 = vsel %vm22, %v6931, 0.0
  %v7022 = vadd.f32 %v7020, %v7021
  %v7023 = vsel %vm22, %v6932, 0.0
  %v7024 = vadd.f32 %v7022, %v7023
  %v7025 = vsel %vm22, %v6933, 0.0
  %v7026 = vadd.f32 %v7024, %v7025
  %v7027 = vsel %vm22, %v6934, 0.0
  %v7028 = vadd.f32 %v7026, %v7027
  %v7029 = vsel %vm22, %v6935, 0.0
  %v7030 = vadd.f32 %v7028, %v7029
  %v7031 = vsel %vm22, %v6936, 0.0
  %v7032 = vadd.f32 %v7030, %v7031
  %v7033 = vsel %vm22, %v6937, 0.0
  %v7034 = vadd.f32 %v7032, %v7033
  %v7035 = vsel %vm22, %v6938, 0.0
  %v7036 = vadd.f32 %v7034, %v7035
  %v7037 = vsel %vm22, %v6939, 0.0
  %v7038 = vadd.f32 %v7036, %v7037
  %v7039 = vsel %vm22, %v6940, 0.0
  %v7040 = vadd.f32 %v7038, %v7039
  %v7041 = vsel %vm22, %v6941, 0.0
  %v7042 = vadd.f32 %v7040, %v7041
  %v7043 = vsel %vm22, %v6942, 0.0
  %v7044 = vadd.f32 %v7042, %v7043
  %v7045 = vsel %vm22, %v6943, 0.0
  %v7046 = vadd.f32 %v7044, %v7045
  %v7047 = vsel %vm22, %v6944, 0.0
  %v7048 = vadd.f32 %v7046, %v7047
  %v7049 = vsel %vm22, %v6945, 0.0
  %v7050 = vadd.f32 %v7048, %v7049
  %v7051 = vsel %vm22, %v6946, 0.0
  %v7052 = vadd.f32 %v7050, %v7051
  %v7053 = vsel %vm22, %v6947, 0.0
  %v7054 = vadd.f32 %v7052, %v7053
  %v7055 = vsel %vm22, %v6948, 0.0
  %v7056 = vadd.f32 %v7054, %v7055
  %v7057 = vsel %vm22, %v6949, 0.0
  %v7058 = vadd.f32 %v7056, %v7057
  %v7059 = vsel %vm22, %v6950, 0.0
  %v7060 = vadd.f32 %v7058, %v7059
  %v7061 = vsel %vm22, %v6951, 0.0
  %v7062 = vadd.f32 %v7060, %v7061
  %v7063 = vsel %vm22, %v6952, 0.0
  %v7064 = vadd.f32 %v7062, %v7063
  %v7065 = vsel %vm22, %v6953, 0.0
  %v7066 = vadd.f32 %v7064, %v7065
  %v7067 = vsel %vm22, %v6954, 0.0
  %v7068 = vadd.f32 %v7066, %v7067
  %v7069 = vsel %vm22, %v6955, 0.0
  %v7070 = vadd.f32 %v7068, %v7069
  %v7071 = vsel %vm22, %v6956, 0.0
  %v7072 = vadd.f32 %v7070, %v7071
  %v7073 = vsel %vm22, %v6957, 0.0
  %v7074 = vadd.f32 %v7072, %v7073
  %v7075 = vsel %vm22, %v6958, 0.0
  %v7076 = vadd.f32 %v7074, %v7075
  %v7077 = vsel %vm22, %v6959, 0.0
  %v7078 = vadd.f32 %v7076, %v7077
  %v7079 = vsel %vm22, %v6960, 0.0
  %v7080 = vadd.f32 %v7078, %v7079
  %v7081 = vsel %vm22, %v6961, 0.0
  %v7082 = vadd.f32 %v7080, %v7081
  %v7083 = vsel %vm22, %v6962, 0.0
  %v7084 = vadd.f32 %v7082, %v7083
  %v7085 = vsel %vm22, %v6963, 0.0
  %v7086 = vadd.f32 %v7084, %v7085
  %v7087 = vsel %vm22, %v6964, 0.0
  %v7088 = vadd.f32 %v7086, %v7087
  %v7089 = vsel %vm22, %v6965, 0.0
  %v7090 = vadd.f32 %v7088, %v7089
  %v7091 = vsel %vm22, %v6966, 0.0
  %v7092 = vadd.f32 %v7090, %v7091
  %v7093 = vsel %vm22, %v6967, 0.0
  %v7094 = vadd.f32 %v7092, %v7093
  %v7095 = vrot.slane %v7094, 4
  %v7096 = vadd.f32 %v7094, %v7095
  %v7097 = vrot.slane %v7096, 2
  %v7098 = vadd.f32 %v7096, %v7097
  %v7099 = vrot.slane %v7098, 1
  %v7100 = vadd.f32 %v7098, %v7099
  %v7101 = vmul.f32 %v6904, %v6904
  %v7102 = vmul.f32 %v6905, %v6905
  %v7103 = vmul.f32 %v6906, %v6906
  %v7104 = vmul.f32 %v6907, %v6907
  %v7105 = vmul.f32 %v6908, %v6908
  %v7106 = vmul.f32 %v6909, %v6909
  %v7107 = vmul.f32 %v6910, %v6910
  %v7108 = vmul.f32 %v6911, %v6911
  %v7109 = vmul.f32 %v6912, %v6912
  %v7110 = vmul.f32 %v6913, %v6913
  %v7111 = vmul.f32 %v6914, %v6914
  %v7112 = vmul.f32 %v6915, %v6915
  %v7113 = vmul.f32 %v6916, %v6916
  %v7114 = vmul.f32 %v6917, %v6917
  %v7115 = vmul.f32 %v6918, %v6918
  %v7116 = vmul.f32 %v6919, %v6919
  %v7117 = vmul.f32 %v6920, %v6920
  %v7118 = vmul.f32 %v6921, %v6921
  %v7119 = vmul.f32 %v6922, %v6922
  %v7120 = vmul.f32 %v6923, %v6923
  %v7121 = vmul.f32 %v6924, %v6924
  %v7122 = vmul.f32 %v6925, %v6925
  %v7123 = vmul.f32 %v6926, %v6926
  %v7124 = vmul.f32 %v6927, %v6927
  %v7125 = vmul.f32 %v6928, %v6928
  %v7126 = vmul.f32 %v6929, %v6929
  %v7127 = vmul.f32 %v6930, %v6930
  %v7128 = vmul.f32 %v6931, %v6931
  %v7129 = vmul.f32 %v6932, %v6932
  %v7130 = vmul.f32 %v6933, %v6933
  %v7131 = vmul.f32 %v6934, %v6934
  %v7132 = vmul.f32 %v6935, %v6935
  %v7133 = vmul.f32 %v6936, %v6936
  %v7134 = vmul.f32 %v6937, %v6937
  %v7135 = vmul.f32 %v6938, %v6938
  %v7136 = vmul.f32 %v6939, %v6939
  %v7137 = vmul.f32 %v6940, %v6940
  %v7138 = vmul.f32 %v6941, %v6941
  %v7139 = vmul.f32 %v6942, %v6942
  %v7140 = vmul.f32 %v6943, %v6943
  %v7141 = vmul.f32 %v6944, %v6944
  %v7142 = vmul.f32 %v6945, %v6945
  %v7143 = vmul.f32 %v6946, %v6946
  %v7144 = vmul.f32 %v6947, %v6947
  %v7145 = vmul.f32 %v6948, %v6948
  %v7146 = vmul.f32 %v6949, %v6949
  %v7147 = vmul.f32 %v6950, %v6950
  %v7148 = vmul.f32 %v6951, %v6951
  %v7149 = vmul.f32 %v6952, %v6952
  %v7150 = vmul.f32 %v6953, %v6953
  %v7151 = vmul.f32 %v6954, %v6954
  %v7152 = vmul.f32 %v6955, %v6955
  %v7153 = vmul.f32 %v6956, %v6956
  %v7154 = vmul.f32 %v6957, %v6957
  %v7155 = vmul.f32 %v6958, %v6958
  %v7156 = vmul.f32 %v6959, %v6959
  %v7157 = vmul.f32 %v6960, %v6960
  %v7158 = vmul.f32 %v6961, %v6961
  %v7159 = vmul.f32 %v6962, %v6962
  %v7160 = vmul.f32 %v6963, %v6963
  %v7161 = vmul.f32 %v6964, %v6964
  %v7162 = vmul.f32 %v6965, %v6965
  %v7163 = vmul.f32 %v6966, %v6966
  %v7164 = vmul.f32 %v6967, %v6967
  %v7165 = vsel %vm22, %v7101, 0.0
  %v7166 = vsel %vm22, %v7102, 0.0
  %v7167 = vadd.f32 %v7165, %v7166
  %v7168 = vsel %vm22, %v7103, 0.0
  %v7169 = vadd.f32 %v7167, %v7168
  %v7170 = vsel %vm22, %v7104, 0.0
  %v7171 = vadd.f32 %v7169, %v7170
  %v7172 = vsel %vm22, %v7105, 0.0
  %v7173 = vadd.f32 %v7171, %v7172
  %v7174 = vsel %vm22, %v7106, 0.0
  %v7175 = vadd.f32 %v7173, %v7174
  %v7176 = vsel %vm22, %v7107, 0.0
  %v7177 = vadd.f32 %v7175, %v7176
  %v7178 = vsel %vm22, %v7108, 0.0
  %v7179 = vadd.f32 %v7177, %v7178
  %v7180 = vsel %vm22, %v7109, 0.0
  %v7181 = vadd.f32 %v7179, %v7180
  %v7182 = vsel %vm22, %v7110, 0.0
  %v7183 = vadd.f32 %v7181, %v7182
  %v7184 = vsel %vm22, %v7111, 0.0
  %v7185 = vadd.f32 %v7183, %v7184
  %v7186 = vsel %vm22, %v7112, 0.0
  %v7187 = vadd.f32 %v7185, %v7186
  %v7188 = vsel %vm22, %v7113, 0.0
  %v7189 = vadd.f32 %v7187, %v7188
  %v7190 = vsel %vm22, %v7114, 0.0
  %v7191 = vadd.f32 %v7189, %v7190
  %v7192 = vsel %vm22, %v7115, 0.0
  %v7193 = vadd.f32 %v7191, %v7192
  %v7194 = vsel %vm22, %v7116, 0.0
  %v7195 = vadd.f32 %v7193, %v7194
  %v7196 = vsel %vm22, %v7117, 0.0
  %v7197 = vadd.f32 %v7195, %v7196
  %v7198 = vsel %vm22, %v7118, 0.0
  %v7199 = vadd.f32 %v7197, %v7198
  %v7200 = vsel %vm22, %v7119, 0.0
  %v7201 = vadd.f32 %v7199, %v7200
  %v7202 = vsel %vm22, %v7120, 0.0
  %v7203 = vadd.f32 %v7201, %v7202
  %v7204 = vsel %vm22, %v7121, 0.0
  %v7205 = vadd.f32 %v7203, %v7204
  %v7206 = vsel %vm22, %v7122, 0.0
  %v7207 = vadd.f32 %v7205, %v7206
  %v7208 = vsel %vm22, %v7123, 0.0
  %v7209 = vadd.f32 %v7207, %v7208
  %v7210 = vsel %vm22, %v7124, 0.0
  %v7211 = vadd.f32 %v7209, %v7210
  %v7212 = vsel %vm22, %v7125, 0.0
  %v7213 = vadd.f32 %v7211, %v7212
  %v7214 = vsel %vm22, %v7126, 0.0
  %v7215 = vadd.f32 %v7213, %v7214
  %v7216 = vsel %vm22, %v7127, 0.0
  %v7217 = vadd.f32 %v7215, %v7216
  %v7218 = vsel %vm22, %v7128, 0.0
  %v7219 = vadd.f32 %v7217, %v7218
  %v7220 = vsel %vm22, %v7129, 0.0
  %v7221 = vadd.f32 %v7219, %v7220
  %v7222 = vsel %vm22, %v7130, 0.0
  %v7223 = vadd.f32 %v7221, %v7222
  %v7224 = vsel %vm22, %v7131, 0.0
  %v7225 = vadd.f32 %v7223, %v7224
  %v7226 = vsel %vm22, %v7132, 0.0
  %v7227 = vadd.f32 %v7225, %v7226
  %v7228 = vsel %vm22, %v7133, 0.0
  %v7229 = vadd.f32 %v7227, %v7228
  %v7230 = vsel %vm22, %v7134, 0.0
  %v7231 = vadd.f32 %v7229, %v7230
  %v7232 = vsel %vm22, %v7135, 0.0
  %v7233 = vadd.f32 %v7231, %v7232
  %v7234 = vsel %vm22, %v7136, 0.0
  %v7235 = vadd.f32 %v7233, %v7234
  %v7236 = vsel %vm22, %v7137, 0.0
  %v7237 = vadd.f32 %v7235, %v7236
  %v7238 = vsel %vm22, %v7138, 0.0
  %v7239 = vadd.f32 %v7237, %v7238
  %v7240 = vsel %vm22, %v7139, 0.0
  %v7241 = vadd.f32 %v7239, %v7240
  %v7242 = vsel %vm22, %v7140, 0.0
  %v7243 = vadd.f32 %v7241, %v7242
  %v7244 = vsel %vm22, %v7141, 0.0
  %v7245 = vadd.f32 %v7243, %v7244
  %v7246 = vsel %vm22, %v7142, 0.0
  %v7247 = vadd.f32 %v7245, %v7246
  %v7248 = vsel %vm22, %v7143, 0.0
  %v7249 = vadd.f32 %v7247, %v7248
  %v7250 = vsel %vm22, %v7144, 0.0
  %v7251 = vadd.f32 %v7249, %v7250
  %v7252 = vsel %vm22, %v7145, 0.0
  %v7253 = vadd.f32 %v7251, %v7252
  %v7254 = vsel %vm22, %v7146, 0.0
  %v7255 = vadd.f32 %v7253, %v7254
  %v7256 = vsel %vm22, %v7147, 0.0
  %v7257 = vadd.f32 %v7255, %v7256
  %v7258 = vsel %vm22, %v7148, 0.0
  %v7259 = vadd.f32 %v7257, %v7258
  %v7260 = vsel %vm22, %v7149, 0.0
  %v7261 = vadd.f32 %v7259, %v7260
  %v7262 = vsel %vm22, %v7150, 0.0
  %v7263 = vadd.f32 %v7261, %v7262
  %v7264 = vsel %vm22, %v7151, 0.0
  %v7265 = vadd.f32 %v7263, %v7264
  %v7266 = vsel %vm22, %v7152, 0.0
  %v7267 = vadd.f32 %v7265, %v7266
  %v7268 = vsel %vm22, %v7153, 0.0
  %v7269 = vadd.f32 %v7267, %v7268
  %v7270 = vsel %vm22, %v7154, 0.0
  %v7271 = vadd.f32 %v7269, %v7270
  %v7272 = vsel %vm22, %v7155, 0.0
  %v7273 = vadd.f32 %v7271, %v7272
  %v7274 = vsel %vm22, %v7156, 0.0
  %v7275 = vadd.f32 %v7273, %v7274
  %v7276 = vsel %vm22, %v7157, 0.0
  %v7277 = vadd.f32 %v7275, %v7276
  %v7278 = vsel %vm22, %v7158, 0.0
  %v7279 = vadd.f32 %v7277, %v7278
  %v7280 = vsel %vm22, %v7159, 0.0
  %v7281 = vadd.f32 %v7279, %v7280
  %v7282 = vsel %vm22, %v7160, 0.0
  %v7283 = vadd.f32 %v7281, %v7282
  %v7284 = vsel %vm22, %v7161, 0.0
  %v7285 = vadd.f32 %v7283, %v7284
  %v7286 = vsel %vm22, %v7162, 0.0
  %v7287 = vadd.f32 %v7285, %v7286
  %v7288 = vsel %vm22, %v7163, 0.0
  %v7289 = vadd.f32 %v7287, %v7288
  %v7290 = vsel %vm22, %v7164, 0.0
  %v7291 = vadd.f32 %v7289, %v7290
  %v7292 = vrot.slane %v7291, 4
  %v7293 = vadd.f32 %v7291, %v7292
  %v7294 = vrot.slane %v7293, 2
  %v7295 = vadd.f32 %v7293, %v7294
  %v7296 = vrot.slane %v7295, 1
  %v7297 = vadd.f32 %v7295, %v7296
  %vm7298 = vcmask 1040384
  %v7299 = vsel %vm7298, %v7100, %v7297
  %7300 = vst.msk [vmem:[%s6] sm:$0x3] %vm25, %v7299
  %7301 = vst.msk [vmem:[%s5] sm:$0xff] %vm22, %v6904
  %7302 = vst.msk [vmem:[%s5 + $0x8] sm:$0xff] %vm22, %v6905
  %7303 = vst.msk [vmem:[%s5 + $0x10] sm:$0xff] %vm22, %v6906
  %7304 = vst.msk [vmem:[%s5 + $0x18] sm:$0xff] %vm22, %v6907
  %7305 = vst.msk [vmem:[%s5 + $0x20] sm:$0xff] %vm22, %v6908
  %7306 = vst.msk [vmem:[%s5 + $0x28] sm:$0xff] %vm22, %v6909
  %7307 = vst.msk [vmem:[%s5 + $0x30] sm:$0xff] %vm22, %v6910
  %7308 = vst.msk [vmem:[%s5 + $0x38] sm:$0xff] %vm22, %v6911
  %7309 = vst.msk [vmem:[%s5 + $0x40] sm:$0xff] %vm22, %v6912
  %7310 = vst.msk [vmem:[%s5 + $0x48] sm:$0xff] %vm22, %v6913
  %7311 = vst.msk [vmem:[%s5 + $0x50] sm:$0xff] %vm22, %v6914
  %7312 = vst.msk [vmem:[%s5 + $0x58] sm:$0xff] %vm22, %v6915
  %7313 = vst.msk [vmem:[%s5 + $0x60] sm:$0xff] %vm22, %v6916
  %7314 = vst.msk [vmem:[%s5 + $0x68] sm:$0xff] %vm22, %v6917
  %7315 = vst.msk [vmem:[%s5 + $0x70] sm:$0xff] %vm22, %v6918
  %7316 = vst.msk [vmem:[%s5 + $0x78] sm:$0xff] %vm22, %v6919
  %7317 = vst.msk [vmem:[%s5 + $0x80] sm:$0xff] %vm22, %v6920
  %7318 = vst.msk [vmem:[%s5 + $0x88] sm:$0xff] %vm22, %v6921
  %7319 = vst.msk [vmem:[%s5 + $0x90] sm:$0xff] %vm22, %v6922
  %7320 = vst.msk [vmem:[%s5 + $0x98] sm:$0xff] %vm22, %v6923
  %7321 = vst.msk [vmem:[%s5 + $0xa0] sm:$0xff] %vm22, %v6924
  %7322 = vst.msk [vmem:[%s5 + $0xa8] sm:$0xff] %vm22, %v6925
  %7323 = vst.msk [vmem:[%s5 + $0xb0] sm:$0xff] %vm22, %v6926
  %7324 = vst.msk [vmem:[%s5 + $0xb8] sm:$0xff] %vm22, %v6927
  %7325 = vst.msk [vmem:[%s5 + $0xc0] sm:$0xff] %vm22, %v6928
  %7326 = vst.msk [vmem:[%s5 + $0xc8] sm:$0xff] %vm22, %v6929
  %7327 = vst.msk [vmem:[%s5 + $0xd0] sm:$0xff] %vm22, %v6930
  %7328 = vst.msk [vmem:[%s5 + $0xd8] sm:$0xff] %vm22, %v6931
  %7329 = vst.msk [vmem:[%s5 + $0xe0] sm:$0xff] %vm22, %v6932
  %7330 = vst.msk [vmem:[%s5 + $0xe8] sm:$0xff] %vm22, %v6933
  %7331 = vst.msk [vmem:[%s5 + $0xf0] sm:$0xff] %vm22, %v6934
  %7332 = vst.msk [vmem:[%s5 + $0xf8] sm:$0xff] %vm22, %v6935
  %7333 = vst.msk [vmem:[%s5 + $0x100] sm:$0xff] %vm22, %v6936
  %7334 = vst.msk [vmem:[%s5 + $0x108] sm:$0xff] %vm22, %v6937
  %7335 = vst.msk [vmem:[%s5 + $0x110] sm:$0xff] %vm22, %v6938
  %7336 = vst.msk [vmem:[%s5 + $0x118] sm:$0xff] %vm22, %v6939
  %7337 = vst.msk [vmem:[%s5 + $0x120] sm:$0xff] %vm22, %v6940
  %7338 = vst.msk [vmem:[%s5 + $0x128] sm:$0xff] %vm22, %v6941
  %7339 = vst.msk [vmem:[%s5 + $0x130] sm:$0xff] %vm22, %v6942
  %7340 = vst.msk [vmem:[%s5 + $0x138] sm:$0xff] %vm22, %v6943
  %7341 = vst.msk [vmem:[%s5 + $0x140] sm:$0xff] %vm22, %v6944
  %7342 = vst.msk [vmem:[%s5 + $0x148] sm:$0xff] %vm22, %v6945
  %7343 = vst.msk [vmem:[%s5 + $0x150] sm:$0xff] %vm22, %v6946
  %7344 = vst.msk [vmem:[%s5 + $0x158] sm:$0xff] %vm22, %v6947
  %7345 = vst.msk [vmem:[%s5 + $0x160] sm:$0xff] %vm22, %v6948
  %7346 = vst.msk [vmem:[%s5 + $0x168] sm:$0xff] %vm22, %v6949
  %7347 = vst.msk [vmem:[%s5 + $0x170] sm:$0xff] %vm22, %v6950
  %7348 = vst.msk [vmem:[%s5 + $0x178] sm:$0xff] %vm22, %v6951
  %7349 = vst.msk [vmem:[%s5 + $0x180] sm:$0xff] %vm22, %v6952
  %7350 = vst.msk [vmem:[%s5 + $0x188] sm:$0xff] %vm22, %v6953
  %7351 = vst.msk [vmem:[%s5 + $0x190] sm:$0xff] %vm22, %v6954
  %7352 = vst.msk [vmem:[%s5 + $0x198] sm:$0xff] %vm22, %v6955
  %7353 = vst.msk [vmem:[%s5 + $0x1a0] sm:$0xff] %vm22, %v6956
  %7354 = vst.msk [vmem:[%s5 + $0x1a8] sm:$0xff] %vm22, %v6957
  %7355 = vst.msk [vmem:[%s5 + $0x1b0] sm:$0xff] %vm22, %v6958
  %7356 = vst.msk [vmem:[%s5 + $0x1b8] sm:$0xff] %vm22, %v6959
  %7357 = vst.msk [vmem:[%s5 + $0x1c0] sm:$0xff] %vm22, %v6960
  %7358 = vst.msk [vmem:[%s5 + $0x1c8] sm:$0xff] %vm22, %v6961
  %7359 = vst.msk [vmem:[%s5 + $0x1d0] sm:$0xff] %vm22, %v6962
  %7360 = vst.msk [vmem:[%s5 + $0x1d8] sm:$0xff] %vm22, %v6963
  %7361 = vst.msk [vmem:[%s5 + $0x1e0] sm:$0xff] %vm22, %v6964
  %7362 = vst.msk [vmem:[%s5 + $0x1e8] sm:$0xff] %vm22, %v6965
  %7363 = vst.msk [vmem:[%s5 + $0x1f0] sm:$0xff] %vm22, %v6966
  %7364 = vst.msk [vmem:[%s5 + $0x1f8] sm:$0xff] %vm22, %v6967
  // Predicated region
  $region22: #{conv_block_pallas.2} parent=0 // pred_check
    _
  $region23: #{conv_block_pallas.2} parent=0 // pred_check_branch
    %7366 = sbr.rel (0) target = $region25
  $region24: #{conv_block_pallas.2} parent=0 // pred_region
    _
  $region25: #{conv_block_pallas.2} parent=0 // pred_fallthru
    _
  // Predicated region
  $region26: #{conv_block_pallas.2} parent=0 // pred_check
    _
  $region27: #{conv_block_pallas.2} parent=0 // pred_check_branch
    %7368 = sbr.rel (0) target = $region29
  $region28: #{conv_block_pallas.2} parent=0 // pred_region
    _
  $region29: #{conv_block_pallas.2} parent=0 // pred_fallthru
    _
  // Predicated region
  $region30: #{conv_block_pallas.2} parent=0 // pred_check
    _
  $region31: #{conv_block_pallas.2} parent=0 // pred_check_branch
    %7370 = sbr.rel (0) target = $region33
  $region32: #{conv_block_pallas.2} parent=0 // pred_region
    _
  $region33: #{conv_block_pallas.2} parent=0 // pred_fallthru
    _
  // Predicated region
  $region34: #{conv_block_pallas.2} parent=0 // pred_check
    _
  $region35: #{conv_block_pallas.2} parent=0 // pred_check_branch
    %7372 = sbr.rel (0) target = $region37
  $region36: #{conv_block_pallas.2} parent=0 // pred_region
    _
  $region37: #{conv_block_pallas.2} parent=0 // pred_fallthru
    _

</llo_original>
